<compile_context>
chip_gen: v6e
topology: v6e:2x2x1
jax: 0.10.0
libtpu: 0.0.40
codegen_flags: <defaults>
</compile_context>

<pallas_src>
import functools

import jax
import jax.numpy as jnp
from jax.experimental import pallas as pl
from jax.experimental.pallas import tpu as pltpu

BN_EPS = 1e-5


# --------------------------------------------------------------------------------------
# Kernel 1: fused per-point MLP (3 -> 64 -> 128 -> 1024) + max pooling over points.
# --------------------------------------------------------------------------------------
def _pointmlp_max_kernel(x_ref, w1_ref, b1_ref, w2_ref, b2_ref, w3_ref, b3_ref,
                         o_ref, *, relu_last):
    nt = pl.program_id(1)

    x = x_ref[0]                                                     # (tn, 3)
    h = jnp.dot(x, w1_ref[0], preferred_element_type=jnp.float32) + b1_ref[...]
    h = jnp.maximum(h, 0.0)
    h = jnp.dot(h, w2_ref[...], preferred_element_type=jnp.float32) + b2_ref[...]
    h = jnp.maximum(h, 0.0)
    h = jnp.dot(h, w3_ref[...], preferred_element_type=jnp.float32) + b3_ref[...]
    if relu_last:
        h = jnp.maximum(h, 0.0)

    tile_max = jnp.max(h, axis=0, keepdims=True)                     # (1, 1024) lane-dense

    @pl.when(nt == 0)
    def _():
        o_ref[0] = tile_max

    @pl.when(nt > 0)
    def _():
        o_ref[0] = jnp.maximum(o_ref[0], tile_max)


def _pick_tile(n):
    for t in (1024, 512, 256, 128, 64, 32, 16, 8):
        if n % t == 0:
            return t
    return n


def _point_mlp_max(x_rows, w1b, b1, w2, b2, w3, b3, *, relu_last, tn):
    """x_rows: (B, N, 3); w1b: (B, 3, 64) per-batch first-layer weight. Returns (B, 1024)."""
    B, N, _ = x_rows.shape
    assert N % tn == 0

    kernel = functools.partial(_pointmlp_max_kernel, relu_last=relu_last)
    flops = 2 * B * N * (3 * 64 + 64 * 128 + 128 * 1024)
    bytes_accessed = 4 * (x_rows.size + w1b.size + b1.size + w2.size + b2.size
                          + w3.size + b3.size + B * 1024)

    out = pl.pallas_call(
        kernel,
        out_shape=jax.ShapeDtypeStruct((B, 1, 1024), jnp.float32),
        grid_spec=pltpu.PrefetchScalarGridSpec(
            num_scalar_prefetch=0,
            grid=(B, N // tn),
            in_specs=[
                pl.BlockSpec((1, tn, 3), lambda b, n: (b, n, 0)),    # points tile (NWC)
                pl.BlockSpec((1, 3, 64), lambda b, n: (b, 0, 0)),    # per-batch W1 (trans folded)
                pl.BlockSpec((1, 64), lambda b, n: (0, 0)),
                pl.BlockSpec((64, 128), lambda b, n: (0, 0)),
                pl.BlockSpec((1, 128), lambda b, n: (0, 0)),
                pl.BlockSpec((128, 1024), lambda b, n: (0, 0)),
                pl.BlockSpec((1, 1024), lambda b, n: (0, 0)),
            ],
            out_specs=pl.BlockSpec((1, 1, 1024), lambda b, n: (b, 0, 0)),
        ),
        compiler_params=pltpu.CompilerParams(
            dimension_semantics=("parallel", "arbitrary"),
        ),
        cost_estimate=pl.CostEstimate(flops=flops, transcendentals=0,
                                      bytes_accessed=bytes_accessed),
    )(x_rows, w1b, b1, w2, b2, w3, b3)
    return out[:, 0, :]


# --------------------------------------------------------------------------------------
# Kernel 2: small fully-connected head (1024 -> 512 -> 256 -> out), single block.
# --------------------------------------------------------------------------------------
def _mlp_head_kernel(x_ref, w1_ref, b1_ref, w2_ref, b2_ref, w3_ref, b3_ref,
                     o_ref, *, log_softmax_dim0):
    h = jnp.dot(x_ref[...], w1_ref[...], preferred_element_type=jnp.float32) + b1_ref[...]
    h = jnp.maximum(h, 0.0)
    h = jnp.dot(h, w2_ref[...], preferred_element_type=jnp.float32) + b2_ref[...]
    h = jnp.maximum(h, 0.0)
    h = jnp.dot(h, w3_ref[...], preferred_element_type=jnp.float32) + b3_ref[...]
    if log_softmax_dim0:
        m = jnp.max(h, axis=0, keepdims=True)
        lse = jnp.log(jnp.sum(jnp.exp(h - m), axis=0, keepdims=True)) + m
        h = h - lse
    o_ref[...] = h.astype(o_ref.dtype)


def _mlp_head(x, w1, b1, w2, b2, w3, b3, *, log_softmax_dim0):
    B = x.shape[0]
    out_dim = w3.shape[1]
    kernel = functools.partial(_mlp_head_kernel, log_softmax_dim0=log_softmax_dim0)
    args = (x, w1, b1, w2, b2, w3, b3)
    return pl.pallas_call(
        kernel,
        out_shape=jax.ShapeDtypeStruct((B, out_dim), jnp.float32),
        grid_spec=pltpu.PrefetchScalarGridSpec(
            num_scalar_prefetch=0,
            grid=(1,),
            in_specs=[pl.BlockSpec(a.shape, lambda i: (0, 0)) for a in args],
            out_specs=pl.BlockSpec((B, out_dim), lambda i: (0, 0)),
        ),
        compiler_params=pltpu.CompilerParams(dimension_semantics=("arbitrary",)),
    )(*args)


# --------------------------------------------------------------------------------------
# Parameter handling: PyTorch-style raw parameters, BN folding for the kernels.
# --------------------------------------------------------------------------------------
def _fold_conv_bn(w, b, bn, eps=BN_EPS):
    """w: (Cout, Cin), b: (Cout,), bn=(gamma, beta, mean, var). Returns ((Cin,Cout), (1,Cout))."""
    g, be, mu, var = bn
    scale = g / jnp.sqrt(var + eps)
    wf = w * scale[:, None]
    bf = (b - mu) * scale + be
    return wf.T, bf[None, :]


def _fold_linear(w, b):
    return w.T, b[None, :]


def fold_params(raw):
    s, f, c = raw['stn'], raw['feat'], raw['cls']
    fp = {}
    fp['stn_w1'], fp['stn_b1'] = _fold_conv_bn(s['c1w'], s['c1b'], s['bn1'])
    fp['stn_w2'], fp['stn_b2'] = _fold_conv_bn(s['c2w'], s['c2b'], s['bn2'])
    fp['stn_w3'], fp['stn_b3'] = _fold_conv_bn(s['c3w'], s['c3b'], s['bn3'])
    fp['stn_f1w'], fp['stn_f1b'] = _fold_conv_bn(s['f1w'], s['f1b'], s['bn4'])
    fp['stn_f2w'], fp['stn_f2b'] = _fold_conv_bn(s['f2w'], s['f2b'], s['bn5'])
    w3t, b3 = _fold_linear(s['f3w'], s['f3b'])
    iden = jnp.array([1, 0, 0, 0, 1, 0, 0, 0, 1], jnp.float32)[None, :]
    fp['stn_f3w'], fp['stn_f3b'] = w3t, b3 + iden          # identity add folded into bias

    fp['feat_w1'], fp['feat_b1'] = _fold_conv_bn(f['c1w'], f['c1b'], f['bn1'])
    fp['feat_w2'], fp['feat_b2'] = _fold_conv_bn(f['c2w'], f['c2b'], f['bn2'])
    fp['feat_w3'], fp['feat_b3'] = _fold_conv_bn(f['c3w'], f['c3b'], f['bn3'])

    fp['cls_f1w'], fp['cls_f1b'] = _fold_conv_bn(c['f1w'], c['f1b'], c['bn1'])
    fp['cls_f2w'], fp['cls_f2b'] = _fold_conv_bn(c['f2w'], c['f2b'], c['bn2'])
    fp['cls_f3w'], fp['cls_f3b'] = _fold_linear(c['f3w'], c['f3b'])
    return fp


def init_raw_params(key, k=2):
    keys = iter(jax.random.split(key, 96))

    def conv(cin, cout):
        bound = float(cin) ** -0.5
        w = jax.random.uniform(next(keys), (cout, cin), jnp.float32, -bound, bound)
        b = jax.random.uniform(next(keys), (cout,), jnp.float32, -bound, bound)
        return w, b

    def bn(c):
        g = jax.random.uniform(next(keys), (c,), jnp.float32, 0.8, 1.2)
        be = jax.random.uniform(next(keys), (c,), jnp.float32, -0.1, 0.1)
        mu = jax.random.uniform(next(keys), (c,), jnp.float32, -0.1, 0.1)
        var = jax.random.uniform(next(keys), (c,), jnp.float32, 0.8, 1.2)
        return (g, be, mu, var)

    stn = {}
    stn['c1w'], stn['c1b'] = conv(3, 64);       stn['bn1'] = bn(64)
    stn['c2w'], stn['c2b'] = conv(64, 128);     stn['bn2'] = bn(128)
    stn['c3w'], stn['c3b'] = conv(128, 1024);   stn['bn3'] = bn(1024)
    stn['f1w'], stn['f1b'] = conv(1024, 512);   stn['bn4'] = bn(512)
    stn['f2w'], stn['f2b'] = conv(512, 256);    stn['bn5'] = bn(256)
    stn['f3w'], stn['f3b'] = conv(256, 9)

    feat = {}
    feat['c1w'], feat['c1b'] = conv(3, 64);     feat['bn1'] = bn(64)
    feat['c2w'], feat['c2b'] = conv(64, 128);   feat['bn2'] = bn(128)
    feat['c3w'], feat['c3b'] = conv(128, 1024); feat['bn3'] = bn(1024)

    cls = {}
    cls['f1w'], cls['f1b'] = conv(1024, 512);   cls['bn1'] = bn(512)
    cls['f2w'], cls['f2b'] = conv(512, 256);    cls['bn2'] = bn(256)
    cls['f3w'], cls['f3b'] = conv(256, k)

    return {'stn': stn, 'feat': feat, 'cls': cls}


# --------------------------------------------------------------------------------------
# Full PointNetCls forward.
# --------------------------------------------------------------------------------------
def pointnet_cls_forward(x_ncw, raw_params, *, tn=None):
    """x_ncw: (B, 3, N) float32. Returns (log_softmax(logits, dim=0), trans (B,3,3))."""
    B, C, N = x_ncw.shape
    assert C == 3
    fp = fold_params(raw_params)
    tn = _pick_tile(N) if tn is None else tn

    # Only the tiny 3-channel input is re-laid out (channels-last rows); all wide
    # intermediate activations stay inside the fused kernels.
    x_rows = jnp.transpose(x_ncw, (0, 2, 1))                         # (B, N, 3)

    # ---- STN3d front-end: per-point MLP + max pool -> (B, 1024)
    w1_stn_b = jnp.tile(fp['stn_w1'][None], (B, 1, 1))               # (B, 3, 64)
    g_stn = _point_mlp_max(x_rows, w1_stn_b, fp['stn_b1'],
                           fp['stn_w2'], fp['stn_b2'],
                           fp['stn_w3'], fp['stn_b3'],
                           relu_last=True, tn=tn)

    # ---- STN3d head -> 3x3 transform (identity already folded into the last bias)
    t9 = _mlp_head(g_stn, fp['stn_f1w'], fp['stn_f1b'],
                   fp['stn_f2w'], fp['stn_f2b'],
                   fp['stn_f3w'], fp['stn_f3b'],
                   log_softmax_dim0=False)                           # (B, 9)
    trans = t9.reshape(B, 3, 3)

    # ---- PointNetfeat front-end: fold trans into the per-batch first-layer weight
    # (x^T @ trans followed by conv1  ==  conv with W1_eff[b] = trans[b] @ W1^T).
    w1_feat_b = jnp.einsum('bcd,do->bco', trans, fp['feat_w1'])      # (B, 3, 64)
    g_feat = _point_mlp_max(x_rows, w1_feat_b, fp['feat_b1'],
                            fp['feat_w2'], fp['feat_b2'],
                            fp['feat_w3'], fp['feat_b3'],
                            relu_last=False, tn=tn)

    # ---- classifier head with log_softmax over dim=0 (as in the PyTorch module)
    logp = _mlp_head(g_feat, fp['cls_f1w'], fp['cls_f1b'],
                     fp['cls_f2w'], fp['cls_f2b'],
                     fp['cls_f3w'], fp['cls_f3b'],
                     log_softmax_dim0=True)                          # (B, k)
    return logp, trans


# --------------------------------------------------------------------------------------
# Pure-JAX reference (unfused, explicit eval-mode BatchNorm) for validation.
# --------------------------------------------------------------------------------------
def _reference(x, raw, eps=BN_EPS):
    def bn_c(y, bn):                                    # y: (B, C, N)
        g, be, mu, var = bn
        s = g / jnp.sqrt(var + eps)
        return (y - mu[None, :, None]) * s[None, :, None] + be[None, :, None]

    def bn_f(y, bn):                                    # y: (B, C)
        g, be, mu, var = bn
        return (y - mu) * (g / jnp.sqrt(var + eps)) + be

    def conv(y, w, b):                                  # (B,Cin,N),(Cout,Cin) -> (B,Cout,N)
        return jnp.einsum('oc,bcn->bon', w, y) + b[None, :, None]

    s, f, c = raw['stn'], raw['feat'], raw['cls']
    # STN3d
    h = jnp.maximum(bn_c(conv(x, s['c1w'], s['c1b']), s['bn1']), 0.0)
    h = jnp.maximum(bn_c(conv(h, s['c2w'], s['c2b']), s['bn2']), 0.0)
    h = jnp.maximum(bn_c(conv(h, s['c3w'], s['c3b']), s['bn3']), 0.0)
    g1 = jnp.max(h, axis=2)
    h = jnp.maximum(bn_f(g1 @ s['f1w'].T + s['f1b'], s['bn4']), 0.0)
    h = jnp.maximum(bn_f(h @ s['f2w'].T + s['f2b'], s['bn5']), 0.0)
    iden = jnp.array([1, 0, 0, 0, 1, 0, 0, 0, 1], jnp.float32)
    t9 = h @ s['f3w'].T + s['f3b'] + iden
    trans = t9.reshape(-1, 3, 3)
    # PointNetfeat
    xt = jnp.einsum('bcn,bcd->bdn', x, trans)
    h = jnp.maximum(bn_c(conv(xt, f['c1w'], f['c1b']), f['bn1']), 0.0)
    h = jnp.maximum(bn_c(conv(h, f['c2w'], f['c2b']), f['bn2']), 0.0)
    h = bn_c(conv(h, f['c3w'], f['c3b']), f['bn3'])
    gf = jnp.max(h, axis=2)
    # classifier head
    h = jnp.maximum(bn_f(gf @ c['f1w'].T + c['f1b'], c['bn1']), 0.0)
    h = jnp.maximum(bn_f(h @ c['f2w'].T + c['f2b'], c['bn2']), 0.0)
    logits = h @ c['f3w'].T + c['f3b']
    return jax.nn.log_softmax(logits, axis=0), trans


if __name__ == "__main__":
    key = jax.random.PRNGKey(0)
    kx, kp = jax.random.split(key)

    B, N, k = 2, 256, 2
    x = jax.random.normal(kx, (B, 3, N), jnp.float32)
    raw = init_raw_params(kp, k=k)

    fwd = jax.jit(pointnet_cls_forward)
    logp, trans = fwd(x, raw)
    logp = jax.block_until_ready(logp)
    trans = jax.block_until_ready(trans)

    ref_logp, ref_trans = _reference(x, raw)
    ref_logp = jax.block_until_ready(ref_logp)
    ref_trans = jax.block_until_ready(ref_trans)

    assert logp.shape == (B, k) and trans.shape == (B, 3, 3)
    assert jnp.allclose(trans, ref_trans, atol=1e-3, rtol=1e-3), \
        float(jnp.max(jnp.abs(trans - ref_trans)))
    assert jnp.allclose(logp, ref_logp, atol=1e-3, rtol=1e-3), \
        float(jnp.max(jnp.abs(logp - ref_logp)))

    print("KERNEL_OK")
</pallas_src>

<mosaic_0001>
module attributes {stable_mosaic.version = 11 : i64} {
  func.func @_pointmlp_max_kernel(%arg0: i32, %arg1: i32, %arg2: memref<1x256x3xf32, #tpu.memory_space<vmem>>, %arg3: memref<1x3x64xf32, #tpu.memory_space<vmem>>, %arg4: memref<1x64xf32, #tpu.memory_space<vmem>>, %arg5: memref<64x128xf32, #tpu.memory_space<vmem>>, %arg6: memref<1x128xf32, #tpu.memory_space<vmem>>, %arg7: memref<128x1024xf32, #tpu.memory_space<vmem>>, %arg8: memref<1x1024xf32, #tpu.memory_space<vmem>>, %arg9: memref<1x1x1024xf32, #tpu.memory_space<vmem>>) attributes {dimension_semantics = [#tpu.dimension_semantics<parallel>, #tpu.dimension_semantics<arbitrary>], iteration_bounds = array<i64: 2, 1>, scalar_prefetch = 0 : i64, scratch_operands = 0 : i64, tpu.core_type = #tpu.core_type<tc>, window_params = [{transform_indices = @transform_0, window_bounds = array<i64: 1, 256, 3>}, {transform_indices = @transform_1, window_bounds = array<i64: 1, 3, 64>}, {pipeline_mode = #tpu.pipeline_mode<synchronous>, transform_indices = @transform_2, window_bounds = array<i64: 1, 64>}, {pipeline_mode = #tpu.pipeline_mode<synchronous>, transform_indices = @transform_3, window_bounds = array<i64: 64, 128>}, {pipeline_mode = #tpu.pipeline_mode<synchronous>, transform_indices = @transform_4, window_bounds = array<i64: 1, 128>}, {pipeline_mode = #tpu.pipeline_mode<synchronous>, transform_indices = @transform_5, window_bounds = array<i64: 128, 1024>}, {pipeline_mode = #tpu.pipeline_mode<synchronous>, transform_indices = @transform_6, window_bounds = array<i64: 1, 1024>}, {transform_indices = @transform_7, window_bounds = array<i64: 1, 1, 1024>}]} {
    %c0 = arith.constant 0 : index
    %c0_0 = arith.constant 0 : index
    %c0_1 = arith.constant 0 : index
    %0 = vector.load %arg2[%c0, %c0_0, %c0_1] : memref<1x256x3xf32, #tpu.memory_space<vmem>>, vector<1x256x3xf32>
    %1 = vector.shape_cast %0 : vector<1x256x3xf32> to vector<256x3xf32>
    %c0_2 = arith.constant 0 : index
    %c0_3 = arith.constant 0 : index
    %c0_4 = arith.constant 0 : index
    %2 = vector.load %arg3[%c0_2, %c0_3, %c0_4] : memref<1x3x64xf32, #tpu.memory_space<vmem>>, vector<1x3x64xf32>
    %3 = vector.shape_cast %2 : vector<1x3x64xf32> to vector<3x64xf32>
    %cst = arith.constant dense<0.000000e+00> : vector<256x64xf32>
    %4 = tpu.matmul %1, %3, %cst {dimension_numbers = #tpu.dot_dimension_numbers<[1], [0], [0], [1], [0, 0, 1, 1], [], []>} : vector<256x3xf32>, vector<3x64xf32>, vector<256x64xf32> -> vector<256x64xf32>
    %c0_5 = arith.constant 0 : index
    %c0_6 = arith.constant 0 : index
    %5 = vector.load %arg4[%c0_5, %c0_6] : memref<1x64xf32, #tpu.memory_space<vmem>>, vector<1x64xf32>
    %6 = vector.broadcast %5 : vector<1x64xf32> to vector<256x64xf32>
    %7 = arith.addf %4, %6 : vector<256x64xf32>
    %cst_7 = arith.constant 0.000000e+00 : f32
    %8 = vector.broadcast %cst_7 : f32 to vector<256x64xf32>
    %9 = arith.maximumf %7, %8 : vector<256x64xf32>
    %c0_8 = arith.constant 0 : index
    %c0_9 = arith.constant 0 : index
    %10 = vector.load %arg5[%c0_8, %c0_9] : memref<64x128xf32, #tpu.memory_space<vmem>>, vector<64x128xf32>
    %cst_10 = arith.constant dense<0.000000e+00> : vector<256x128xf32>
    %11 = tpu.matmul %9, %10, %cst_10 {dimension_numbers = #tpu.dot_dimension_numbers<[1], [0], [0], [1], [0, 0, 1, 1], [], []>} : vector<256x64xf32>, vector<64x128xf32>, vector<256x128xf32> -> vector<256x128xf32>
    %c0_11 = arith.constant 0 : index
    %c0_12 = arith.constant 0 : index
    %12 = vector.load %arg6[%c0_11, %c0_12] : memref<1x128xf32, #tpu.memory_space<vmem>>, vector<1x128xf32>
    %13 = vector.broadcast %12 : vector<1x128xf32> to vector<256x128xf32>
    %14 = arith.addf %11, %13 : vector<256x128xf32>
    %cst_13 = arith.constant 0.000000e+00 : f32
    %15 = vector.broadcast %cst_13 : f32 to vector<256x128xf32>
    %16 = arith.maximumf %14, %15 : vector<256x128xf32>
    %c0_14 = arith.constant 0 : index
    %c0_15 = arith.constant 0 : index
    %17 = vector.load %arg7[%c0_14, %c0_15] : memref<128x1024xf32, #tpu.memory_space<vmem>>, vector<128x1024xf32>
    %cst_16 = arith.constant dense<0.000000e+00> : vector<256x1024xf32>
    %18 = tpu.matmul %16, %17, %cst_16 {dimension_numbers = #tpu.dot_dimension_numbers<[1], [0], [0], [1], [0, 0, 1, 1], [], []>} : vector<256x128xf32>, vector<128x1024xf32>, vector<256x1024xf32> -> vector<256x1024xf32>
    %c0_17 = arith.constant 0 : index
    %c0_18 = arith.constant 0 : index
    %19 = vector.load %arg8[%c0_17, %c0_18] : memref<1x1024xf32, #tpu.memory_space<vmem>>, vector<1x1024xf32>
    %20 = vector.broadcast %19 : vector<1x1024xf32> to vector<256x1024xf32>
    %21 = arith.addf %18, %20 : vector<256x1024xf32>
    %cst_19 = arith.constant 0.000000e+00 : f32
    %22 = vector.broadcast %cst_19 : f32 to vector<256x1024xf32>
    %23 = arith.maximumf %21, %22 : vector<256x1024xf32>
    %cst_20 = arith.constant dense<0xFF800000> : vector<1024xf32>
    %24 = vector.multi_reduction <maximumf>, %23, %cst_20 [0] : vector<256x1024xf32> to vector<1024xf32>
    %25 = vector.shape_cast %24 : vector<1024xf32> to vector<1x1024xf32>
    %c0_i32 = arith.constant 0 : i32
    %26 = arith.cmpi eq, %arg1, %c0_i32 : i32
    %27 = arith.extui %26 : i1 to i32
    %c0_i32_21 = arith.constant 0 : i32
    %28 = arith.cmpi ne, %27, %c0_i32_21 : i32
    scf.if %28 {
      %c0_24 = arith.constant 0 : index
      %c0_25 = arith.constant 0 : index
      %c0_26 = arith.constant 0 : index
      %32 = vector.load %arg9[%c0_24, %c0_25, %c0_26] : memref<1x1x1024xf32, #tpu.memory_space<vmem>>, vector<1x1x1024xf32>
      %33 = vector.shape_cast %32 : vector<1x1x1024xf32> to vector<1x1024xf32>
      %34 = vector.shape_cast %25 : vector<1x1024xf32> to vector<1x1x1024xf32>
      tpu.vector_store %arg9[%c0_24, %c0_25, %c0_26], %34 {strides = array<i32>} : memref<1x1x1024xf32, #tpu.memory_space<vmem>>, vector<1x1x1024xf32>,
    } else {
    }
    %c0_i32_22 = arith.constant 0 : i32
    %29 = arith.cmpi sgt, %arg1, %c0_i32_22 : i32
    %30 = arith.extui %29 : i1 to i32
    %c0_i32_23 = arith.constant 0 : i32
    %31 = arith.cmpi ne, %30, %c0_i32_23 : i32
    scf.if %31 {
      %c0_24 = arith.constant 0 : index
      %c0_25 = arith.constant 0 : index
      %c0_26 = arith.constant 0 : index
      %32 = vector.load %arg9[%c0_24, %c0_25, %c0_26] : memref<1x1x1024xf32, #tpu.memory_space<vmem>>, vector<1x1x1024xf32>
      %33 = vector.shape_cast %32 : vector<1x1x1024xf32> to vector<1x1024xf32>
      %34 = arith.maximumf %33, %25 : vector<1x1024xf32>
      %c0_27 = arith.constant 0 : index
      %c0_28 = arith.constant 0 : index
      %c0_29 = arith.constant 0 : index
      %35 = vector.load %arg9[%c0_27, %c0_28, %c0_29] : memref<1x1x1024xf32, #tpu.memory_space<vmem>>, vector<1x1x1024xf32>
      %36 = vector.shape_cast %35 : vector<1x1x1024xf32> to vector<1x1024xf32>
      %37 = vector.shape_cast %34 : vector<1x1024xf32> to vector<1x1x1024xf32>
      tpu.vector_store %arg9[%c0_27, %c0_28, %c0_29], %37 {strides = array<i32>} : memref<1x1x1024xf32, #tpu.memory_space<vmem>>, vector<1x1x1024xf32>,
    } else {
    }
    return
  }
  func.func @transform_0(%arg0: i32, %arg1: i32) -> (i32, i32, i32) {
    %c0_i32 = arith.constant 0 : i32
    %c0_i32_0 = arith.constant 0 : i32
    return %arg0, %arg1, %c0_i32 : i32, i32, i32
  }
  func.func @transform_1(%arg0: i32, %arg1: i32) -> (i32, i32, i32) {
    %c0_i32 = arith.constant 0 : i32
    %c0_i32_0 = arith.constant 0 : i32
    %c0_i32_1 = arith.constant 0 : i32
    return %arg0, %c0_i32, %c0_i32_0 : i32, i32, i32
  }
  func.func @transform_2(%arg0: i32, %arg1: i32) -> (i32, i32) {
    %c0_i32 = arith.constant 0 : i32
    %c0_i32_0 = arith.constant 0 : i32
    %c0_i32_1 = arith.constant 0 : i32
    return %c0_i32, %c0_i32_0 : i32, i32
  }
  func.func @transform_3(%arg0: i32, %arg1: i32) -> (i32, i32) {
    %c0_i32 = arith.constant 0 : i32
    %c0_i32_0 = arith.constant 0 : i32
    %c0_i32_1 = arith.constant 0 : i32
    return %c0_i32, %c0_i32_0 : i32, i32
  }
  func.func @transform_4(%arg0: i32, %arg1: i32) -> (i32, i32) {
    %c0_i32 = arith.constant 0 : i32
    %c0_i32_0 = arith.constant 0 : i32
    %c0_i32_1 = arith.constant 0 : i32
    return %c0_i32, %c0_i32_0 : i32, i32
  }
  func.func @transform_5(%arg0: i32, %arg1: i32) -> (i32, i32) {
    %c0_i32 = arith.constant 0 : i32
    %c0_i32_0 = arith.constant 0 : i32
    %c0_i32_1 = arith.constant 0 : i32
    return %c0_i32, %c0_i32_0 : i32, i32
  }
  func.func @transform_6(%arg0: i32, %arg1: i32) -> (i32, i32) {
    %c0_i32 = arith.constant 0 : i32
    %c0_i32_0 = arith.constant 0 : i32
    %c0_i32_1 = arith.constant 0 : i32
    return %c0_i32, %c0_i32_0 : i32, i32
  }
  func.func @transform_7(%arg0: i32, %arg1: i32) -> (i32, i32, i32) {
    %c0_i32 = arith.constant 0 : i32
    %c0_i32_0 = arith.constant 0 : i32
    %c0_i32_1 = arith.constant 0 : i32
    return %arg0, %c0_i32, %c0_i32_0 : i32, i32, i32
  }
}

module attributes {stable_mosaic.version = 11 : i64} {
  func.func @_mlp_head_kernel(%arg0: i32, %arg1: memref<2x1024xf32, #tpu.memory_space<vmem>>, %arg2: memref<1024x512xf32, #tpu.memory_space<vmem>>, %arg3: memref<1x512xf32, #tpu.memory_space<vmem>>, %arg4: memref<512x256xf32, #tpu.memory_space<vmem>>, %arg5: memref<1x256xf32, #tpu.memory_space<vmem>>, %arg6: memref<256x9xf32, #tpu.memory_space<vmem>>, %arg7: memref<1x9xf32, #tpu.memory_space<vmem>>, %arg8: memref<2x9xf32, #tpu.memory_space<vmem>>) attributes {dimension_semantics = [#tpu.dimension_semantics<arbitrary>], iteration_bounds = array<i64: 1>, scalar_prefetch = 0 : i64, scratch_operands = 0 : i64, tpu.core_type = #tpu.core_type<tc>, window_params = [{pipeline_mode = #tpu.pipeline_mode<synchronous>, transform_indices = @transform_0, window_bounds = array<i64: 2, 1024>}, {pipeline_mode = #tpu.pipeline_mode<synchronous>, transform_indices = @transform_1, window_bounds = array<i64: 1024, 512>}, {pipeline_mode = #tpu.pipeline_mode<synchronous>, transform_indices = @transform_2, window_bounds = array<i64: 1, 512>}, {pipeline_mode = #tpu.pipeline_mode<synchronous>, transform_indices = @transform_3, window_bounds = array<i64: 512, 256>}, {pipeline_mode = #tpu.pipeline_mode<synchronous>, transform_indices = @transform_4, window_bounds = array<i64: 1, 256>}, {pipeline_mode = #tpu.pipeline_mode<synchronous>, transform_indices = @transform_5, window_bounds = array<i64: 256, 9>}, {pipeline_mode = #tpu.pipeline_mode<synchronous>, transform_indices = @transform_6, window_bounds = array<i64: 1, 9>}, {pipeline_mode = #tpu.pipeline_mode<synchronous>, transform_indices = @transform_7, window_bounds = array<i64: 2, 9>}]} {
    %c0 = arith.constant 0 : index
    %c0_0 = arith.constant 0 : index
    %0 = vector.load %arg1[%c0, %c0_0] : memref<2x1024xf32, #tpu.memory_space<vmem>>, vector<2x1024xf32>
    %c0_1 = arith.constant 0 : index
    %c0_2 = arith.constant 0 : index
    %1 = vector.load %arg2[%c0_1, %c0_2] : memref<1024x512xf32, #tpu.memory_space<vmem>>, vector<1024x512xf32>
    %cst = arith.constant dense<0.000000e+00> : vector<2x512xf32>
    %2 = tpu.matmul %0, %1, %cst {dimension_numbers = #tpu.dot_dimension_numbers<[1], [0], [0], [1], [0, 0, 1, 1], [], []>} : vector<2x1024xf32>, vector<1024x512xf32>, vector<2x512xf32> -> vector<2x512xf32>
    %c0_3 = arith.constant 0 : index
    %c0_4 = arith.constant 0 : index
    %3 = vector.load %arg3[%c0_3, %c0_4] : memref<1x512xf32, #tpu.memory_space<vmem>>, vector<1x512xf32>
    %4 = vector.broadcast %3 : vector<1x512xf32> to vector<2x512xf32>
    %5 = arith.addf %2, %4 : vector<2x512xf32>
    %cst_5 = arith.constant 0.000000e+00 : f32
    %6 = vector.broadcast %cst_5 : f32 to vector<2x512xf32>
    %7 = arith.maximumf %5, %6 : vector<2x512xf32>
    %c0_6 = arith.constant 0 : index
    %c0_7 = arith.constant 0 : index
    %8 = vector.load %arg4[%c0_6, %c0_7] : memref<512x256xf32, #tpu.memory_space<vmem>>, vector<512x256xf32>
    %cst_8 = arith.constant dense<0.000000e+00> : vector<2x256xf32>
    %9 = tpu.matmul %7, %8, %cst_8 {dimension_numbers = #tpu.dot_dimension_numbers<[1], [0], [0], [1], [0, 0, 1, 1], [], []>} : vector<2x512xf32>, vector<512x256xf32>, vector<2x256xf32> -> vector<2x256xf32>
    %c0_9 = arith.constant 0 : index
    %c0_10 = arith.constant 0 : index
    %10 = vector.load %arg5[%c0_9, %c0_10] : memref<1x256xf32, #tpu.memory_space<vmem>>, vector<1x256xf32>
    %11 = vector.broadcast %10 : vector<1x256xf32> to vector<2x256xf32>
    %12 = arith.addf %9, %11 : vector<2x256xf32>
    %cst_11 = arith.constant 0.000000e+00 : f32
    %13 = vector.broadcast %cst_11 : f32 to vector<2x256xf32>
    %14 = arith.maximumf %12, %13 : vector<2x256xf32>
    %c0_12 = arith.constant 0 : index
    %c0_13 = arith.constant 0 : index
    %15 = vector.load %arg6[%c0_12, %c0_13] : memref<256x9xf32, #tpu.memory_space<vmem>>, vector<256x9xf32>
    %cst_14 = arith.constant dense<0.000000e+00> : vector<2x9xf32>
    %16 = tpu.matmul %14, %15, %cst_14 {dimension_numbers = #tpu.dot_dimension_numbers<[1], [0], [0], [1], [0, 0, 1, 1], [], []>} : vector<2x256xf32>, vector<256x9xf32>, vector<2x9xf32> -> vector<2x9xf32>
    %c0_15 = arith.constant 0 : index
    %c0_16 = arith.constant 0 : index
    %17 = vector.load %arg7[%c0_15, %c0_16] : memref<1x9xf32, #tpu.memory_space<vmem>>, vector<1x9xf32>
    %18 = vector.broadcast %17 : vector<1x9xf32> to vector<2x9xf32>
    %19 = arith.addf %16, %18 : vector<2x9xf32>
    %c0_17 = arith.constant 0 : index
    %c0_18 = arith.constant 0 : index
    %20 = vector.load %arg8[%c0_17, %c0_18] : memref<2x9xf32, #tpu.memory_space<vmem>>, vector<2x9xf32>
    tpu.vector_store %arg8[%c0_17, %c0_18], %19 {strides = array<i32>} : memref<2x9xf32, #tpu.memory_space<vmem>>, vector<2x9xf32>,
    return
  }
  func.func @transform_0(%arg0: i32) -> (i32, i32) {
    %c0_i32 = arith.constant 0 : i32
    %c0_i32_0 = arith.constant 0 : i32
    %c0_i32_1 = arith.constant 0 : i32
    return %c0_i32, %c0_i32_0 : i32, i32
  }
  func.func @transform_1(%arg0: i32) -> (i32, i32) {
    %c0_i32 = arith.constant 0 : i32
    %c0_i32_0 = arith.constant 0 : i32
    %c0_i32_1 = arith.constant 0 : i32
    return %c0_i32, %c0_i32_0 : i32, i32
  }
  func.func @transform_2(%arg0: i32) -> (i32, i32) {
    %c0_i32 = arith.constant 0 : i32
    %c0_i32_0 = arith.constant 0 : i32
    %c0_i32_1 = arith.constant 0 : i32
    return %c0_i32, %c0_i32_0 : i32, i32
  }
  func.func @transform_3(%arg0: i32) -> (i32, i32) {
    %c0_i32 = arith.constant 0 : i32
    %c0_i32_0 = arith.constant 0 : i32
    %c0_i32_1 = arith.constant 0 : i32
    return %c0_i32, %c0_i32_0 : i32, i32
  }
  func.func @transform_4(%arg0: i32) -> (i32, i32) {
    %c0_i32 = arith.constant 0 : i32
    %c0_i32_0 = arith.constant 0 : i32
    %c0_i32_1 = arith.constant 0 : i32
    return %c0_i32, %c0_i32_0 : i32, i32
  }
  func.func @transform_5(%arg0: i32) -> (i32, i32) {
    %c0_i32 = arith.constant 0 : i32
    %c0_i32_0 = arith.constant 0 : i32
    %c0_i32_1 = arith.constant 0 : i32
    return %c0_i32, %c0_i32_0 : i32, i32
  }
  func.func @transform_6(%arg0: i32) -> (i32, i32) {
    %c0_i32 = arith.constant 0 : i32
    %c0_i32_0 = arith.constant 0 : i32
    %c0_i32_1 = arith.constant 0 : i32
    return %c0_i32, %c0_i32_0 : i32, i32
  }
  func.func @transform_7(%arg0: i32) -> (i32, i32) {
    %c0_i32 = arith.constant 0 : i32
    %c0_i32_0 = arith.constant 0 : i32
    %c0_i32_1 = arith.constant 0 : i32
    return %c0_i32, %c0_i32_0 : i32, i32
  }
}

module attributes {stable_mosaic.version = 11 : i64} {
  func.func @_pointmlp_max_kernel(%arg0: i32, %arg1: i32, %arg2: memref<1x256x3xf32, #tpu.memory_space<vmem>>, %arg3: memref<1x3x64xf32, #tpu.memory_space<vmem>>, %arg4: memref<1x64xf32, #tpu.memory_space<vmem>>, %arg5: memref<64x128xf32, #tpu.memory_space<vmem>>, %arg6: memref<1x128xf32, #tpu.memory_space<vmem>>, %arg7: memref<128x1024xf32, #tpu.memory_space<vmem>>, %arg8: memref<1x1024xf32, #tpu.memory_space<vmem>>, %arg9: memref<1x1x1024xf32, #tpu.memory_space<vmem>>) attributes {dimension_semantics = [#tpu.dimension_semantics<parallel>, #tpu.dimension_semantics<arbitrary>], iteration_bounds = array<i64: 2, 1>, scalar_prefetch = 0 : i64, scratch_operands = 0 : i64, tpu.core_type = #tpu.core_type<tc>, window_params = [{transform_indices = @transform_0, window_bounds = array<i64: 1, 256, 3>}, {transform_indices = @transform_1, window_bounds = array<i64: 1, 3, 64>}, {pipeline_mode = #tpu.pipeline_mode<synchronous>, transform_indices = @transform_2, window_bounds = array<i64: 1, 64>}, {pipeline_mode = #tpu.pipeline_mode<synchronous>, transform_indices = @transform_3, window_bounds = array<i64: 64, 128>}, {pipeline_mode = #tpu.pipeline_mode<synchronous>, transform_indices = @transform_4, window_bounds = array<i64: 1, 128>}, {pipeline_mode = #tpu.pipeline_mode<synchronous>, transform_indices = @transform_5, window_bounds = array<i64: 128, 1024>}, {pipeline_mode = #tpu.pipeline_mode<synchronous>, transform_indices = @transform_6, window_bounds = array<i64: 1, 1024>}, {transform_indices = @transform_7, window_bounds = array<i64: 1, 1, 1024>}]} {
    %c0 = arith.constant 0 : index
    %c0_0 = arith.constant 0 : index
    %c0_1 = arith.constant 0 : index
    %0 = vector.load %arg2[%c0, %c0_0, %c0_1] : memref<1x256x3xf32, #tpu.memory_space<vmem>>, vector<1x256x3xf32>
    %1 = vector.shape_cast %0 : vector<1x256x3xf32> to vector<256x3xf32>
    %c0_2 = arith.constant 0 : index
    %c0_3 = arith.constant 0 : index
    %c0_4 = arith.constant 0 : index
    %2 = vector.load %arg3[%c0_2, %c0_3, %c0_4] : memref<1x3x64xf32, #tpu.memory_space<vmem>>, vector<1x3x64xf32>
    %3 = vector.shape_cast %2 : vector<1x3x64xf32> to vector<3x64xf32>
    %cst = arith.constant dense<0.000000e+00> : vector<256x64xf32>
    %4 = tpu.matmul %1, %3, %cst {dimension_numbers = #tpu.dot_dimension_numbers<[1], [0], [0], [1], [0, 0, 1, 1], [], []>} : vector<256x3xf32>, vector<3x64xf32>, vector<256x64xf32> -> vector<256x64xf32>
    %c0_5 = arith.constant 0 : index
    %c0_6 = arith.constant 0 : index
    %5 = vector.load %arg4[%c0_5, %c0_6] : memref<1x64xf32, #tpu.memory_space<vmem>>, vector<1x64xf32>
    %6 = vector.broadcast %5 : vector<1x64xf32> to vector<256x64xf32>
    %7 = arith.addf %4, %6 : vector<256x64xf32>
    %cst_7 = arith.constant 0.000000e+00 : f32
    %8 = vector.broadcast %cst_7 : f32 to vector<256x64xf32>
    %9 = arith.maximumf %7, %8 : vector<256x64xf32>
    %c0_8 = arith.constant 0 : index
    %c0_9 = arith.constant 0 : index
    %10 = vector.load %arg5[%c0_8, %c0_9] : memref<64x128xf32, #tpu.memory_space<vmem>>, vector<64x128xf32>
    %cst_10 = arith.constant dense<0.000000e+00> : vector<256x128xf32>
    %11 = tpu.matmul %9, %10, %cst_10 {dimension_numbers = #tpu.dot_dimension_numbers<[1], [0], [0], [1], [0, 0, 1, 1], [], []>} : vector<256x64xf32>, vector<64x128xf32>, vector<256x128xf32> -> vector<256x128xf32>
    %c0_11 = arith.constant 0 : index
    %c0_12 = arith.constant 0 : index
    %12 = vector.load %arg6[%c0_11, %c0_12] : memref<1x128xf32, #tpu.memory_space<vmem>>, vector<1x128xf32>
    %13 = vector.broadcast %12 : vector<1x128xf32> to vector<256x128xf32>
    %14 = arith.addf %11, %13 : vector<256x128xf32>
    %cst_13 = arith.constant 0.000000e+00 : f32
    %15 = vector.broadcast %cst_13 : f32 to vector<256x128xf32>
    %16 = arith.maximumf %14, %15 : vector<256x128xf32>
    %c0_14 = arith.constant 0 : index
    %c0_15 = arith.constant 0 : index
    %17 = vector.load %arg7[%c0_14, %c0_15] : memref<128x1024xf32, #tpu.memory_space<vmem>>, vector<128x1024xf32>
    %cst_16 = arith.constant dense<0.000000e+00> : vector<256x1024xf32>
    %18 = tpu.matmul %16, %17, %cst_16 {dimension_numbers = #tpu.dot_dimension_numbers<[1], [0], [0], [1], [0, 0, 1, 1], [], []>} : vector<256x128xf32>, vector<128x1024xf32>, vector<256x1024xf32> -> vector<256x1024xf32>
    %c0_17 = arith.constant 0 : index
    %c0_18 = arith.constant 0 : index
    %19 = vector.load %arg8[%c0_17, %c0_18] : memref<1x1024xf32, #tpu.memory_space<vmem>>, vector<1x1024xf32>
    %20 = vector.broadcast %19 : vector<1x1024xf32> to vector<256x1024xf32>
    %21 = arith.addf %18, %20 : vector<256x1024xf32>
    %cst_19 = arith.constant dense<0xFF800000> : vector<1024xf32>
    %22 = vector.multi_reduction <maximumf>, %21, %cst_19 [0] : vector<256x1024xf32> to vector<1024xf32>
    %23 = vector.shape_cast %22 : vector<1024xf32> to vector<1x1024xf32>
    %c0_i32 = arith.constant 0 : i32
    %24 = arith.cmpi eq, %arg1, %c0_i32 : i32
    %25 = arith.extui %24 : i1 to i32
    %c0_i32_20 = arith.constant 0 : i32
    %26 = arith.cmpi ne, %25, %c0_i32_20 : i32
    scf.if %26 {
      %c0_23 = arith.constant 0 : index
      %c0_24 = arith.constant 0 : index
      %c0_25 = arith.constant 0 : index
      %30 = vector.load %arg9[%c0_23, %c0_24, %c0_25] : memref<1x1x1024xf32, #tpu.memory_space<vmem>>, vector<1x1x1024xf32>
      %31 = vector.shape_cast %30 : vector<1x1x1024xf32> to vector<1x1024xf32>
      %32 = vector.shape_cast %23 : vector<1x1024xf32> to vector<1x1x1024xf32>
      tpu.vector_store %arg9[%c0_23, %c0_24, %c0_25], %32 {strides = array<i32>} : memref<1x1x1024xf32, #tpu.memory_space<vmem>>, vector<1x1x1024xf32>,
    } else {
    }
    %c0_i32_21 = arith.constant 0 : i32
    %27 = arith.cmpi sgt, %arg1, %c0_i32_21 : i32
    %28 = arith.extui %27 : i1 to i32
    %c0_i32_22 = arith.constant 0 : i32
    %29 = arith.cmpi ne, %28, %c0_i32_22 : i32
    scf.if %29 {
      %c0_23 = arith.constant 0 : index
      %c0_24 = arith.constant 0 : index
      %c0_25 = arith.constant 0 : index
      %30 = vector.load %arg9[%c0_23, %c0_24, %c0_25] : memref<1x1x1024xf32, #tpu.memory_space<vmem>>, vector<1x1x1024xf32>
      %31 = vector.shape_cast %30 : vector<1x1x1024xf32> to vector<1x1024xf32>
      %32 = arith.maximumf %31, %23 : vector<1x1024xf32>
      %c0_26 = arith.constant 0 : index
      %c0_27 = arith.constant 0 : index
      %c0_28 = arith.constant 0 : index
      %33 = vector.load %arg9[%c0_26, %c0_27, %c0_28] : memref<1x1x1024xf32, #tpu.memory_space<vmem>>, vector<1x1x1024xf32>
      %34 = vector.shape_cast %33 : vector<1x1x1024xf32> to vector<1x1024xf32>
      %35 = vector.shape_cast %32 : vector<1x1024xf32> to vector<1x1x1024xf32>
      tpu.vector_store %arg9[%c0_26, %c0_27, %c0_28], %35 {strides = array<i32>} : memref<1x1x1024xf32, #tpu.memory_space<vmem>>, vector<1x1x1024xf32>,
    } else {
    }
    return
  }
  func.func @transform_0(%arg0: i32, %arg1: i32) -> (i32, i32, i32) {
    %c0_i32 = arith.constant 0 : i32
    %c0_i32_0 = arith.constant 0 : i32
    return %arg0, %arg1, %c0_i32 : i32, i32, i32
  }
  func.func @transform_1(%arg0: i32, %arg1: i32) -> (i32, i32, i32) {
    %c0_i32 = arith.constant 0 : i32
    %c0_i32_0 = arith.constant 0 : i32
    %c0_i32_1 = arith.constant 0 : i32
    return %arg0, %c0_i32, %c0_i32_0 : i32, i32, i32
  }
  func.func @transform_2(%arg0: i32, %arg1: i32) -> (i32, i32) {
    %c0_i32 = arith.constant 0 : i32
    %c0_i32_0 = arith.constant 0 : i32
    %c0_i32_1 = arith.constant 0 : i32
    return %c0_i32, %c0_i32_0 : i32, i32
  }
  func.func @transform_3(%arg0: i32, %arg1: i32) -> (i32, i32) {
    %c0_i32 = arith.constant 0 : i32
    %c0_i32_0 = arith.constant 0 : i32
    %c0_i32_1 = arith.constant 0 : i32
    return %c0_i32, %c0_i32_0 : i32, i32
  }
  func.func @transform_4(%arg0: i32, %arg1: i32) -> (i32, i32) {
    %c0_i32 = arith.constant 0 : i32
    %c0_i32_0 = arith.constant 0 : i32
    %c0_i32_1 = arith.constant 0 : i32
    return %c0_i32, %c0_i32_0 : i32, i32
  }
  func.func @transform_5(%arg0: i32, %arg1: i32) -> (i32, i32) {
    %c0_i32 = arith.constant 0 : i32
    %c0_i32_0 = arith.constant 0 : i32
    %c0_i32_1 = arith.constant 0 : i32
    return %c0_i32, %c0_i32_0 : i32, i32
  }
  func.func @transform_6(%arg0: i32, %arg1: i32) -> (i32, i32) {
    %c0_i32 = arith.constant 0 : i32
    %c0_i32_0 = arith.constant 0 : i32
    %c0_i32_1 = arith.constant 0 : i32
    return %c0_i32, %c0_i32_0 : i32, i32
  }
  func.func @transform_7(%arg0: i32, %arg1: i32) -> (i32, i32, i32) {
    %c0_i32 = arith.constant 0 : i32
    %c0_i32_0 = arith.constant 0 : i32
    %c0_i32_1 = arith.constant 0 : i32
    return %arg0, %c0_i32, %c0_i32_0 : i32, i32, i32
  }
}

module attributes {stable_mosaic.version = 11 : i64} {
  func.func @_mlp_head_kernel(%arg0: i32, %arg1: memref<2x1024xf32, #tpu.memory_space<vmem>>, %arg2: memref<1024x512xf32, #tpu.memory_space<vmem>>, %arg3: memref<1x512xf32, #tpu.memory_space<vmem>>, %arg4: memref<512x256xf32, #tpu.memory_space<vmem>>, %arg5: memref<1x256xf32, #tpu.memory_space<vmem>>, %arg6: memref<256x2xf32, #tpu.memory_space<vmem>>, %arg7: memref<1x2xf32, #tpu.memory_space<vmem>>, %arg8: memref<2x2xf32, #tpu.memory_space<vmem>>) attributes {dimension_semantics = [#tpu.dimension_semantics<arbitrary>], iteration_bounds = array<i64: 1>, scalar_prefetch = 0 : i64, scratch_operands = 0 : i64, tpu.core_type = #tpu.core_type<tc>, window_params = [{pipeline_mode = #tpu.pipeline_mode<synchronous>, transform_indices = @transform_0, window_bounds = array<i64: 2, 1024>}, {pipeline_mode = #tpu.pipeline_mode<synchronous>, transform_indices = @transform_1, window_bounds = array<i64: 1024, 512>}, {pipeline_mode = #tpu.pipeline_mode<synchronous>, transform_indices = @transform_2, window_bounds = array<i64: 1, 512>}, {pipeline_mode = #tpu.pipeline_mode<synchronous>, transform_indices = @transform_3, window_bounds = array<i64: 512, 256>}, {pipeline_mode = #tpu.pipeline_mode<synchronous>, transform_indices = @transform_4, window_bounds = array<i64: 1, 256>}, {pipeline_mode = #tpu.pipeline_mode<synchronous>, transform_indices = @transform_5, window_bounds = array<i64: 256, 2>}, {pipeline_mode = #tpu.pipeline_mode<synchronous>, transform_indices = @transform_6, window_bounds = array<i64: 1, 2>}, {pipeline_mode = #tpu.pipeline_mode<synchronous>, transform_indices = @transform_7, window_bounds = array<i64: 2, 2>}]} {
    %c0 = arith.constant 0 : index
    %c0_0 = arith.constant 0 : index
    %0 = vector.load %arg1[%c0, %c0_0] : memref<2x1024xf32, #tpu.memory_space<vmem>>, vector<2x1024xf32>
    %c0_1 = arith.constant 0 : index
    %c0_2 = arith.constant 0 : index
    %1 = vector.load %arg2[%c0_1, %c0_2] : memref<1024x512xf32, #tpu.memory_space<vmem>>, vector<1024x512xf32>
    %cst = arith.constant dense<0.000000e+00> : vector<2x512xf32>
    %2 = tpu.matmul %0, %1, %cst {dimension_numbers = #tpu.dot_dimension_numbers<[1], [0], [0], [1], [0, 0, 1, 1], [], []>} : vector<2x1024xf32>, vector<1024x512xf32>, vector<2x512xf32> -> vector<2x512xf32>
    %c0_3 = arith.constant 0 : index
    %c0_4 = arith.constant 0 : index
    %3 = vector.load %arg3[%c0_3, %c0_4] : memref<1x512xf32, #tpu.memory_space<vmem>>, vector<1x512xf32>
    %4 = vector.broadcast %3 : vector<1x512xf32> to vector<2x512xf32>
    %5 = arith.addf %2, %4 : vector<2x512xf32>
    %cst_5 = arith.constant 0.000000e+00 : f32
    %6 = vector.broadcast %cst_5 : f32 to vector<2x512xf32>
    %7 = arith.maximumf %5, %6 : vector<2x512xf32>
    %c0_6 = arith.constant 0 : index
    %c0_7 = arith.constant 0 : index
    %8 = vector.load %arg4[%c0_6, %c0_7] : memref<512x256xf32, #tpu.memory_space<vmem>>, vector<512x256xf32>
    %cst_8 = arith.constant dense<0.000000e+00> : vector<2x256xf32>
    %9 = tpu.matmul %7, %8, %cst_8 {dimension_numbers = #tpu.dot_dimension_numbers<[1], [0], [0], [1], [0, 0, 1, 1], [], []>} : vector<2x512xf32>, vector<512x256xf32>, vector<2x256xf32> -> vector<2x256xf32>
    %c0_9 = arith.constant 0 : index
    %c0_10 = arith.constant 0 : index
    %10 = vector.load %arg5[%c0_9, %c0_10] : memref<1x256xf32, #tpu.memory_space<vmem>>, vector<1x256xf32>
    %11 = vector.broadcast %10 : vector<1x256xf32> to vector<2x256xf32>
    %12 = arith.addf %9, %11 : vector<2x256xf32>
    %cst_11 = arith.constant 0.000000e+00 : f32
    %13 = vector.broadcast %cst_11 : f32 to vector<2x256xf32>
    %14 = arith.maximumf %12, %13 : vector<2x256xf32>
    %c0_12 = arith.constant 0 : index
    %c0_13 = arith.constant 0 : index
    %15 = vector.load %arg6[%c0_12, %c0_13] : memref<256x2xf32, #tpu.memory_space<vmem>>, vector<256x2xf32>
    %cst_14 = arith.constant dense<0.000000e+00> : vector<2x2xf32>
    %16 = tpu.matmul %14, %15, %cst_14 {dimension_numbers = #tpu.dot_dimension_numbers<[1], [0], [0], [1], [0, 0, 1, 1], [], []>} : vector<2x256xf32>, vector<256x2xf32>, vector<2x2xf32> -> vector<2x2xf32>
    %c0_15 = arith.constant 0 : index
    %c0_16 = arith.constant 0 : index
    %17 = vector.load %arg7[%c0_15, %c0_16] : memref<1x2xf32, #tpu.memory_space<vmem>>, vector<1x2xf32>
    %18 = vector.broadcast %17 : vector<1x2xf32> to vector<2x2xf32>
    %19 = arith.addf %16, %18 : vector<2x2xf32>
    %cst_17 = arith.constant dense<0xFF800000> : vector<2xf32>
    %20 = vector.multi_reduction <maximumf>, %19, %cst_17 [0] : vector<2x2xf32> to vector<2xf32>
    %21 = vector.shape_cast %20 : vector<2xf32> to vector<1x2xf32>
    %22 = vector.broadcast %21 : vector<1x2xf32> to vector<2x2xf32>
    %23 = arith.subf %19, %22 : vector<2x2xf32>
    %24 = math.exp %23 : vector<2x2xf32>
    %cst_18 = arith.constant dense<0.000000e+00> : vector<2xf32>
    %25 = vector.multi_reduction <add>, %24, %cst_18 [0] : vector<2x2xf32> to vector<2xf32>
    %26 = vector.shape_cast %25 : vector<2xf32> to vector<1x2xf32>
    %27 = math.log %26 : vector<1x2xf32>
    %28 = arith.addf %27, %21 : vector<1x2xf32>
    %29 = vector.broadcast %28 : vector<1x2xf32> to vector<2x2xf32>
    %30 = arith.subf %19, %29 : vector<2x2xf32>
    %c0_19 = arith.constant 0 : index
    %c0_20 = arith.constant 0 : index
    %31 = vector.load %arg8[%c0_19, %c0_20] : memref<2x2xf32, #tpu.memory_space<vmem>>, vector<2x2xf32>
    tpu.vector_store %arg8[%c0_19, %c0_20], %30 {strides = array<i32>} : memref<2x2xf32, #tpu.memory_space<vmem>>, vector<2x2xf32>,
    return
  }
  func.func @transform_0(%arg0: i32) -> (i32, i32) {
    %c0_i32 = arith.constant 0 : i32
    %c0_i32_0 = arith.constant 0 : i32
    %c0_i32_1 = arith.constant 0 : i32
    return %c0_i32, %c0_i32_0 : i32, i32
  }
  func.func @transform_1(%arg0: i32) -> (i32, i32) {
    %c0_i32 = arith.constant 0 : i32
    %c0_i32_0 = arith.constant 0 : i32
    %c0_i32_1 = arith.constant 0 : i32
    return %c0_i32, %c0_i32_0 : i32, i32
  }
  func.func @transform_2(%arg0: i32) -> (i32, i32) {
    %c0_i32 = arith.constant 0 : i32
    %c0_i32_0 = arith.constant 0 : i32
    %c0_i32_1 = arith.constant 0 : i32
    return %c0_i32, %c0_i32_0 : i32, i32
  }
  func.func @transform_3(%arg0: i32) -> (i32, i32) {
    %c0_i32 = arith.constant 0 : i32
    %c0_i32_0 = arith.constant 0 : i32
    %c0_i32_1 = arith.constant 0 : i32
    return %c0_i32, %c0_i32_0 : i32, i32
  }
  func.func @transform_4(%arg0: i32) -> (i32, i32) {
    %c0_i32 = arith.constant 0 : i32
    %c0_i32_0 = arith.constant 0 : i32
    %c0_i32_1 = arith.constant 0 : i32
    return %c0_i32, %c0_i32_0 : i32, i32
  }
  func.func @transform_5(%arg0: i32) -> (i32, i32) {
    %c0_i32 = arith.constant 0 : i32
    %c0_i32_0 = arith.constant 0 : i32
    %c0_i32_1 = arith.constant 0 : i32
    return %c0_i32, %c0_i32_0 : i32, i32
  }
  func.func @transform_6(%arg0: i32) -> (i32, i32) {
    %c0_i32 = arith.constant 0 : i32
    %c0_i32_0 = arith.constant 0 : i32
    %c0_i32_1 = arith.constant 0 : i32
    return %c0_i32, %c0_i32_0 : i32, i32
  }
  func.func @transform_7(%arg0: i32) -> (i32, i32) {
    %c0_i32 = arith.constant 0 : i32
    %c0_i32_0 = arith.constant 0 : i32
    %c0_i32_1 = arith.constant 0 : i32
    return %c0_i32, %c0_i32_0 : i32, i32
  }
}

</mosaic_0001>

<llo_original>
// kernel: pointnet_cls_forward.4
$region0: #{pointnet_cls_forward.4}
  #allocation0 [shape = 'u32[]', space=smem, size = 0x4, offset = 0x4, fixed_abs, tag = 'smem constant byte address 0x4 - core index']
  #allocation1 [shape = 'u32[144,128]{1,0:T(1,128)}', space=vmem, size = 0x12000, scoped, tag = 'internal scratch']
  %s0 = inlined_call_operand.vmem [shape: f32[2,256,3], index: 0, kind: input, shape index: {}]
  %s1 = inlined_call_operand.vmem [shape: f32[2,3,64], index: 1, kind: input, shape index: {}]
  %s2 = inlined_call_operand.vmem [shape: f32[1,64], index: 2, kind: input, shape index: {}]
  %s3 = inlined_call_operand.vmem [shape: f32[64,128], index: 3, kind: input, shape index: {}]
  %s4 = inlined_call_operand.vmem [shape: f32[1,128], index: 4, kind: input, shape index: {}]
  %s5 = inlined_call_operand.vmem [shape: f32[128,1024], index: 5, kind: input, shape index: {}]
  %s6 = inlined_call_operand.vmem [shape: f32[1,1024], index: 6, kind: input, shape index: {}]
  %s7 = inlined_call_operand.vmem [shape: f32[2,1,1024], index: 7, kind: output, shape index: {}]
  %s8 = sld [smem:[#allocation0]]
  $region69: #{pointnet_cls_forward.4} parent=0
    _
  %s10 = ssub.s32 1, %s8
  %s11 = scalar_select 0, %s10, %s8
  loop: start=0, step=1, limit=4
  $region2: #{pointnet_cls_forward.4} parent=0 // loop_pre_header
    _
  $region3: #{pointnet_cls_forward.4} parent=0 // loop_header
    %s13 = sphi 0, %s17
    %p14 = scmp.ge.s32.totalorder %s13, 4
    %s20 = sphi 0, %s32
    %s21 = sphi 0, %s28
    %s22 = sphi 0, %s20
    %s23 = sphi 0, %s21
    %s24 = sphi 0, %s22
    %s25 = sphi 0, %s23
    %s37 = sphi 0, %s39
    %s40 = sphi 0, %s37
    %s41 = sphi 0, %s40
    %s57 = sphi 0, %s41
    %s63 = sphi 0, %s65
    %s66 = sphi 0, %s63
    %s67 = sphi 0, %s66
    %s83 = sphi 0, %s67
    %s87 = sphi 0, %s87
    %s89 = sphi 0, %s87
    %s90 = sphi 0, %s89
    %s104 = sphi 0, %s90
    %s108 = sphi 0, %s108
    %s110 = sphi 0, %s108
    %s111 = sphi 0, %s110
    %s125 = sphi 0, %s111
    %s129 = sphi 0, %s129
    %s131 = sphi 0, %s129
    %s132 = sphi 0, %s131
    %s146 = sphi 0, %s132
    %s150 = sphi 0, %s150
    %s152 = sphi 0, %s150
    %s153 = sphi 0, %s152
    %s167 = sphi 0, %s153
    %s171 = sphi 0, %s171
    %s173 = sphi 0, %s171
    %s174 = sphi 0, %s173
    %s188 = sphi 0, %s174
    %s194 = sphi 0, %s196
    %s197 = sphi 0, %s194
    %s198 = sphi 0, %s197
    %s214 = sphi 0, %s198
  $region4: #{pointnet_cls_forward.4} parent=0 // loop_header_branch
    %16 = sbr.rel (%p14) target = $region8
  $region5: #{pointnet_cls_forward.4} parent=0 // loop_body
    %s18 = ssub.s32 %s13, 1
    %s19 = ssub.s32 %s13, 2
    %s26 = sadd.s32 1, %s21
    %p27 = scmp.ge.s32.totalorder %s26, 1
    %s28 = scalar_select %p27, 0, %s26
    %s29 = sadd.s32 1, %s20
    %s30 = scalar_select %p27, %s29, %s20
    %p31 = scmp.ge.s32.totalorder %s30, 2
    %s32 = scalar_select %p31, 0, %s30
    %s33 = ssub.s32 %s20, %s32
    %s34 = ssub.s32 %s21, %s28
    %s35 = sor.u32 %s33, %s34
    %p36 = scmp.eq.s32.totalorder %s35, 0
    %s38 = sadd.s32 %s37, 1
    %s39 = scalar_select %p36, %s37, %s38
    %p42 = pneg %p36
    %p43 = scmp.eq.s32.totalorder %s13, 1
    %p44 = por %p42, %p43
    %p45 = scmp.ne.s32.totalorder %s37, %s40
    %p46 = scmp.eq.s32.totalorder %s13, 0
    %p47 = por %p45, %p46
    %p48 = scmp.ne.s32.totalorder %s37, %s40
    %p49 = scmp.eq.s32.totalorder %s18, 1
    %p50 = por %p48, %p49
    %p51 = scmp.ne.s32.totalorder %s40, %s41
    %p52 = scmp.eq.s32.totalorder %s18, 0
    %p53 = por %p51, %p52
    %p54 = scmp.ne.s32.totalorder %s40, %s41
    %p55 = scmp.eq.s32.totalorder %s19, 1
    %p56 = por %p54, %p55
    %p58 = scmp.ne.s32.totalorder %s41, %s57
    %p59 = scmp.eq.s32.totalorder %s19, 0
    %p60 = por %p58, %p59
    %s61 = ssub.s32 %s20, %s32
    %p62 = scmp.eq.s32.totalorder %s61, 0
    %s64 = sadd.s32 %s63, 1
    %s65 = scalar_select %p62, %s63, %s64
    %p68 = pneg %p62
    %p69 = scmp.eq.s32.totalorder %s13, 1
    %p70 = por %p68, %p69
    %p71 = scmp.ne.s32.totalorder %s63, %s66
    %p72 = scmp.eq.s32.totalorder %s13, 0
    %p73 = por %p71, %p72
    %p74 = scmp.ne.s32.totalorder %s63, %s66
    %p75 = scmp.eq.s32.totalorder %s18, 1
    %p76 = por %p74, %p75
    %p77 = scmp.ne.s32.totalorder %s66, %s67
    %p78 = scmp.eq.s32.totalorder %s18, 0
    %p79 = por %p77, %p78
    %p80 = scmp.ne.s32.totalorder %s66, %s67
    %p81 = scmp.eq.s32.totalorder %s19, 1
    %p82 = por %p80, %p81
    %p84 = scmp.ne.s32.totalorder %s67, %s83
    %p85 = scmp.eq.s32.totalorder %s19, 0
    %p86 = por %p84, %p85
    %s88 = sadd.s32 %s87, 1
    %p91 = scmp.eq.s32.totalorder %s13, 1
    %p92 = scmp.ne.s32.totalorder %s87, %s89
    %p93 = scmp.eq.s32.totalorder %s13, 0
    %p94 = por %p92, %p93
    %p95 = scmp.ne.s32.totalorder %s87, %s89
    %p96 = scmp.eq.s32.totalorder %s18, 1
    %p97 = por %p95, %p96
    %p98 = scmp.ne.s32.totalorder %s89, %s90
    %p99 = scmp.eq.s32.totalorder %s18, 0
    %p100 = por %p98, %p99
    %p101 = scmp.ne.s32.totalorder %s89, %s90
    %p102 = scmp.eq.s32.totalorder %s19, 1
    %p103 = por %p101, %p102
    %p105 = scmp.ne.s32.totalorder %s90, %s104
    %p106 = scmp.eq.s32.totalorder %s19, 0
    %p107 = por %p105, %p106
    %s109 = sadd.s32 %s108, 1
    %p112 = scmp.eq.s32.totalorder %s13, 1
    %p113 = scmp.ne.s32.totalorder %s108, %s110
    %p114 = scmp.eq.s32.totalorder %s13, 0
    %p115 = por %p113, %p114
    %p116 = scmp.ne.s32.totalorder %s108, %s110
    %p117 = scmp.eq.s32.totalorder %s18, 1
    %p118 = por %p116, %p117
    %p119 = scmp.ne.s32.totalorder %s110, %s111
    %p120 = scmp.eq.s32.totalorder %s18, 0
    %p121 = por %p119, %p120
    %p122 = scmp.ne.s32.totalorder %s110, %s111
    %p123 = scmp.eq.s32.totalorder %s19, 1
    %p124 = por %p122, %p123
    %p126 = scmp.ne.s32.totalorder %s111, %s125
    %p127 = scmp.eq.s32.totalorder %s19, 0
    %p128 = por %p126, %p127
    %s130 = sadd.s32 %s129, 1
    %p133 = scmp.eq.s32.totalorder %s13, 1
    %p134 = scmp.ne.s32.totalorder %s129, %s131
    %p135 = scmp.eq.s32.totalorder %s13, 0
    %p136 = por %p134, %p135
    %p137 = scmp.ne.s32.totalorder %s129, %s131
    %p138 = scmp.eq.s32.totalorder %s18, 1
    %p139 = por %p137, %p138
    %p140 = scmp.ne.s32.totalorder %s131, %s132
    %p141 = scmp.eq.s32.totalorder %s18, 0
    %p142 = por %p140, %p141
    %p143 = scmp.ne.s32.totalorder %s131, %s132
    %p144 = scmp.eq.s32.totalorder %s19, 1
    %p145 = por %p143, %p144
    %p147 = scmp.ne.s32.totalorder %s132, %s146
    %p148 = scmp.eq.s32.totalorder %s19, 0
    %p149 = por %p147, %p148
    %s151 = sadd.s32 %s150, 1
    %p154 = scmp.eq.s32.totalorder %s13, 1
    %p155 = scmp.ne.s32.totalorder %s150, %s152
    %p156 = scmp.eq.s32.totalorder %s13, 0
    %p157 = por %p155, %p156
    %p158 = scmp.ne.s32.totalorder %s150, %s152
    %p159 = scmp.eq.s32.totalorder %s18, 1
    %p160 = por %p158, %p159
    %p161 = scmp.ne.s32.totalorder %s152, %s153
    %p162 = scmp.eq.s32.totalorder %s18, 0
    %p163 = por %p161, %p162
    %p164 = scmp.ne.s32.totalorder %s152, %s153
    %p165 = scmp.eq.s32.totalorder %s19, 1
    %p166 = por %p164, %p165
    %p168 = scmp.ne.s32.totalorder %s153, %s167
    %p169 = scmp.eq.s32.totalorder %s19, 0
    %p170 = por %p168, %p169
    %s172 = sadd.s32 %s171, 1
    %p175 = scmp.eq.s32.totalorder %s13, 1
    %p176 = scmp.ne.s32.totalorder %s171, %s173
    %p177 = scmp.eq.s32.totalorder %s13, 0
    %p178 = por %p176, %p177
    %p179 = scmp.ne.s32.totalorder %s171, %s173
    %p180 = scmp.eq.s32.totalorder %s18, 1
    %p181 = por %p179, %p180
    %p182 = scmp.ne.s32.totalorder %s173, %s174
    %p183 = scmp.eq.s32.totalorder %s18, 0
    %p184 = por %p182, %p183
    %p185 = scmp.ne.s32.totalorder %s173, %s174
    %p186 = scmp.eq.s32.totalorder %s19, 1
    %p187 = por %p185, %p186
    %p189 = scmp.ne.s32.totalorder %s174, %s188
    %p190 = scmp.eq.s32.totalorder %s19, 0
    %p191 = por %p189, %p190
    %s192 = ssub.s32 %s20, %s32
    %p193 = scmp.eq.s32.totalorder %s192, 0
    %s195 = sadd.s32 %s194, 1
    %s196 = scalar_select %p193, %s194, %s195
    %p199 = pneg %p193
    %p200 = scmp.eq.s32.totalorder %s13, 1
    %p201 = por %p199, %p200
    %p202 = scmp.ne.s32.totalorder %s194, %s197
    %p203 = scmp.eq.s32.totalorder %s13, 0
    %p204 = por %p202, %p203
    %p205 = scmp.ne.s32.totalorder %s194, %s197
    %p206 = scmp.eq.s32.totalorder %s18, 1
    %p207 = por %p205, %p206
    %p208 = scmp.ne.s32.totalorder %s197, %s198
    %p209 = scmp.eq.s32.totalorder %s18, 0
    %p210 = por %p208, %p209
    %p211 = scmp.ne.s32.totalorder %s197, %s198
    %p212 = scmp.eq.s32.totalorder %s19, 1
    %p213 = por %p211, %p212
    %p215 = scmp.ne.s32.totalorder %s198, %s214
    %p216 = scmp.eq.s32.totalorder %s19, 0
    %p217 = por %p215, %p216
    %p218 = scmp.le.s32.totalorder 1, %s13
    %p219 = scmp.lt.s32.totalorder %s13, 3
    %p220 = pnand %p218, %p219
    %p221 = pneg %p220
    // Predicated region
    $region9: #{pointnet_cls_forward.4} parent=5 // pred_check
      _
    $region10: #{pointnet_cls_forward.4} parent=5 // pred_check_branch
      %223 = sbr.rel (%p220) target = $region12
    $region11: #{pointnet_cls_forward.4} parent=5 // pred_region
      %s224 = ssub.s32 %s13, 1
      // Predicated region
      $region13: #{pointnet_cls_forward.4} parent=11 // pred_check
        %p225 = pneg %p100
      $region14: #{pointnet_cls_forward.4} parent=11 // pred_check_branch
        %227 = sbr.rel (%p225) target = $region16
      $region15: #{pointnet_cls_forward.4} parent=11 // pred_region
        _
      $region16: #{pointnet_cls_forward.4} parent=11 // pred_fallthru
        _
      // Predicated region
      $region17: #{pointnet_cls_forward.4} parent=11 // pred_check
        %p228 = pneg %p121
      $region18: #{pointnet_cls_forward.4} parent=11 // pred_check_branch
        %230 = sbr.rel (%p228) target = $region20
      $region19: #{pointnet_cls_forward.4} parent=11 // pred_region
        _
      $region20: #{pointnet_cls_forward.4} parent=11 // pred_fallthru
        _
      // Predicated region
      $region21: #{pointnet_cls_forward.4} parent=11 // pred_check
        %p231 = pneg %p142
      $region22: #{pointnet_cls_forward.4} parent=11 // pred_check_branch
        %233 = sbr.rel (%p231) target = $region24
      $region23: #{pointnet_cls_forward.4} parent=11 // pred_region
        _
      $region24: #{pointnet_cls_forward.4} parent=11 // pred_fallthru
        _
      // Predicated region
      $region25: #{pointnet_cls_forward.4} parent=11 // pred_check
        %p234 = pneg %p163
      $region26: #{pointnet_cls_forward.4} parent=11 // pred_check_branch
        %236 = sbr.rel (%p234) target = $region28
      $region27: #{pointnet_cls_forward.4} parent=11 // pred_region
        _
      $region28: #{pointnet_cls_forward.4} parent=11 // pred_fallthru
        _
      // Predicated region
      $region29: #{pointnet_cls_forward.4} parent=11 // pred_check
        %p237 = pneg %p184
      $region30: #{pointnet_cls_forward.4} parent=11 // pred_check_branch
        %239 = sbr.rel (%p237) target = $region32
      $region31: #{pointnet_cls_forward.4} parent=11 // pred_region
        _
      $region32: #{pointnet_cls_forward.4} parent=11 // pred_fallthru
        _
    $region12: #{pointnet_cls_forward.4} parent=5 // pred_fallthru
      _
    %p240 = scmp.lt.s32.totalorder %s13, 2
    // Predicated region
    $region33: #{pointnet_cls_forward.4} parent=5 // pred_check
      %p241 = pneg %p240
    $region34: #{pointnet_cls_forward.4} parent=5 // pred_check_branch
      %243 = sbr.rel (%p241) target = $region36
    $region35: #{pointnet_cls_forward.4} parent=5 // pred_region
      // Predicated region
      $region37: #{pointnet_cls_forward.4} parent=35 // pred_check
        %p244 = pneg %p47
      $region38: #{pointnet_cls_forward.4} parent=35 // pred_check_branch
        %246 = sbr.rel (%p244) target = $region40
      $region39: #{pointnet_cls_forward.4} parent=35 // pred_region
        %s247 = smul.u32 32, %s21
        %p248 = scmp.lt.s32.totalorder %s20, 1
        %s249 = scalar_select %p248, %s20, 1
        %p250 = scmp.lt.s32.totalorder %s247, 31
        %s251 = scalar_select %p250, %s247, 31
        %s252 = smul.addr %s249, 32
        %s253 = sadd.s32 %s251, %s252
        %s254 = smul.addr %s253, 8
        %s255 = scalar_lea.vmem %s0, %s254
        %s256 = smul.u32 32, %s21
      $region40: #{pointnet_cls_forward.4} parent=35 // pred_fallthru
        _
      // Predicated region
      $region41: #{pointnet_cls_forward.4} parent=35 // pred_check
        %p257 = pneg %p73
      $region42: #{pointnet_cls_forward.4} parent=35 // pred_check_branch
        %259 = sbr.rel (%p257) target = $region44
      $region43: #{pointnet_cls_forward.4} parent=35 // pred_region
        %p260 = scmp.lt.s32.totalorder %s20, 1
        %s261 = scalar_select %p260, %s20, 1
        %s262 = smul.addr %s261, 4
        %s263 = scalar_lea.vmem %s1, %s262
      $region44: #{pointnet_cls_forward.4} parent=35 // pred_fallthru
        _
    $region36: #{pointnet_cls_forward.4} parent=5 // pred_fallthru
      _
    %p264 = scmp.le.s32.totalorder 1, %s13
    %p265 = scmp.lt.s32.totalorder %s13, 3
    %p266 = pnand %p264, %p265
    %p267 = pneg %p266
    // Predicated region
    $region45: #{pointnet_cls_forward.4} parent=5 // pred_check
      _
    $region46: #{pointnet_cls_forward.4} parent=5 // pred_check_branch
      %269 = sbr.rel (%p266) target = $region48
    $region47: #{pointnet_cls_forward.4} parent=5 // pred_region
      %s270 = ssub.s32 %s13, 1
      %s271 = smul.u32 32, %s23
      %p272 = scmp.lt.s32.totalorder %s22, 1
      %s273 = scalar_select %p272, %s22, 1
      %p274 = scmp.lt.s32.totalorder %s271, 31
      %s275 = scalar_select %p274, %s271, 31
      %s276 = smul.addr %s273, 32
      %s277 = sadd.s32 %s275, %s276
      %s278 = smul.addr %s277, 8
      %s279 = scalar_lea.vmem %s0, %s278
      %p280 = pneg %p53
      %p281 = pneg %p50
      %p282 = scmp.lt.s32.totalorder %s22, 1
      %s283 = scalar_select %p282, %s22, 1
      %s284 = smul.addr %s283, 4
      %s285 = scalar_lea.vmem %s1, %s284
      %p286 = pneg %p79
      %p287 = pneg %p76
      %p288 = pneg %p100
      %p289 = pneg %p97
      %p290 = pneg %p121
      %p291 = pneg %p118
      %p292 = pneg %p142
      %p293 = pneg %p139
      %p294 = pneg %p163
      %p295 = pneg %p160
      %p296 = pneg %p184
      %p297 = pneg %p181
      %p298 = pneg %p210
      %p299 = pneg %p207
      %p300 = scmp.lt.s32.totalorder %s22, 1
      %s301 = scalar_select %p300, %s22, 1
      %s302 = smul.addr %s301, 8
      %s303 = scalar_lea.vmem %s7, %s302
      %s304 = smul.u32 32, %s23
      %p305 = scmp.lt.s32.totalorder %s22, 1
      %s306 = scalar_select %p305, %s22, 1
      %p307 = scmp.lt.s32.totalorder %s304, 31
      %s308 = scalar_select %p307, %s304, 31
      %s309 = smul.addr %s306, 32
      %s310 = sadd.s32 %s308, %s309
      %s311 = smul.addr %s310, 8
      %s312 = scalar_lea.vmem %s0, %s311
      %s313 = smul.u32 32, %s23
      %p314 = scmp.lt.s32.totalorder %s22, 1
      %s315 = scalar_select %p314, %s22, 1
      %s316 = smul.addr %s315, 4
      %s317 = scalar_lea.vmem %s1, %s316
      %p318 = scmp.lt.s32.totalorder %s22, 1
      %s319 = scalar_select %p318, %s22, 1
      %s320 = smul.addr %s319, 8
      %s321 = scalar_lea.vmem %s7, %s320
      %v322 = vld [vmem:[%s312] sm:$0xff]
      %v323 = vld [vmem:[%s312 + $0x8] sm:$0xff]
      %v324 = vld [vmem:[%s312 + $0x10] sm:$0xff]
      %v325 = vld [vmem:[%s312 + $0x18] sm:$0xff]
      %v326 = vld [vmem:[%s312 + $0x20] sm:$0xff]
      %v327 = vld [vmem:[%s312 + $0x28] sm:$0xff]
      %v328 = vld [vmem:[%s312 + $0x30] sm:$0xff]
      %v329 = vld [vmem:[%s312 + $0x38] sm:$0xff]
      %v330 = vld [vmem:[%s312 + $0x40] sm:$0xff]
      %v331 = vld [vmem:[%s312 + $0x48] sm:$0xff]
      %v332 = vld [vmem:[%s312 + $0x50] sm:$0xff]
      %v333 = vld [vmem:[%s312 + $0x58] sm:$0xff]
      %v334 = vld [vmem:[%s312 + $0x60] sm:$0xff]
      %v335 = vld [vmem:[%s312 + $0x68] sm:$0xff]
      %v336 = vld [vmem:[%s312 + $0x70] sm:$0xff]
      %v337 = vld [vmem:[%s312 + $0x78] sm:$0xff]
      %v338 = vld [vmem:[%s312 + $0x80] sm:$0xff]
      %v339 = vld [vmem:[%s312 + $0x88] sm:$0xff]
      %v340 = vld [vmem:[%s312 + $0x90] sm:$0xff]
      %v341 = vld [vmem:[%s312 + $0x98] sm:$0xff]
      %v342 = vld [vmem:[%s312 + $0xa0] sm:$0xff]
      %v343 = vld [vmem:[%s312 + $0xa8] sm:$0xff]
      %v344 = vld [vmem:[%s312 + $0xb0] sm:$0xff]
      %v345 = vld [vmem:[%s312 + $0xb8] sm:$0xff]
      %v346 = vld [vmem:[%s312 + $0xc0] sm:$0xff]
      %v347 = vld [vmem:[%s312 + $0xc8] sm:$0xff]
      %v348 = vld [vmem:[%s312 + $0xd0] sm:$0xff]
      %v349 = vld [vmem:[%s312 + $0xd8] sm:$0xff]
      %v350 = vld [vmem:[%s312 + $0xe0] sm:$0xff]
      %v351 = vld [vmem:[%s312 + $0xe8] sm:$0xff]
      %v352 = vld [vmem:[%s312 + $0xf0] sm:$0xff]
      %v353 = vld [vmem:[%s312 + $0xf8] sm:$0xff]
      %v354 = vld [vmem:[%s317] sm:$0x7]
      %v355 = vld [vmem:[%s2] sm:$0x1]
      %v357 = vlaneseq
      %v358 = vshrl.u32 %v357, 7
      %v359 = vsub.s32 0, %v358
      %v360 = vrot.slane %v355, %v359
      %vm362 = vcmask 23552
      %v364 = vsel %vm362, %v322, 0
      %v367 = vsel %vm362, %v323, 0
      %v370 = vsel %vm362, %v324, 0
      %v373 = vsel %vm362, %v325, 0
      %v376 = vsel %vm362, %v326, 0
      %v379 = vsel %vm362, %v327, 0
      %v382 = vsel %vm362, %v328, 0
      %v385 = vsel %vm362, %v329, 0
      %v388 = vsel %vm362, %v330, 0
      %v391 = vsel %vm362, %v331, 0
      %v394 = vsel %vm362, %v332, 0
      %v397 = vsel %vm362, %v333, 0
      %v400 = vsel %vm362, %v334, 0
      %v403 = vsel %vm362, %v335, 0
      %v406 = vsel %vm362, %v336, 0
      %v409 = vsel %vm362, %v337, 0
      %v412 = vsel %vm362, %v338, 0
      %v415 = vsel %vm362, %v339, 0
      %v418 = vsel %vm362, %v340, 0
      %v421 = vsel %vm362, %v341, 0
      %v424 = vsel %vm362, %v342, 0
      %v427 = vsel %vm362, %v343, 0
      %v430 = vsel %vm362, %v344, 0
      %v433 = vsel %vm362, %v345, 0
      %v436 = vsel %vm362, %v346, 0
      %v439 = vsel %vm362, %v347, 0
      %v442 = vsel %vm362, %v348, 0
      %v445 = vsel %vm362, %v349, 0
      %v448 = vsel %vm362, %v350, 0
      %v451 = vsel %vm362, %v351, 0
      %v454 = vsel %vm362, %v352, 0
      %v457 = vsel %vm362, %v353, 0
      %vm459 = vcmask 1042432
      %v461 = vsel %vm459, %v354, 0
      %463 = vmatprep.subr.mxu0 0.0
      %464 = vmatpush1.msra.mxu0 0.0
      %465 = vmatprep.subr.mxu0 0.0
      %466 = vmatpush1.msra.mxu0 0.0
      %467 = vmatprep.subr.mxu0 0.0
      %468 = vmatpush1.msra.mxu0 0.0
      %469 = vmatprep.subr.mxu0 0.0
      %470 = vmatpush1.msra.mxu0 0.0
      %471 = vmatprep.subr.mxu0 0.0
      %472 = vmatpush1.msra.mxu0 0.0
      %473 = vmatprep.subr.mxu0 0.0
      %474 = vmatpush1.msra.mxu0 0.0
      %475 = vmatprep.subr.mxu0 0.0
      %476 = vmatpush1.msra.mxu0 0.0
      %477 = vmatprep.subr.mxu0 0.0
      %478 = vmatpush1.msra.mxu0 0.0
      %479 = vmatprep.subr.mxu0 0.0
      %480 = vmatpush1.msra.mxu0 0.0
      %481 = vmatprep.subr.mxu0 0.0
      %482 = vmatpush1.msra.mxu0 0.0
      %483 = vmatprep.subr.mxu0 0.0
      %484 = vmatpush1.msra.mxu0 0.0
      %485 = vmatprep.subr.mxu0 0.0
      %486 = vmatpush1.msra.mxu0 0.0
      %487 = vmatprep.subr.mxu0 0.0
      %488 = vmatpush1.msra.mxu0 0.0
      %489 = vmatprep.subr.mxu0 0.0
      %490 = vmatpush1.msra.mxu0 0.0
      %491 = vmatprep.subr.mxu0 0.0
      %492 = vmatpush1.msra.mxu0 0.0
      %493 = vmatprep.subr.mxu0 0.0
      %494 = vmatpush1.msra.mxu0 %v461
      %495 = vmatprep.subr.mxu0 0.0
      %496 = vmatpush2.msra.mxu0 0.0
      %497 = vmatprep.subr.mxu0 0.0
      %498 = vmatpush2.msra.mxu0 0.0
      %499 = vmatprep.subr.mxu0 0.0
      %500 = vmatpush2.msra.mxu0 0.0
      %501 = vmatprep.subr.mxu0 0.0
      %502 = vmatpush2.msra.mxu0 0.0
      %503 = vmatprep.subr.mxu0 0.0
      %504 = vmatpush2.msra.mxu0 0.0
      %505 = vmatprep.subr.mxu0 0.0
      %506 = vmatpush2.msra.mxu0 0.0
      %507 = vmatprep.subr.mxu0 0.0
      %508 = vmatpush2.msra.mxu0 0.0
      %509 = vmatprep.subr.mxu0 0.0
      %510 = vmatpush2.msra.mxu0 0.0
      %511 = vmatprep.subr.mxu0 0.0
      %512 = vmatpush2.msra.mxu0 0.0
      %513 = vmatprep.subr.mxu0 0.0
      %514 = vmatpush2.msra.mxu0 0.0
      %515 = vmatprep.subr.mxu0 0.0
      %516 = vmatpush2.msra.mxu0 0.0
      %517 = vmatprep.subr.mxu0 0.0
      %518 = vmatpush2.msra.mxu0 0.0
      %519 = vmatprep.subr.mxu0 0.0
      %520 = vmatpush2.msra.mxu0 0.0
      %521 = vmatprep.subr.mxu0 0.0
      %522 = vmatpush2.msra.mxu0 0.0
      %523 = vmatprep.subr.mxu0 0.0
      %524 = vmatpush2.msra.mxu0 0.0
      %525 = vmatprep.subr.mxu0 0.0
      %526 = vmatpush2.msra.mxu0 0.0
      %527 = vmatprep.mubr.f32.mxu0 0.0
      %528 = vmatmul.mubr.f32.gmra.mxu0 %v364
      %v529 = vpop.f32.mrf.mxu0
      %v530 = vadd.f32 %v360, %v529
      %v531 = vpop.f32.mrf.mxu0
      %532 = vmatprep.mubr.f32.mxu0 0.0
      %533 = vmatmul.mubr.f32.gmra.mxu0 %v367
      %v534 = vpop.f32.mrf.mxu0
      %v535 = vadd.f32 %v360, %v534
      %v536 = vpop.f32.mrf.mxu0
      %537 = vmatprep.mubr.f32.mxu0 0.0
      %538 = vmatmul.mubr.f32.gmra.mxu0 %v370
      %v539 = vpop.f32.mrf.mxu0
      %v540 = vadd.f32 %v360, %v539
      %v541 = vpop.f32.mrf.mxu0
      %542 = vmatprep.mubr.f32.mxu0 0.0
      %543 = vmatmul.mubr.f32.gmra.mxu0 %v373
      %v544 = vpop.f32.mrf.mxu0
      %v545 = vadd.f32 %v360, %v544
      %v546 = vpop.f32.mrf.mxu0
      %547 = vmatprep.mubr.f32.mxu0 0.0
      %548 = vmatmul.mubr.f32.gmra.mxu0 %v376
      %v549 = vpop.f32.mrf.mxu0
      %v550 = vadd.f32 %v360, %v549
      %v551 = vpop.f32.mrf.mxu0
      %552 = vmatprep.mubr.f32.mxu0 0.0
      %553 = vmatmul.mubr.f32.gmra.mxu0 %v379
      %v554 = vpop.f32.mrf.mxu0
      %v555 = vadd.f32 %v360, %v554
      %v556 = vpop.f32.mrf.mxu0
      %557 = vmatprep.mubr.f32.mxu0 0.0
      %558 = vmatmul.mubr.f32.gmra.mxu0 %v382
      %v559 = vpop.f32.mrf.mxu0
      %v560 = vadd.f32 %v360, %v559
      %v561 = vpop.f32.mrf.mxu0
      %562 = vmatprep.mubr.f32.mxu0 0.0
      %563 = vmatmul.mubr.f32.gmra.mxu0 %v385
      %v564 = vpop.f32.mrf.mxu0
      %v565 = vadd.f32 %v360, %v564
      %v566 = vpop.f32.mrf.mxu0
      %567 = vmatprep.mubr.f32.mxu0 0.0
      %568 = vmatmul.mubr.f32.gmra.mxu0 %v388
      %v569 = vpop.f32.mrf.mxu0
      %v570 = vadd.f32 %v360, %v569
      %v571 = vpop.f32.mrf.mxu0
      %572 = vmatprep.mubr.f32.mxu0 0.0
      %573 = vmatmul.mubr.f32.gmra.mxu0 %v391
      %v574 = vpop.f32.mrf.mxu0
      %v575 = vadd.f32 %v360, %v574
      %v576 = vpop.f32.mrf.mxu0
      %577 = vmatprep.mubr.f32.mxu0 0.0
      %578 = vmatmul.mubr.f32.gmra.mxu0 %v394
      %v579 = vpop.f32.mrf.mxu0
      %v580 = vadd.f32 %v360, %v579
      %v581 = vpop.f32.mrf.mxu0
      %582 = vmatprep.mubr.f32.mxu0 0.0
      %583 = vmatmul.mubr.f32.gmra.mxu0 %v397
      %v584 = vpop.f32.mrf.mxu0
      %v585 = vadd.f32 %v360, %v584
      %v586 = vpop.f32.mrf.mxu0
      %587 = vmatprep.mubr.f32.mxu0 0.0
      %588 = vmatmul.mubr.f32.gmra.mxu0 %v400
      %v589 = vpop.f32.mrf.mxu0
      %v590 = vadd.f32 %v360, %v589
      %v591 = vpop.f32.mrf.mxu0
      %592 = vmatprep.mubr.f32.mxu0 0.0
      %593 = vmatmul.mubr.f32.gmra.mxu0 %v403
      %v594 = vpop.f32.mrf.mxu0
      %v595 = vadd.f32 %v360, %v594
      %v596 = vpop.f32.mrf.mxu0
      %597 = vmatprep.mubr.f32.mxu0 0.0
      %598 = vmatmul.mubr.f32.gmra.mxu0 %v406
      %v599 = vpop.f32.mrf.mxu0
      %v600 = vadd.f32 %v360, %v599
      %v601 = vpop.f32.mrf.mxu0
      %602 = vmatprep.mubr.f32.mxu0 0.0
      %603 = vmatmul.mubr.f32.gmra.mxu0 %v409
      %v604 = vpop.f32.mrf.mxu0
      %v605 = vadd.f32 %v360, %v604
      %v606 = vpop.f32.mrf.mxu0
      %607 = vmatprep.mubr.f32.mxu0 0.0
      %608 = vmatmul.mubr.f32.gmra.mxu0 %v412
      %v609 = vpop.f32.mrf.mxu0
      %v610 = vadd.f32 %v360, %v609
      %v611 = vpop.f32.mrf.mxu0
      %612 = vmatprep.mubr.f32.mxu0 0.0
      %613 = vmatmul.mubr.f32.gmra.mxu0 %v415
      %v614 = vpop.f32.mrf.mxu0
      %v615 = vadd.f32 %v360, %v614
      %v616 = vpop.f32.mrf.mxu0
      %617 = vmatprep.mubr.f32.mxu0 0.0
      %618 = vmatmul.mubr.f32.gmra.mxu0 %v418
      %v619 = vpop.f32.mrf.mxu0
      %v620 = vadd.f32 %v360, %v619
      %v621 = vpop.f32.mrf.mxu0
      %622 = vmatprep.mubr.f32.mxu0 0.0
      %623 = vmatmul.mubr.f32.gmra.mxu0 %v421
      %v624 = vpop.f32.mrf.mxu0
      %v625 = vadd.f32 %v360, %v624
      %v626 = vpop.f32.mrf.mxu0
      %627 = vmatprep.mubr.f32.mxu0 0.0
      %628 = vmatmul.mubr.f32.gmra.mxu0 %v424
      %v629 = vpop.f32.mrf.mxu0
      %v630 = vadd.f32 %v360, %v629
      %v631 = vpop.f32.mrf.mxu0
      %632 = vmatprep.mubr.f32.mxu0 0.0
      %633 = vmatmul.mubr.f32.gmra.mxu0 %v427
      %v634 = vpop.f32.mrf.mxu0
      %v635 = vadd.f32 %v360, %v634
      %v636 = vpop.f32.mrf.mxu0
      %637 = vmatprep.mubr.f32.mxu0 0.0
      %638 = vmatmul.mubr.f32.gmra.mxu0 %v430
      %v639 = vpop.f32.mrf.mxu0
      %v640 = vadd.f32 %v360, %v639
      %v641 = vpop.f32.mrf.mxu0
      %642 = vmatprep.mubr.f32.mxu0 0.0
      %643 = vmatmul.mubr.f32.gmra.mxu0 %v433
      %v644 = vpop.f32.mrf.mxu0
      %v645 = vadd.f32 %v360, %v644
      %v646 = vpop.f32.mrf.mxu0
      %647 = vmatprep.mubr.f32.mxu0 0.0
      %648 = vmatmul.mubr.f32.gmra.mxu0 %v436
      %v649 = vpop.f32.mrf.mxu0
      %v650 = vadd.f32 %v360, %v649
      %v651 = vpop.f32.mrf.mxu0
      %652 = vmatprep.mubr.f32.mxu0 0.0
      %653 = vmatmul.mubr.f32.gmra.mxu0 %v439
      %v654 = vpop.f32.mrf.mxu0
      %v655 = vadd.f32 %v360, %v654
      %v656 = vpop.f32.mrf.mxu0
      %657 = vmatprep.mubr.f32.mxu0 0.0
      %658 = vmatmul.mubr.f32.gmra.mxu0 %v442
      %v659 = vpop.f32.mrf.mxu0
      %v660 = vadd.f32 %v360, %v659
      %v661 = vpop.f32.mrf.mxu0
      %662 = vmatprep.mubr.f32.mxu0 0.0
      %663 = vmatmul.mubr.f32.gmra.mxu0 %v445
      %v664 = vpop.f32.mrf.mxu0
      %v665 = vadd.f32 %v360, %v664
      %v666 = vpop.f32.mrf.mxu0
      %667 = vmatprep.mubr.f32.mxu0 0.0
      %668 = vmatmul.mubr.f32.gmra.mxu0 %v448
      %v669 = vpop.f32.mrf.mxu0
      %v670 = vadd.f32 %v360, %v669
      %v671 = vpop.f32.mrf.mxu0
      %672 = vmatprep.mubr.f32.mxu0 0.0
      %673 = vmatmul.mubr.f32.gmra.mxu0 %v451
      %v674 = vpop.f32.mrf.mxu0
      %v675 = vadd.f32 %v360, %v674
      %v676 = vpop.f32.mrf.mxu0
      %677 = vmatprep.mubr.f32.mxu0 0.0
      %678 = vmatmul.mubr.f32.gmra.mxu0 %v454
      %v679 = vpop.f32.mrf.mxu0
      %v680 = vadd.f32 %v360, %v679
      %v681 = vpop.f32.mrf.mxu0
      %682 = vmatprep.mubr.f32.mxu0 0.0
      %683 = vmatmul.mubr.f32.gmra.mxu0 %v457
      %v684 = vpop.f32.mrf.mxu0
      %v685 = vadd.f32 %v360, %v684
      %v686 = vpop.f32.mrf.mxu0
      %687 = vdwg.mxu0
      %v688 = vmax.f32 %v530, 0.0
      %v689 = vmax.f32 %v535, 0.0
      %v690 = vmax.f32 %v540, 0.0
      %v691 = vmax.f32 %v545, 0.0
      %v692 = vmax.f32 %v550, 0.0
      %v693 = vmax.f32 %v555, 0.0
      %v694 = vmax.f32 %v560, 0.0
      %v695 = vmax.f32 %v565, 0.0
      %v696 = vmax.f32 %v570, 0.0
      %v697 = vmax.f32 %v575, 0.0
      %v698 = vmax.f32 %v580, 0.0
      %v699 = vmax.f32 %v585, 0.0
      %v700 = vmax.f32 %v590, 0.0
      %v701 = vmax.f32 %v595, 0.0
      %v702 = vmax.f32 %v600, 0.0
      %v703 = vmax.f32 %v605, 0.0
      %v704 = vmax.f32 %v610, 0.0
      %v705 = vmax.f32 %v615, 0.0
      %v706 = vmax.f32 %v620, 0.0
      %v707 = vmax.f32 %v625, 0.0
      %v708 = vmax.f32 %v630, 0.0
      %v709 = vmax.f32 %v635, 0.0
      %v710 = vmax.f32 %v640, 0.0
      %v711 = vmax.f32 %v645, 0.0
      %v712 = vmax.f32 %v650, 0.0
      %v713 = vmax.f32 %v655, 0.0
      %v714 = vmax.f32 %v660, 0.0
      %v715 = vmax.f32 %v665, 0.0
      %v716 = vmax.f32 %v670, 0.0
      %v717 = vmax.f32 %v675, 0.0
      %v718 = vmax.f32 %v680, 0.0
      %v719 = vmax.f32 %v685, 0.0
      %v720 = vld [vmem:[%s3] sm:$0xff]
      %v721 = vld [vmem:[%s3 + $0x8] sm:$0xff]
      %v722 = vld [vmem:[%s3 + $0x10] sm:$0xff]
      %v723 = vld [vmem:[%s3 + $0x18] sm:$0xff]
      %v724 = vld [vmem:[%s3 + $0x20] sm:$0xff]
      %v725 = vld [vmem:[%s3 + $0x28] sm:$0xff]
      %v726 = vld [vmem:[%s3 + $0x30] sm:$0xff]
      %v727 = vld [vmem:[%s3 + $0x38] sm:$0xff]
      %v728 = vld [vmem:[%s4] sm:$0x1]
      %v730 = vlaneseq
      %v731 = vshrl.u32 %v730, 7
      %v732 = vsub.s32 0, %v731
      %v733 = vrot.slane %v728, %v732
      %vm735 = vcmask 523264
      %v737 = vsel %vm735, %v688, 0
      %v740 = vsel %vm735, %v689, 0
      %v743 = vsel %vm735, %v690, 0
      %v746 = vsel %vm735, %v691, 0
      %v749 = vsel %vm735, %v692, 0
      %v752 = vsel %vm735, %v693, 0
      %v755 = vsel %vm735, %v694, 0
      %v758 = vsel %vm735, %v695, 0
      %v761 = vsel %vm735, %v696, 0
      %v764 = vsel %vm735, %v697, 0
      %v767 = vsel %vm735, %v698, 0
      %v770 = vsel %vm735, %v699, 0
      %v773 = vsel %vm735, %v700, 0
      %v776 = vsel %vm735, %v701, 0
      %v779 = vsel %vm735, %v702, 0
      %v782 = vsel %vm735, %v703, 0
      %v785 = vsel %vm735, %v704, 0
      %v788 = vsel %vm735, %v705, 0
      %v791 = vsel %vm735, %v706, 0
      %v794 = vsel %vm735, %v707, 0
      %v797 = vsel %vm735, %v708, 0
      %v800 = vsel %vm735, %v709, 0
      %v803 = vsel %vm735, %v710, 0
      %v806 = vsel %vm735, %v711, 0
      %v809 = vsel %vm735, %v712, 0
      %v812 = vsel %vm735, %v713, 0
      %v815 = vsel %vm735, %v714, 0
      %v818 = vsel %vm735, %v715, 0
      %v821 = vsel %vm735, %v716, 0
      %v824 = vsel %vm735, %v717, 0
      %v827 = vsel %vm735, %v718, 0
      %v830 = vsel %vm735, %v719, 0
      %832 = vmatprep.subr.mxu0 0.0
      %833 = vmatpush1.msra.mxu0 0.0
      %834 = vmatprep.subr.mxu0 0.0
      %835 = vmatpush1.msra.mxu0 0.0
      %836 = vmatprep.subr.mxu0 0.0
      %837 = vmatpush1.msra.mxu0 0.0
      %838 = vmatprep.subr.mxu0 0.0
      %839 = vmatpush1.msra.mxu0 0.0
      %840 = vmatprep.subr.mxu0 0.0
      %841 = vmatpush1.msra.mxu0 0.0
      %842 = vmatprep.subr.mxu0 0.0
      %843 = vmatpush1.msra.mxu0 0.0
      %844 = vmatprep.subr.mxu0 0.0
      %845 = vmatpush1.msra.mxu0 0.0
      %846 = vmatprep.subr.mxu0 0.0
      %847 = vmatpush1.msra.mxu0 0.0
      %848 = vmatprep.subr.mxu0 0.0
      %849 = vmatpush1.msra.mxu0 %v727
      %850 = vmatprep.subr.mxu0 0.0
      %851 = vmatpush1.msra.mxu0 %v726
      %852 = vmatprep.subr.mxu0 0.0
      %853 = vmatpush1.msra.mxu0 %v725
      %854 = vmatprep.subr.mxu0 0.0
      %855 = vmatpush1.msra.mxu0 %v724
      %856 = vmatprep.subr.mxu0 0.0
      %857 = vmatpush1.msra.mxu0 %v723
      %858 = vmatprep.subr.mxu0 0.0
      %859 = vmatpush1.msra.mxu0 %v722
      %860 = vmatprep.subr.mxu0 0.0
      %861 = vmatpush1.msra.mxu0 %v721
      %862 = vmatprep.subr.mxu0 0.0
      %863 = vmatpush1.msra.mxu0 %v720
      %864 = vmatprep.subr.mxu0 0.0
      %865 = vmatpush2.msra.mxu0 0.0
      %866 = vmatprep.subr.mxu0 0.0
      %867 = vmatpush2.msra.mxu0 0.0
      %868 = vmatprep.subr.mxu0 0.0
      %869 = vmatpush2.msra.mxu0 0.0
      %870 = vmatprep.subr.mxu0 0.0
      %871 = vmatpush2.msra.mxu0 0.0
      %872 = vmatprep.subr.mxu0 0.0
      %873 = vmatpush2.msra.mxu0 0.0
      %874 = vmatprep.subr.mxu0 0.0
      %875 = vmatpush2.msra.mxu0 0.0
      %876 = vmatprep.subr.mxu0 0.0
      %877 = vmatpush2.msra.mxu0 0.0
      %878 = vmatprep.subr.mxu0 0.0
      %879 = vmatpush2.msra.mxu0 0.0
      %880 = vmatprep.subr.mxu0 0.0
      %881 = vmatpush2.msra.mxu0 0.0
      %882 = vmatprep.subr.mxu0 0.0
      %883 = vmatpush2.msra.mxu0 0.0
      %884 = vmatprep.subr.mxu0 0.0
      %885 = vmatpush2.msra.mxu0 0.0
      %886 = vmatprep.subr.mxu0 0.0
      %887 = vmatpush2.msra.mxu0 0.0
      %888 = vmatprep.subr.mxu0 0.0
      %889 = vmatpush2.msra.mxu0 0.0
      %890 = vmatprep.subr.mxu0 0.0
      %891 = vmatpush2.msra.mxu0 0.0
      %892 = vmatprep.subr.mxu0 0.0
      %893 = vmatpush2.msra.mxu0 0.0
      %894 = vmatprep.subr.mxu0 0.0
      %895 = vmatpush2.msra.mxu0 0.0
      %896 = vmatprep.mubr.f32.mxu0 0.0
      %897 = vmatmul.mubr.f32.gmra.mxu0 %v737
      %v898 = vpop.f32.mrf.mxu0
      %v899 = vadd.f32 %v733, %v898
      %v900 = vpop.f32.mrf.mxu0
      %901 = vmatprep.mubr.f32.mxu0 0.0
      %902 = vmatmul.mubr.f32.gmra.mxu0 %v740
      %v903 = vpop.f32.mrf.mxu0
      %v904 = vadd.f32 %v733, %v903
      %v905 = vpop.f32.mrf.mxu0
      %906 = vmatprep.mubr.f32.mxu0 0.0
      %907 = vmatmul.mubr.f32.gmra.mxu0 %v743
      %v908 = vpop.f32.mrf.mxu0
      %v909 = vadd.f32 %v733, %v908
      %v910 = vpop.f32.mrf.mxu0
      %911 = vmatprep.mubr.f32.mxu0 0.0
      %912 = vmatmul.mubr.f32.gmra.mxu0 %v746
      %v913 = vpop.f32.mrf.mxu0
      %v914 = vadd.f32 %v733, %v913
      %v915 = vpop.f32.mrf.mxu0
      %916 = vmatprep.mubr.f32.mxu0 0.0
      %917 = vmatmul.mubr.f32.gmra.mxu0 %v749
      %v918 = vpop.f32.mrf.mxu0
      %v919 = vadd.f32 %v733, %v918
      %v920 = vpop.f32.mrf.mxu0
      %921 = vmatprep.mubr.f32.mxu0 0.0
      %922 = vmatmul.mubr.f32.gmra.mxu0 %v752
      %v923 = vpop.f32.mrf.mxu0
      %v924 = vadd.f32 %v733, %v923
      %v925 = vpop.f32.mrf.mxu0
      %926 = vmatprep.mubr.f32.mxu0 0.0
      %927 = vmatmul.mubr.f32.gmra.mxu0 %v755
      %v928 = vpop.f32.mrf.mxu0
      %v929 = vadd.f32 %v733, %v928
      %v930 = vpop.f32.mrf.mxu0
      %931 = vmatprep.mubr.f32.mxu0 0.0
      %932 = vmatmul.mubr.f32.gmra.mxu0 %v758
      %v933 = vpop.f32.mrf.mxu0
      %v934 = vadd.f32 %v733, %v933
      %v935 = vpop.f32.mrf.mxu0
      %936 = vmatprep.mubr.f32.mxu0 0.0
      %937 = vmatmul.mubr.f32.gmra.mxu0 %v761
      %v938 = vpop.f32.mrf.mxu0
      %v939 = vadd.f32 %v733, %v938
      %v940 = vpop.f32.mrf.mxu0
      %941 = vmatprep.mubr.f32.mxu0 0.0
      %942 = vmatmul.mubr.f32.gmra.mxu0 %v764
      %v943 = vpop.f32.mrf.mxu0
      %v944 = vadd.f32 %v733, %v943
      %v945 = vpop.f32.mrf.mxu0
      %946 = vmatprep.mubr.f32.mxu0 0.0
      %947 = vmatmul.mubr.f32.gmra.mxu0 %v767
      %v948 = vpop.f32.mrf.mxu0
      %v949 = vadd.f32 %v733, %v948
      %v950 = vpop.f32.mrf.mxu0
      %951 = vmatprep.mubr.f32.mxu0 0.0
      %952 = vmatmul.mubr.f32.gmra.mxu0 %v770
      %v953 = vpop.f32.mrf.mxu0
      %v954 = vadd.f32 %v733, %v953
      %v955 = vpop.f32.mrf.mxu0
      %956 = vmatprep.mubr.f32.mxu0 0.0
      %957 = vmatmul.mubr.f32.gmra.mxu0 %v773
      %v958 = vpop.f32.mrf.mxu0
      %v959 = vadd.f32 %v733, %v958
      %v960 = vpop.f32.mrf.mxu0
      %961 = vmatprep.mubr.f32.mxu0 0.0
      %962 = vmatmul.mubr.f32.gmra.mxu0 %v776
      %v963 = vpop.f32.mrf.mxu0
      %v964 = vadd.f32 %v733, %v963
      %v965 = vpop.f32.mrf.mxu0
      %966 = vmatprep.mubr.f32.mxu0 0.0
      %967 = vmatmul.mubr.f32.gmra.mxu0 %v779
      %v968 = vpop.f32.mrf.mxu0
      %v969 = vadd.f32 %v733, %v968
      %v970 = vpop.f32.mrf.mxu0
      %971 = vmatprep.mubr.f32.mxu0 0.0
      %972 = vmatmul.mubr.f32.gmra.mxu0 %v782
      %v973 = vpop.f32.mrf.mxu0
      %v974 = vadd.f32 %v733, %v973
      %v975 = vpop.f32.mrf.mxu0
      %976 = vmatprep.mubr.f32.mxu0 0.0
      %977 = vmatmul.mubr.f32.gmra.mxu0 %v785
      %v978 = vpop.f32.mrf.mxu0
      %v979 = vadd.f32 %v733, %v978
      %v980 = vpop.f32.mrf.mxu0
      %981 = vmatprep.mubr.f32.mxu0 0.0
      %982 = vmatmul.mubr.f32.gmra.mxu0 %v788
      %v983 = vpop.f32.mrf.mxu0
      %v984 = vadd.f32 %v733, %v983
      %v985 = vpop.f32.mrf.mxu0
      %986 = vmatprep.mubr.f32.mxu0 0.0
      %987 = vmatmul.mubr.f32.gmra.mxu0 %v791
      %v988 = vpop.f32.mrf.mxu0
      %v989 = vadd.f32 %v733, %v988
      %v990 = vpop.f32.mrf.mxu0
      %991 = vmatprep.mubr.f32.mxu0 0.0
      %992 = vmatmul.mubr.f32.gmra.mxu0 %v794
      %v993 = vpop.f32.mrf.mxu0
      %v994 = vadd.f32 %v733, %v993
      %v995 = vpop.f32.mrf.mxu0
      %996 = vmatprep.mubr.f32.mxu0 0.0
      %997 = vmatmul.mubr.f32.gmra.mxu0 %v797
      %v998 = vpop.f32.mrf.mxu0
      %v999 = vadd.f32 %v733, %v998
      %v1000 = vpop.f32.mrf.mxu0
      %1001 = vmatprep.mubr.f32.mxu0 0.0
      %1002 = vmatmul.mubr.f32.gmra.mxu0 %v800
      %v1003 = vpop.f32.mrf.mxu0
      %v1004 = vadd.f32 %v733, %v1003
      %v1005 = vpop.f32.mrf.mxu0
      %1006 = vmatprep.mubr.f32.mxu0 0.0
      %1007 = vmatmul.mubr.f32.gmra.mxu0 %v803
      %v1008 = vpop.f32.mrf.mxu0
      %v1009 = vadd.f32 %v733, %v1008
      %v1010 = vpop.f32.mrf.mxu0
      %1011 = vmatprep.mubr.f32.mxu0 0.0
      %1012 = vmatmul.mubr.f32.gmra.mxu0 %v806
      %v1013 = vpop.f32.mrf.mxu0
      %v1014 = vadd.f32 %v733, %v1013
      %v1015 = vpop.f32.mrf.mxu0
      %1016 = vmatprep.mubr.f32.mxu0 0.0
      %1017 = vmatmul.mubr.f32.gmra.mxu0 %v809
      %v1018 = vpop.f32.mrf.mxu0
      %v1019 = vadd.f32 %v733, %v1018
      %v1020 = vpop.f32.mrf.mxu0
      %1021 = vmatprep.mubr.f32.mxu0 0.0
      %1022 = vmatmul.mubr.f32.gmra.mxu0 %v812
      %v1023 = vpop.f32.mrf.mxu0
      %v1024 = vadd.f32 %v733, %v1023
      %v1025 = vpop.f32.mrf.mxu0
      %1026 = vmatprep.mubr.f32.mxu0 0.0
      %1027 = vmatmul.mubr.f32.gmra.mxu0 %v815
      %v1028 = vpop.f32.mrf.mxu0
      %v1029 = vadd.f32 %v733, %v1028
      %v1030 = vpop.f32.mrf.mxu0
      %1031 = vmatprep.mubr.f32.mxu0 0.0
      %1032 = vmatmul.mubr.f32.gmra.mxu0 %v818
      %v1033 = vpop.f32.mrf.mxu0
      %v1034 = vadd.f32 %v733, %v1033
      %v1035 = vpop.f32.mrf.mxu0
      %1036 = vmatprep.mubr.f32.mxu0 0.0
      %1037 = vmatmul.mubr.f32.gmra.mxu0 %v821
      %v1038 = vpop.f32.mrf.mxu0
      %v1039 = vadd.f32 %v733, %v1038
      %v1040 = vpop.f32.mrf.mxu0
      %1041 = vmatprep.mubr.f32.mxu0 0.0
      %1042 = vmatmul.mubr.f32.gmra.mxu0 %v824
      %v1043 = vpop.f32.mrf.mxu0
      %v1044 = vadd.f32 %v733, %v1043
      %v1045 = vpop.f32.mrf.mxu0
      %1046 = vmatprep.mubr.f32.mxu0 0.0
      %1047 = vmatmul.mubr.f32.gmra.mxu0 %v827
      %v1048 = vpop.f32.mrf.mxu0
      %v1049 = vadd.f32 %v733, %v1048
      %v1050 = vpop.f32.mrf.mxu0
      %1051 = vmatprep.mubr.f32.mxu0 0.0
      %1052 = vmatmul.mubr.f32.gmra.mxu0 %v830
      %v1053 = vpop.f32.mrf.mxu0
      %v1054 = vadd.f32 %v733, %v1053
      %v1055 = vpop.f32.mrf.mxu0
      %1056 = vdwg.mxu0
      %v1057 = vmax.f32 %v899, 0.0
      %v1058 = vmax.f32 %v904, 0.0
      %v1059 = vmax.f32 %v909, 0.0
      %v1060 = vmax.f32 %v914, 0.0
      %v1061 = vmax.f32 %v919, 0.0
      %v1062 = vmax.f32 %v924, 0.0
      %v1063 = vmax.f32 %v929, 0.0
      %v1064 = vmax.f32 %v934, 0.0
      %v1065 = vmax.f32 %v939, 0.0
      %v1066 = vmax.f32 %v944, 0.0
      %v1067 = vmax.f32 %v949, 0.0
      %v1068 = vmax.f32 %v954, 0.0
      %v1069 = vmax.f32 %v959, 0.0
      %v1070 = vmax.f32 %v964, 0.0
      %v1071 = vmax.f32 %v969, 0.0
      %v1072 = vmax.f32 %v974, 0.0
      %v1073 = vmax.f32 %v979, 0.0
      %v1074 = vmax.f32 %v984, 0.0
      %v1075 = vmax.f32 %v989, 0.0
      %v1076 = vmax.f32 %v994, 0.0
      %v1077 = vmax.f32 %v999, 0.0
      %v1078 = vmax.f32 %v1004, 0.0
      %v1079 = vmax.f32 %v1009, 0.0
      %v1080 = vmax.f32 %v1014, 0.0
      %v1081 = vmax.f32 %v1019, 0.0
      %v1082 = vmax.f32 %v1024, 0.0
      %v1083 = vmax.f32 %v1029, 0.0
      %v1084 = vmax.f32 %v1034, 0.0
      %v1085 = vmax.f32 %v1039, 0.0
      %v1086 = vmax.f32 %v1044, 0.0
      %v1087 = vmax.f32 %v1049, 0.0
      %v1088 = vmax.f32 %v1054, 0.0
      %v1089 = vld [vmem:[%s5] sm:$0xff]
      %v1090 = vld [vmem:[%s5 + $0x8] sm:$0xff]
      %v1091 = vld [vmem:[%s5 + $0x10] sm:$0xff]
      %v1092 = vld [vmem:[%s5 + $0x18] sm:$0xff]
      %v1093 = vld [vmem:[%s5 + $0x20] sm:$0xff]
      %v1094 = vld [vmem:[%s5 + $0x28] sm:$0xff]
      %v1095 = vld [vmem:[%s5 + $0x30] sm:$0xff]
      %v1096 = vld [vmem:[%s5 + $0x38] sm:$0xff]
      %v1097 = vld [vmem:[%s5 + $0x40] sm:$0xff]
      %v1098 = vld [vmem:[%s5 + $0x48] sm:$0xff]
      %v1099 = vld [vmem:[%s5 + $0x50] sm:$0xff]
      %v1100 = vld [vmem:[%s5 + $0x58] sm:$0xff]
      %v1101 = vld [vmem:[%s5 + $0x60] sm:$0xff]
      %v1102 = vld [vmem:[%s5 + $0x68] sm:$0xff]
      %v1103 = vld [vmem:[%s5 + $0x70] sm:$0xff]
      %v1104 = vld [vmem:[%s5 + $0x78] sm:$0xff]
      %v1105 = vld [vmem:[%s5 + $0x80] sm:$0xff]
      %v1106 = vld [vmem:[%s5 + $0x88] sm:$0xff]
      %v1107 = vld [vmem:[%s5 + $0x90] sm:$0xff]
      %v1108 = vld [vmem:[%s5 + $0x98] sm:$0xff]
      %v1109 = vld [vmem:[%s5 + $0xa0] sm:$0xff]
      %v1110 = vld [vmem:[%s5 + $0xa8] sm:$0xff]
      %v1111 = vld [vmem:[%s5 + $0xb0] sm:$0xff]
      %v1112 = vld [vmem:[%s5 + $0xb8] sm:$0xff]
      %v1113 = vld [vmem:[%s5 + $0xc0] sm:$0xff]
      %v1114 = vld [vmem:[%s5 + $0xc8] sm:$0xff]
      %v1115 = vld [vmem:[%s5 + $0xd0] sm:$0xff]
      %v1116 = vld [vmem:[%s5 + $0xd8] sm:$0xff]
      %v1117 = vld [vmem:[%s5 + $0xe0] sm:$0xff]
      %v1118 = vld [vmem:[%s5 + $0xe8] sm:$0xff]
      %v1119 = vld [vmem:[%s5 + $0xf0] sm:$0xff]
      %v1120 = vld [vmem:[%s5 + $0xf8] sm:$0xff]
      %v1121 = vld [vmem:[%s5 + $0x100] sm:$0xff]
      %v1122 = vld [vmem:[%s5 + $0x108] sm:$0xff]
      %v1123 = vld [vmem:[%s5 + $0x110] sm:$0xff]
      %v1124 = vld [vmem:[%s5 + $0x118] sm:$0xff]
      %v1125 = vld [vmem:[%s5 + $0x120] sm:$0xff]
      %v1126 = vld [vmem:[%s5 + $0x128] sm:$0xff]
      %v1127 = vld [vmem:[%s5 + $0x130] sm:$0xff]
      %v1128 = vld [vmem:[%s5 + $0x138] sm:$0xff]
      %v1129 = vld [vmem:[%s5 + $0x140] sm:$0xff]
      %v1130 = vld [vmem:[%s5 + $0x148] sm:$0xff]
      %v1131 = vld [vmem:[%s5 + $0x150] sm:$0xff]
      %v1132 = vld [vmem:[%s5 + $0x158] sm:$0xff]
      %v1133 = vld [vmem:[%s5 + $0x160] sm:$0xff]
      %v1134 = vld [vmem:[%s5 + $0x168] sm:$0xff]
      %v1135 = vld [vmem:[%s5 + $0x170] sm:$0xff]
      %v1136 = vld [vmem:[%s5 + $0x178] sm:$0xff]
      %v1137 = vld [vmem:[%s5 + $0x180] sm:$0xff]
      %v1138 = vld [vmem:[%s5 + $0x188] sm:$0xff]
      %v1139 = vld [vmem:[%s5 + $0x190] sm:$0xff]
      %v1140 = vld [vmem:[%s5 + $0x198] sm:$0xff]
      %v1141 = vld [vmem:[%s5 + $0x1a0] sm:$0xff]
      %v1142 = vld [vmem:[%s5 + $0x1a8] sm:$0xff]
      %v1143 = vld [vmem:[%s5 + $0x1b0] sm:$0xff]
      %v1144 = vld [vmem:[%s5 + $0x1b8] sm:$0xff]
      %v1145 = vld [vmem:[%s5 + $0x1c0] sm:$0xff]
      %v1146 = vld [vmem:[%s5 + $0x1c8] sm:$0xff]
      %v1147 = vld [vmem:[%s5 + $0x1d0] sm:$0xff]
      %v1148 = vld [vmem:[%s5 + $0x1d8] sm:$0xff]
      %v1149 = vld [vmem:[%s5 + $0x1e0] sm:$0xff]
      %v1150 = vld [vmem:[%s5 + $0x1e8] sm:$0xff]
      %v1151 = vld [vmem:[%s5 + $0x1f0] sm:$0xff]
      %v1152 = vld [vmem:[%s5 + $0x1f8] sm:$0xff]
      %v1153 = vld [vmem:[%s5 + $0x200] sm:$0xff]
      %v1154 = vld [vmem:[%s5 + $0x208] sm:$0xff]
      %v1155 = vld [vmem:[%s5 + $0x210] sm:$0xff]
      %v1156 = vld [vmem:[%s5 + $0x218] sm:$0xff]
      %v1157 = vld [vmem:[%s5 + $0x220] sm:$0xff]
      %v1158 = vld [vmem:[%s5 + $0x228] sm:$0xff]
      %v1159 = vld [vmem:[%s5 + $0x230] sm:$0xff]
      %v1160 = vld [vmem:[%s5 + $0x238] sm:$0xff]
      %v1161 = vld [vmem:[%s5 + $0x240] sm:$0xff]
      %v1162 = vld [vmem:[%s5 + $0x248] sm:$0xff]
      %v1163 = vld [vmem:[%s5 + $0x250] sm:$0xff]
      %v1164 = vld [vmem:[%s5 + $0x258] sm:$0xff]
      %v1165 = vld [vmem:[%s5 + $0x260] sm:$0xff]
      %v1166 = vld [vmem:[%s5 + $0x268] sm:$0xff]
      %v1167 = vld [vmem:[%s5 + $0x270] sm:$0xff]
      %v1168 = vld [vmem:[%s5 + $0x278] sm:$0xff]
      %v1169 = vld [vmem:[%s5 + $0x280] sm:$0xff]
      %v1170 = vld [vmem:[%s5 + $0x288] sm:$0xff]
      %v1171 = vld [vmem:[%s5 + $0x290] sm:$0xff]
      %v1172 = vld [vmem:[%s5 + $0x298] sm:$0xff]
      %v1173 = vld [vmem:[%s5 + $0x2a0] sm:$0xff]
      %v1174 = vld [vmem:[%s5 + $0x2a8] sm:$0xff]
      %v1175 = vld [vmem:[%s5 + $0x2b0] sm:$0xff]
      %v1176 = vld [vmem:[%s5 + $0x2b8] sm:$0xff]
      %v1177 = vld [vmem:[%s5 + $0x2c0] sm:$0xff]
      %v1178 = vld [vmem:[%s5 + $0x2c8] sm:$0xff]
      %v1179 = vld [vmem:[%s5 + $0x2d0] sm:$0xff]
      %v1180 = vld [vmem:[%s5 + $0x2d8] sm:$0xff]
      %v1181 = vld [vmem:[%s5 + $0x2e0] sm:$0xff]
      %v1182 = vld [vmem:[%s5 + $0x2e8] sm:$0xff]
      %v1183 = vld [vmem:[%s5 + $0x2f0] sm:$0xff]
      %v1184 = vld [vmem:[%s5 + $0x2f8] sm:$0xff]
      %v1185 = vld [vmem:[%s5 + $0x300] sm:$0xff]
      %v1186 = vld [vmem:[%s5 + $0x308] sm:$0xff]
      %v1187 = vld [vmem:[%s5 + $0x310] sm:$0xff]
      %v1188 = vld [vmem:[%s5 + $0x318] sm:$0xff]
      %v1189 = vld [vmem:[%s5 + $0x320] sm:$0xff]
      %v1190 = vld [vmem:[%s5 + $0x328] sm:$0xff]
      %v1191 = vld [vmem:[%s5 + $0x330] sm:$0xff]
      %v1192 = vld [vmem:[%s5 + $0x338] sm:$0xff]
      %v1193 = vld [vmem:[%s5 + $0x340] sm:$0xff]
      %v1194 = vld [vmem:[%s5 + $0x348] sm:$0xff]
      %v1195 = vld [vmem:[%s5 + $0x350] sm:$0xff]
      %v1196 = vld [vmem:[%s5 + $0x358] sm:$0xff]
      %v1197 = vld [vmem:[%s5 + $0x360] sm:$0xff]
      %v1198 = vld [vmem:[%s5 + $0x368] sm:$0xff]
      %v1199 = vld [vmem:[%s5 + $0x370] sm:$0xff]
      %v1200 = vld [vmem:[%s5 + $0x378] sm:$0xff]
      %v1201 = vld [vmem:[%s5 + $0x380] sm:$0xff]
      %v1202 = vld [vmem:[%s5 + $0x388] sm:$0xff]
      %v1203 = vld [vmem:[%s5 + $0x390] sm:$0xff]
      %v1204 = vld [vmem:[%s5 + $0x398] sm:$0xff]
      %v1205 = vld [vmem:[%s5 + $0x3a0] sm:$0xff]
      %v1206 = vld [vmem:[%s5 + $0x3a8] sm:$0xff]
      %v1207 = vld [vmem:[%s5 + $0x3b0] sm:$0xff]
      %v1208 = vld [vmem:[%s5 + $0x3b8] sm:$0xff]
      %v1209 = vld [vmem:[%s5 + $0x3c0] sm:$0xff]
      %v1210 = vld [vmem:[%s5 + $0x3c8] sm:$0xff]
      %v1211 = vld [vmem:[%s5 + $0x3d0] sm:$0xff]
      %v1212 = vld [vmem:[%s5 + $0x3d8] sm:$0xff]
      %v1213 = vld [vmem:[%s5 + $0x3e0] sm:$0xff]
      %v1214 = vld [vmem:[%s5 + $0x3e8] sm:$0xff]
      %v1215 = vld [vmem:[%s5 + $0x3f0] sm:$0xff]
      %v1216 = vld [vmem:[%s5 + $0x3f8] sm:$0xff]
      %v1217 = vld [vmem:[%s6] sm:$0xff]
      %v1219 = vlaneseq
      %v1220 = vshrl.u32 %v1219, 7
      %v1221 = vsub.s32 0, %v1220
      %v1222 = vrot.slane %v1217, %v1221
      %v1223 = vlaneseq
      %v1224 = vshrl.u32 %v1223, 7
      %v1225 = vsub.s32 1, %v1224
      %v1226 = vrot.slane %v1217, %v1225
      %v1227 = vlaneseq
      %v1228 = vshrl.u32 %v1227, 7
      %v1229 = vsub.s32 2, %v1228
      %v1230 = vrot.slane %v1217, %v1229
      %v1231 = vlaneseq
      %v1232 = vshrl.u32 %v1231, 7
      %v1233 = vsub.s32 3, %v1232
      %v1234 = vrot.slane %v1217, %v1233
      %v1235 = vlaneseq
      %v1236 = vshrl.u32 %v1235, 7
      %v1237 = vsub.s32 4, %v1236
      %v1238 = vrot.slane %v1217, %v1237
      %v1239 = vlaneseq
      %v1240 = vshrl.u32 %v1239, 7
      %v1241 = vsub.s32 5, %v1240
      %v1242 = vrot.slane %v1217, %v1241
      %v1243 = vlaneseq
      %v1244 = vshrl.u32 %v1243, 7
      %v1245 = vsub.s32 6, %v1244
      %v1246 = vrot.slane %v1217, %v1245
      %v1247 = vlaneseq
      %v1248 = vshrl.u32 %v1247, 7
      %v1249 = vsub.s32 7, %v1248
      %v1250 = vrot.slane %v1217, %v1249
      %1259 = vmatprep.subr.mxu0 %v1210
      %1260 = vmatpush1.msra.mxu0 %v1209
      %1261 = vmatprep.subr.mxu0 %v1202
      %1262 = vmatpush1.msra.mxu0 %v1201
      %1263 = vmatprep.subr.mxu0 %v1194
      %1264 = vmatpush1.msra.mxu0 %v1193
      %1265 = vmatprep.subr.mxu0 %v1186
      %1266 = vmatpush1.msra.mxu0 %v1185
      %1267 = vmatprep.subr.mxu0 %v1178
      %1268 = vmatpush1.msra.mxu0 %v1177
      %1269 = vmatprep.subr.mxu0 %v1170
      %1270 = vmatpush1.msra.mxu0 %v1169
      %1271 = vmatprep.subr.mxu0 %v1162
      %1272 = vmatpush1.msra.mxu0 %v1161
      %1273 = vmatprep.subr.mxu0 %v1154
      %1274 = vmatpush1.msra.mxu0 %v1153
      %1275 = vmatprep.subr.mxu0 %v1146
      %1276 = vmatpush1.msra.mxu0 %v1145
      %1277 = vmatprep.subr.mxu0 %v1138
      %1278 = vmatpush1.msra.mxu0 %v1137
      %1279 = vmatprep.subr.mxu0 %v1130
      %1280 = vmatpush1.msra.mxu0 %v1129
      %1281 = vmatprep.subr.mxu0 %v1122
      %1282 = vmatpush1.msra.mxu0 %v1121
      %1283 = vmatprep.subr.mxu0 %v1114
      %1284 = vmatpush1.msra.mxu0 %v1113
      %1285 = vmatprep.subr.mxu0 %v1106
      %1286 = vmatpush1.msra.mxu0 %v1105
      %1287 = vmatprep.subr.mxu0 %v1098
      %1288 = vmatpush1.msra.mxu0 %v1097
      %1289 = vmatprep.subr.mxu0 %v1090
      %1290 = vmatpush1.msra.mxu0 %v1089
      %1291 = vmatprep.subr.mxu0 0.0
      %1292 = vmatpush2.msra.mxu0 0.0
      %1293 = vmatprep.subr.mxu0 0.0
      %1294 = vmatpush2.msra.mxu0 0.0
      %1295 = vmatprep.subr.mxu0 0.0
      %1296 = vmatpush2.msra.mxu0 0.0
      %1297 = vmatprep.subr.mxu0 0.0
      %1298 = vmatpush2.msra.mxu0 0.0
      %1299 = vmatprep.subr.mxu0 0.0
      %1300 = vmatpush2.msra.mxu0 0.0
      %1301 = vmatprep.subr.mxu0 0.0
      %1302 = vmatpush2.msra.mxu0 0.0
      %1303 = vmatprep.subr.mxu0 0.0
      %1304 = vmatpush2.msra.mxu0 0.0
      %1305 = vmatprep.subr.mxu0 0.0
      %1306 = vmatpush2.msra.mxu0 0.0
      %1307 = vmatprep.subr.mxu0 0.0
      %1308 = vmatpush2.msra.mxu0 0.0
      %1309 = vmatprep.subr.mxu0 0.0
      %1310 = vmatpush2.msra.mxu0 0.0
      %1311 = vmatprep.subr.mxu0 0.0
      %1312 = vmatpush2.msra.mxu0 0.0
      %1313 = vmatprep.subr.mxu0 0.0
      %1314 = vmatpush2.msra.mxu0 0.0
      %1315 = vmatprep.subr.mxu0 0.0
      %1316 = vmatpush2.msra.mxu0 0.0
      %1317 = vmatprep.subr.mxu0 0.0
      %1318 = vmatpush2.msra.mxu0 0.0
      %1319 = vmatprep.subr.mxu0 0.0
      %1320 = vmatpush2.msra.mxu0 0.0
      %1321 = vmatprep.subr.mxu0 0.0
      %1322 = vmatpush2.msra.mxu0 0.0
      %1323 = vmatprep.mubr.f32.mxu0 0.0
      %1324 = vmatmul.mubr.f32.gmra.mxu0 %v1057
      %v1325 = vpop.f32.mrf.mxu0
      %v1326 = vadd.f32 %v1222, %v1325
      %v1327 = vpop.f32.mrf.mxu0
      %v1328 = vadd.f32 %v1226, %v1327
      %1329 = vmatprep.mubr.f32.mxu0 0.0
      %1330 = vmatmul.mubr.f32.gmra.mxu0 %v1058
      %v1331 = vpop.f32.mrf.mxu0
      %v1332 = vadd.f32 %v1222, %v1331
      %v1333 = vpop.f32.mrf.mxu0
      %v1334 = vadd.f32 %v1226, %v1333
      %1335 = vmatprep.mubr.f32.mxu0 0.0
      %1336 = vmatmul.mubr.f32.gmra.mxu0 %v1059
      %v1337 = vpop.f32.mrf.mxu0
      %v1338 = vadd.f32 %v1222, %v1337
      %v1339 = vpop.f32.mrf.mxu0
      %v1340 = vadd.f32 %v1226, %v1339
      %1341 = vmatprep.mubr.f32.mxu0 0.0
      %1342 = vmatmul.mubr.f32.gmra.mxu0 %v1060
      %v1343 = vpop.f32.mrf.mxu0
      %v1344 = vadd.f32 %v1222, %v1343
      %v1345 = vpop.f32.mrf.mxu0
      %v1346 = vadd.f32 %v1226, %v1345
      %1347 = vmatprep.mubr.f32.mxu0 0.0
      %1348 = vmatmul.mubr.f32.gmra.mxu0 %v1061
      %v1349 = vpop.f32.mrf.mxu0
      %v1350 = vadd.f32 %v1222, %v1349
      %v1351 = vpop.f32.mrf.mxu0
      %v1352 = vadd.f32 %v1226, %v1351
      %1353 = vmatprep.mubr.f32.mxu0 0.0
      %1354 = vmatmul.mubr.f32.gmra.mxu0 %v1062
      %v1355 = vpop.f32.mrf.mxu0
      %v1356 = vadd.f32 %v1222, %v1355
      %v1357 = vpop.f32.mrf.mxu0
      %v1358 = vadd.f32 %v1226, %v1357
      %1359 = vmatprep.mubr.f32.mxu0 0.0
      %1360 = vmatmul.mubr.f32.gmra.mxu0 %v1063
      %v1361 = vpop.f32.mrf.mxu0
      %v1362 = vadd.f32 %v1222, %v1361
      %v1363 = vpop.f32.mrf.mxu0
      %v1364 = vadd.f32 %v1226, %v1363
      %1365 = vmatprep.mubr.f32.mxu0 0.0
      %1366 = vmatmul.mubr.f32.gmra.mxu0 %v1064
      %v1367 = vpop.f32.mrf.mxu0
      %v1368 = vadd.f32 %v1222, %v1367
      %v1369 = vpop.f32.mrf.mxu0
      %v1370 = vadd.f32 %v1226, %v1369
      %1371 = vmatprep.mubr.f32.mxu0 0.0
      %1372 = vmatmul.mubr.f32.gmra.mxu0 %v1065
      %v1373 = vpop.f32.mrf.mxu0
      %v1374 = vadd.f32 %v1222, %v1373
      %v1375 = vpop.f32.mrf.mxu0
      %v1376 = vadd.f32 %v1226, %v1375
      %1377 = vmatprep.mubr.f32.mxu0 0.0
      %1378 = vmatmul.mubr.f32.gmra.mxu0 %v1066
      %v1379 = vpop.f32.mrf.mxu0
      %v1380 = vadd.f32 %v1222, %v1379
      %v1381 = vpop.f32.mrf.mxu0
      %v1382 = vadd.f32 %v1226, %v1381
      %1383 = vmatprep.mubr.f32.mxu0 0.0
      %1384 = vmatmul.mubr.f32.gmra.mxu0 %v1067
      %v1385 = vpop.f32.mrf.mxu0
      %v1386 = vadd.f32 %v1222, %v1385
      %v1387 = vpop.f32.mrf.mxu0
      %v1388 = vadd.f32 %v1226, %v1387
      %1389 = vmatprep.mubr.f32.mxu0 0.0
      %1390 = vmatmul.mubr.f32.gmra.mxu0 %v1068
      %v1391 = vpop.f32.mrf.mxu0
      %v1392 = vadd.f32 %v1222, %v1391
      %v1393 = vpop.f32.mrf.mxu0
      %v1394 = vadd.f32 %v1226, %v1393
      %1395 = vmatprep.mubr.f32.mxu0 0.0
      %1396 = vmatmul.mubr.f32.gmra.mxu0 %v1069
      %v1397 = vpop.f32.mrf.mxu0
      %v1398 = vadd.f32 %v1222, %v1397
      %v1399 = vpop.f32.mrf.mxu0
      %v1400 = vadd.f32 %v1226, %v1399
      %1401 = vmatprep.mubr.f32.mxu0 0.0
      %1402 = vmatmul.mubr.f32.gmra.mxu0 %v1070
      %v1403 = vpop.f32.mrf.mxu0
      %v1404 = vadd.f32 %v1222, %v1403
      %v1405 = vpop.f32.mrf.mxu0
      %v1406 = vadd.f32 %v1226, %v1405
      %1407 = vmatprep.mubr.f32.mxu0 0.0
      %1408 = vmatmul.mubr.f32.gmra.mxu0 %v1071
      %v1409 = vpop.f32.mrf.mxu0
      %v1410 = vadd.f32 %v1222, %v1409
      %v1411 = vpop.f32.mrf.mxu0
      %v1412 = vadd.f32 %v1226, %v1411
      %1413 = vmatprep.mubr.f32.mxu0 0.0
      %1414 = vmatmul.mubr.f32.gmra.mxu0 %v1072
      %v1415 = vpop.f32.mrf.mxu0
      %v1416 = vadd.f32 %v1222, %v1415
      %v1417 = vpop.f32.mrf.mxu0
      %v1418 = vadd.f32 %v1226, %v1417
      %1419 = vmatprep.mubr.f32.mxu0 0.0
      %1420 = vmatmul.mubr.f32.gmra.mxu0 %v1073
      %v1421 = vpop.f32.mrf.mxu0
      %v1422 = vadd.f32 %v1222, %v1421
      %v1423 = vpop.f32.mrf.mxu0
      %v1424 = vadd.f32 %v1226, %v1423
      %1425 = vmatprep.mubr.f32.mxu0 0.0
      %1426 = vmatmul.mubr.f32.gmra.mxu0 %v1074
      %v1427 = vpop.f32.mrf.mxu0
      %v1428 = vadd.f32 %v1222, %v1427
      %v1429 = vpop.f32.mrf.mxu0
      %v1430 = vadd.f32 %v1226, %v1429
      %1431 = vmatprep.mubr.f32.mxu0 0.0
      %1432 = vmatmul.mubr.f32.gmra.mxu0 %v1075
      %v1433 = vpop.f32.mrf.mxu0
      %v1434 = vadd.f32 %v1222, %v1433
      %v1435 = vpop.f32.mrf.mxu0
      %v1436 = vadd.f32 %v1226, %v1435
      %1437 = vmatprep.mubr.f32.mxu0 0.0
      %1438 = vmatmul.mubr.f32.gmra.mxu0 %v1076
      %v1439 = vpop.f32.mrf.mxu0
      %v1440 = vadd.f32 %v1222, %v1439
      %v1441 = vpop.f32.mrf.mxu0
      %v1442 = vadd.f32 %v1226, %v1441
      %1443 = vmatprep.mubr.f32.mxu0 0.0
      %1444 = vmatmul.mubr.f32.gmra.mxu0 %v1077
      %v1445 = vpop.f32.mrf.mxu0
      %v1446 = vadd.f32 %v1222, %v1445
      %v1447 = vpop.f32.mrf.mxu0
      %v1448 = vadd.f32 %v1226, %v1447
      %1449 = vmatprep.mubr.f32.mxu0 0.0
      %1450 = vmatmul.mubr.f32.gmra.mxu0 %v1078
      %v1451 = vpop.f32.mrf.mxu0
      %v1452 = vadd.f32 %v1222, %v1451
      %v1453 = vpop.f32.mrf.mxu0
      %v1454 = vadd.f32 %v1226, %v1453
      %1455 = vmatprep.mubr.f32.mxu0 0.0
      %1456 = vmatmul.mubr.f32.gmra.mxu0 %v1079
      %v1457 = vpop.f32.mrf.mxu0
      %v1458 = vadd.f32 %v1222, %v1457
      %v1459 = vpop.f32.mrf.mxu0
      %v1460 = vadd.f32 %v1226, %v1459
      %1461 = vmatprep.mubr.f32.mxu0 0.0
      %1462 = vmatmul.mubr.f32.gmra.mxu0 %v1080
      %v1463 = vpop.f32.mrf.mxu0
      %v1464 = vadd.f32 %v1222, %v1463
      %v1465 = vpop.f32.mrf.mxu0
      %v1466 = vadd.f32 %v1226, %v1465
      %1467 = vmatprep.mubr.f32.mxu0 0.0
      %1468 = vmatmul.mubr.f32.gmra.mxu0 %v1081
      %v1469 = vpop.f32.mrf.mxu0
      %v1470 = vadd.f32 %v1222, %v1469
      %v1471 = vpop.f32.mrf.mxu0
      %v1472 = vadd.f32 %v1226, %v1471
      %1473 = vmatprep.mubr.f32.mxu0 0.0
      %1474 = vmatmul.mubr.f32.gmra.mxu0 %v1082
      %v1475 = vpop.f32.mrf.mxu0
      %v1476 = vadd.f32 %v1222, %v1475
      %v1477 = vpop.f32.mrf.mxu0
      %v1478 = vadd.f32 %v1226, %v1477
      %1479 = vmatprep.mubr.f32.mxu0 0.0
      %1480 = vmatmul.mubr.f32.gmra.mxu0 %v1083
      %v1481 = vpop.f32.mrf.mxu0
      %v1482 = vadd.f32 %v1222, %v1481
      %v1483 = vpop.f32.mrf.mxu0
      %v1484 = vadd.f32 %v1226, %v1483
      %1485 = vmatprep.mubr.f32.mxu0 0.0
      %1486 = vmatmul.mubr.f32.gmra.mxu0 %v1084
      %v1487 = vpop.f32.mrf.mxu0
      %v1488 = vadd.f32 %v1222, %v1487
      %v1489 = vpop.f32.mrf.mxu0
      %v1490 = vadd.f32 %v1226, %v1489
      %1491 = vmatprep.mubr.f32.mxu0 0.0
      %1492 = vmatmul.mubr.f32.gmra.mxu0 %v1085
      %v1493 = vpop.f32.mrf.mxu0
      %v1494 = vadd.f32 %v1222, %v1493
      %v1495 = vpop.f32.mrf.mxu0
      %v1496 = vadd.f32 %v1226, %v1495
      %1497 = vmatprep.mubr.f32.mxu0 0.0
      %1498 = vmatmul.mubr.f32.gmra.mxu0 %v1086
      %v1499 = vpop.f32.mrf.mxu0
      %v1500 = vadd.f32 %v1222, %v1499
      %v1501 = vpop.f32.mrf.mxu0
      %v1502 = vadd.f32 %v1226, %v1501
      %1503 = vmatprep.mubr.f32.mxu0 0.0
      %1504 = vmatmul.mubr.f32.gmra.mxu0 %v1087
      %v1505 = vpop.f32.mrf.mxu0
      %v1506 = vadd.f32 %v1222, %v1505
      %v1507 = vpop.f32.mrf.mxu0
      %v1508 = vadd.f32 %v1226, %v1507
      %1509 = vmatprep.mubr.f32.mxu0 0.0
      %1510 = vmatmul.mubr.f32.gmra.mxu0 %v1088
      %v1511 = vpop.f32.mrf.mxu0
      %v1512 = vadd.f32 %v1222, %v1511
      %v1513 = vpop.f32.mrf.mxu0
      %v1514 = vadd.f32 %v1226, %v1513
      %1515 = vdwg.mxu0
      %1516 = vmatprep.subr.mxu0 %v1212
      %1517 = vmatpush1.msra.mxu0 %v1211
      %1518 = vmatprep.subr.mxu0 %v1204
      %1519 = vmatpush1.msra.mxu0 %v1203
      %1520 = vmatprep.subr.mxu0 %v1196
      %1521 = vmatpush1.msra.mxu0 %v1195
      %1522 = vmatprep.subr.mxu0 %v1188
      %1523 = vmatpush1.msra.mxu0 %v1187
      %1524 = vmatprep.subr.mxu0 %v1180
      %1525 = vmatpush1.msra.mxu0 %v1179
      %1526 = vmatprep.subr.mxu0 %v1172
      %1527 = vmatpush1.msra.mxu0 %v1171
      %1528 = vmatprep.subr.mxu0 %v1164
      %1529 = vmatpush1.msra.mxu0 %v1163
      %1530 = vmatprep.subr.mxu0 %v1156
      %1531 = vmatpush1.msra.mxu0 %v1155
      %1532 = vmatprep.subr.mxu0 %v1148
      %1533 = vmatpush1.msra.mxu0 %v1147
      %1534 = vmatprep.subr.mxu0 %v1140
      %1535 = vmatpush1.msra.mxu0 %v1139
      %1536 = vmatprep.subr.mxu0 %v1132
      %1537 = vmatpush1.msra.mxu0 %v1131
      %1538 = vmatprep.subr.mxu0 %v1124
      %1539 = vmatpush1.msra.mxu0 %v1123
      %1540 = vmatprep.subr.mxu0 %v1116
      %1541 = vmatpush1.msra.mxu0 %v1115
      %1542 = vmatprep.subr.mxu0 %v1108
      %1543 = vmatpush1.msra.mxu0 %v1107
      %1544 = vmatprep.subr.mxu0 %v1100
      %1545 = vmatpush1.msra.mxu0 %v1099
      %1546 = vmatprep.subr.mxu0 %v1092
      %1547 = vmatpush1.msra.mxu0 %v1091
      %1548 = vmatprep.subr.mxu0 0.0
      %1549 = vmatpush2.msra.mxu0 0.0
      %1550 = vmatprep.subr.mxu0 0.0
      %1551 = vmatpush2.msra.mxu0 0.0
      %1552 = vmatprep.subr.mxu0 0.0
      %1553 = vmatpush2.msra.mxu0 0.0
      %1554 = vmatprep.subr.mxu0 0.0
      %1555 = vmatpush2.msra.mxu0 0.0
      %1556 = vmatprep.subr.mxu0 0.0
      %1557 = vmatpush2.msra.mxu0 0.0
      %1558 = vmatprep.subr.mxu0 0.0
      %1559 = vmatpush2.msra.mxu0 0.0
      %1560 = vmatprep.subr.mxu0 0.0
      %1561 = vmatpush2.msra.mxu0 0.0
      %1562 = vmatprep.subr.mxu0 0.0
      %1563 = vmatpush2.msra.mxu0 0.0
      %1564 = vmatprep.subr.mxu0 0.0
      %1565 = vmatpush2.msra.mxu0 0.0
      %1566 = vmatprep.subr.mxu0 0.0
      %1567 = vmatpush2.msra.mxu0 0.0
      %1568 = vmatprep.subr.mxu0 0.0
      %1569 = vmatpush2.msra.mxu0 0.0
      %1570 = vmatprep.subr.mxu0 0.0
      %1571 = vmatpush2.msra.mxu0 0.0
      %1572 = vmatprep.subr.mxu0 0.0
      %1573 = vmatpush2.msra.mxu0 0.0
      %1574 = vmatprep.subr.mxu0 0.0
      %1575 = vmatpush2.msra.mxu0 0.0
      %1576 = vmatprep.subr.mxu0 0.0
      %1577 = vmatpush2.msra.mxu0 0.0
      %1578 = vmatprep.subr.mxu0 0.0
      %1579 = vmatpush2.msra.mxu0 0.0
      %1580 = vmatprep.mubr.f32.mxu0 0.0
      %1581 = vmatmul.mubr.f32.gmra.mxu0 %v1057
      %v1582 = vpop.f32.mrf.mxu0
      %v1583 = vadd.f32 %v1230, %v1582
      %v1584 = vpop.f32.mrf.mxu0
      %v1585 = vadd.f32 %v1234, %v1584
      %1586 = vmatprep.mubr.f32.mxu0 0.0
      %1587 = vmatmul.mubr.f32.gmra.mxu0 %v1058
      %v1588 = vpop.f32.mrf.mxu0
      %v1589 = vadd.f32 %v1230, %v1588
      %v1590 = vpop.f32.mrf.mxu0
      %v1591 = vadd.f32 %v1234, %v1590
      %1592 = vmatprep.mubr.f32.mxu0 0.0
      %1593 = vmatmul.mubr.f32.gmra.mxu0 %v1059
      %v1594 = vpop.f32.mrf.mxu0
      %v1595 = vadd.f32 %v1230, %v1594
      %v1596 = vpop.f32.mrf.mxu0
      %v1597 = vadd.f32 %v1234, %v1596
      %1598 = vmatprep.mubr.f32.mxu0 0.0
      %1599 = vmatmul.mubr.f32.gmra.mxu0 %v1060
      %v1600 = vpop.f32.mrf.mxu0
      %v1601 = vadd.f32 %v1230, %v1600
      %v1602 = vpop.f32.mrf.mxu0
      %v1603 = vadd.f32 %v1234, %v1602
      %1604 = vmatprep.mubr.f32.mxu0 0.0
      %1605 = vmatmul.mubr.f32.gmra.mxu0 %v1061
      %v1606 = vpop.f32.mrf.mxu0
      %v1607 = vadd.f32 %v1230, %v1606
      %v1608 = vpop.f32.mrf.mxu0
      %v1609 = vadd.f32 %v1234, %v1608
      %1610 = vmatprep.mubr.f32.mxu0 0.0
      %1611 = vmatmul.mubr.f32.gmra.mxu0 %v1062
      %v1612 = vpop.f32.mrf.mxu0
      %v1613 = vadd.f32 %v1230, %v1612
      %v1614 = vpop.f32.mrf.mxu0
      %v1615 = vadd.f32 %v1234, %v1614
      %1616 = vmatprep.mubr.f32.mxu0 0.0
      %1617 = vmatmul.mubr.f32.gmra.mxu0 %v1063
      %v1618 = vpop.f32.mrf.mxu0
      %v1619 = vadd.f32 %v1230, %v1618
      %v1620 = vpop.f32.mrf.mxu0
      %v1621 = vadd.f32 %v1234, %v1620
      %1622 = vmatprep.mubr.f32.mxu0 0.0
      %1623 = vmatmul.mubr.f32.gmra.mxu0 %v1064
      %v1624 = vpop.f32.mrf.mxu0
      %v1625 = vadd.f32 %v1230, %v1624
      %v1626 = vpop.f32.mrf.mxu0
      %v1627 = vadd.f32 %v1234, %v1626
      %1628 = vmatprep.mubr.f32.mxu0 0.0
      %1629 = vmatmul.mubr.f32.gmra.mxu0 %v1065
      %v1630 = vpop.f32.mrf.mxu0
      %v1631 = vadd.f32 %v1230, %v1630
      %v1632 = vpop.f32.mrf.mxu0
      %v1633 = vadd.f32 %v1234, %v1632
      %1634 = vmatprep.mubr.f32.mxu0 0.0
      %1635 = vmatmul.mubr.f32.gmra.mxu0 %v1066
      %v1636 = vpop.f32.mrf.mxu0
      %v1637 = vadd.f32 %v1230, %v1636
      %v1638 = vpop.f32.mrf.mxu0
      %v1639 = vadd.f32 %v1234, %v1638
      %1640 = vmatprep.mubr.f32.mxu0 0.0
      %1641 = vmatmul.mubr.f32.gmra.mxu0 %v1067
      %v1642 = vpop.f32.mrf.mxu0
      %v1643 = vadd.f32 %v1230, %v1642
      %v1644 = vpop.f32.mrf.mxu0
      %v1645 = vadd.f32 %v1234, %v1644
      %1646 = vmatprep.mubr.f32.mxu0 0.0
      %1647 = vmatmul.mubr.f32.gmra.mxu0 %v1068
      %v1648 = vpop.f32.mrf.mxu0
      %v1649 = vadd.f32 %v1230, %v1648
      %v1650 = vpop.f32.mrf.mxu0
      %v1651 = vadd.f32 %v1234, %v1650
      %1652 = vmatprep.mubr.f32.mxu0 0.0
      %1653 = vmatmul.mubr.f32.gmra.mxu0 %v1069
      %v1654 = vpop.f32.mrf.mxu0
      %v1655 = vadd.f32 %v1230, %v1654
      %v1656 = vpop.f32.mrf.mxu0
      %v1657 = vadd.f32 %v1234, %v1656
      %1658 = vmatprep.mubr.f32.mxu0 0.0
      %1659 = vmatmul.mubr.f32.gmra.mxu0 %v1070
      %v1660 = vpop.f32.mrf.mxu0
      %v1661 = vadd.f32 %v1230, %v1660
      %v1662 = vpop.f32.mrf.mxu0
      %v1663 = vadd.f32 %v1234, %v1662
      %1664 = vmatprep.mubr.f32.mxu0 0.0
      %1665 = vmatmul.mubr.f32.gmra.mxu0 %v1071
      %v1666 = vpop.f32.mrf.mxu0
      %v1667 = vadd.f32 %v1230, %v1666
      %v1668 = vpop.f32.mrf.mxu0
      %v1669 = vadd.f32 %v1234, %v1668
      %1670 = vmatprep.mubr.f32.mxu0 0.0
      %1671 = vmatmul.mubr.f32.gmra.mxu0 %v1072
      %v1672 = vpop.f32.mrf.mxu0
      %v1673 = vadd.f32 %v1230, %v1672
      %v1674 = vpop.f32.mrf.mxu0
      %v1675 = vadd.f32 %v1234, %v1674
      %1676 = vmatprep.mubr.f32.mxu0 0.0
      %1677 = vmatmul.mubr.f32.gmra.mxu0 %v1073
      %v1678 = vpop.f32.mrf.mxu0
      %v1679 = vadd.f32 %v1230, %v1678
      %v1680 = vpop.f32.mrf.mxu0
      %v1681 = vadd.f32 %v1234, %v1680
      %1682 = vmatprep.mubr.f32.mxu0 0.0
      %1683 = vmatmul.mubr.f32.gmra.mxu0 %v1074
      %v1684 = vpop.f32.mrf.mxu0
      %v1685 = vadd.f32 %v1230, %v1684
      %v1686 = vpop.f32.mrf.mxu0
      %v1687 = vadd.f32 %v1234, %v1686
      %1688 = vmatprep.mubr.f32.mxu0 0.0
      %1689 = vmatmul.mubr.f32.gmra.mxu0 %v1075
      %v1690 = vpop.f32.mrf.mxu0
      %v1691 = vadd.f32 %v1230, %v1690
      %v1692 = vpop.f32.mrf.mxu0
      %v1693 = vadd.f32 %v1234, %v1692
      %1694 = vmatprep.mubr.f32.mxu0 0.0
      %1695 = vmatmul.mubr.f32.gmra.mxu0 %v1076
      %v1696 = vpop.f32.mrf.mxu0
      %v1697 = vadd.f32 %v1230, %v1696
      %v1698 = vpop.f32.mrf.mxu0
      %v1699 = vadd.f32 %v1234, %v1698
      %1700 = vmatprep.mubr.f32.mxu0 0.0
      %1701 = vmatmul.mubr.f32.gmra.mxu0 %v1077
      %v1702 = vpop.f32.mrf.mxu0
      %v1703 = vadd.f32 %v1230, %v1702
      %v1704 = vpop.f32.mrf.mxu0
      %v1705 = vadd.f32 %v1234, %v1704
      %1706 = vmatprep.mubr.f32.mxu0 0.0
      %1707 = vmatmul.mubr.f32.gmra.mxu0 %v1078
      %v1708 = vpop.f32.mrf.mxu0
      %v1709 = vadd.f32 %v1230, %v1708
      %v1710 = vpop.f32.mrf.mxu0
      %v1711 = vadd.f32 %v1234, %v1710
      %1712 = vmatprep.mubr.f32.mxu0 0.0
      %1713 = vmatmul.mubr.f32.gmra.mxu0 %v1079
      %v1714 = vpop.f32.mrf.mxu0
      %v1715 = vadd.f32 %v1230, %v1714
      %v1716 = vpop.f32.mrf.mxu0
      %v1717 = vadd.f32 %v1234, %v1716
      %1718 = vmatprep.mubr.f32.mxu0 0.0
      %1719 = vmatmul.mubr.f32.gmra.mxu0 %v1080
      %v1720 = vpop.f32.mrf.mxu0
      %v1721 = vadd.f32 %v1230, %v1720
      %v1722 = vpop.f32.mrf.mxu0
      %v1723 = vadd.f32 %v1234, %v1722
      %1724 = vmatprep.mubr.f32.mxu0 0.0
      %1725 = vmatmul.mubr.f32.gmra.mxu0 %v1081
      %v1726 = vpop.f32.mrf.mxu0
      %v1727 = vadd.f32 %v1230, %v1726
      %v1728 = vpop.f32.mrf.mxu0
      %v1729 = vadd.f32 %v1234, %v1728
      %1730 = vmatprep.mubr.f32.mxu0 0.0
      %1731 = vmatmul.mubr.f32.gmra.mxu0 %v1082
      %v1732 = vpop.f32.mrf.mxu0
      %v1733 = vadd.f32 %v1230, %v1732
      %v1734 = vpop.f32.mrf.mxu0
      %v1735 = vadd.f32 %v1234, %v1734
      %1736 = vmatprep.mubr.f32.mxu0 0.0
      %1737 = vmatmul.mubr.f32.gmra.mxu0 %v1083
      %v1738 = vpop.f32.mrf.mxu0
      %v1739 = vadd.f32 %v1230, %v1738
      %v1740 = vpop.f32.mrf.mxu0
      %v1741 = vadd.f32 %v1234, %v1740
      %1742 = vmatprep.mubr.f32.mxu0 0.0
      %1743 = vmatmul.mubr.f32.gmra.mxu0 %v1084
      %v1744 = vpop.f32.mrf.mxu0
      %v1745 = vadd.f32 %v1230, %v1744
      %v1746 = vpop.f32.mrf.mxu0
      %v1747 = vadd.f32 %v1234, %v1746
      %1748 = vmatprep.mubr.f32.mxu0 0.0
      %1749 = vmatmul.mubr.f32.gmra.mxu0 %v1085
      %v1750 = vpop.f32.mrf.mxu0
      %v1751 = vadd.f32 %v1230, %v1750
      %v1752 = vpop.f32.mrf.mxu0
      %v1753 = vadd.f32 %v1234, %v1752
      %1754 = vmatprep.mubr.f32.mxu0 0.0
      %1755 = vmatmul.mubr.f32.gmra.mxu0 %v1086
      %v1756 = vpop.f32.mrf.mxu0
      %v1757 = vadd.f32 %v1230, %v1756
      %v1758 = vpop.f32.mrf.mxu0
      %v1759 = vadd.f32 %v1234, %v1758
      %1760 = vmatprep.mubr.f32.mxu0 0.0
      %1761 = vmatmul.mubr.f32.gmra.mxu0 %v1087
      %v1762 = vpop.f32.mrf.mxu0
      %v1763 = vadd.f32 %v1230, %v1762
      %v1764 = vpop.f32.mrf.mxu0
      %v1765 = vadd.f32 %v1234, %v1764
      %1766 = vmatprep.mubr.f32.mxu0 0.0
      %1767 = vmatmul.mubr.f32.gmra.mxu0 %v1088
      %v1768 = vpop.f32.mrf.mxu0
      %v1769 = vadd.f32 %v1230, %v1768
      %v1770 = vpop.f32.mrf.mxu0
      %v1771 = vadd.f32 %v1234, %v1770
      %1772 = vdwg.mxu0
      %1773 = vmatprep.subr.mxu0 %v1214
      %1774 = vmatpush1.msra.mxu0 %v1213
      %1775 = vmatprep.subr.mxu0 %v1206
      %1776 = vmatpush1.msra.mxu0 %v1205
      %1777 = vmatprep.subr.mxu0 %v1198
      %1778 = vmatpush1.msra.mxu0 %v1197
      %1779 = vmatprep.subr.mxu0 %v1190
      %1780 = vmatpush1.msra.mxu0 %v1189
      %1781 = vmatprep.subr.mxu0 %v1182
      %1782 = vmatpush1.msra.mxu0 %v1181
      %1783 = vmatprep.subr.mxu0 %v1174
      %1784 = vmatpush1.msra.mxu0 %v1173
      %1785 = vmatprep.subr.mxu0 %v1166
      %1786 = vmatpush1.msra.mxu0 %v1165
      %1787 = vmatprep.subr.mxu0 %v1158
      %1788 = vmatpush1.msra.mxu0 %v1157
      %1789 = vmatprep.subr.mxu0 %v1150
      %1790 = vmatpush1.msra.mxu0 %v1149
      %1791 = vmatprep.subr.mxu0 %v1142
      %1792 = vmatpush1.msra.mxu0 %v1141
      %1793 = vmatprep.subr.mxu0 %v1134
      %1794 = vmatpush1.msra.mxu0 %v1133
      %1795 = vmatprep.subr.mxu0 %v1126
      %1796 = vmatpush1.msra.mxu0 %v1125
      %1797 = vmatprep.subr.mxu0 %v1118
      %1798 = vmatpush1.msra.mxu0 %v1117
      %1799 = vmatprep.subr.mxu0 %v1110
      %1800 = vmatpush1.msra.mxu0 %v1109
      %1801 = vmatprep.subr.mxu0 %v1102
      %1802 = vmatpush1.msra.mxu0 %v1101
      %1803 = vmatprep.subr.mxu0 %v1094
      %1804 = vmatpush1.msra.mxu0 %v1093
      %1805 = vmatprep.subr.mxu0 0.0
      %1806 = vmatpush2.msra.mxu0 0.0
      %1807 = vmatprep.subr.mxu0 0.0
      %1808 = vmatpush2.msra.mxu0 0.0
      %1809 = vmatprep.subr.mxu0 0.0
      %1810 = vmatpush2.msra.mxu0 0.0
      %1811 = vmatprep.subr.mxu0 0.0
      %1812 = vmatpush2.msra.mxu0 0.0
      %1813 = vmatprep.subr.mxu0 0.0
      %1814 = vmatpush2.msra.mxu0 0.0
      %1815 = vmatprep.subr.mxu0 0.0
      %1816 = vmatpush2.msra.mxu0 0.0
      %1817 = vmatprep.subr.mxu0 0.0
      %1818 = vmatpush2.msra.mxu0 0.0
      %1819 = vmatprep.subr.mxu0 0.0
      %1820 = vmatpush2.msra.mxu0 0.0
      %1821 = vmatprep.subr.mxu0 0.0
      %1822 = vmatpush2.msra.mxu0 0.0
      %1823 = vmatprep.subr.mxu0 0.0
      %1824 = vmatpush2.msra.mxu0 0.0
      %1825 = vmatprep.subr.mxu0 0.0
      %1826 = vmatpush2.msra.mxu0 0.0
      %1827 = vmatprep.subr.mxu0 0.0
      %1828 = vmatpush2.msra.mxu0 0.0
      %1829 = vmatprep.subr.mxu0 0.0
      %1830 = vmatpush2.msra.mxu0 0.0
      %1831 = vmatprep.subr.mxu0 0.0
      %1832 = vmatpush2.msra.mxu0 0.0
      %1833 = vmatprep.subr.mxu0 0.0
      %1834 = vmatpush2.msra.mxu0 0.0
      %1835 = vmatprep.subr.mxu0 0.0
      %1836 = vmatpush2.msra.mxu0 0.0
      %1837 = vmatprep.mubr.f32.mxu0 0.0
      %1838 = vmatmul.mubr.f32.gmra.mxu0 %v1057
      %v1839 = vpop.f32.mrf.mxu0
      %v1840 = vadd.f32 %v1238, %v1839
      %v1841 = vpop.f32.mrf.mxu0
      %v1842 = vadd.f32 %v1242, %v1841
      %1843 = vmatprep.mubr.f32.mxu0 0.0
      %1844 = vmatmul.mubr.f32.gmra.mxu0 %v1058
      %v1845 = vpop.f32.mrf.mxu0
      %v1846 = vadd.f32 %v1238, %v1845
      %v1847 = vpop.f32.mrf.mxu0
      %v1848 = vadd.f32 %v1242, %v1847
      %1849 = vmatprep.mubr.f32.mxu0 0.0
      %1850 = vmatmul.mubr.f32.gmra.mxu0 %v1059
      %v1851 = vpop.f32.mrf.mxu0
      %v1852 = vadd.f32 %v1238, %v1851
      %v1853 = vpop.f32.mrf.mxu0
      %v1854 = vadd.f32 %v1242, %v1853
      %1855 = vmatprep.mubr.f32.mxu0 0.0
      %1856 = vmatmul.mubr.f32.gmra.mxu0 %v1060
      %v1857 = vpop.f32.mrf.mxu0
      %v1858 = vadd.f32 %v1238, %v1857
      %v1859 = vpop.f32.mrf.mxu0
      %v1860 = vadd.f32 %v1242, %v1859
      %1861 = vmatprep.mubr.f32.mxu0 0.0
      %1862 = vmatmul.mubr.f32.gmra.mxu0 %v1061
      %v1863 = vpop.f32.mrf.mxu0
      %v1864 = vadd.f32 %v1238, %v1863
      %v1865 = vpop.f32.mrf.mxu0
      %v1866 = vadd.f32 %v1242, %v1865
      %1867 = vmatprep.mubr.f32.mxu0 0.0
      %1868 = vmatmul.mubr.f32.gmra.mxu0 %v1062
      %v1869 = vpop.f32.mrf.mxu0
      %v1870 = vadd.f32 %v1238, %v1869
      %v1871 = vpop.f32.mrf.mxu0
      %v1872 = vadd.f32 %v1242, %v1871
      %1873 = vmatprep.mubr.f32.mxu0 0.0
      %1874 = vmatmul.mubr.f32.gmra.mxu0 %v1063
      %v1875 = vpop.f32.mrf.mxu0
      %v1876 = vadd.f32 %v1238, %v1875
      %v1877 = vpop.f32.mrf.mxu0
      %v1878 = vadd.f32 %v1242, %v1877
      %1879 = vmatprep.mubr.f32.mxu0 0.0
      %1880 = vmatmul.mubr.f32.gmra.mxu0 %v1064
      %v1881 = vpop.f32.mrf.mxu0
      %v1882 = vadd.f32 %v1238, %v1881
      %v1883 = vpop.f32.mrf.mxu0
      %v1884 = vadd.f32 %v1242, %v1883
      %1885 = vmatprep.mubr.f32.mxu0 0.0
      %1886 = vmatmul.mubr.f32.gmra.mxu0 %v1065
      %v1887 = vpop.f32.mrf.mxu0
      %v1888 = vadd.f32 %v1238, %v1887
      %v1889 = vpop.f32.mrf.mxu0
      %v1890 = vadd.f32 %v1242, %v1889
      %1891 = vmatprep.mubr.f32.mxu0 0.0
      %1892 = vmatmul.mubr.f32.gmra.mxu0 %v1066
      %v1893 = vpop.f32.mrf.mxu0
      %v1894 = vadd.f32 %v1238, %v1893
      %v1895 = vpop.f32.mrf.mxu0
      %v1896 = vadd.f32 %v1242, %v1895
      %1897 = vmatprep.mubr.f32.mxu0 0.0
      %1898 = vmatmul.mubr.f32.gmra.mxu0 %v1067
      %v1899 = vpop.f32.mrf.mxu0
      %v1900 = vadd.f32 %v1238, %v1899
      %v1901 = vpop.f32.mrf.mxu0
      %v1902 = vadd.f32 %v1242, %v1901
      %1903 = vmatprep.mubr.f32.mxu0 0.0
      %1904 = vmatmul.mubr.f32.gmra.mxu0 %v1068
      %v1905 = vpop.f32.mrf.mxu0
      %v1906 = vadd.f32 %v1238, %v1905
      %v1907 = vpop.f32.mrf.mxu0
      %v1908 = vadd.f32 %v1242, %v1907
      %1909 = vmatprep.mubr.f32.mxu0 0.0
      %1910 = vmatmul.mubr.f32.gmra.mxu0 %v1069
      %v1911 = vpop.f32.mrf.mxu0
      %v1912 = vadd.f32 %v1238, %v1911
      %v1913 = vpop.f32.mrf.mxu0
      %v1914 = vadd.f32 %v1242, %v1913
      %1915 = vmatprep.mubr.f32.mxu0 0.0
      %1916 = vmatmul.mubr.f32.gmra.mxu0 %v1070
      %v1917 = vpop.f32.mrf.mxu0
      %v1918 = vadd.f32 %v1238, %v1917
      %v1919 = vpop.f32.mrf.mxu0
      %v1920 = vadd.f32 %v1242, %v1919
      %1921 = vmatprep.mubr.f32.mxu0 0.0
      %1922 = vmatmul.mubr.f32.gmra.mxu0 %v1071
      %v1923 = vpop.f32.mrf.mxu0
      %v1924 = vadd.f32 %v1238, %v1923
      %v1925 = vpop.f32.mrf.mxu0
      %v1926 = vadd.f32 %v1242, %v1925
      %1927 = vmatprep.mubr.f32.mxu0 0.0
      %1928 = vmatmul.mubr.f32.gmra.mxu0 %v1072
      %v1929 = vpop.f32.mrf.mxu0
      %v1930 = vadd.f32 %v1238, %v1929
      %v1931 = vpop.f32.mrf.mxu0
      %v1932 = vadd.f32 %v1242, %v1931
      %1933 = vmatprep.mubr.f32.mxu0 0.0
      %1934 = vmatmul.mubr.f32.gmra.mxu0 %v1073
      %v1935 = vpop.f32.mrf.mxu0
      %v1936 = vadd.f32 %v1238, %v1935
      %v1937 = vpop.f32.mrf.mxu0
      %v1938 = vadd.f32 %v1242, %v1937
      %1939 = vmatprep.mubr.f32.mxu0 0.0
      %1940 = vmatmul.mubr.f32.gmra.mxu0 %v1074
      %v1941 = vpop.f32.mrf.mxu0
      %v1942 = vadd.f32 %v1238, %v1941
      %v1943 = vpop.f32.mrf.mxu0
      %v1944 = vadd.f32 %v1242, %v1943
      %1945 = vmatprep.mubr.f32.mxu0 0.0
      %1946 = vmatmul.mubr.f32.gmra.mxu0 %v1075
      %v1947 = vpop.f32.mrf.mxu0
      %v1948 = vadd.f32 %v1238, %v1947
      %v1949 = vpop.f32.mrf.mxu0
      %v1950 = vadd.f32 %v1242, %v1949
      %1951 = vmatprep.mubr.f32.mxu0 0.0
      %1952 = vmatmul.mubr.f32.gmra.mxu0 %v1076
      %v1953 = vpop.f32.mrf.mxu0
      %v1954 = vadd.f32 %v1238, %v1953
      %v1955 = vpop.f32.mrf.mxu0
      %v1956 = vadd.f32 %v1242, %v1955
      %1957 = vmatprep.mubr.f32.mxu0 0.0
      %1958 = vmatmul.mubr.f32.gmra.mxu0 %v1077
      %v1959 = vpop.f32.mrf.mxu0
      %v1960 = vadd.f32 %v1238, %v1959
      %v1961 = vpop.f32.mrf.mxu0
      %v1962 = vadd.f32 %v1242, %v1961
      %1963 = vmatprep.mubr.f32.mxu0 0.0
      %1964 = vmatmul.mubr.f32.gmra.mxu0 %v1078
      %v1965 = vpop.f32.mrf.mxu0
      %v1966 = vadd.f32 %v1238, %v1965
      %v1967 = vpop.f32.mrf.mxu0
      %v1968 = vadd.f32 %v1242, %v1967
      %1969 = vmatprep.mubr.f32.mxu0 0.0
      %1970 = vmatmul.mubr.f32.gmra.mxu0 %v1079
      %v1971 = vpop.f32.mrf.mxu0
      %v1972 = vadd.f32 %v1238, %v1971
      %v1973 = vpop.f32.mrf.mxu0
      %v1974 = vadd.f32 %v1242, %v1973
      %1975 = vmatprep.mubr.f32.mxu0 0.0
      %1976 = vmatmul.mubr.f32.gmra.mxu0 %v1080
      %v1977 = vpop.f32.mrf.mxu0
      %v1978 = vadd.f32 %v1238, %v1977
      %v1979 = vpop.f32.mrf.mxu0
      %v1980 = vadd.f32 %v1242, %v1979
      %1981 = vmatprep.mubr.f32.mxu0 0.0
      %1982 = vmatmul.mubr.f32.gmra.mxu0 %v1081
      %v1983 = vpop.f32.mrf.mxu0
      %v1984 = vadd.f32 %v1238, %v1983
      %v1985 = vpop.f32.mrf.mxu0
      %v1986 = vadd.f32 %v1242, %v1985
      %1987 = vmatprep.mubr.f32.mxu0 0.0
      %1988 = vmatmul.mubr.f32.gmra.mxu0 %v1082
      %v1989 = vpop.f32.mrf.mxu0
      %v1990 = vadd.f32 %v1238, %v1989
      %v1991 = vpop.f32.mrf.mxu0
      %v1992 = vadd.f32 %v1242, %v1991
      %1993 = vmatprep.mubr.f32.mxu0 0.0
      %1994 = vmatmul.mubr.f32.gmra.mxu0 %v1083
      %v1995 = vpop.f32.mrf.mxu0
      %v1996 = vadd.f32 %v1238, %v1995
      %v1997 = vpop.f32.mrf.mxu0
      %v1998 = vadd.f32 %v1242, %v1997
      %1999 = vmatprep.mubr.f32.mxu0 0.0
      %2000 = vmatmul.mubr.f32.gmra.mxu0 %v1084
      %v2001 = vpop.f32.mrf.mxu0
      %v2002 = vadd.f32 %v1238, %v2001
      %v2003 = vpop.f32.mrf.mxu0
      %v2004 = vadd.f32 %v1242, %v2003
      %2005 = vmatprep.mubr.f32.mxu0 0.0
      %2006 = vmatmul.mubr.f32.gmra.mxu0 %v1085
      %v2007 = vpop.f32.mrf.mxu0
      %v2008 = vadd.f32 %v1238, %v2007
      %v2009 = vpop.f32.mrf.mxu0
      %v2010 = vadd.f32 %v1242, %v2009
      %2011 = vmatprep.mubr.f32.mxu0 0.0
      %2012 = vmatmul.mubr.f32.gmra.mxu0 %v1086
      %v2013 = vpop.f32.mrf.mxu0
      %v2014 = vadd.f32 %v1238, %v2013
      %v2015 = vpop.f32.mrf.mxu0
      %v2016 = vadd.f32 %v1242, %v2015
      %2017 = vmatprep.mubr.f32.mxu0 0.0
      %2018 = vmatmul.mubr.f32.gmra.mxu0 %v1087
      %v2019 = vpop.f32.mrf.mxu0
      %v2020 = vadd.f32 %v1238, %v2019
      %v2021 = vpop.f32.mrf.mxu0
      %v2022 = vadd.f32 %v1242, %v2021
      %2023 = vmatprep.mubr.f32.mxu0 0.0
      %2024 = vmatmul.mubr.f32.gmra.mxu0 %v1088
      %v2025 = vpop.f32.mrf.mxu0
      %v2026 = vadd.f32 %v1238, %v2025
      %v2027 = vpop.f32.mrf.mxu0
      %v2028 = vadd.f32 %v1242, %v2027
      %2029 = vdwg.mxu0
      %2030 = vmatprep.subr.mxu0 %v1216
      %2031 = vmatpush1.msra.mxu0 %v1215
      %2032 = vmatprep.subr.mxu0 %v1208
      %2033 = vmatpush1.msra.mxu0 %v1207
      %2034 = vmatprep.subr.mxu0 %v1200
      %2035 = vmatpush1.msra.mxu0 %v1199
      %2036 = vmatprep.subr.mxu0 %v1192
      %2037 = vmatpush1.msra.mxu0 %v1191
      %2038 = vmatprep.subr.mxu0 %v1184
      %2039 = vmatpush1.msra.mxu0 %v1183
      %2040 = vmatprep.subr.mxu0 %v1176
      %2041 = vmatpush1.msra.mxu0 %v1175
      %2042 = vmatprep.subr.mxu0 %v1168
      %2043 = vmatpush1.msra.mxu0 %v1167
      %2044 = vmatprep.subr.mxu0 %v1160
      %2045 = vmatpush1.msra.mxu0 %v1159
      %2046 = vmatprep.subr.mxu0 %v1152
      %2047 = vmatpush1.msra.mxu0 %v1151
      %2048 = vmatprep.subr.mxu0 %v1144
      %2049 = vmatpush1.msra.mxu0 %v1143
      %2050 = vmatprep.subr.mxu0 %v1136
      %2051 = vmatpush1.msra.mxu0 %v1135
      %2052 = vmatprep.subr.mxu0 %v1128
      %2053 = vmatpush1.msra.mxu0 %v1127
      %2054 = vmatprep.subr.mxu0 %v1120
      %2055 = vmatpush1.msra.mxu0 %v1119
      %2056 = vmatprep.subr.mxu0 %v1112
      %2057 = vmatpush1.msra.mxu0 %v1111
      %2058 = vmatprep.subr.mxu0 %v1104
      %2059 = vmatpush1.msra.mxu0 %v1103
      %2060 = vmatprep.subr.mxu0 %v1096
      %2061 = vmatpush1.msra.mxu0 %v1095
      %2062 = vmatprep.subr.mxu0 0.0
      %2063 = vmatpush2.msra.mxu0 0.0
      %2064 = vmatprep.subr.mxu0 0.0
      %2065 = vmatpush2.msra.mxu0 0.0
      %2066 = vmatprep.subr.mxu0 0.0
      %2067 = vmatpush2.msra.mxu0 0.0
      %2068 = vmatprep.subr.mxu0 0.0
      %2069 = vmatpush2.msra.mxu0 0.0
      %2070 = vmatprep.subr.mxu0 0.0
      %2071 = vmatpush2.msra.mxu0 0.0
      %2072 = vmatprep.subr.mxu0 0.0
      %2073 = vmatpush2.msra.mxu0 0.0
      %2074 = vmatprep.subr.mxu0 0.0
      %2075 = vmatpush2.msra.mxu0 0.0
      %2076 = vmatprep.subr.mxu0 0.0
      %2077 = vmatpush2.msra.mxu0 0.0
      %2078 = vmatprep.subr.mxu0 0.0
      %2079 = vmatpush2.msra.mxu0 0.0
      %2080 = vmatprep.subr.mxu0 0.0
      %2081 = vmatpush2.msra.mxu0 0.0
      %2082 = vmatprep.subr.mxu0 0.0
      %2083 = vmatpush2.msra.mxu0 0.0
      %2084 = vmatprep.subr.mxu0 0.0
      %2085 = vmatpush2.msra.mxu0 0.0
      %2086 = vmatprep.subr.mxu0 0.0
      %2087 = vmatpush2.msra.mxu0 0.0
      %2088 = vmatprep.subr.mxu0 0.0
      %2089 = vmatpush2.msra.mxu0 0.0
      %2090 = vmatprep.subr.mxu0 0.0
      %2091 = vmatpush2.msra.mxu0 0.0
      %2092 = vmatprep.subr.mxu0 0.0
      %2093 = vmatpush2.msra.mxu0 0.0
      %2094 = vmatprep.mubr.f32.mxu0 0.0
      %2095 = vmatmul.mubr.f32.gmra.mxu0 %v1057
      %v2096 = vpop.f32.mrf.mxu0
      %v2097 = vadd.f32 %v1246, %v2096
      %v2098 = vpop.f32.mrf.mxu0
      %v2099 = vadd.f32 %v1250, %v2098
      %2100 = vmatprep.mubr.f32.mxu0 0.0
      %2101 = vmatmul.mubr.f32.gmra.mxu0 %v1058
      %v2102 = vpop.f32.mrf.mxu0
      %v2103 = vadd.f32 %v1246, %v2102
      %v2104 = vpop.f32.mrf.mxu0
      %v2105 = vadd.f32 %v1250, %v2104
      %2106 = vmatprep.mubr.f32.mxu0 0.0
      %2107 = vmatmul.mubr.f32.gmra.mxu0 %v1059
      %v2108 = vpop.f32.mrf.mxu0
      %v2109 = vadd.f32 %v1246, %v2108
      %v2110 = vpop.f32.mrf.mxu0
      %v2111 = vadd.f32 %v1250, %v2110
      %2112 = vmatprep.mubr.f32.mxu0 0.0
      %2113 = vmatmul.mubr.f32.gmra.mxu0 %v1060
      %v2114 = vpop.f32.mrf.mxu0
      %v2115 = vadd.f32 %v1246, %v2114
      %v2116 = vpop.f32.mrf.mxu0
      %v2117 = vadd.f32 %v1250, %v2116
      %2118 = vmatprep.mubr.f32.mxu0 0.0
      %2119 = vmatmul.mubr.f32.gmra.mxu0 %v1061
      %v2120 = vpop.f32.mrf.mxu0
      %v2121 = vadd.f32 %v1246, %v2120
      %v2122 = vpop.f32.mrf.mxu0
      %v2123 = vadd.f32 %v1250, %v2122
      %2124 = vmatprep.mubr.f32.mxu0 0.0
      %2125 = vmatmul.mubr.f32.gmra.mxu0 %v1062
      %v2126 = vpop.f32.mrf.mxu0
      %v2127 = vadd.f32 %v1246, %v2126
      %v2128 = vpop.f32.mrf.mxu0
      %v2129 = vadd.f32 %v1250, %v2128
      %2130 = vmatprep.mubr.f32.mxu0 0.0
      %2131 = vmatmul.mubr.f32.gmra.mxu0 %v1063
      %v2132 = vpop.f32.mrf.mxu0
      %v2133 = vadd.f32 %v1246, %v2132
      %v2134 = vpop.f32.mrf.mxu0
      %v2135 = vadd.f32 %v1250, %v2134
      %2136 = vmatprep.mubr.f32.mxu0 0.0
      %2137 = vmatmul.mubr.f32.gmra.mxu0 %v1064
      %v2138 = vpop.f32.mrf.mxu0
      %v2139 = vadd.f32 %v1246, %v2138
      %v2140 = vpop.f32.mrf.mxu0
      %v2141 = vadd.f32 %v1250, %v2140
      %2142 = vmatprep.mubr.f32.mxu0 0.0
      %2143 = vmatmul.mubr.f32.gmra.mxu0 %v1065
      %v2144 = vpop.f32.mrf.mxu0
      %v2145 = vadd.f32 %v1246, %v2144
      %v2146 = vpop.f32.mrf.mxu0
      %v2147 = vadd.f32 %v1250, %v2146
      %2148 = vmatprep.mubr.f32.mxu0 0.0
      %2149 = vmatmul.mubr.f32.gmra.mxu0 %v1066
      %v2150 = vpop.f32.mrf.mxu0
      %v2151 = vadd.f32 %v1246, %v2150
      %v2152 = vpop.f32.mrf.mxu0
      %v2153 = vadd.f32 %v1250, %v2152
      %2154 = vmatprep.mubr.f32.mxu0 0.0
      %2155 = vmatmul.mubr.f32.gmra.mxu0 %v1067
      %v2156 = vpop.f32.mrf.mxu0
      %v2157 = vadd.f32 %v1246, %v2156
      %v2158 = vpop.f32.mrf.mxu0
      %v2159 = vadd.f32 %v1250, %v2158
      %2160 = vmatprep.mubr.f32.mxu0 0.0
      %2161 = vmatmul.mubr.f32.gmra.mxu0 %v1068
      %v2162 = vpop.f32.mrf.mxu0
      %v2163 = vadd.f32 %v1246, %v2162
      %v2164 = vpop.f32.mrf.mxu0
      %v2165 = vadd.f32 %v1250, %v2164
      %2166 = vmatprep.mubr.f32.mxu0 0.0
      %2167 = vmatmul.mubr.f32.gmra.mxu0 %v1069
      %v2168 = vpop.f32.mrf.mxu0
      %v2169 = vadd.f32 %v1246, %v2168
      %v2170 = vpop.f32.mrf.mxu0
      %v2171 = vadd.f32 %v1250, %v2170
      %2172 = vmatprep.mubr.f32.mxu0 0.0
      %2173 = vmatmul.mubr.f32.gmra.mxu0 %v1070
      %v2174 = vpop.f32.mrf.mxu0
      %v2175 = vadd.f32 %v1246, %v2174
      %v2176 = vpop.f32.mrf.mxu0
      %v2177 = vadd.f32 %v1250, %v2176
      %2178 = vmatprep.mubr.f32.mxu0 0.0
      %2179 = vmatmul.mubr.f32.gmra.mxu0 %v1071
      %v2180 = vpop.f32.mrf.mxu0
      %v2181 = vadd.f32 %v1246, %v2180
      %v2182 = vpop.f32.mrf.mxu0
      %v2183 = vadd.f32 %v1250, %v2182
      %2184 = vmatprep.mubr.f32.mxu0 0.0
      %2185 = vmatmul.mubr.f32.gmra.mxu0 %v1072
      %v2186 = vpop.f32.mrf.mxu0
      %v2187 = vadd.f32 %v1246, %v2186
      %v2188 = vpop.f32.mrf.mxu0
      %v2189 = vadd.f32 %v1250, %v2188
      %2190 = vmatprep.mubr.f32.mxu0 0.0
      %2191 = vmatmul.mubr.f32.gmra.mxu0 %v1073
      %v2192 = vpop.f32.mrf.mxu0
      %v2193 = vadd.f32 %v1246, %v2192
      %v2194 = vpop.f32.mrf.mxu0
      %v2195 = vadd.f32 %v1250, %v2194
      %2196 = vmatprep.mubr.f32.mxu0 0.0
      %2197 = vmatmul.mubr.f32.gmra.mxu0 %v1074
      %v2198 = vpop.f32.mrf.mxu0
      %v2199 = vadd.f32 %v1246, %v2198
      %v2200 = vpop.f32.mrf.mxu0
      %v2201 = vadd.f32 %v1250, %v2200
      %2202 = vmatprep.mubr.f32.mxu0 0.0
      %2203 = vmatmul.mubr.f32.gmra.mxu0 %v1075
      %v2204 = vpop.f32.mrf.mxu0
      %v2205 = vadd.f32 %v1246, %v2204
      %v2206 = vpop.f32.mrf.mxu0
      %v2207 = vadd.f32 %v1250, %v2206
      %2208 = vmatprep.mubr.f32.mxu0 0.0
      %2209 = vmatmul.mubr.f32.gmra.mxu0 %v1076
      %v2210 = vpop.f32.mrf.mxu0
      %v2211 = vadd.f32 %v1246, %v2210
      %v2212 = vpop.f32.mrf.mxu0
      %v2213 = vadd.f32 %v1250, %v2212
      %2214 = vmatprep.mubr.f32.mxu0 0.0
      %2215 = vmatmul.mubr.f32.gmra.mxu0 %v1077
      %v2216 = vpop.f32.mrf.mxu0
      %v2217 = vadd.f32 %v1246, %v2216
      %v2218 = vpop.f32.mrf.mxu0
      %v2219 = vadd.f32 %v1250, %v2218
      %2220 = vmatprep.mubr.f32.mxu0 0.0
      %2221 = vmatmul.mubr.f32.gmra.mxu0 %v1078
      %v2222 = vpop.f32.mrf.mxu0
      %v2223 = vadd.f32 %v1246, %v2222
      %v2224 = vpop.f32.mrf.mxu0
      %v2225 = vadd.f32 %v1250, %v2224
      %2226 = vmatprep.mubr.f32.mxu0 0.0
      %2227 = vmatmul.mubr.f32.gmra.mxu0 %v1079
      %v2228 = vpop.f32.mrf.mxu0
      %v2229 = vadd.f32 %v1246, %v2228
      %v2230 = vpop.f32.mrf.mxu0
      %v2231 = vadd.f32 %v1250, %v2230
      %2232 = vmatprep.mubr.f32.mxu0 0.0
      %2233 = vmatmul.mubr.f32.gmra.mxu0 %v1080
      %v2234 = vpop.f32.mrf.mxu0
      %v2235 = vadd.f32 %v1246, %v2234
      %v2236 = vpop.f32.mrf.mxu0
      %v2237 = vadd.f32 %v1250, %v2236
      %2238 = vmatprep.mubr.f32.mxu0 0.0
      %2239 = vmatmul.mubr.f32.gmra.mxu0 %v1081
      %v2240 = vpop.f32.mrf.mxu0
      %v2241 = vadd.f32 %v1246, %v2240
      %v2242 = vpop.f32.mrf.mxu0
      %v2243 = vadd.f32 %v1250, %v2242
      %2244 = vmatprep.mubr.f32.mxu0 0.0
      %2245 = vmatmul.mubr.f32.gmra.mxu0 %v1082
      %v2246 = vpop.f32.mrf.mxu0
      %v2247 = vadd.f32 %v1246, %v2246
      %v2248 = vpop.f32.mrf.mxu0
      %v2249 = vadd.f32 %v1250, %v2248
      %2250 = vmatprep.mubr.f32.mxu0 0.0
      %2251 = vmatmul.mubr.f32.gmra.mxu0 %v1083
      %v2252 = vpop.f32.mrf.mxu0
      %v2253 = vadd.f32 %v1246, %v2252
      %v2254 = vpop.f32.mrf.mxu0
      %v2255 = vadd.f32 %v1250, %v2254
      %2256 = vmatprep.mubr.f32.mxu0 0.0
      %2257 = vmatmul.mubr.f32.gmra.mxu0 %v1084
      %v2258 = vpop.f32.mrf.mxu0
      %v2259 = vadd.f32 %v1246, %v2258
      %v2260 = vpop.f32.mrf.mxu0
      %v2261 = vadd.f32 %v1250, %v2260
      %2262 = vmatprep.mubr.f32.mxu0 0.0
      %2263 = vmatmul.mubr.f32.gmra.mxu0 %v1085
      %v2264 = vpop.f32.mrf.mxu0
      %v2265 = vadd.f32 %v1246, %v2264
      %v2266 = vpop.f32.mrf.mxu0
      %v2267 = vadd.f32 %v1250, %v2266
      %2268 = vmatprep.mubr.f32.mxu0 0.0
      %2269 = vmatmul.mubr.f32.gmra.mxu0 %v1086
      %v2270 = vpop.f32.mrf.mxu0
      %v2271 = vadd.f32 %v1246, %v2270
      %v2272 = vpop.f32.mrf.mxu0
      %v2273 = vadd.f32 %v1250, %v2272
      %2274 = vmatprep.mubr.f32.mxu0 0.0
      %2275 = vmatmul.mubr.f32.gmra.mxu0 %v1087
      %v2276 = vpop.f32.mrf.mxu0
      %v2277 = vadd.f32 %v1246, %v2276
      %v2278 = vpop.f32.mrf.mxu0
      %v2279 = vadd.f32 %v1250, %v2278
      %2280 = vmatprep.mubr.f32.mxu0 0.0
      %2281 = vmatmul.mubr.f32.gmra.mxu0 %v1088
      %v2282 = vpop.f32.mrf.mxu0
      %v2283 = vadd.f32 %v1246, %v2282
      %v2284 = vpop.f32.mrf.mxu0
      %v2285 = vadd.f32 %v1250, %v2284
      %2286 = vdwg.mxu0
      %v2287 = vmax.f32 %v1326, 0.0
      %v2288 = vmax.f32 %v1328, 0.0
      %v2289 = vmax.f32 %v1583, 0.0
      %v2290 = vmax.f32 %v1585, 0.0
      %v2291 = vmax.f32 %v1840, 0.0
      %v2292 = vmax.f32 %v1842, 0.0
      %v2293 = vmax.f32 %v2097, 0.0
      %v2294 = vmax.f32 %v2099, 0.0
      %v2295 = vmax.f32 %v1332, 0.0
      %v2296 = vmax.f32 %v1334, 0.0
      %v2297 = vmax.f32 %v1589, 0.0
      %v2298 = vmax.f32 %v1591, 0.0
      %v2299 = vmax.f32 %v1846, 0.0
      %v2300 = vmax.f32 %v1848, 0.0
      %v2301 = vmax.f32 %v2103, 0.0
      %v2302 = vmax.f32 %v2105, 0.0
      %v2303 = vmax.f32 %v1338, 0.0
      %v2304 = vmax.f32 %v1340, 0.0
      %v2305 = vmax.f32 %v1595, 0.0
      %v2306 = vmax.f32 %v1597, 0.0
      %v2307 = vmax.f32 %v1852, 0.0
      %v2308 = vmax.f32 %v1854, 0.0
      %v2309 = vmax.f32 %v2109, 0.0
      %v2310 = vmax.f32 %v2111, 0.0
      %v2311 = vmax.f32 %v1344, 0.0
      %v2312 = vmax.f32 %v1346, 0.0
      %v2313 = vmax.f32 %v1601, 0.0
      %v2314 = vmax.f32 %v1603, 0.0
      %v2315 = vmax.f32 %v1858, 0.0
      %v2316 = vmax.f32 %v1860, 0.0
      %v2317 = vmax.f32 %v2115, 0.0
      %v2318 = vmax.f32 %v2117, 0.0
      %v2319 = vmax.f32 %v1350, 0.0
      %v2320 = vmax.f32 %v1352, 0.0
      %v2321 = vmax.f32 %v1607, 0.0
      %v2322 = vmax.f32 %v1609, 0.0
      %v2323 = vmax.f32 %v1864, 0.0
      %v2324 = vmax.f32 %v1866, 0.0
      %v2325 = vmax.f32 %v2121, 0.0
      %v2326 = vmax.f32 %v2123, 0.0
      %v2327 = vmax.f32 %v1356, 0.0
      %v2328 = vmax.f32 %v1358, 0.0
      %v2329 = vmax.f32 %v1613, 0.0
      %v2330 = vmax.f32 %v1615, 0.0
      %v2331 = vmax.f32 %v1870, 0.0
      %v2332 = vmax.f32 %v1872, 0.0
      %v2333 = vmax.f32 %v2127, 0.0
      %v2334 = vmax.f32 %v2129, 0.0
      %v2335 = vmax.f32 %v1362, 0.0
      %v2336 = vmax.f32 %v1364, 0.0
      %v2337 = vmax.f32 %v1619, 0.0
      %v2338 = vmax.f32 %v1621, 0.0
      %v2339 = vmax.f32 %v1876, 0.0
      %v2340 = vmax.f32 %v1878, 0.0
      %v2341 = vmax.f32 %v2133, 0.0
      %v2342 = vmax.f32 %v2135, 0.0
      %v2343 = vmax.f32 %v1368, 0.0
      %v2344 = vmax.f32 %v1370, 0.0
      %v2345 = vmax.f32 %v1625, 0.0
      %v2346 = vmax.f32 %v1627, 0.0
      %v2347 = vmax.f32 %v1882, 0.0
      %v2348 = vmax.f32 %v1884, 0.0
      %v2349 = vmax.f32 %v2139, 0.0
      %v2350 = vmax.f32 %v2141, 0.0
      %v2351 = vmax.f32 %v1374, 0.0
      %v2352 = vmax.f32 %v1376, 0.0
      %v2353 = vmax.f32 %v1631, 0.0
      %v2354 = vmax.f32 %v1633, 0.0
      %v2355 = vmax.f32 %v1888, 0.0
      %v2356 = vmax.f32 %v1890, 0.0
      %v2357 = vmax.f32 %v2145, 0.0
      %v2358 = vmax.f32 %v2147, 0.0
      %v2359 = vmax.f32 %v1380, 0.0
      %v2360 = vmax.f32 %v1382, 0.0
      %v2361 = vmax.f32 %v1637, 0.0
      %v2362 = vmax.f32 %v1639, 0.0
      %v2363 = vmax.f32 %v1894, 0.0
      %v2364 = vmax.f32 %v1896, 0.0
      %v2365 = vmax.f32 %v2151, 0.0
      %v2366 = vmax.f32 %v2153, 0.0
      %v2367 = vmax.f32 %v1386, 0.0
      %v2368 = vmax.f32 %v1388, 0.0
      %v2369 = vmax.f32 %v1643, 0.0
      %v2370 = vmax.f32 %v1645, 0.0
      %v2371 = vmax.f32 %v1900, 0.0
      %v2372 = vmax.f32 %v1902, 0.0
      %v2373 = vmax.f32 %v2157, 0.0
      %v2374 = vmax.f32 %v2159, 0.0
      %v2375 = vmax.f32 %v1392, 0.0
      %v2376 = vmax.f32 %v1394, 0.0
      %v2377 = vmax.f32 %v1649, 0.0
      %v2378 = vmax.f32 %v1651, 0.0
      %v2379 = vmax.f32 %v1906, 0.0
      %v2380 = vmax.f32 %v1908, 0.0
      %v2381 = vmax.f32 %v2163, 0.0
      %v2382 = vmax.f32 %v2165, 0.0
      %v2383 = vmax.f32 %v1398, 0.0
      %v2384 = vmax.f32 %v1400, 0.0
      %v2385 = vmax.f32 %v1655, 0.0
      %v2386 = vmax.f32 %v1657, 0.0
      %v2387 = vmax.f32 %v1912, 0.0
      %v2388 = vmax.f32 %v1914, 0.0
      %v2389 = vmax.f32 %v2169, 0.0
      %v2390 = vmax.f32 %v2171, 0.0
      %v2391 = vmax.f32 %v1404, 0.0
      %v2392 = vmax.f32 %v1406, 0.0
      %v2393 = vmax.f32 %v1661, 0.0
      %v2394 = vmax.f32 %v1663, 0.0
      %v2395 = vmax.f32 %v1918, 0.0
      %v2396 = vmax.f32 %v1920, 0.0
      %v2397 = vmax.f32 %v2175, 0.0
      %v2398 = vmax.f32 %v2177, 0.0
      %v2399 = vmax.f32 %v1410, 0.0
      %v2400 = vmax.f32 %v1412, 0.0
      %v2401 = vmax.f32 %v1667, 0.0
      %v2402 = vmax.f32 %v1669, 0.0
      %v2403 = vmax.f32 %v1924, 0.0
      %v2404 = vmax.f32 %v1926, 0.0
      %v2405 = vmax.f32 %v2181, 0.0
      %v2406 = vmax.f32 %v2183, 0.0
      %v2407 = vmax.f32 %v1416, 0.0
      %v2408 = vmax.f32 %v1418, 0.0
      %v2409 = vmax.f32 %v1673, 0.0
      %v2410 = vmax.f32 %v1675, 0.0
      %v2411 = vmax.f32 %v1930, 0.0
      %v2412 = vmax.f32 %v1932, 0.0
      %v2413 = vmax.f32 %v2187, 0.0
      %v2414 = vmax.f32 %v2189, 0.0
      %v2415 = vmax.f32 %v1422, 0.0
      %v2416 = vmax.f32 %v1424, 0.0
      %v2417 = vmax.f32 %v1679, 0.0
      %v2418 = vmax.f32 %v1681, 0.0
      %v2419 = vmax.f32 %v1936, 0.0
      %v2420 = vmax.f32 %v1938, 0.0
      %v2421 = vmax.f32 %v2193, 0.0
      %v2422 = vmax.f32 %v2195, 0.0
      %v2423 = vmax.f32 %v1428, 0.0
      %v2424 = vmax.f32 %v1430, 0.0
      %v2425 = vmax.f32 %v1685, 0.0
      %v2426 = vmax.f32 %v1687, 0.0
      %v2427 = vmax.f32 %v1942, 0.0
      %v2428 = vmax.f32 %v1944, 0.0
      %v2429 = vmax.f32 %v2199, 0.0
      %v2430 = vmax.f32 %v2201, 0.0
      %v2431 = vmax.f32 %v1434, 0.0
      %v2432 = vmax.f32 %v1436, 0.0
      %v2433 = vmax.f32 %v1691, 0.0
      %v2434 = vmax.f32 %v1693, 0.0
      %v2435 = vmax.f32 %v1948, 0.0
      %v2436 = vmax.f32 %v1950, 0.0
      %v2437 = vmax.f32 %v2205, 0.0
      %v2438 = vmax.f32 %v2207, 0.0
      %v2439 = vmax.f32 %v1440, 0.0
      %v2440 = vmax.f32 %v1442, 0.0
      %v2441 = vmax.f32 %v1697, 0.0
      %v2442 = vmax.f32 %v1699, 0.0
      %v2443 = vmax.f32 %v1954, 0.0
      %v2444 = vmax.f32 %v1956, 0.0
      %v2445 = vmax.f32 %v2211, 0.0
      %v2446 = vmax.f32 %v2213, 0.0
      %v2447 = vmax.f32 %v1446, 0.0
      %v2448 = vmax.f32 %v1448, 0.0
      %v2449 = vmax.f32 %v1703, 0.0
      %v2450 = vmax.f32 %v1705, 0.0
      %v2451 = vmax.f32 %v1960, 0.0
      %v2452 = vmax.f32 %v1962, 0.0
      %v2453 = vmax.f32 %v2217, 0.0
      %v2454 = vmax.f32 %v2219, 0.0
      %v2455 = vmax.f32 %v1452, 0.0
      %v2456 = vmax.f32 %v1454, 0.0
      %v2457 = vmax.f32 %v1709, 0.0
      %v2458 = vmax.f32 %v1711, 0.0
      %v2459 = vmax.f32 %v1966, 0.0
      %v2460 = vmax.f32 %v1968, 0.0
      %v2461 = vmax.f32 %v2223, 0.0
      %v2462 = vmax.f32 %v2225, 0.0
      %v2463 = vmax.f32 %v1458, 0.0
      %v2464 = vmax.f32 %v1460, 0.0
      %v2465 = vmax.f32 %v1715, 0.0
      %v2466 = vmax.f32 %v1717, 0.0
      %v2467 = vmax.f32 %v1972, 0.0
      %v2468 = vmax.f32 %v1974, 0.0
      %v2469 = vmax.f32 %v2229, 0.0
      %v2470 = vmax.f32 %v2231, 0.0
      %v2471 = vmax.f32 %v1464, 0.0
      %v2472 = vmax.f32 %v1466, 0.0
      %v2473 = vmax.f32 %v1721, 0.0
      %v2474 = vmax.f32 %v1723, 0.0
      %v2475 = vmax.f32 %v1978, 0.0
      %v2476 = vmax.f32 %v1980, 0.0
      %v2477 = vmax.f32 %v2235, 0.0
      %v2478 = vmax.f32 %v2237, 0.0
      %v2479 = vmax.f32 %v1470, 0.0
      %v2480 = vmax.f32 %v1472, 0.0
      %v2481 = vmax.f32 %v1727, 0.0
      %v2482 = vmax.f32 %v1729, 0.0
      %v2483 = vmax.f32 %v1984, 0.0
      %v2484 = vmax.f32 %v1986, 0.0
      %v2485 = vmax.f32 %v2241, 0.0
      %v2486 = vmax.f32 %v2243, 0.0
      %v2487 = vmax.f32 %v1476, 0.0
      %v2488 = vmax.f32 %v1478, 0.0
      %v2489 = vmax.f32 %v1733, 0.0
      %v2490 = vmax.f32 %v1735, 0.0
      %v2491 = vmax.f32 %v1990, 0.0
      %v2492 = vmax.f32 %v1992, 0.0
      %v2493 = vmax.f32 %v2247, 0.0
      %v2494 = vmax.f32 %v2249, 0.0
      %v2495 = vmax.f32 %v1482, 0.0
      %v2496 = vmax.f32 %v1484, 0.0
      %v2497 = vmax.f32 %v1739, 0.0
      %v2498 = vmax.f32 %v1741, 0.0
      %v2499 = vmax.f32 %v1996, 0.0
      %v2500 = vmax.f32 %v1998, 0.0
      %v2501 = vmax.f32 %v2253, 0.0
      %v2502 = vmax.f32 %v2255, 0.0
      %v2503 = vmax.f32 %v1488, 0.0
      %v2504 = vmax.f32 %v1490, 0.0
      %v2505 = vmax.f32 %v1745, 0.0
      %v2506 = vmax.f32 %v1747, 0.0
      %v2507 = vmax.f32 %v2002, 0.0
      %v2508 = vmax.f32 %v2004, 0.0
      %v2509 = vmax.f32 %v2259, 0.0
      %v2510 = vmax.f32 %v2261, 0.0
      %v2511 = vmax.f32 %v1494, 0.0
      %v2512 = vmax.f32 %v1496, 0.0
      %v2513 = vmax.f32 %v1751, 0.0
      %v2514 = vmax.f32 %v1753, 0.0
      %v2515 = vmax.f32 %v2008, 0.0
      %v2516 = vmax.f32 %v2010, 0.0
      %v2517 = vmax.f32 %v2265, 0.0
      %v2518 = vmax.f32 %v2267, 0.0
      %v2519 = vmax.f32 %v1500, 0.0
      %v2520 = vmax.f32 %v1502, 0.0
      %v2521 = vmax.f32 %v1757, 0.0
      %v2522 = vmax.f32 %v1759, 0.0
      %v2523 = vmax.f32 %v2014, 0.0
      %v2524 = vmax.f32 %v2016, 0.0
      %v2525 = vmax.f32 %v2271, 0.0
      %v2526 = vmax.f32 %v2273, 0.0
      %v2527 = vmax.f32 %v1506, 0.0
      %v2528 = vmax.f32 %v1508, 0.0
      %v2529 = vmax.f32 %v1763, 0.0
      %v2530 = vmax.f32 %v1765, 0.0
      %v2531 = vmax.f32 %v2020, 0.0
      %v2532 = vmax.f32 %v2022, 0.0
      %v2533 = vmax.f32 %v2277, 0.0
      %v2534 = vmax.f32 %v2279, 0.0
      %v2535 = vmax.f32 %v1512, 0.0
      %v2536 = vmax.f32 %v1514, 0.0
      %v2537 = vmax.f32 %v1769, 0.0
      %v2538 = vmax.f32 %v1771, 0.0
      %v2539 = vmax.f32 %v2026, 0.0
      %v2540 = vmax.f32 %v2028, 0.0
      %v2541 = vmax.f32 %v2283, 0.0
      %v2542 = vmax.f32 %v2285, 0.0
      %v2543 = vmax.f32 %v2287, %v2295
      %v2544 = vmax.f32 %v2543, %v2303
      %v2545 = vmax.f32 %v2544, %v2311
      %v2546 = vmax.f32 %v2545, %v2319
      %v2547 = vmax.f32 %v2546, %v2327
      %v2548 = vmax.f32 %v2547, %v2335
      %v2549 = vmax.f32 %v2548, %v2343
      %v2550 = vmax.f32 %v2549, %v2351
      %v2551 = vmax.f32 %v2550, %v2359
      %v2552 = vmax.f32 %v2551, %v2367
      %v2553 = vmax.f32 %v2552, %v2375
      %v2554 = vmax.f32 %v2553, %v2383
      %v2555 = vmax.f32 %v2554, %v2391
      %v2556 = vmax.f32 %v2555, %v2399
      %v2557 = vmax.f32 %v2556, %v2407
      %v2558 = vmax.f32 %v2557, %v2415
      %v2559 = vmax.f32 %v2558, %v2423
      %v2560 = vmax.f32 %v2559, %v2431
      %v2561 = vmax.f32 %v2560, %v2439
      %v2562 = vmax.f32 %v2561, %v2447
      %v2563 = vmax.f32 %v2562, %v2455
      %v2564 = vmax.f32 %v2563, %v2463
      %v2565 = vmax.f32 %v2564, %v2471
      %v2566 = vmax.f32 %v2565, %v2479
      %v2567 = vmax.f32 %v2566, %v2487
      %v2568 = vmax.f32 %v2567, %v2495
      %v2569 = vmax.f32 %v2568, %v2503
      %v2570 = vmax.f32 %v2569, %v2511
      %v2571 = vmax.f32 %v2570, %v2519
      %v2572 = vmax.f32 %v2571, %v2527
      %v2573 = vmax.f32 %v2572, %v2535
      %v2574 = vrot.slane %v2573, 4
      %v2575 = vmax.f32 %v2573, %v2574
      %v2576 = vrot.slane %v2575, 2
      %v2577 = vmax.f32 %v2575, %v2576
      %v2578 = vrot.slane %v2577, 1
      %v2579 = vmax.f32 %v2577, %v2578
      %v2580 = vmax.f32 %v2288, %v2296
      %v2581 = vmax.f32 %v2580, %v2304
      %v2582 = vmax.f32 %v2581, %v2312
      %v2583 = vmax.f32 %v2582, %v2320
      %v2584 = vmax.f32 %v2583, %v2328
      %v2585 = vmax.f32 %v2584, %v2336
      %v2586 = vmax.f32 %v2585, %v2344
      %v2587 = vmax.f32 %v2586, %v2352
      %v2588 = vmax.f32 %v2587, %v2360
      %v2589 = vmax.f32 %v2588, %v2368
      %v2590 = vmax.f32 %v2589, %v2376
      %v2591 = vmax.f32 %v2590, %v2384
      %v2592 = vmax.f32 %v2591, %v2392
      %v2593 = vmax.f32 %v2592, %v2400
      %v2594 = vmax.f32 %v2593, %v2408
      %v2595 = vmax.f32 %v2594, %v2416
      %v2596 = vmax.f32 %v2595, %v2424
      %v2597 = vmax.f32 %v2596, %v2432
      %v2598 = vmax.f32 %v2597, %v2440
      %v2599 = vmax.f32 %v2598, %v2448
      %v2600 = vmax.f32 %v2599, %v2456
      %v2601 = vmax.f32 %v2600, %v2464
      %v2602 = vmax.f32 %v2601, %v2472
      %v2603 = vmax.f32 %v2602, %v2480
      %v2604 = vmax.f32 %v2603, %v2488
      %v2605 = vmax.f32 %v2604, %v2496
      %v2606 = vmax.f32 %v2605, %v2504
      %v2607 = vmax.f32 %v2606, %v2512
      %v2608 = vmax.f32 %v2607, %v2520
      %v2609 = vmax.f32 %v2608, %v2528
      %v2610 = vmax.f32 %v2609, %v2536
      %v2611 = vrot.slane %v2610, 4
      %v2612 = vmax.f32 %v2610, %v2611
      %v2613 = vrot.slane %v2612, 2
      %v2614 = vmax.f32 %v2612, %v2613
      %v2615 = vrot.slane %v2614, 1
      %v2616 = vmax.f32 %v2614, %v2615
      %v2617 = vmax.f32 %v2289, %v2297
      %v2618 = vmax.f32 %v2617, %v2305
      %v2619 = vmax.f32 %v2618, %v2313
      %v2620 = vmax.f32 %v2619, %v2321
      %v2621 = vmax.f32 %v2620, %v2329
      %v2622 = vmax.f32 %v2621, %v2337
      %v2623 = vmax.f32 %v2622, %v2345
      %v2624 = vmax.f32 %v2623, %v2353
      %v2625 = vmax.f32 %v2624, %v2361
      %v2626 = vmax.f32 %v2625, %v2369
      %v2627 = vmax.f32 %v2626, %v2377
      %v2628 = vmax.f32 %v2627, %v2385
      %v2629 = vmax.f32 %v2628, %v2393
      %v2630 = vmax.f32 %v2629, %v2401
      %v2631 = vmax.f32 %v2630, %v2409
      %v2632 = vmax.f32 %v2631, %v2417
      %v2633 = vmax.f32 %v2632, %v2425
      %v2634 = vmax.f32 %v2633, %v2433
      %v2635 = vmax.f32 %v2634, %v2441
      %v2636 = vmax.f32 %v2635, %v2449
      %v2637 = vmax.f32 %v2636, %v2457
      %v2638 = vmax.f32 %v2637, %v2465
      %v2639 = vmax.f32 %v2638, %v2473
      %v2640 = vmax.f32 %v2639, %v2481
      %v2641 = vmax.f32 %v2640, %v2489
      %v2642 = vmax.f32 %v2641, %v2497
      %v2643 = vmax.f32 %v2642, %v2505
      %v2644 = vmax.f32 %v2643, %v2513
      %v2645 = vmax.f32 %v2644, %v2521
      %v2646 = vmax.f32 %v2645, %v2529
      %v2647 = vmax.f32 %v2646, %v2537
      %v2648 = vrot.slane %v2647, 4
      %v2649 = vmax.f32 %v2647, %v2648
      %v2650 = vrot.slane %v2649, 2
      %v2651 = vmax.f32 %v2649, %v2650
      %v2652 = vrot.slane %v2651, 1
      %v2653 = vmax.f32 %v2651, %v2652
      %v2654 = vmax.f32 %v2290, %v2298
      %v2655 = vmax.f32 %v2654, %v2306
      %v2656 = vmax.f32 %v2655, %v2314
      %v2657 = vmax.f32 %v2656, %v2322
      %v2658 = vmax.f32 %v2657, %v2330
      %v2659 = vmax.f32 %v2658, %v2338
      %v2660 = vmax.f32 %v2659, %v2346
      %v2661 = vmax.f32 %v2660, %v2354
      %v2662 = vmax.f32 %v2661, %v2362
      %v2663 = vmax.f32 %v2662, %v2370
      %v2664 = vmax.f32 %v2663, %v2378
      %v2665 = vmax.f32 %v2664, %v2386
      %v2666 = vmax.f32 %v2665, %v2394
      %v2667 = vmax.f32 %v2666, %v2402
      %v2668 = vmax.f32 %v2667, %v2410
      %v2669 = vmax.f32 %v2668, %v2418
      %v2670 = vmax.f32 %v2669, %v2426
      %v2671 = vmax.f32 %v2670, %v2434
      %v2672 = vmax.f32 %v2671, %v2442
      %v2673 = vmax.f32 %v2672, %v2450
      %v2674 = vmax.f32 %v2673, %v2458
      %v2675 = vmax.f32 %v2674, %v2466
      %v2676 = vmax.f32 %v2675, %v2474
      %v2677 = vmax.f32 %v2676, %v2482
      %v2678 = vmax.f32 %v2677, %v2490
      %v2679 = vmax.f32 %v2678, %v2498
      %v2680 = vmax.f32 %v2679, %v2506
      %v2681 = vmax.f32 %v2680, %v2514
      %v2682 = vmax.f32 %v2681, %v2522
      %v2683 = vmax.f32 %v2682, %v2530
      %v2684 = vmax.f32 %v2683, %v2538
      %v2685 = vrot.slane %v2684, 4
      %v2686 = vmax.f32 %v2684, %v2685
      %v2687 = vrot.slane %v2686, 2
      %v2688 = vmax.f32 %v2686, %v2687
      %v2689 = vrot.slane %v2688, 1
      %v2690 = vmax.f32 %v2688, %v2689
      %v2691 = vmax.f32 %v2291, %v2299
      %v2692 = vmax.f32 %v2691, %v2307
      %v2693 = vmax.f32 %v2692, %v2315
      %v2694 = vmax.f32 %v2693, %v2323
      %v2695 = vmax.f32 %v2694, %v2331
      %v2696 = vmax.f32 %v2695, %v2339
      %v2697 = vmax.f32 %v2696, %v2347
      %v2698 = vmax.f32 %v2697, %v2355
      %v2699 = vmax.f32 %v2698, %v2363
      %v2700 = vmax.f32 %v2699, %v2371
      %v2701 = vmax.f32 %v2700, %v2379
      %v2702 = vmax.f32 %v2701, %v2387
      %v2703 = vmax.f32 %v2702, %v2395
      %v2704 = vmax.f32 %v2703, %v2403
      %v2705 = vmax.f32 %v2704, %v2411
      %v2706 = vmax.f32 %v2705, %v2419
      %v2707 = vmax.f32 %v2706, %v2427
      %v2708 = vmax.f32 %v2707, %v2435
      %v2709 = vmax.f32 %v2708, %v2443
      %v2710 = vmax.f32 %v2709, %v2451
      %v2711 = vmax.f32 %v2710, %v2459
      %v2712 = vmax.f32 %v2711, %v2467
      %v2713 = vmax.f32 %v2712, %v2475
      %v2714 = vmax.f32 %v2713, %v2483
      %v2715 = vmax.f32 %v2714, %v2491
      %v2716 = vmax.f32 %v2715, %v2499
      %v2717 = vmax.f32 %v2716, %v2507
      %v2718 = vmax.f32 %v2717, %v2515
      %v2719 = vmax.f32 %v2718, %v2523
      %v2720 = vmax.f32 %v2719, %v2531
      %v2721 = vmax.f32 %v2720, %v2539
      %v2722 = vrot.slane %v2721, 4
      %v2723 = vmax.f32 %v2721, %v2722
      %v2724 = vrot.slane %v2723, 2
      %v2725 = vmax.f32 %v2723, %v2724
      %v2726 = vrot.slane %v2725, 1
      %v2727 = vmax.f32 %v2725, %v2726
      %v2728 = vmax.f32 %v2292, %v2300
      %v2729 = vmax.f32 %v2728, %v2308
      %v2730 = vmax.f32 %v2729, %v2316
      %v2731 = vmax.f32 %v2730, %v2324
      %v2732 = vmax.f32 %v2731, %v2332
      %v2733 = vmax.f32 %v2732, %v2340
      %v2734 = vmax.f32 %v2733, %v2348
      %v2735 = vmax.f32 %v2734, %v2356
      %v2736 = vmax.f32 %v2735, %v2364
      %v2737 = vmax.f32 %v2736, %v2372
      %v2738 = vmax.f32 %v2737, %v2380
      %v2739 = vmax.f32 %v2738, %v2388
      %v2740 = vmax.f32 %v2739, %v2396
      %v2741 = vmax.f32 %v2740, %v2404
      %v2742 = vmax.f32 %v2741, %v2412
      %v2743 = vmax.f32 %v2742, %v2420
      %v2744 = vmax.f32 %v2743, %v2428
      %v2745 = vmax.f32 %v2744, %v2436
      %v2746 = vmax.f32 %v2745, %v2444
      %v2747 = vmax.f32 %v2746, %v2452
      %v2748 = vmax.f32 %v2747, %v2460
      %v2749 = vmax.f32 %v2748, %v2468
      %v2750 = vmax.f32 %v2749, %v2476
      %v2751 = vmax.f32 %v2750, %v2484
      %v2752 = vmax.f32 %v2751, %v2492
      %v2753 = vmax.f32 %v2752, %v2500
      %v2754 = vmax.f32 %v2753, %v2508
      %v2755 = vmax.f32 %v2754, %v2516
      %v2756 = vmax.f32 %v2755, %v2524
      %v2757 = vmax.f32 %v2756, %v2532
      %v2758 = vmax.f32 %v2757, %v2540
      %v2759 = vrot.slane %v2758, 4
      %v2760 = vmax.f32 %v2758, %v2759
      %v2761 = vrot.slane %v2760, 2
      %v2762 = vmax.f32 %v2760, %v2761
      %v2763 = vrot.slane %v2762, 1
      %v2764 = vmax.f32 %v2762, %v2763
      %v2765 = vmax.f32 %v2293, %v2301
      %v2766 = vmax.f32 %v2765, %v2309
      %v2767 = vmax.f32 %v2766, %v2317
      %v2768 = vmax.f32 %v2767, %v2325
      %v2769 = vmax.f32 %v2768, %v2333
      %v2770 = vmax.f32 %v2769, %v2341
      %v2771 = vmax.f32 %v2770, %v2349
      %v2772 = vmax.f32 %v2771, %v2357
      %v2773 = vmax.f32 %v2772, %v2365
      %v2774 = vmax.f32 %v2773, %v2373
      %v2775 = vmax.f32 %v2774, %v2381
      %v2776 = vmax.f32 %v2775, %v2389
      %v2777 = vmax.f32 %v2776, %v2397
      %v2778 = vmax.f32 %v2777, %v2405
      %v2779 = vmax.f32 %v2778, %v2413
      %v2780 = vmax.f32 %v2779, %v2421
      %v2781 = vmax.f32 %v2780, %v2429
      %v2782 = vmax.f32 %v2781, %v2437
      %v2783 = vmax.f32 %v2782, %v2445
      %v2784 = vmax.f32 %v2783, %v2453
      %v2785 = vmax.f32 %v2784, %v2461
      %v2786 = vmax.f32 %v2785, %v2469
      %v2787 = vmax.f32 %v2786, %v2477
      %v2788 = vmax.f32 %v2787, %v2485
      %v2789 = vmax.f32 %v2788, %v2493
      %v2790 = vmax.f32 %v2789, %v2501
      %v2791 = vmax.f32 %v2790, %v2509
      %v2792 = vmax.f32 %v2791, %v2517
      %v2793 = vmax.f32 %v2792, %v2525
      %v2794 = vmax.f32 %v2793, %v2533
      %v2795 = vmax.f32 %v2794, %v2541
      %v2796 = vrot.slane %v2795, 4
      %v2797 = vmax.f32 %v2795, %v2796
      %v2798 = vrot.slane %v2797, 2
      %v2799 = vmax.f32 %v2797, %v2798
      %v2800 = vrot.slane %v2799, 1
      %v2801 = vmax.f32 %v2799, %v2800
      %v2802 = vmax.f32 %v2294, %v2302
      %v2803 = vmax.f32 %v2802, %v2310
      %v2804 = vmax.f32 %v2803, %v2318
      %v2805 = vmax.f32 %v2804, %v2326
      %v2806 = vmax.f32 %v2805, %v2334
      %v2807 = vmax.f32 %v2806, %v2342
      %v2808 = vmax.f32 %v2807, %v2350
      %v2809 = vmax.f32 %v2808, %v2358
      %v2810 = vmax.f32 %v2809, %v2366
      %v2811 = vmax.f32 %v2810, %v2374
      %v2812 = vmax.f32 %v2811, %v2382
      %v2813 = vmax.f32 %v2812, %v2390
      %v2814 = vmax.f32 %v2813, %v2398
      %v2815 = vmax.f32 %v2814, %v2406
      %v2816 = vmax.f32 %v2815, %v2414
      %v2817 = vmax.f32 %v2816, %v2422
      %v2818 = vmax.f32 %v2817, %v2430
      %v2819 = vmax.f32 %v2818, %v2438
      %v2820 = vmax.f32 %v2819, %v2446
      %v2821 = vmax.f32 %v2820, %v2454
      %v2822 = vmax.f32 %v2821, %v2462
      %v2823 = vmax.f32 %v2822, %v2470
      %v2824 = vmax.f32 %v2823, %v2478
      %v2825 = vmax.f32 %v2824, %v2486
      %v2826 = vmax.f32 %v2825, %v2494
      %v2827 = vmax.f32 %v2826, %v2502
      %v2828 = vmax.f32 %v2827, %v2510
      %v2829 = vmax.f32 %v2828, %v2518
      %v2830 = vmax.f32 %v2829, %v2526
      %v2831 = vmax.f32 %v2830, %v2534
      %v2832 = vmax.f32 %v2831, %v2542
      %v2833 = vrot.slane %v2832, 4
      %v2834 = vmax.f32 %v2832, %v2833
      %v2835 = vrot.slane %v2834, 2
      %v2836 = vmax.f32 %v2834, %v2835
      %v2837 = vrot.slane %v2836, 1
      %v2838 = vmax.f32 %v2836, %v2837
      %p2839 = scmp.eq.s32.totalorder %s23, 0
      // Predicated region
      $region49: #{pointnet_cls_forward.4} parent=47 // pred_check
        %p2840 = pneg %p2839
      $region50: #{pointnet_cls_forward.4} parent=47 // pred_check_branch
        %2842 = sbr.rel (%p2840) target = $region52
      $region51: #{pointnet_cls_forward.4} parent=47 // pred_region
        %v2851 = vcombine.low %v2579, %v2616
        %v2852 = vcombine.low %v2653, %v2690
        %v2853 = vcombine.low %v2727, %v2764
        %v2854 = vcombine.low %v2801, %v2838
        %v2856 = vunpack.c.l.s4 1966171168
        %v2857 = vunpack.c.0.s8 %v2856
        %v2858 = vlaneseq
        %v2859 = vshrl.u32 %v2858, 7
        %v2860 = vsub.s32 %v2857, %v2859
        %v2861 = vrot.slane %v2851, %v2860
        %v2863 = vunpack.c.l.s4 1966171168
        %v2864 = vunpack.c.0.s8 %v2863
        %v2865 = vlaneseq
        %v2866 = vshrl.u32 %v2865, 7
        %v2867 = vsub.s32 %v2864, %v2866
        %v2868 = vrot.slane %v2852, %v2867
        %v2870 = vunpack.c.l.s4 1966171168
        %v2871 = vunpack.c.0.s8 %v2870
        %v2872 = vlaneseq
        %v2873 = vshrl.u32 %v2872, 7
        %v2874 = vsub.s32 %v2871, %v2873
        %v2875 = vrot.slane %v2853, %v2874
        %v2877 = vunpack.c.l.s4 1966171168
        %v2878 = vunpack.c.0.s8 %v2877
        %v2879 = vlaneseq
        %v2880 = vshrl.u32 %v2879, 7
        %v2881 = vsub.s32 %v2878, %v2880
        %v2882 = vrot.slane %v2854, %v2881
        %v2883 = vcombine.low %v2861, %v2868
        %v2884 = vcombine.low %v2875, %v2882
        %v2886 = vunpack.c.l.s4 1966171168
        %v2887 = vunpack.c.0.s8 %v2886
        %v2888 = vlaneseq
        %v2889 = vshrl.u32 %v2888, 7
        %v2890 = vsub.s32 %v2887, %v2889
        %v2891 = vrot.slane %v2883, %v2890
        %v2893 = vunpack.c.l.s4 1966171168
        %v2894 = vunpack.c.0.s8 %v2893
        %v2895 = vlaneseq
        %v2896 = vshrl.u32 %v2895, 7
        %v2897 = vsub.s32 %v2894, %v2896
        %v2898 = vrot.slane %v2884, %v2897
        %v2899 = vcombine.low %v2891, %v2898
        %2901 = vst [vmem:[%s321] sm:$0xff] %v2899
      $region52: #{pointnet_cls_forward.4} parent=47 // pred_fallthru
        _
      %p2902 = scmp.gt.s32.totalorder %s23, 0
      // Predicated region
      $region53: #{pointnet_cls_forward.4} parent=47 // pred_check
        %p2903 = pneg %p2902
      $region54: #{pointnet_cls_forward.4} parent=47 // pred_check_branch
        %2905 = sbr.rel (%p2903) target = $region56
      $region55: #{pointnet_cls_forward.4} parent=47 // pred_region
        %v2906 = vld [vmem:[%s321] sm:$0xff]
        %v2915 = vcombine.low %v2579, %v2616
        %v2916 = vcombine.low %v2653, %v2690
        %v2917 = vcombine.low %v2727, %v2764
        %v2918 = vcombine.low %v2801, %v2838
        %v2920 = vunpack.c.l.s4 1966171168
        %v2921 = vunpack.c.0.s8 %v2920
        %v2922 = vlaneseq
        %v2923 = vshrl.u32 %v2922, 7
        %v2924 = vsub.s32 %v2921, %v2923
        %v2925 = vrot.slane %v2915, %v2924
        %v2927 = vunpack.c.l.s4 1966171168
        %v2928 = vunpack.c.0.s8 %v2927
        %v2929 = vlaneseq
        %v2930 = vshrl.u32 %v2929, 7
        %v2931 = vsub.s32 %v2928, %v2930
        %v2932 = vrot.slane %v2916, %v2931
        %v2934 = vunpack.c.l.s4 1966171168
        %v2935 = vunpack.c.0.s8 %v2934
        %v2936 = vlaneseq
        %v2937 = vshrl.u32 %v2936, 7
        %v2938 = vsub.s32 %v2935, %v2937
        %v2939 = vrot.slane %v2917, %v2938
        %v2941 = vunpack.c.l.s4 1966171168
        %v2942 = vunpack.c.0.s8 %v2941
        %v2943 = vlaneseq
        %v2944 = vshrl.u32 %v2943, 7
        %v2945 = vsub.s32 %v2942, %v2944
        %v2946 = vrot.slane %v2918, %v2945
        %v2947 = vcombine.low %v2925, %v2932
        %v2948 = vcombine.low %v2939, %v2946
        %v2950 = vunpack.c.l.s4 1966171168
        %v2951 = vunpack.c.0.s8 %v2950
        %v2952 = vlaneseq
        %v2953 = vshrl.u32 %v2952, 7
        %v2954 = vsub.s32 %v2951, %v2953
        %v2955 = vrot.slane %v2947, %v2954
        %v2957 = vunpack.c.l.s4 1966171168
        %v2958 = vunpack.c.0.s8 %v2957
        %v2959 = vlaneseq
        %v2960 = vshrl.u32 %v2959, 7
        %v2961 = vsub.s32 %v2958, %v2960
        %v2962 = vrot.slane %v2948, %v2961
        %v2963 = vcombine.low %v2955, %v2962
        %v2965 = vmax.f32 %v2906, %v2963
        %2966 = vst [vmem:[%s321] sm:$0xff] %v2965
      $region56: #{pointnet_cls_forward.4} parent=47 // pred_fallthru
        _
      %p2967 = scmp.lt.s32.totalorder %s22, 1
      %s2968 = scalar_select %p2967, %s22, 1
      %s2969 = smul.addr %s2968, 8
      %s2970 = scalar_lea.vmem %s7, %s2969
      // Predicated region
      $region57: #{pointnet_cls_forward.4} parent=47 // pred_check
        %p2971 = pneg %p207
      $region58: #{pointnet_cls_forward.4} parent=47 // pred_check_branch
        %2973 = sbr.rel (%p2971) target = $region60
      $region59: #{pointnet_cls_forward.4} parent=47 // pred_region
        _
      $region60: #{pointnet_cls_forward.4} parent=47 // pred_fallthru
        _
    $region48: #{pointnet_cls_forward.4} parent=5 // pred_fallthru
      _
    %p2974 = scmp.le.s32.totalorder 2, %s13
    // Predicated region
    $region61: #{pointnet_cls_forward.4} parent=5 // pred_check
      %p2975 = pneg %p2974
    $region62: #{pointnet_cls_forward.4} parent=5 // pred_check_branch
      %2977 = sbr.rel (%p2975) target = $region64
    $region63: #{pointnet_cls_forward.4} parent=5 // pred_region
      %s2978 = ssub.s32 %s13, 2
      // Predicated region
      $region65: #{pointnet_cls_forward.4} parent=63 // pred_check
        %p2979 = pneg %p213
      $region66: #{pointnet_cls_forward.4} parent=63 // pred_check_branch
        %2981 = sbr.rel (%p2979) target = $region68
      $region67: #{pointnet_cls_forward.4} parent=63 // pred_region
        %p2982 = scmp.lt.s32.totalorder %s24, 1
        %s2983 = scalar_select %p2982, %s24, 1
        %s2984 = smul.addr %s2983, 8
        %s2985 = scalar_lea.vmem %s7, %s2984
      $region68: #{pointnet_cls_forward.4} parent=63 // pred_fallthru
        _
    $region64: #{pointnet_cls_forward.4} parent=5 // pred_fallthru
      _
  $region6: #{pointnet_cls_forward.4} parent=0 // loop_footer
    %s17 = sadd.s32 1, %s13
  $region7: #{pointnet_cls_forward.4} parent=0 // loop_footer_branch
    %12 = sbr.rel target = $region3
  $region8: #{pointnet_cls_forward.4} parent=0 // loop_exit
    _

// kernel: pointnet_cls_forward.5
$region0: #{pointnet_cls_forward.5}
  #allocation0 [shape = 'u32[]', space=smem, size = 0x4, offset = 0x4, fixed_abs, tag = 'smem constant byte address 0x4 - core index']
  #allocation1 [shape = 'u32[144,128]{1,0:T(1,128)}', space=vmem, size = 0x12000, scoped, tag = 'internal scratch']
  %s0 = inlined_call_operand.vmem [shape: f32[2,1024], index: 0, kind: input, shape index: {}]
  %s1 = inlined_call_operand.vmem [shape: f32[1024,512], index: 1, kind: input, shape index: {}]
  %s2 = inlined_call_operand.vmem [shape: f32[1,512], index: 2, kind: input, shape index: {}]
  %s3 = inlined_call_operand.vmem [shape: f32[512,256], index: 3, kind: input, shape index: {}]
  %s4 = inlined_call_operand.vmem [shape: f32[1,256], index: 4, kind: input, shape index: {}]
  %s5 = inlined_call_operand.vmem [shape: f32[256,9], index: 5, kind: input, shape index: {}]
  %s6 = inlined_call_operand.vmem [shape: f32[1,9], index: 6, kind: input, shape index: {}]
  %s7 = inlined_call_operand.vmem [shape: f32[2,9], index: 7, kind: output, shape index: {}]
  %s8 = sld [smem:[#allocation0]]
  $region38: #{pointnet_cls_forward.5} parent=0
    _
  %s10 = ssub.s32 1, %s8
  %s11 = scalar_select 0, %s10, %s8
  // Predicated region
  $region2: #{pointnet_cls_forward.5} parent=0 // pred_check
    _
  $region3: #{pointnet_cls_forward.5} parent=0 // pred_check_branch
    %13 = sbr.rel (0) target = $region5
  $region4: #{pointnet_cls_forward.5} parent=0 // pred_region
    _
  $region5: #{pointnet_cls_forward.5} parent=0 // pred_fallthru
    _
  // Predicated region
  $region6: #{pointnet_cls_forward.5} parent=0 // pred_check
    _
  $region7: #{pointnet_cls_forward.5} parent=0 // pred_check_branch
    %15 = sbr.rel (0) target = $region9
  $region8: #{pointnet_cls_forward.5} parent=0 // pred_region
    _
  $region9: #{pointnet_cls_forward.5} parent=0 // pred_fallthru
    _
  // Predicated region
  $region10: #{pointnet_cls_forward.5} parent=0 // pred_check
    _
  $region11: #{pointnet_cls_forward.5} parent=0 // pred_check_branch
    %17 = sbr.rel (0) target = $region13
  $region12: #{pointnet_cls_forward.5} parent=0 // pred_region
    _
  $region13: #{pointnet_cls_forward.5} parent=0 // pred_fallthru
    _
  // Predicated region
  $region14: #{pointnet_cls_forward.5} parent=0 // pred_check
    _
  $region15: #{pointnet_cls_forward.5} parent=0 // pred_check_branch
    %19 = sbr.rel (0) target = $region17
  $region16: #{pointnet_cls_forward.5} parent=0 // pred_region
    _
  $region17: #{pointnet_cls_forward.5} parent=0 // pred_fallthru
    _
  // Predicated region
  $region18: #{pointnet_cls_forward.5} parent=0 // pred_check
    _
  $region19: #{pointnet_cls_forward.5} parent=0 // pred_check_branch
    %21 = sbr.rel (0) target = $region21
  $region20: #{pointnet_cls_forward.5} parent=0 // pred_region
    _
  $region21: #{pointnet_cls_forward.5} parent=0 // pred_fallthru
    _
  // Predicated region
  $region22: #{pointnet_cls_forward.5} parent=0 // pred_check
    _
  $region23: #{pointnet_cls_forward.5} parent=0 // pred_check_branch
    %23 = sbr.rel (0) target = $region25
  $region24: #{pointnet_cls_forward.5} parent=0 // pred_region
    _
  $region25: #{pointnet_cls_forward.5} parent=0 // pred_fallthru
    _
  // Predicated region
  $region26: #{pointnet_cls_forward.5} parent=0 // pred_check
    _
  $region27: #{pointnet_cls_forward.5} parent=0 // pred_check_branch
    %25 = sbr.rel (0) target = $region29
  $region28: #{pointnet_cls_forward.5} parent=0 // pred_region
    _
  $region29: #{pointnet_cls_forward.5} parent=0 // pred_fallthru
    _
  %v26 = vld [vmem:[%s0] sm:$0xff]
  %v27 = vld [vmem:[%s0 + $0x8] sm:$0xff]
  %v28 = vld [vmem:[%s1] sm:$0xff]
  %v29 = vld [vmem:[%s1 + $0x8] sm:$0xff]
  %v30 = vld [vmem:[%s1 + $0x10] sm:$0xff]
  %v31 = vld [vmem:[%s1 + $0x18] sm:$0xff]
  %v32 = vld [vmem:[%s1 + $0x20] sm:$0xff]
  %v33 = vld [vmem:[%s1 + $0x28] sm:$0xff]
  %v34 = vld [vmem:[%s1 + $0x30] sm:$0xff]
  %v35 = vld [vmem:[%s1 + $0x38] sm:$0xff]
  %v36 = vld [vmem:[%s1 + $0x40] sm:$0xff]
  %v37 = vld [vmem:[%s1 + $0x48] sm:$0xff]
  %v38 = vld [vmem:[%s1 + $0x50] sm:$0xff]
  %v39 = vld [vmem:[%s1 + $0x58] sm:$0xff]
  %v40 = vld [vmem:[%s1 + $0x60] sm:$0xff]
  %v41 = vld [vmem:[%s1 + $0x68] sm:$0xff]
  %v42 = vld [vmem:[%s1 + $0x70] sm:$0xff]
  %v43 = vld [vmem:[%s1 + $0x78] sm:$0xff]
  %v44 = vld [vmem:[%s1 + $0x80] sm:$0xff]
  %v45 = vld [vmem:[%s1 + $0x88] sm:$0xff]
  %v46 = vld [vmem:[%s1 + $0x90] sm:$0xff]
  %v47 = vld [vmem:[%s1 + $0x98] sm:$0xff]
  %v48 = vld [vmem:[%s1 + $0xa0] sm:$0xff]
  %v49 = vld [vmem:[%s1 + $0xa8] sm:$0xff]
  %v50 = vld [vmem:[%s1 + $0xb0] sm:$0xff]
  %v51 = vld [vmem:[%s1 + $0xb8] sm:$0xff]
  %v52 = vld [vmem:[%s1 + $0xc0] sm:$0xff]
  %v53 = vld [vmem:[%s1 + $0xc8] sm:$0xff]
  %v54 = vld [vmem:[%s1 + $0xd0] sm:$0xff]
  %v55 = vld [vmem:[%s1 + $0xd8] sm:$0xff]
  %v56 = vld [vmem:[%s1 + $0xe0] sm:$0xff]
  %v57 = vld [vmem:[%s1 + $0xe8] sm:$0xff]
  %v58 = vld [vmem:[%s1 + $0xf0] sm:$0xff]
  %v59 = vld [vmem:[%s1 + $0xf8] sm:$0xff]
  %v60 = vld [vmem:[%s1 + $0x100] sm:$0xff]
  %v61 = vld [vmem:[%s1 + $0x108] sm:$0xff]
  %v62 = vld [vmem:[%s1 + $0x110] sm:$0xff]
  %v63 = vld [vmem:[%s1 + $0x118] sm:$0xff]
  %v64 = vld [vmem:[%s1 + $0x120] sm:$0xff]
  %v65 = vld [vmem:[%s1 + $0x128] sm:$0xff]
  %v66 = vld [vmem:[%s1 + $0x130] sm:$0xff]
  %v67 = vld [vmem:[%s1 + $0x138] sm:$0xff]
  %v68 = vld [vmem:[%s1 + $0x140] sm:$0xff]
  %v69 = vld [vmem:[%s1 + $0x148] sm:$0xff]
  %v70 = vld [vmem:[%s1 + $0x150] sm:$0xff]
  %v71 = vld [vmem:[%s1 + $0x158] sm:$0xff]
  %v72 = vld [vmem:[%s1 + $0x160] sm:$0xff]
  %v73 = vld [vmem:[%s1 + $0x168] sm:$0xff]
  %v74 = vld [vmem:[%s1 + $0x170] sm:$0xff]
  %v75 = vld [vmem:[%s1 + $0x178] sm:$0xff]
  %v76 = vld [vmem:[%s1 + $0x180] sm:$0xff]
  %v77 = vld [vmem:[%s1 + $0x188] sm:$0xff]
  %v78 = vld [vmem:[%s1 + $0x190] sm:$0xff]
  %v79 = vld [vmem:[%s1 + $0x198] sm:$0xff]
  %v80 = vld [vmem:[%s1 + $0x1a0] sm:$0xff]
  %v81 = vld [vmem:[%s1 + $0x1a8] sm:$0xff]
  %v82 = vld [vmem:[%s1 + $0x1b0] sm:$0xff]
  %v83 = vld [vmem:[%s1 + $0x1b8] sm:$0xff]
  %v84 = vld [vmem:[%s1 + $0x1c0] sm:$0xff]
  %v85 = vld [vmem:[%s1 + $0x1c8] sm:$0xff]
  %v86 = vld [vmem:[%s1 + $0x1d0] sm:$0xff]
  %v87 = vld [vmem:[%s1 + $0x1d8] sm:$0xff]
  %v88 = vld [vmem:[%s1 + $0x1e0] sm:$0xff]
  %v89 = vld [vmem:[%s1 + $0x1e8] sm:$0xff]
  %v90 = vld [vmem:[%s1 + $0x1f0] sm:$0xff]
  %v91 = vld [vmem:[%s1 + $0x1f8] sm:$0xff]
  %v92 = vld [vmem:[%s1 + $0x200] sm:$0xff]
  %v93 = vld [vmem:[%s1 + $0x208] sm:$0xff]
  %v94 = vld [vmem:[%s1 + $0x210] sm:$0xff]
  %v95 = vld [vmem:[%s1 + $0x218] sm:$0xff]
  %v96 = vld [vmem:[%s1 + $0x220] sm:$0xff]
  %v97 = vld [vmem:[%s1 + $0x228] sm:$0xff]
  %v98 = vld [vmem:[%s1 + $0x230] sm:$0xff]
  %v99 = vld [vmem:[%s1 + $0x238] sm:$0xff]
  %v100 = vld [vmem:[%s1 + $0x240] sm:$0xff]
  %v101 = vld [vmem:[%s1 + $0x248] sm:$0xff]
  %v102 = vld [vmem:[%s1 + $0x250] sm:$0xff]
  %v103 = vld [vmem:[%s1 + $0x258] sm:$0xff]
  %v104 = vld [vmem:[%s1 + $0x260] sm:$0xff]
  %v105 = vld [vmem:[%s1 + $0x268] sm:$0xff]
  %v106 = vld [vmem:[%s1 + $0x270] sm:$0xff]
  %v107 = vld [vmem:[%s1 + $0x278] sm:$0xff]
  %v108 = vld [vmem:[%s1 + $0x280] sm:$0xff]
  %v109 = vld [vmem:[%s1 + $0x288] sm:$0xff]
  %v110 = vld [vmem:[%s1 + $0x290] sm:$0xff]
  %v111 = vld [vmem:[%s1 + $0x298] sm:$0xff]
  %v112 = vld [vmem:[%s1 + $0x2a0] sm:$0xff]
  %v113 = vld [vmem:[%s1 + $0x2a8] sm:$0xff]
  %v114 = vld [vmem:[%s1 + $0x2b0] sm:$0xff]
  %v115 = vld [vmem:[%s1 + $0x2b8] sm:$0xff]
  %v116 = vld [vmem:[%s1 + $0x2c0] sm:$0xff]
  %v117 = vld [vmem:[%s1 + $0x2c8] sm:$0xff]
  %v118 = vld [vmem:[%s1 + $0x2d0] sm:$0xff]
  %v119 = vld [vmem:[%s1 + $0x2d8] sm:$0xff]
  %v120 = vld [vmem:[%s1 + $0x2e0] sm:$0xff]
  %v121 = vld [vmem:[%s1 + $0x2e8] sm:$0xff]
  %v122 = vld [vmem:[%s1 + $0x2f0] sm:$0xff]
  %v123 = vld [vmem:[%s1 + $0x2f8] sm:$0xff]
  %v124 = vld [vmem:[%s1 + $0x300] sm:$0xff]
  %v125 = vld [vmem:[%s1 + $0x308] sm:$0xff]
  %v126 = vld [vmem:[%s1 + $0x310] sm:$0xff]
  %v127 = vld [vmem:[%s1 + $0x318] sm:$0xff]
  %v128 = vld [vmem:[%s1 + $0x320] sm:$0xff]
  %v129 = vld [vmem:[%s1 + $0x328] sm:$0xff]
  %v130 = vld [vmem:[%s1 + $0x330] sm:$0xff]
  %v131 = vld [vmem:[%s1 + $0x338] sm:$0xff]
  %v132 = vld [vmem:[%s1 + $0x340] sm:$0xff]
  %v133 = vld [vmem:[%s1 + $0x348] sm:$0xff]
  %v134 = vld [vmem:[%s1 + $0x350] sm:$0xff]
  %v135 = vld [vmem:[%s1 + $0x358] sm:$0xff]
  %v136 = vld [vmem:[%s1 + $0x360] sm:$0xff]
  %v137 = vld [vmem:[%s1 + $0x368] sm:$0xff]
  %v138 = vld [vmem:[%s1 + $0x370] sm:$0xff]
  %v139 = vld [vmem:[%s1 + $0x378] sm:$0xff]
  %v140 = vld [vmem:[%s1 + $0x380] sm:$0xff]
  %v141 = vld [vmem:[%s1 + $0x388] sm:$0xff]
  %v142 = vld [vmem:[%s1 + $0x390] sm:$0xff]
  %v143 = vld [vmem:[%s1 + $0x398] sm:$0xff]
  %v144 = vld [vmem:[%s1 + $0x3a0] sm:$0xff]
  %v145 = vld [vmem:[%s1 + $0x3a8] sm:$0xff]
  %v146 = vld [vmem:[%s1 + $0x3b0] sm:$0xff]
  %v147 = vld [vmem:[%s1 + $0x3b8] sm:$0xff]
  %v148 = vld [vmem:[%s1 + $0x3c0] sm:$0xff]
  %v149 = vld [vmem:[%s1 + $0x3c8] sm:$0xff]
  %v150 = vld [vmem:[%s1 + $0x3d0] sm:$0xff]
  %v151 = vld [vmem:[%s1 + $0x3d8] sm:$0xff]
  %v152 = vld [vmem:[%s1 + $0x3e0] sm:$0xff]
  %v153 = vld [vmem:[%s1 + $0x3e8] sm:$0xff]
  %v154 = vld [vmem:[%s1 + $0x3f0] sm:$0xff]
  %v155 = vld [vmem:[%s1 + $0x3f8] sm:$0xff]
  %v156 = vld [vmem:[%s1 + $0x400] sm:$0xff]
  %v157 = vld [vmem:[%s1 + $0x408] sm:$0xff]
  %v158 = vld [vmem:[%s1 + $0x410] sm:$0xff]
  %v159 = vld [vmem:[%s1 + $0x418] sm:$0xff]
  %v160 = vld [vmem:[%s1 + $0x420] sm:$0xff]
  %v161 = vld [vmem:[%s1 + $0x428] sm:$0xff]
  %v162 = vld [vmem:[%s1 + $0x430] sm:$0xff]
  %v163 = vld [vmem:[%s1 + $0x438] sm:$0xff]
  %v164 = vld [vmem:[%s1 + $0x440] sm:$0xff]
  %v165 = vld [vmem:[%s1 + $0x448] sm:$0xff]
  %v166 = vld [vmem:[%s1 + $0x450] sm:$0xff]
  %v167 = vld [vmem:[%s1 + $0x458] sm:$0xff]
  %v168 = vld [vmem:[%s1 + $0x460] sm:$0xff]
  %v169 = vld [vmem:[%s1 + $0x468] sm:$0xff]
  %v170 = vld [vmem:[%s1 + $0x470] sm:$0xff]
  %v171 = vld [vmem:[%s1 + $0x478] sm:$0xff]
  %v172 = vld [vmem:[%s1 + $0x480] sm:$0xff]
  %v173 = vld [vmem:[%s1 + $0x488] sm:$0xff]
  %v174 = vld [vmem:[%s1 + $0x490] sm:$0xff]
  %v175 = vld [vmem:[%s1 + $0x498] sm:$0xff]
  %v176 = vld [vmem:[%s1 + $0x4a0] sm:$0xff]
  %v177 = vld [vmem:[%s1 + $0x4a8] sm:$0xff]
  %v178 = vld [vmem:[%s1 + $0x4b0] sm:$0xff]
  %v179 = vld [vmem:[%s1 + $0x4b8] sm:$0xff]
  %v180 = vld [vmem:[%s1 + $0x4c0] sm:$0xff]
  %v181 = vld [vmem:[%s1 + $0x4c8] sm:$0xff]
  %v182 = vld [vmem:[%s1 + $0x4d0] sm:$0xff]
  %v183 = vld [vmem:[%s1 + $0x4d8] sm:$0xff]
  %v184 = vld [vmem:[%s1 + $0x4e0] sm:$0xff]
  %v185 = vld [vmem:[%s1 + $0x4e8] sm:$0xff]
  %v186 = vld [vmem:[%s1 + $0x4f0] sm:$0xff]
  %v187 = vld [vmem:[%s1 + $0x4f8] sm:$0xff]
  %v188 = vld [vmem:[%s1 + $0x500] sm:$0xff]
  %v189 = vld [vmem:[%s1 + $0x508] sm:$0xff]
  %v190 = vld [vmem:[%s1 + $0x510] sm:$0xff]
  %v191 = vld [vmem:[%s1 + $0x518] sm:$0xff]
  %v192 = vld [vmem:[%s1 + $0x520] sm:$0xff]
  %v193 = vld [vmem:[%s1 + $0x528] sm:$0xff]
  %v194 = vld [vmem:[%s1 + $0x530] sm:$0xff]
  %v195 = vld [vmem:[%s1 + $0x538] sm:$0xff]
  %v196 = vld [vmem:[%s1 + $0x540] sm:$0xff]
  %v197 = vld [vmem:[%s1 + $0x548] sm:$0xff]
  %v198 = vld [vmem:[%s1 + $0x550] sm:$0xff]
  %v199 = vld [vmem:[%s1 + $0x558] sm:$0xff]
  %v200 = vld [vmem:[%s1 + $0x560] sm:$0xff]
  %v201 = vld [vmem:[%s1 + $0x568] sm:$0xff]
  %v202 = vld [vmem:[%s1 + $0x570] sm:$0xff]
  %v203 = vld [vmem:[%s1 + $0x578] sm:$0xff]
  %v204 = vld [vmem:[%s1 + $0x580] sm:$0xff]
  %v205 = vld [vmem:[%s1 + $0x588] sm:$0xff]
  %v206 = vld [vmem:[%s1 + $0x590] sm:$0xff]
  %v207 = vld [vmem:[%s1 + $0x598] sm:$0xff]
  %v208 = vld [vmem:[%s1 + $0x5a0] sm:$0xff]
  %v209 = vld [vmem:[%s1 + $0x5a8] sm:$0xff]
  %v210 = vld [vmem:[%s1 + $0x5b0] sm:$0xff]
  %v211 = vld [vmem:[%s1 + $0x5b8] sm:$0xff]
  %v212 = vld [vmem:[%s1 + $0x5c0] sm:$0xff]
  %v213 = vld [vmem:[%s1 + $0x5c8] sm:$0xff]
  %v214 = vld [vmem:[%s1 + $0x5d0] sm:$0xff]
  %v215 = vld [vmem:[%s1 + $0x5d8] sm:$0xff]
  %v216 = vld [vmem:[%s1 + $0x5e0] sm:$0xff]
  %v217 = vld [vmem:[%s1 + $0x5e8] sm:$0xff]
  %v218 = vld [vmem:[%s1 + $0x5f0] sm:$0xff]
  %v219 = vld [vmem:[%s1 + $0x5f8] sm:$0xff]
  %v220 = vld [vmem:[%s1 + $0x600] sm:$0xff]
  %v221 = vld [vmem:[%s1 + $0x608] sm:$0xff]
  %v222 = vld [vmem:[%s1 + $0x610] sm:$0xff]
  %v223 = vld [vmem:[%s1 + $0x618] sm:$0xff]
  %v224 = vld [vmem:[%s1 + $0x620] sm:$0xff]
  %v225 = vld [vmem:[%s1 + $0x628] sm:$0xff]
  %v226 = vld [vmem:[%s1 + $0x630] sm:$0xff]
  %v227 = vld [vmem:[%s1 + $0x638] sm:$0xff]
  %v228 = vld [vmem:[%s1 + $0x640] sm:$0xff]
  %v229 = vld [vmem:[%s1 + $0x648] sm:$0xff]
  %v230 = vld [vmem:[%s1 + $0x650] sm:$0xff]
  %v231 = vld [vmem:[%s1 + $0x658] sm:$0xff]
  %v232 = vld [vmem:[%s1 + $0x660] sm:$0xff]
  %v233 = vld [vmem:[%s1 + $0x668] sm:$0xff]
  %v234 = vld [vmem:[%s1 + $0x670] sm:$0xff]
  %v235 = vld [vmem:[%s1 + $0x678] sm:$0xff]
  %v236 = vld [vmem:[%s1 + $0x680] sm:$0xff]
  %v237 = vld [vmem:[%s1 + $0x688] sm:$0xff]
  %v238 = vld [vmem:[%s1 + $0x690] sm:$0xff]
  %v239 = vld [vmem:[%s1 + $0x698] sm:$0xff]
  %v240 = vld [vmem:[%s1 + $0x6a0] sm:$0xff]
  %v241 = vld [vmem:[%s1 + $0x6a8] sm:$0xff]
  %v242 = vld [vmem:[%s1 + $0x6b0] sm:$0xff]
  %v243 = vld [vmem:[%s1 + $0x6b8] sm:$0xff]
  %v244 = vld [vmem:[%s1 + $0x6c0] sm:$0xff]
  %v245 = vld [vmem:[%s1 + $0x6c8] sm:$0xff]
  %v246 = vld [vmem:[%s1 + $0x6d0] sm:$0xff]
  %v247 = vld [vmem:[%s1 + $0x6d8] sm:$0xff]
  %v248 = vld [vmem:[%s1 + $0x6e0] sm:$0xff]
  %v249 = vld [vmem:[%s1 + $0x6e8] sm:$0xff]
  %v250 = vld [vmem:[%s1 + $0x6f0] sm:$0xff]
  %v251 = vld [vmem:[%s1 + $0x6f8] sm:$0xff]
  %v252 = vld [vmem:[%s1 + $0x700] sm:$0xff]
  %v253 = vld [vmem:[%s1 + $0x708] sm:$0xff]
  %v254 = vld [vmem:[%s1 + $0x710] sm:$0xff]
  %v255 = vld [vmem:[%s1 + $0x718] sm:$0xff]
  %v256 = vld [vmem:[%s1 + $0x720] sm:$0xff]
  %v257 = vld [vmem:[%s1 + $0x728] sm:$0xff]
  %v258 = vld [vmem:[%s1 + $0x730] sm:$0xff]
  %v259 = vld [vmem:[%s1 + $0x738] sm:$0xff]
  %v260 = vld [vmem:[%s1 + $0x740] sm:$0xff]
  %v261 = vld [vmem:[%s1 + $0x748] sm:$0xff]
  %v262 = vld [vmem:[%s1 + $0x750] sm:$0xff]
  %v263 = vld [vmem:[%s1 + $0x758] sm:$0xff]
  %v264 = vld [vmem:[%s1 + $0x760] sm:$0xff]
  %v265 = vld [vmem:[%s1 + $0x768] sm:$0xff]
  %v266 = vld [vmem:[%s1 + $0x770] sm:$0xff]
  %v267 = vld [vmem:[%s1 + $0x778] sm:$0xff]
  %v268 = vld [vmem:[%s1 + $0x780] sm:$0xff]
  %v269 = vld [vmem:[%s1 + $0x788] sm:$0xff]
  %v270 = vld [vmem:[%s1 + $0x790] sm:$0xff]
  %v271 = vld [vmem:[%s1 + $0x798] sm:$0xff]
  %v272 = vld [vmem:[%s1 + $0x7a0] sm:$0xff]
  %v273 = vld [vmem:[%s1 + $0x7a8] sm:$0xff]
  %v274 = vld [vmem:[%s1 + $0x7b0] sm:$0xff]
  %v275 = vld [vmem:[%s1 + $0x7b8] sm:$0xff]
  %v276 = vld [vmem:[%s1 + $0x7c0] sm:$0xff]
  %v277 = vld [vmem:[%s1 + $0x7c8] sm:$0xff]
  %v278 = vld [vmem:[%s1 + $0x7d0] sm:$0xff]
  %v279 = vld [vmem:[%s1 + $0x7d8] sm:$0xff]
  %v280 = vld [vmem:[%s1 + $0x7e0] sm:$0xff]
  %v281 = vld [vmem:[%s1 + $0x7e8] sm:$0xff]
  %v282 = vld [vmem:[%s1 + $0x7f0] sm:$0xff]
  %v283 = vld [vmem:[%s1 + $0x7f8] sm:$0xff]
  %v284 = vld [vmem:[%s1 + $0x800] sm:$0xff]
  %v285 = vld [vmem:[%s1 + $0x808] sm:$0xff]
  %v286 = vld [vmem:[%s1 + $0x810] sm:$0xff]
  %v287 = vld [vmem:[%s1 + $0x818] sm:$0xff]
  %v288 = vld [vmem:[%s1 + $0x820] sm:$0xff]
  %v289 = vld [vmem:[%s1 + $0x828] sm:$0xff]
  %v290 = vld [vmem:[%s1 + $0x830] sm:$0xff]
  %v291 = vld [vmem:[%s1 + $0x838] sm:$0xff]
  %v292 = vld [vmem:[%s1 + $0x840] sm:$0xff]
  %v293 = vld [vmem:[%s1 + $0x848] sm:$0xff]
  %v294 = vld [vmem:[%s1 + $0x850] sm:$0xff]
  %v295 = vld [vmem:[%s1 + $0x858] sm:$0xff]
  %v296 = vld [vmem:[%s1 + $0x860] sm:$0xff]
  %v297 = vld [vmem:[%s1 + $0x868] sm:$0xff]
  %v298 = vld [vmem:[%s1 + $0x870] sm:$0xff]
  %v299 = vld [vmem:[%s1 + $0x878] sm:$0xff]
  %v300 = vld [vmem:[%s1 + $0x880] sm:$0xff]
  %v301 = vld [vmem:[%s1 + $0x888] sm:$0xff]
  %v302 = vld [vmem:[%s1 + $0x890] sm:$0xff]
  %v303 = vld [vmem:[%s1 + $0x898] sm:$0xff]
  %v304 = vld [vmem:[%s1 + $0x8a0] sm:$0xff]
  %v305 = vld [vmem:[%s1 + $0x8a8] sm:$0xff]
  %v306 = vld [vmem:[%s1 + $0x8b0] sm:$0xff]
  %v307 = vld [vmem:[%s1 + $0x8b8] sm:$0xff]
  %v308 = vld [vmem:[%s1 + $0x8c0] sm:$0xff]
  %v309 = vld [vmem:[%s1 + $0x8c8] sm:$0xff]
  %v310 = vld [vmem:[%s1 + $0x8d0] sm:$0xff]
  %v311 = vld [vmem:[%s1 + $0x8d8] sm:$0xff]
  %v312 = vld [vmem:[%s1 + $0x8e0] sm:$0xff]
  %v313 = vld [vmem:[%s1 + $0x8e8] sm:$0xff]
  %v314 = vld [vmem:[%s1 + $0x8f0] sm:$0xff]
  %v315 = vld [vmem:[%s1 + $0x8f8] sm:$0xff]
  %v316 = vld [vmem:[%s1 + $0x900] sm:$0xff]
  %v317 = vld [vmem:[%s1 + $0x908] sm:$0xff]
  %v318 = vld [vmem:[%s1 + $0x910] sm:$0xff]
  %v319 = vld [vmem:[%s1 + $0x918] sm:$0xff]
  %v320 = vld [vmem:[%s1 + $0x920] sm:$0xff]
  %v321 = vld [vmem:[%s1 + $0x928] sm:$0xff]
  %v322 = vld [vmem:[%s1 + $0x930] sm:$0xff]
  %v323 = vld [vmem:[%s1 + $0x938] sm:$0xff]
  %v324 = vld [vmem:[%s1 + $0x940] sm:$0xff]
  %v325 = vld [vmem:[%s1 + $0x948] sm:$0xff]
  %v326 = vld [vmem:[%s1 + $0x950] sm:$0xff]
  %v327 = vld [vmem:[%s1 + $0x958] sm:$0xff]
  %v328 = vld [vmem:[%s1 + $0x960] sm:$0xff]
  %v329 = vld [vmem:[%s1 + $0x968] sm:$0xff]
  %v330 = vld [vmem:[%s1 + $0x970] sm:$0xff]
  %v331 = vld [vmem:[%s1 + $0x978] sm:$0xff]
  %v332 = vld [vmem:[%s1 + $0x980] sm:$0xff]
  %v333 = vld [vmem:[%s1 + $0x988] sm:$0xff]
  %v334 = vld [vmem:[%s1 + $0x990] sm:$0xff]
  %v335 = vld [vmem:[%s1 + $0x998] sm:$0xff]
  %v336 = vld [vmem:[%s1 + $0x9a0] sm:$0xff]
  %v337 = vld [vmem:[%s1 + $0x9a8] sm:$0xff]
  %v338 = vld [vmem:[%s1 + $0x9b0] sm:$0xff]
  %v339 = vld [vmem:[%s1 + $0x9b8] sm:$0xff]
  %v340 = vld [vmem:[%s1 + $0x9c0] sm:$0xff]
  %v341 = vld [vmem:[%s1 + $0x9c8] sm:$0xff]
  %v342 = vld [vmem:[%s1 + $0x9d0] sm:$0xff]
  %v343 = vld [vmem:[%s1 + $0x9d8] sm:$0xff]
  %v344 = vld [vmem:[%s1 + $0x9e0] sm:$0xff]
  %v345 = vld [vmem:[%s1 + $0x9e8] sm:$0xff]
  %v346 = vld [vmem:[%s1 + $0x9f0] sm:$0xff]
  %v347 = vld [vmem:[%s1 + $0x9f8] sm:$0xff]
  %v348 = vld [vmem:[%s1 + $0xa00] sm:$0xff]
  %v349 = vld [vmem:[%s1 + $0xa08] sm:$0xff]
  %v350 = vld [vmem:[%s1 + $0xa10] sm:$0xff]
  %v351 = vld [vmem:[%s1 + $0xa18] sm:$0xff]
  %v352 = vld [vmem:[%s1 + $0xa20] sm:$0xff]
  %v353 = vld [vmem:[%s1 + $0xa28] sm:$0xff]
  %v354 = vld [vmem:[%s1 + $0xa30] sm:$0xff]
  %v355 = vld [vmem:[%s1 + $0xa38] sm:$0xff]
  %v356 = vld [vmem:[%s1 + $0xa40] sm:$0xff]
  %v357 = vld [vmem:[%s1 + $0xa48] sm:$0xff]
  %v358 = vld [vmem:[%s1 + $0xa50] sm:$0xff]
  %v359 = vld [vmem:[%s1 + $0xa58] sm:$0xff]
  %v360 = vld [vmem:[%s1 + $0xa60] sm:$0xff]
  %v361 = vld [vmem:[%s1 + $0xa68] sm:$0xff]
  %v362 = vld [vmem:[%s1 + $0xa70] sm:$0xff]
  %v363 = vld [vmem:[%s1 + $0xa78] sm:$0xff]
  %v364 = vld [vmem:[%s1 + $0xa80] sm:$0xff]
  %v365 = vld [vmem:[%s1 + $0xa88] sm:$0xff]
  %v366 = vld [vmem:[%s1 + $0xa90] sm:$0xff]
  %v367 = vld [vmem:[%s1 + $0xa98] sm:$0xff]
  %v368 = vld [vmem:[%s1 + $0xaa0] sm:$0xff]
  %v369 = vld [vmem:[%s1 + $0xaa8] sm:$0xff]
  %v370 = vld [vmem:[%s1 + $0xab0] sm:$0xff]
  %v371 = vld [vmem:[%s1 + $0xab8] sm:$0xff]
  %v372 = vld [vmem:[%s1 + $0xac0] sm:$0xff]
  %v373 = vld [vmem:[%s1 + $0xac8] sm:$0xff]
  %v374 = vld [vmem:[%s1 + $0xad0] sm:$0xff]
  %v375 = vld [vmem:[%s1 + $0xad8] sm:$0xff]
  %v376 = vld [vmem:[%s1 + $0xae0] sm:$0xff]
  %v377 = vld [vmem:[%s1 + $0xae8] sm:$0xff]
  %v378 = vld [vmem:[%s1 + $0xaf0] sm:$0xff]
  %v379 = vld [vmem:[%s1 + $0xaf8] sm:$0xff]
  %v380 = vld [vmem:[%s1 + $0xb00] sm:$0xff]
  %v381 = vld [vmem:[%s1 + $0xb08] sm:$0xff]
  %v382 = vld [vmem:[%s1 + $0xb10] sm:$0xff]
  %v383 = vld [vmem:[%s1 + $0xb18] sm:$0xff]
  %v384 = vld [vmem:[%s1 + $0xb20] sm:$0xff]
  %v385 = vld [vmem:[%s1 + $0xb28] sm:$0xff]
  %v386 = vld [vmem:[%s1 + $0xb30] sm:$0xff]
  %v387 = vld [vmem:[%s1 + $0xb38] sm:$0xff]
  %v388 = vld [vmem:[%s1 + $0xb40] sm:$0xff]
  %v389 = vld [vmem:[%s1 + $0xb48] sm:$0xff]
  %v390 = vld [vmem:[%s1 + $0xb50] sm:$0xff]
  %v391 = vld [vmem:[%s1 + $0xb58] sm:$0xff]
  %v392 = vld [vmem:[%s1 + $0xb60] sm:$0xff]
  %v393 = vld [vmem:[%s1 + $0xb68] sm:$0xff]
  %v394 = vld [vmem:[%s1 + $0xb70] sm:$0xff]
  %v395 = vld [vmem:[%s1 + $0xb78] sm:$0xff]
  %v396 = vld [vmem:[%s1 + $0xb80] sm:$0xff]
  %v397 = vld [vmem:[%s1 + $0xb88] sm:$0xff]
  %v398 = vld [vmem:[%s1 + $0xb90] sm:$0xff]
  %v399 = vld [vmem:[%s1 + $0xb98] sm:$0xff]
  %v400 = vld [vmem:[%s1 + $0xba0] sm:$0xff]
  %v401 = vld [vmem:[%s1 + $0xba8] sm:$0xff]
  %v402 = vld [vmem:[%s1 + $0xbb0] sm:$0xff]
  %v403 = vld [vmem:[%s1 + $0xbb8] sm:$0xff]
  %v404 = vld [vmem:[%s1 + $0xbc0] sm:$0xff]
  %v405 = vld [vmem:[%s1 + $0xbc8] sm:$0xff]
  %v406 = vld [vmem:[%s1 + $0xbd0] sm:$0xff]
  %v407 = vld [vmem:[%s1 + $0xbd8] sm:$0xff]
  %v408 = vld [vmem:[%s1 + $0xbe0] sm:$0xff]
  %v409 = vld [vmem:[%s1 + $0xbe8] sm:$0xff]
  %v410 = vld [vmem:[%s1 + $0xbf0] sm:$0xff]
  %v411 = vld [vmem:[%s1 + $0xbf8] sm:$0xff]
  %v412 = vld [vmem:[%s1 + $0xc00] sm:$0xff]
  %v413 = vld [vmem:[%s1 + $0xc08] sm:$0xff]
  %v414 = vld [vmem:[%s1 + $0xc10] sm:$0xff]
  %v415 = vld [vmem:[%s1 + $0xc18] sm:$0xff]
  %v416 = vld [vmem:[%s1 + $0xc20] sm:$0xff]
  %v417 = vld [vmem:[%s1 + $0xc28] sm:$0xff]
  %v418 = vld [vmem:[%s1 + $0xc30] sm:$0xff]
  %v419 = vld [vmem:[%s1 + $0xc38] sm:$0xff]
  %v420 = vld [vmem:[%s1 + $0xc40] sm:$0xff]
  %v421 = vld [vmem:[%s1 + $0xc48] sm:$0xff]
  %v422 = vld [vmem:[%s1 + $0xc50] sm:$0xff]
  %v423 = vld [vmem:[%s1 + $0xc58] sm:$0xff]
  %v424 = vld [vmem:[%s1 + $0xc60] sm:$0xff]
  %v425 = vld [vmem:[%s1 + $0xc68] sm:$0xff]
  %v426 = vld [vmem:[%s1 + $0xc70] sm:$0xff]
  %v427 = vld [vmem:[%s1 + $0xc78] sm:$0xff]
  %v428 = vld [vmem:[%s1 + $0xc80] sm:$0xff]
  %v429 = vld [vmem:[%s1 + $0xc88] sm:$0xff]
  %v430 = vld [vmem:[%s1 + $0xc90] sm:$0xff]
  %v431 = vld [vmem:[%s1 + $0xc98] sm:$0xff]
  %v432 = vld [vmem:[%s1 + $0xca0] sm:$0xff]
  %v433 = vld [vmem:[%s1 + $0xca8] sm:$0xff]
  %v434 = vld [vmem:[%s1 + $0xcb0] sm:$0xff]
  %v435 = vld [vmem:[%s1 + $0xcb8] sm:$0xff]
  %v436 = vld [vmem:[%s1 + $0xcc0] sm:$0xff]
  %v437 = vld [vmem:[%s1 + $0xcc8] sm:$0xff]
  %v438 = vld [vmem:[%s1 + $0xcd0] sm:$0xff]
  %v439 = vld [vmem:[%s1 + $0xcd8] sm:$0xff]
  %v440 = vld [vmem:[%s1 + $0xce0] sm:$0xff]
  %v441 = vld [vmem:[%s1 + $0xce8] sm:$0xff]
  %v442 = vld [vmem:[%s1 + $0xcf0] sm:$0xff]
  %v443 = vld [vmem:[%s1 + $0xcf8] sm:$0xff]
  %v444 = vld [vmem:[%s1 + $0xd00] sm:$0xff]
  %v445 = vld [vmem:[%s1 + $0xd08] sm:$0xff]
  %v446 = vld [vmem:[%s1 + $0xd10] sm:$0xff]
  %v447 = vld [vmem:[%s1 + $0xd18] sm:$0xff]
  %v448 = vld [vmem:[%s1 + $0xd20] sm:$0xff]
  %v449 = vld [vmem:[%s1 + $0xd28] sm:$0xff]
  %v450 = vld [vmem:[%s1 + $0xd30] sm:$0xff]
  %v451 = vld [vmem:[%s1 + $0xd38] sm:$0xff]
  %v452 = vld [vmem:[%s1 + $0xd40] sm:$0xff]
  %v453 = vld [vmem:[%s1 + $0xd48] sm:$0xff]
  %v454 = vld [vmem:[%s1 + $0xd50] sm:$0xff]
  %v455 = vld [vmem:[%s1 + $0xd58] sm:$0xff]
  %v456 = vld [vmem:[%s1 + $0xd60] sm:$0xff]
  %v457 = vld [vmem:[%s1 + $0xd68] sm:$0xff]
  %v458 = vld [vmem:[%s1 + $0xd70] sm:$0xff]
  %v459 = vld [vmem:[%s1 + $0xd78] sm:$0xff]
  %v460 = vld [vmem:[%s1 + $0xd80] sm:$0xff]
  %v461 = vld [vmem:[%s1 + $0xd88] sm:$0xff]
  %v462 = vld [vmem:[%s1 + $0xd90] sm:$0xff]
  %v463 = vld [vmem:[%s1 + $0xd98] sm:$0xff]
  %v464 = vld [vmem:[%s1 + $0xda0] sm:$0xff]
  %v465 = vld [vmem:[%s1 + $0xda8] sm:$0xff]
  %v466 = vld [vmem:[%s1 + $0xdb0] sm:$0xff]
  %v467 = vld [vmem:[%s1 + $0xdb8] sm:$0xff]
  %v468 = vld [vmem:[%s1 + $0xdc0] sm:$0xff]
  %v469 = vld [vmem:[%s1 + $0xdc8] sm:$0xff]
  %v470 = vld [vmem:[%s1 + $0xdd0] sm:$0xff]
  %v471 = vld [vmem:[%s1 + $0xdd8] sm:$0xff]
  %v472 = vld [vmem:[%s1 + $0xde0] sm:$0xff]
  %v473 = vld [vmem:[%s1 + $0xde8] sm:$0xff]
  %v474 = vld [vmem:[%s1 + $0xdf0] sm:$0xff]
  %v475 = vld [vmem:[%s1 + $0xdf8] sm:$0xff]
  %v476 = vld [vmem:[%s1 + $0xe00] sm:$0xff]
  %v477 = vld [vmem:[%s1 + $0xe08] sm:$0xff]
  %v478 = vld [vmem:[%s1 + $0xe10] sm:$0xff]
  %v479 = vld [vmem:[%s1 + $0xe18] sm:$0xff]
  %v480 = vld [vmem:[%s1 + $0xe20] sm:$0xff]
  %v481 = vld [vmem:[%s1 + $0xe28] sm:$0xff]
  %v482 = vld [vmem:[%s1 + $0xe30] sm:$0xff]
  %v483 = vld [vmem:[%s1 + $0xe38] sm:$0xff]
  %v484 = vld [vmem:[%s1 + $0xe40] sm:$0xff]
  %v485 = vld [vmem:[%s1 + $0xe48] sm:$0xff]
  %v486 = vld [vmem:[%s1 + $0xe50] sm:$0xff]
  %v487 = vld [vmem:[%s1 + $0xe58] sm:$0xff]
  %v488 = vld [vmem:[%s1 + $0xe60] sm:$0xff]
  %v489 = vld [vmem:[%s1 + $0xe68] sm:$0xff]
  %v490 = vld [vmem:[%s1 + $0xe70] sm:$0xff]
  %v491 = vld [vmem:[%s1 + $0xe78] sm:$0xff]
  %v492 = vld [vmem:[%s1 + $0xe80] sm:$0xff]
  %v493 = vld [vmem:[%s1 + $0xe88] sm:$0xff]
  %v494 = vld [vmem:[%s1 + $0xe90] sm:$0xff]
  %v495 = vld [vmem:[%s1 + $0xe98] sm:$0xff]
  %v496 = vld [vmem:[%s1 + $0xea0] sm:$0xff]
  %v497 = vld [vmem:[%s1 + $0xea8] sm:$0xff]
  %v498 = vld [vmem:[%s1 + $0xeb0] sm:$0xff]
  %v499 = vld [vmem:[%s1 + $0xeb8] sm:$0xff]
  %v500 = vld [vmem:[%s1 + $0xec0] sm:$0xff]
  %v501 = vld [vmem:[%s1 + $0xec8] sm:$0xff]
  %v502 = vld [vmem:[%s1 + $0xed0] sm:$0xff]
  %v503 = vld [vmem:[%s1 + $0xed8] sm:$0xff]
  %v504 = vld [vmem:[%s1 + $0xee0] sm:$0xff]
  %v505 = vld [vmem:[%s1 + $0xee8] sm:$0xff]
  %v506 = vld [vmem:[%s1 + $0xef0] sm:$0xff]
  %v507 = vld [vmem:[%s1 + $0xef8] sm:$0xff]
  %v508 = vld [vmem:[%s1 + $0xf00] sm:$0xff]
  %v509 = vld [vmem:[%s1 + $0xf08] sm:$0xff]
  %v510 = vld [vmem:[%s1 + $0xf10] sm:$0xff]
  %v511 = vld [vmem:[%s1 + $0xf18] sm:$0xff]
  %v512 = vld [vmem:[%s1 + $0xf20] sm:$0xff]
  %v513 = vld [vmem:[%s1 + $0xf28] sm:$0xff]
  %v514 = vld [vmem:[%s1 + $0xf30] sm:$0xff]
  %v515 = vld [vmem:[%s1 + $0xf38] sm:$0xff]
  %v516 = vld [vmem:[%s1 + $0xf40] sm:$0xff]
  %v517 = vld [vmem:[%s1 + $0xf48] sm:$0xff]
  %v518 = vld [vmem:[%s1 + $0xf50] sm:$0xff]
  %v519 = vld [vmem:[%s1 + $0xf58] sm:$0xff]
  %v520 = vld [vmem:[%s1 + $0xf60] sm:$0xff]
  %v521 = vld [vmem:[%s1 + $0xf68] sm:$0xff]
  %v522 = vld [vmem:[%s1 + $0xf70] sm:$0xff]
  %v523 = vld [vmem:[%s1 + $0xf78] sm:$0xff]
  %v524 = vld [vmem:[%s1 + $0xf80] sm:$0xff]
  %v525 = vld [vmem:[%s1 + $0xf88] sm:$0xff]
  %v526 = vld [vmem:[%s1 + $0xf90] sm:$0xff]
  %v527 = vld [vmem:[%s1 + $0xf98] sm:$0xff]
  %v528 = vld [vmem:[%s1 + $0xfa0] sm:$0xff]
  %v529 = vld [vmem:[%s1 + $0xfa8] sm:$0xff]
  %v530 = vld [vmem:[%s1 + $0xfb0] sm:$0xff]
  %v531 = vld [vmem:[%s1 + $0xfb8] sm:$0xff]
  %v532 = vld [vmem:[%s1 + $0xfc0] sm:$0xff]
  %v533 = vld [vmem:[%s1 + $0xfc8] sm:$0xff]
  %v534 = vld [vmem:[%s1 + $0xfd0] sm:$0xff]
  %v535 = vld [vmem:[%s1 + $0xfd8] sm:$0xff]
  %v536 = vld [vmem:[%s1 + $0xfe0] sm:$0xff]
  %v537 = vld [vmem:[%s1 + $0xfe8] sm:$0xff]
  %v538 = vld [vmem:[%s1 + $0xff0] sm:$0xff]
  %v539 = vld [vmem:[%s1 + $0xff8] sm:$0xff]
  %v540 = vld [vmem:[%s2] sm:$0xf]
  %v542 = vlaneseq
  %v543 = vshrl.u32 %v542, 7
  %v544 = vsub.s32 0, %v543
  %v545 = vrot.slane %v540, %v544
  %v546 = vlaneseq
  %v547 = vshrl.u32 %v546, 7
  %v548 = vsub.s32 1, %v547
  %v549 = vrot.slane %v540, %v548
  %v550 = vlaneseq
  %v551 = vshrl.u32 %v550, 7
  %v552 = vsub.s32 2, %v551
  %v553 = vrot.slane %v540, %v552
  %v554 = vlaneseq
  %v555 = vshrl.u32 %v554, 7
  %v556 = vsub.s32 3, %v555
  %v557 = vrot.slane %v540, %v556
  %v564 = vcombine.high %v26, %v26
  %v566 = vunpack.c.l.s4 1983009808
  %v567 = vunpack.c.0.s8 %v566
  %v568 = vlaneseq
  %v569 = vshrl.u32 %v568, 7
  %v570 = vsub.s32 %v567, %v569
  %v571 = vrot.slane %v26, %v570
  %v573 = vunpack.c.l.s4 1983009808
  %v574 = vunpack.c.0.s8 %v573
  %v575 = vlaneseq
  %v576 = vshrl.u32 %v575, 7
  %v577 = vsub.s32 %v574, %v576
  %v578 = vrot.slane %v564, %v577
  %v579 = vcombine.high %v571, %v571
  %v580 = vcombine.high %v578, %v578
  %v581 = vcombine.high %v27, %v27
  %v583 = vunpack.c.l.s4 1983009808
  %v584 = vunpack.c.0.s8 %v583
  %v585 = vlaneseq
  %v586 = vshrl.u32 %v585, 7
  %v587 = vsub.s32 %v584, %v586
  %v588 = vrot.slane %v27, %v587
  %v590 = vunpack.c.l.s4 1983009808
  %v591 = vunpack.c.0.s8 %v590
  %v592 = vlaneseq
  %v593 = vshrl.u32 %v592, 7
  %v594 = vsub.s32 %v591, %v593
  %v595 = vrot.slane %v581, %v594
  %v596 = vcombine.high %v588, %v588
  %v597 = vcombine.high %v595, %v595
  %606 = vmatprep.subr.mxu0 %v89
  %607 = vmatpush1.msra.mxu0 %v88
  %608 = vmatprep.subr.mxu0 %v85
  %609 = vmatpush1.msra.mxu0 %v84
  %610 = vmatprep.subr.mxu0 %v81
  %611 = vmatpush1.msra.mxu0 %v80
  %612 = vmatprep.subr.mxu0 %v77
  %613 = vmatpush1.msra.mxu0 %v76
  %614 = vmatprep.subr.mxu0 %v73
  %615 = vmatpush1.msra.mxu0 %v72
  %616 = vmatprep.subr.mxu0 %v69
  %617 = vmatpush1.msra.mxu0 %v68
  %618 = vmatprep.subr.mxu0 %v65
  %619 = vmatpush1.msra.mxu0 %v64
  %620 = vmatprep.subr.mxu0 %v61
  %621 = vmatpush1.msra.mxu0 %v60
  %622 = vmatprep.subr.mxu0 %v57
  %623 = vmatpush1.msra.mxu0 %v56
  %624 = vmatprep.subr.mxu0 %v53
  %625 = vmatpush1.msra.mxu0 %v52
  %626 = vmatprep.subr.mxu0 %v49
  %627 = vmatpush1.msra.mxu0 %v48
  %628 = vmatprep.subr.mxu0 %v45
  %629 = vmatpush1.msra.mxu0 %v44
  %630 = vmatprep.subr.mxu0 %v41
  %631 = vmatpush1.msra.mxu0 %v40
  %632 = vmatprep.subr.mxu0 %v37
  %633 = vmatpush1.msra.mxu0 %v36
  %634 = vmatprep.subr.mxu0 %v33
  %635 = vmatpush1.msra.mxu0 %v32
  %636 = vmatprep.subr.mxu0 %v29
  %637 = vmatpush1.msra.mxu0 %v28
  %638 = vmatprep.subr.mxu0 %v153
  %639 = vmatpush2.msra.mxu0 %v152
  %640 = vmatprep.subr.mxu0 %v149
  %641 = vmatpush2.msra.mxu0 %v148
  %642 = vmatprep.subr.mxu0 %v145
  %643 = vmatpush2.msra.mxu0 %v144
  %644 = vmatprep.subr.mxu0 %v141
  %645 = vmatpush2.msra.mxu0 %v140
  %646 = vmatprep.subr.mxu0 %v137
  %647 = vmatpush2.msra.mxu0 %v136
  %648 = vmatprep.subr.mxu0 %v133
  %649 = vmatpush2.msra.mxu0 %v132
  %650 = vmatprep.subr.mxu0 %v129
  %651 = vmatpush2.msra.mxu0 %v128
  %652 = vmatprep.subr.mxu0 %v125
  %653 = vmatpush2.msra.mxu0 %v124
  %654 = vmatprep.subr.mxu0 %v121
  %655 = vmatpush2.msra.mxu0 %v120
  %656 = vmatprep.subr.mxu0 %v117
  %657 = vmatpush2.msra.mxu0 %v116
  %658 = vmatprep.subr.mxu0 %v113
  %659 = vmatpush2.msra.mxu0 %v112
  %660 = vmatprep.subr.mxu0 %v109
  %661 = vmatpush2.msra.mxu0 %v108
  %662 = vmatprep.subr.mxu0 %v105
  %663 = vmatpush2.msra.mxu0 %v104
  %664 = vmatprep.subr.mxu0 %v101
  %665 = vmatpush2.msra.mxu0 %v100
  %666 = vmatprep.subr.mxu0 %v97
  %667 = vmatpush2.msra.mxu0 %v96
  %668 = vmatprep.subr.mxu0 %v93
  %669 = vmatpush2.msra.mxu0 %v92
  %670 = vmatprep.mubr.f32.mxu0 %v579
  %671 = vmatmul.mubr.f32.gmra.mxu0 %v571
  %v672 = vpop.f32.mrf.mxu0
  %v673 = vadd.f32 %v545, %v672
  %v674 = vpop.f32.mrf.mxu0
  %v675 = vadd.f32 %v549, %v674
  %676 = vdwg.mxu0
  %677 = vmatprep.subr.mxu0 %v217
  %678 = vmatpush1.msra.mxu0 %v216
  %679 = vmatprep.subr.mxu0 %v213
  %680 = vmatpush1.msra.mxu0 %v212
  %681 = vmatprep.subr.mxu0 %v209
  %682 = vmatpush1.msra.mxu0 %v208
  %683 = vmatprep.subr.mxu0 %v205
  %684 = vmatpush1.msra.mxu0 %v204
  %685 = vmatprep.subr.mxu0 %v201
  %686 = vmatpush1.msra.mxu0 %v200
  %687 = vmatprep.subr.mxu0 %v197
  %688 = vmatpush1.msra.mxu0 %v196
  %689 = vmatprep.subr.mxu0 %v193
  %690 = vmatpush1.msra.mxu0 %v192
  %691 = vmatprep.subr.mxu0 %v189
  %692 = vmatpush1.msra.mxu0 %v188
  %693 = vmatprep.subr.mxu0 %v185
  %694 = vmatpush1.msra.mxu0 %v184
  %695 = vmatprep.subr.mxu0 %v181
  %696 = vmatpush1.msra.mxu0 %v180
  %697 = vmatprep.subr.mxu0 %v177
  %698 = vmatpush1.msra.mxu0 %v176
  %699 = vmatprep.subr.mxu0 %v173
  %700 = vmatpush1.msra.mxu0 %v172
  %701 = vmatprep.subr.mxu0 %v169
  %702 = vmatpush1.msra.mxu0 %v168
  %703 = vmatprep.subr.mxu0 %v165
  %704 = vmatpush1.msra.mxu0 %v164
  %705 = vmatprep.subr.mxu0 %v161
  %706 = vmatpush1.msra.mxu0 %v160
  %707 = vmatprep.subr.mxu0 %v157
  %708 = vmatpush1.msra.mxu0 %v156
  %709 = vmatprep.subr.mxu0 %v281
  %710 = vmatpush2.msra.mxu0 %v280
  %711 = vmatprep.subr.mxu0 %v277
  %712 = vmatpush2.msra.mxu0 %v276
  %713 = vmatprep.subr.mxu0 %v273
  %714 = vmatpush2.msra.mxu0 %v272
  %715 = vmatprep.subr.mxu0 %v269
  %716 = vmatpush2.msra.mxu0 %v268
  %717 = vmatprep.subr.mxu0 %v265
  %718 = vmatpush2.msra.mxu0 %v264
  %719 = vmatprep.subr.mxu0 %v261
  %720 = vmatpush2.msra.mxu0 %v260
  %721 = vmatprep.subr.mxu0 %v257
  %722 = vmatpush2.msra.mxu0 %v256
  %723 = vmatprep.subr.mxu0 %v253
  %724 = vmatpush2.msra.mxu0 %v252
  %725 = vmatprep.subr.mxu0 %v249
  %726 = vmatpush2.msra.mxu0 %v248
  %727 = vmatprep.subr.mxu0 %v245
  %728 = vmatpush2.msra.mxu0 %v244
  %729 = vmatprep.subr.mxu0 %v241
  %730 = vmatpush2.msra.mxu0 %v240
  %731 = vmatprep.subr.mxu0 %v237
  %732 = vmatpush2.msra.mxu0 %v236
  %733 = vmatprep.subr.mxu0 %v233
  %734 = vmatpush2.msra.mxu0 %v232
  %735 = vmatprep.subr.mxu0 %v229
  %736 = vmatpush2.msra.mxu0 %v228
  %737 = vmatprep.subr.mxu0 %v225
  %738 = vmatpush2.msra.mxu0 %v224
  %739 = vmatprep.subr.mxu0 %v221
  %740 = vmatpush2.msra.mxu0 %v220
  %741 = vmatprep.mubr.f32.mxu0 %v580
  %742 = vmatmul.mubr.f32.gmra.mxu0 %v578
  %v743 = vpop.f32.mrf.mxu0
  %v744 = vadd.f32 %v673, %v743
  %v745 = vpop.f32.mrf.mxu0
  %v746 = vadd.f32 %v675, %v745
  %747 = vdwg.mxu0
  %748 = vmatprep.subr.mxu0 %v345
  %749 = vmatpush1.msra.mxu0 %v344
  %750 = vmatprep.subr.mxu0 %v341
  %751 = vmatpush1.msra.mxu0 %v340
  %752 = vmatprep.subr.mxu0 %v337
  %753 = vmatpush1.msra.mxu0 %v336
  %754 = vmatprep.subr.mxu0 %v333
  %755 = vmatpush1.msra.mxu0 %v332
  %756 = vmatprep.subr.mxu0 %v329
  %757 = vmatpush1.msra.mxu0 %v328
  %758 = vmatprep.subr.mxu0 %v325
  %759 = vmatpush1.msra.mxu0 %v324
  %760 = vmatprep.subr.mxu0 %v321
  %761 = vmatpush1.msra.mxu0 %v320
  %762 = vmatprep.subr.mxu0 %v317
  %763 = vmatpush1.msra.mxu0 %v316
  %764 = vmatprep.subr.mxu0 %v313
  %765 = vmatpush1.msra.mxu0 %v312
  %766 = vmatprep.subr.mxu0 %v309
  %767 = vmatpush1.msra.mxu0 %v308
  %768 = vmatprep.subr.mxu0 %v305
  %769 = vmatpush1.msra.mxu0 %v304
  %770 = vmatprep.subr.mxu0 %v301
  %771 = vmatpush1.msra.mxu0 %v300
  %772 = vmatprep.subr.mxu0 %v297
  %773 = vmatpush1.msra.mxu0 %v296
  %774 = vmatprep.subr.mxu0 %v293
  %775 = vmatpush1.msra.mxu0 %v292
  %776 = vmatprep.subr.mxu0 %v289
  %777 = vmatpush1.msra.mxu0 %v288
  %778 = vmatprep.subr.mxu0 %v285
  %779 = vmatpush1.msra.mxu0 %v284
  %780 = vmatprep.subr.mxu0 %v409
  %781 = vmatpush2.msra.mxu0 %v408
  %782 = vmatprep.subr.mxu0 %v405
  %783 = vmatpush2.msra.mxu0 %v404
  %784 = vmatprep.subr.mxu0 %v401
  %785 = vmatpush2.msra.mxu0 %v400
  %786 = vmatprep.subr.mxu0 %v397
  %787 = vmatpush2.msra.mxu0 %v396
  %788 = vmatprep.subr.mxu0 %v393
  %789 = vmatpush2.msra.mxu0 %v392
  %790 = vmatprep.subr.mxu0 %v389
  %791 = vmatpush2.msra.mxu0 %v388
  %792 = vmatprep.subr.mxu0 %v385
  %793 = vmatpush2.msra.mxu0 %v384
  %794 = vmatprep.subr.mxu0 %v381
  %795 = vmatpush2.msra.mxu0 %v380
  %796 = vmatprep.subr.mxu0 %v377
  %797 = vmatpush2.msra.mxu0 %v376
  %798 = vmatprep.subr.mxu0 %v373
  %799 = vmatpush2.msra.mxu0 %v372
  %800 = vmatprep.subr.mxu0 %v369
  %801 = vmatpush2.msra.mxu0 %v368
  %802 = vmatprep.subr.mxu0 %v365
  %803 = vmatpush2.msra.mxu0 %v364
  %804 = vmatprep.subr.mxu0 %v361
  %805 = vmatpush2.msra.mxu0 %v360
  %806 = vmatprep.subr.mxu0 %v357
  %807 = vmatpush2.msra.mxu0 %v356
  %808 = vmatprep.subr.mxu0 %v353
  %809 = vmatpush2.msra.mxu0 %v352
  %810 = vmatprep.subr.mxu0 %v349
  %811 = vmatpush2.msra.mxu0 %v348
  %812 = vmatprep.mubr.f32.mxu0 %v596
  %813 = vmatmul.mubr.f32.gmra.mxu0 %v588
  %v814 = vpop.f32.mrf.mxu0
  %v815 = vadd.f32 %v744, %v814
  %v816 = vpop.f32.mrf.mxu0
  %v817 = vadd.f32 %v746, %v816
  %818 = vdwg.mxu0
  %819 = vmatprep.subr.mxu0 %v473
  %820 = vmatpush1.msra.mxu0 %v472
  %821 = vmatprep.subr.mxu0 %v469
  %822 = vmatpush1.msra.mxu0 %v468
  %823 = vmatprep.subr.mxu0 %v465
  %824 = vmatpush1.msra.mxu0 %v464
  %825 = vmatprep.subr.mxu0 %v461
  %826 = vmatpush1.msra.mxu0 %v460
  %827 = vmatprep.subr.mxu0 %v457
  %828 = vmatpush1.msra.mxu0 %v456
  %829 = vmatprep.subr.mxu0 %v453
  %830 = vmatpush1.msra.mxu0 %v452
  %831 = vmatprep.subr.mxu0 %v449
  %832 = vmatpush1.msra.mxu0 %v448
  %833 = vmatprep.subr.mxu0 %v445
  %834 = vmatpush1.msra.mxu0 %v444
  %835 = vmatprep.subr.mxu0 %v441
  %836 = vmatpush1.msra.mxu0 %v440
  %837 = vmatprep.subr.mxu0 %v437
  %838 = vmatpush1.msra.mxu0 %v436
  %839 = vmatprep.subr.mxu0 %v433
  %840 = vmatpush1.msra.mxu0 %v432
  %841 = vmatprep.subr.mxu0 %v429
  %842 = vmatpush1.msra.mxu0 %v428
  %843 = vmatprep.subr.mxu0 %v425
  %844 = vmatpush1.msra.mxu0 %v424
  %845 = vmatprep.subr.mxu0 %v421
  %846 = vmatpush1.msra.mxu0 %v420
  %847 = vmatprep.subr.mxu0 %v417
  %848 = vmatpush1.msra.mxu0 %v416
  %849 = vmatprep.subr.mxu0 %v413
  %850 = vmatpush1.msra.mxu0 %v412
  %851 = vmatprep.subr.mxu0 %v537
  %852 = vmatpush2.msra.mxu0 %v536
  %853 = vmatprep.subr.mxu0 %v533
  %854 = vmatpush2.msra.mxu0 %v532
  %855 = vmatprep.subr.mxu0 %v529
  %856 = vmatpush2.msra.mxu0 %v528
  %857 = vmatprep.subr.mxu0 %v525
  %858 = vmatpush2.msra.mxu0 %v524
  %859 = vmatprep.subr.mxu0 %v521
  %860 = vmatpush2.msra.mxu0 %v520
  %861 = vmatprep.subr.mxu0 %v517
  %862 = vmatpush2.msra.mxu0 %v516
  %863 = vmatprep.subr.mxu0 %v513
  %864 = vmatpush2.msra.mxu0 %v512
  %865 = vmatprep.subr.mxu0 %v509
  %866 = vmatpush2.msra.mxu0 %v508
  %867 = vmatprep.subr.mxu0 %v505
  %868 = vmatpush2.msra.mxu0 %v504
  %869 = vmatprep.subr.mxu0 %v501
  %870 = vmatpush2.msra.mxu0 %v500
  %871 = vmatprep.subr.mxu0 %v497
  %872 = vmatpush2.msra.mxu0 %v496
  %873 = vmatprep.subr.mxu0 %v493
  %874 = vmatpush2.msra.mxu0 %v492
  %875 = vmatprep.subr.mxu0 %v489
  %876 = vmatpush2.msra.mxu0 %v488
  %877 = vmatprep.subr.mxu0 %v485
  %878 = vmatpush2.msra.mxu0 %v484
  %879 = vmatprep.subr.mxu0 %v481
  %880 = vmatpush2.msra.mxu0 %v480
  %881 = vmatprep.subr.mxu0 %v477
  %882 = vmatpush2.msra.mxu0 %v476
  %883 = vmatprep.mubr.f32.mxu0 %v597
  %884 = vmatmul.mubr.f32.gmra.mxu0 %v595
  %v885 = vpop.f32.mrf.mxu0
  %v886 = vadd.f32 %v815, %v885
  %v887 = vpop.f32.mrf.mxu0
  %v888 = vadd.f32 %v817, %v887
  %889 = vdwg.mxu0
  %890 = vmatprep.subr.mxu0 %v91
  %891 = vmatpush1.msra.mxu0 %v90
  %892 = vmatprep.subr.mxu0 %v87
  %893 = vmatpush1.msra.mxu0 %v86
  %894 = vmatprep.subr.mxu0 %v83
  %895 = vmatpush1.msra.mxu0 %v82
  %896 = vmatprep.subr.mxu0 %v79
  %897 = vmatpush1.msra.mxu0 %v78
  %898 = vmatprep.subr.mxu0 %v75
  %899 = vmatpush1.msra.mxu0 %v74
  %900 = vmatprep.subr.mxu0 %v71
  %901 = vmatpush1.msra.mxu0 %v70
  %902 = vmatprep.subr.mxu0 %v67
  %903 = vmatpush1.msra.mxu0 %v66
  %904 = vmatprep.subr.mxu0 %v63
  %905 = vmatpush1.msra.mxu0 %v62
  %906 = vmatprep.subr.mxu0 %v59
  %907 = vmatpush1.msra.mxu0 %v58
  %908 = vmatprep.subr.mxu0 %v55
  %909 = vmatpush1.msra.mxu0 %v54
  %910 = vmatprep.subr.mxu0 %v51
  %911 = vmatpush1.msra.mxu0 %v50
  %912 = vmatprep.subr.mxu0 %v47
  %913 = vmatpush1.msra.mxu0 %v46
  %914 = vmatprep.subr.mxu0 %v43
  %915 = vmatpush1.msra.mxu0 %v42
  %916 = vmatprep.subr.mxu0 %v39
  %917 = vmatpush1.msra.mxu0 %v38
  %918 = vmatprep.subr.mxu0 %v35
  %919 = vmatpush1.msra.mxu0 %v34
  %920 = vmatprep.subr.mxu0 %v31
  %921 = vmatpush1.msra.mxu0 %v30
  %922 = vmatprep.subr.mxu0 %v155
  %923 = vmatpush2.msra.mxu0 %v154
  %924 = vmatprep.subr.mxu0 %v151
  %925 = vmatpush2.msra.mxu0 %v150
  %926 = vmatprep.subr.mxu0 %v147
  %927 = vmatpush2.msra.mxu0 %v146
  %928 = vmatprep.subr.mxu0 %v143
  %929 = vmatpush2.msra.mxu0 %v142
  %930 = vmatprep.subr.mxu0 %v139
  %931 = vmatpush2.msra.mxu0 %v138
  %932 = vmatprep.subr.mxu0 %v135
  %933 = vmatpush2.msra.mxu0 %v134
  %934 = vmatprep.subr.mxu0 %v131
  %935 = vmatpush2.msra.mxu0 %v130
  %936 = vmatprep.subr.mxu0 %v127
  %937 = vmatpush2.msra.mxu0 %v126
  %938 = vmatprep.subr.mxu0 %v123
  %939 = vmatpush2.msra.mxu0 %v122
  %940 = vmatprep.subr.mxu0 %v119
  %941 = vmatpush2.msra.mxu0 %v118
  %942 = vmatprep.subr.mxu0 %v115
  %943 = vmatpush2.msra.mxu0 %v114
  %944 = vmatprep.subr.mxu0 %v111
  %945 = vmatpush2.msra.mxu0 %v110
  %946 = vmatprep.subr.mxu0 %v107
  %947 = vmatpush2.msra.mxu0 %v106
  %948 = vmatprep.subr.mxu0 %v103
  %949 = vmatpush2.msra.mxu0 %v102
  %950 = vmatprep.subr.mxu0 %v99
  %951 = vmatpush2.msra.mxu0 %v98
  %952 = vmatprep.subr.mxu0 %v95
  %953 = vmatpush2.msra.mxu0 %v94
  %954 = vmatprep.mubr.f32.mxu0 %v579
  %955 = vmatmul.mubr.f32.gmra.mxu0 %v571
  %v956 = vpop.f32.mrf.mxu0
  %v957 = vadd.f32 %v553, %v956
  %v958 = vpop.f32.mrf.mxu0
  %v959 = vadd.f32 %v557, %v958
  %960 = vdwg.mxu0
  %961 = vmatprep.subr.mxu0 %v219
  %962 = vmatpush1.msra.mxu0 %v218
  %963 = vmatprep.subr.mxu0 %v215
  %964 = vmatpush1.msra.mxu0 %v214
  %965 = vmatprep.subr.mxu0 %v211
  %966 = vmatpush1.msra.mxu0 %v210
  %967 = vmatprep.subr.mxu0 %v207
  %968 = vmatpush1.msra.mxu0 %v206
  %969 = vmatprep.subr.mxu0 %v203
  %970 = vmatpush1.msra.mxu0 %v202
  %971 = vmatprep.subr.mxu0 %v199
  %972 = vmatpush1.msra.mxu0 %v198
  %973 = vmatprep.subr.mxu0 %v195
  %974 = vmatpush1.msra.mxu0 %v194
  %975 = vmatprep.subr.mxu0 %v191
  %976 = vmatpush1.msra.mxu0 %v190
  %977 = vmatprep.subr.mxu0 %v187
  %978 = vmatpush1.msra.mxu0 %v186
  %979 = vmatprep.subr.mxu0 %v183
  %980 = vmatpush1.msra.mxu0 %v182
  %981 = vmatprep.subr.mxu0 %v179
  %982 = vmatpush1.msra.mxu0 %v178
  %983 = vmatprep.subr.mxu0 %v175
  %984 = vmatpush1.msra.mxu0 %v174
  %985 = vmatprep.subr.mxu0 %v171
  %986 = vmatpush1.msra.mxu0 %v170
  %987 = vmatprep.subr.mxu0 %v167
  %988 = vmatpush1.msra.mxu0 %v166
  %989 = vmatprep.subr.mxu0 %v163
  %990 = vmatpush1.msra.mxu0 %v162
  %991 = vmatprep.subr.mxu0 %v159
  %992 = vmatpush1.msra.mxu0 %v158
  %993 = vmatprep.subr.mxu0 %v283
  %994 = vmatpush2.msra.mxu0 %v282
  %995 = vmatprep.subr.mxu0 %v279
  %996 = vmatpush2.msra.mxu0 %v278
  %997 = vmatprep.subr.mxu0 %v275
  %998 = vmatpush2.msra.mxu0 %v274
  %999 = vmatprep.subr.mxu0 %v271
  %1000 = vmatpush2.msra.mxu0 %v270
  %1001 = vmatprep.subr.mxu0 %v267
  %1002 = vmatpush2.msra.mxu0 %v266
  %1003 = vmatprep.subr.mxu0 %v263
  %1004 = vmatpush2.msra.mxu0 %v262
  %1005 = vmatprep.subr.mxu0 %v259
  %1006 = vmatpush2.msra.mxu0 %v258
  %1007 = vmatprep.subr.mxu0 %v255
  %1008 = vmatpush2.msra.mxu0 %v254
  %1009 = vmatprep.subr.mxu0 %v251
  %1010 = vmatpush2.msra.mxu0 %v250
  %1011 = vmatprep.subr.mxu0 %v247
  %1012 = vmatpush2.msra.mxu0 %v246
  %1013 = vmatprep.subr.mxu0 %v243
  %1014 = vmatpush2.msra.mxu0 %v242
  %1015 = vmatprep.subr.mxu0 %v239
  %1016 = vmatpush2.msra.mxu0 %v238
  %1017 = vmatprep.subr.mxu0 %v235
  %1018 = vmatpush2.msra.mxu0 %v234
  %1019 = vmatprep.subr.mxu0 %v231
  %1020 = vmatpush2.msra.mxu0 %v230
  %1021 = vmatprep.subr.mxu0 %v227
  %1022 = vmatpush2.msra.mxu0 %v226
  %1023 = vmatprep.subr.mxu0 %v223
  %1024 = vmatpush2.msra.mxu0 %v222
  %1025 = vmatprep.mubr.f32.mxu0 %v580
  %1026 = vmatmul.mubr.f32.gmra.mxu0 %v578
  %v1027 = vpop.f32.mrf.mxu0
  %v1028 = vadd.f32 %v957, %v1027
  %v1029 = vpop.f32.mrf.mxu0
  %v1030 = vadd.f32 %v959, %v1029
  %1031 = vdwg.mxu0
  %1032 = vmatprep.subr.mxu0 %v347
  %1033 = vmatpush1.msra.mxu0 %v346
  %1034 = vmatprep.subr.mxu0 %v343
  %1035 = vmatpush1.msra.mxu0 %v342
  %1036 = vmatprep.subr.mxu0 %v339
  %1037 = vmatpush1.msra.mxu0 %v338
  %1038 = vmatprep.subr.mxu0 %v335
  %1039 = vmatpush1.msra.mxu0 %v334
  %1040 = vmatprep.subr.mxu0 %v331
  %1041 = vmatpush1.msra.mxu0 %v330
  %1042 = vmatprep.subr.mxu0 %v327
  %1043 = vmatpush1.msra.mxu0 %v326
  %1044 = vmatprep.subr.mxu0 %v323
  %1045 = vmatpush1.msra.mxu0 %v322
  %1046 = vmatprep.subr.mxu0 %v319
  %1047 = vmatpush1.msra.mxu0 %v318
  %1048 = vmatprep.subr.mxu0 %v315
  %1049 = vmatpush1.msra.mxu0 %v314
  %1050 = vmatprep.subr.mxu0 %v311
  %1051 = vmatpush1.msra.mxu0 %v310
  %1052 = vmatprep.subr.mxu0 %v307
  %1053 = vmatpush1.msra.mxu0 %v306
  %1054 = vmatprep.subr.mxu0 %v303
  %1055 = vmatpush1.msra.mxu0 %v302
  %1056 = vmatprep.subr.mxu0 %v299
  %1057 = vmatpush1.msra.mxu0 %v298
  %1058 = vmatprep.subr.mxu0 %v295
  %1059 = vmatpush1.msra.mxu0 %v294
  %1060 = vmatprep.subr.mxu0 %v291
  %1061 = vmatpush1.msra.mxu0 %v290
  %1062 = vmatprep.subr.mxu0 %v287
  %1063 = vmatpush1.msra.mxu0 %v286
  %1064 = vmatprep.subr.mxu0 %v411
  %1065 = vmatpush2.msra.mxu0 %v410
  %1066 = vmatprep.subr.mxu0 %v407
  %1067 = vmatpush2.msra.mxu0 %v406
  %1068 = vmatprep.subr.mxu0 %v403
  %1069 = vmatpush2.msra.mxu0 %v402
  %1070 = vmatprep.subr.mxu0 %v399
  %1071 = vmatpush2.msra.mxu0 %v398
  %1072 = vmatprep.subr.mxu0 %v395
  %1073 = vmatpush2.msra.mxu0 %v394
  %1074 = vmatprep.subr.mxu0 %v391
  %1075 = vmatpush2.msra.mxu0 %v390
  %1076 = vmatprep.subr.mxu0 %v387
  %1077 = vmatpush2.msra.mxu0 %v386
  %1078 = vmatprep.subr.mxu0 %v383
  %1079 = vmatpush2.msra.mxu0 %v382
  %1080 = vmatprep.subr.mxu0 %v379
  %1081 = vmatpush2.msra.mxu0 %v378
  %1082 = vmatprep.subr.mxu0 %v375
  %1083 = vmatpush2.msra.mxu0 %v374
  %1084 = vmatprep.subr.mxu0 %v371
  %1085 = vmatpush2.msra.mxu0 %v370
  %1086 = vmatprep.subr.mxu0 %v367
  %1087 = vmatpush2.msra.mxu0 %v366
  %1088 = vmatprep.subr.mxu0 %v363
  %1089 = vmatpush2.msra.mxu0 %v362
  %1090 = vmatprep.subr.mxu0 %v359
  %1091 = vmatpush2.msra.mxu0 %v358
  %1092 = vmatprep.subr.mxu0 %v355
  %1093 = vmatpush2.msra.mxu0 %v354
  %1094 = vmatprep.subr.mxu0 %v351
  %1095 = vmatpush2.msra.mxu0 %v350
  %1096 = vmatprep.mubr.f32.mxu0 %v596
  %1097 = vmatmul.mubr.f32.gmra.mxu0 %v588
  %v1098 = vpop.f32.mrf.mxu0
  %v1099 = vadd.f32 %v1028, %v1098
  %v1100 = vpop.f32.mrf.mxu0
  %v1101 = vadd.f32 %v1030, %v1100
  %1102 = vdwg.mxu0
  %1103 = vmatprep.subr.mxu0 %v475
  %1104 = vmatpush1.msra.mxu0 %v474
  %1105 = vmatprep.subr.mxu0 %v471
  %1106 = vmatpush1.msra.mxu0 %v470
  %1107 = vmatprep.subr.mxu0 %v467
  %1108 = vmatpush1.msra.mxu0 %v466
  %1109 = vmatprep.subr.mxu0 %v463
  %1110 = vmatpush1.msra.mxu0 %v462
  %1111 = vmatprep.subr.mxu0 %v459
  %1112 = vmatpush1.msra.mxu0 %v458
  %1113 = vmatprep.subr.mxu0 %v455
  %1114 = vmatpush1.msra.mxu0 %v454
  %1115 = vmatprep.subr.mxu0 %v451
  %1116 = vmatpush1.msra.mxu0 %v450
  %1117 = vmatprep.subr.mxu0 %v447
  %1118 = vmatpush1.msra.mxu0 %v446
  %1119 = vmatprep.subr.mxu0 %v443
  %1120 = vmatpush1.msra.mxu0 %v442
  %1121 = vmatprep.subr.mxu0 %v439
  %1122 = vmatpush1.msra.mxu0 %v438
  %1123 = vmatprep.subr.mxu0 %v435
  %1124 = vmatpush1.msra.mxu0 %v434
  %1125 = vmatprep.subr.mxu0 %v431
  %1126 = vmatpush1.msra.mxu0 %v430
  %1127 = vmatprep.subr.mxu0 %v427
  %1128 = vmatpush1.msra.mxu0 %v426
  %1129 = vmatprep.subr.mxu0 %v423
  %1130 = vmatpush1.msra.mxu0 %v422
  %1131 = vmatprep.subr.mxu0 %v419
  %1132 = vmatpush1.msra.mxu0 %v418
  %1133 = vmatprep.subr.mxu0 %v415
  %1134 = vmatpush1.msra.mxu0 %v414
  %1135 = vmatprep.subr.mxu0 %v539
  %1136 = vmatpush2.msra.mxu0 %v538
  %1137 = vmatprep.subr.mxu0 %v535
  %1138 = vmatpush2.msra.mxu0 %v534
  %1139 = vmatprep.subr.mxu0 %v531
  %1140 = vmatpush2.msra.mxu0 %v530
  %1141 = vmatprep.subr.mxu0 %v527
  %1142 = vmatpush2.msra.mxu0 %v526
  %1143 = vmatprep.subr.mxu0 %v523
  %1144 = vmatpush2.msra.mxu0 %v522
  %1145 = vmatprep.subr.mxu0 %v519
  %1146 = vmatpush2.msra.mxu0 %v518
  %1147 = vmatprep.subr.mxu0 %v515
  %1148 = vmatpush2.msra.mxu0 %v514
  %1149 = vmatprep.subr.mxu0 %v511
  %1150 = vmatpush2.msra.mxu0 %v510
  %1151 = vmatprep.subr.mxu0 %v507
  %1152 = vmatpush2.msra.mxu0 %v506
  %1153 = vmatprep.subr.mxu0 %v503
  %1154 = vmatpush2.msra.mxu0 %v502
  %1155 = vmatprep.subr.mxu0 %v499
  %1156 = vmatpush2.msra.mxu0 %v498
  %1157 = vmatprep.subr.mxu0 %v495
  %1158 = vmatpush2.msra.mxu0 %v494
  %1159 = vmatprep.subr.mxu0 %v491
  %1160 = vmatpush2.msra.mxu0 %v490
  %1161 = vmatprep.subr.mxu0 %v487
  %1162 = vmatpush2.msra.mxu0 %v486
  %1163 = vmatprep.subr.mxu0 %v483
  %1164 = vmatpush2.msra.mxu0 %v482
  %1165 = vmatprep.subr.mxu0 %v479
  %1166 = vmatpush2.msra.mxu0 %v478
  %1167 = vmatprep.mubr.f32.mxu0 %v597
  %1168 = vmatmul.mubr.f32.gmra.mxu0 %v595
  %v1169 = vpop.f32.mrf.mxu0
  %v1170 = vadd.f32 %v1099, %v1169
  %v1171 = vpop.f32.mrf.mxu0
  %v1172 = vadd.f32 %v1101, %v1171
  %1173 = vdwg.mxu0
  %v1174 = vmax.f32 %v886, 0.0
  %v1175 = vmax.f32 %v888, 0.0
  %v1176 = vmax.f32 %v1170, 0.0
  %v1177 = vmax.f32 %v1172, 0.0
  %v1178 = vld [vmem:[%s3] sm:$0xff]
  %v1179 = vld [vmem:[%s3 + $0x8] sm:$0xff]
  %v1180 = vld [vmem:[%s3 + $0x10] sm:$0xff]
  %v1181 = vld [vmem:[%s3 + $0x18] sm:$0xff]
  %v1182 = vld [vmem:[%s3 + $0x20] sm:$0xff]
  %v1183 = vld [vmem:[%s3 + $0x28] sm:$0xff]
  %v1184 = vld [vmem:[%s3 + $0x30] sm:$0xff]
  %v1185 = vld [vmem:[%s3 + $0x38] sm:$0xff]
  %v1186 = vld [vmem:[%s3 + $0x40] sm:$0xff]
  %v1187 = vld [vmem:[%s3 + $0x48] sm:$0xff]
  %v1188 = vld [vmem:[%s3 + $0x50] sm:$0xff]
  %v1189 = vld [vmem:[%s3 + $0x58] sm:$0xff]
  %v1190 = vld [vmem:[%s3 + $0x60] sm:$0xff]
  %v1191 = vld [vmem:[%s3 + $0x68] sm:$0xff]
  %v1192 = vld [vmem:[%s3 + $0x70] sm:$0xff]
  %v1193 = vld [vmem:[%s3 + $0x78] sm:$0xff]
  %v1194 = vld [vmem:[%s3 + $0x80] sm:$0xff]
  %v1195 = vld [vmem:[%s3 + $0x88] sm:$0xff]
  %v1196 = vld [vmem:[%s3 + $0x90] sm:$0xff]
  %v1197 = vld [vmem:[%s3 + $0x98] sm:$0xff]
  %v1198 = vld [vmem:[%s3 + $0xa0] sm:$0xff]
  %v1199 = vld [vmem:[%s3 + $0xa8] sm:$0xff]
  %v1200 = vld [vmem:[%s3 + $0xb0] sm:$0xff]
  %v1201 = vld [vmem:[%s3 + $0xb8] sm:$0xff]
  %v1202 = vld [vmem:[%s3 + $0xc0] sm:$0xff]
  %v1203 = vld [vmem:[%s3 + $0xc8] sm:$0xff]
  %v1204 = vld [vmem:[%s3 + $0xd0] sm:$0xff]
  %v1205 = vld [vmem:[%s3 + $0xd8] sm:$0xff]
  %v1206 = vld [vmem:[%s3 + $0xe0] sm:$0xff]
  %v1207 = vld [vmem:[%s3 + $0xe8] sm:$0xff]
  %v1208 = vld [vmem:[%s3 + $0xf0] sm:$0xff]
  %v1209 = vld [vmem:[%s3 + $0xf8] sm:$0xff]
  %v1210 = vld [vmem:[%s3 + $0x100] sm:$0xff]
  %v1211 = vld [vmem:[%s3 + $0x108] sm:$0xff]
  %v1212 = vld [vmem:[%s3 + $0x110] sm:$0xff]
  %v1213 = vld [vmem:[%s3 + $0x118] sm:$0xff]
  %v1214 = vld [vmem:[%s3 + $0x120] sm:$0xff]
  %v1215 = vld [vmem:[%s3 + $0x128] sm:$0xff]
  %v1216 = vld [vmem:[%s3 + $0x130] sm:$0xff]
  %v1217 = vld [vmem:[%s3 + $0x138] sm:$0xff]
  %v1218 = vld [vmem:[%s3 + $0x140] sm:$0xff]
  %v1219 = vld [vmem:[%s3 + $0x148] sm:$0xff]
  %v1220 = vld [vmem:[%s3 + $0x150] sm:$0xff]
  %v1221 = vld [vmem:[%s3 + $0x158] sm:$0xff]
  %v1222 = vld [vmem:[%s3 + $0x160] sm:$0xff]
  %v1223 = vld [vmem:[%s3 + $0x168] sm:$0xff]
  %v1224 = vld [vmem:[%s3 + $0x170] sm:$0xff]
  %v1225 = vld [vmem:[%s3 + $0x178] sm:$0xff]
  %v1226 = vld [vmem:[%s3 + $0x180] sm:$0xff]
  %v1227 = vld [vmem:[%s3 + $0x188] sm:$0xff]
  %v1228 = vld [vmem:[%s3 + $0x190] sm:$0xff]
  %v1229 = vld [vmem:[%s3 + $0x198] sm:$0xff]
  %v1230 = vld [vmem:[%s3 + $0x1a0] sm:$0xff]
  %v1231 = vld [vmem:[%s3 + $0x1a8] sm:$0xff]
  %v1232 = vld [vmem:[%s3 + $0x1b0] sm:$0xff]
  %v1233 = vld [vmem:[%s3 + $0x1b8] sm:$0xff]
  %v1234 = vld [vmem:[%s3 + $0x1c0] sm:$0xff]
  %v1235 = vld [vmem:[%s3 + $0x1c8] sm:$0xff]
  %v1236 = vld [vmem:[%s3 + $0x1d0] sm:$0xff]
  %v1237 = vld [vmem:[%s3 + $0x1d8] sm:$0xff]
  %v1238 = vld [vmem:[%s3 + $0x1e0] sm:$0xff]
  %v1239 = vld [vmem:[%s3 + $0x1e8] sm:$0xff]
  %v1240 = vld [vmem:[%s3 + $0x1f0] sm:$0xff]
  %v1241 = vld [vmem:[%s3 + $0x1f8] sm:$0xff]
  %v1242 = vld [vmem:[%s3 + $0x200] sm:$0xff]
  %v1243 = vld [vmem:[%s3 + $0x208] sm:$0xff]
  %v1244 = vld [vmem:[%s3 + $0x210] sm:$0xff]
  %v1245 = vld [vmem:[%s3 + $0x218] sm:$0xff]
  %v1246 = vld [vmem:[%s3 + $0x220] sm:$0xff]
  %v1247 = vld [vmem:[%s3 + $0x228] sm:$0xff]
  %v1248 = vld [vmem:[%s3 + $0x230] sm:$0xff]
  %v1249 = vld [vmem:[%s3 + $0x238] sm:$0xff]
  %v1250 = vld [vmem:[%s3 + $0x240] sm:$0xff]
  %v1251 = vld [vmem:[%s3 + $0x248] sm:$0xff]
  %v1252 = vld [vmem:[%s3 + $0x250] sm:$0xff]
  %v1253 = vld [vmem:[%s3 + $0x258] sm:$0xff]
  %v1254 = vld [vmem:[%s3 + $0x260] sm:$0xff]
  %v1255 = vld [vmem:[%s3 + $0x268] sm:$0xff]
  %v1256 = vld [vmem:[%s3 + $0x270] sm:$0xff]
  %v1257 = vld [vmem:[%s3 + $0x278] sm:$0xff]
  %v1258 = vld [vmem:[%s3 + $0x280] sm:$0xff]
  %v1259 = vld [vmem:[%s3 + $0x288] sm:$0xff]
  %v1260 = vld [vmem:[%s3 + $0x290] sm:$0xff]
  %v1261 = vld [vmem:[%s3 + $0x298] sm:$0xff]
  %v1262 = vld [vmem:[%s3 + $0x2a0] sm:$0xff]
  %v1263 = vld [vmem:[%s3 + $0x2a8] sm:$0xff]
  %v1264 = vld [vmem:[%s3 + $0x2b0] sm:$0xff]
  %v1265 = vld [vmem:[%s3 + $0x2b8] sm:$0xff]
  %v1266 = vld [vmem:[%s3 + $0x2c0] sm:$0xff]
  %v1267 = vld [vmem:[%s3 + $0x2c8] sm:$0xff]
  %v1268 = vld [vmem:[%s3 + $0x2d0] sm:$0xff]
  %v1269 = vld [vmem:[%s3 + $0x2d8] sm:$0xff]
  %v1270 = vld [vmem:[%s3 + $0x2e0] sm:$0xff]
  %v1271 = vld [vmem:[%s3 + $0x2e8] sm:$0xff]
  %v1272 = vld [vmem:[%s3 + $0x2f0] sm:$0xff]
  %v1273 = vld [vmem:[%s3 + $0x2f8] sm:$0xff]
  %v1274 = vld [vmem:[%s3 + $0x300] sm:$0xff]
  %v1275 = vld [vmem:[%s3 + $0x308] sm:$0xff]
  %v1276 = vld [vmem:[%s3 + $0x310] sm:$0xff]
  %v1277 = vld [vmem:[%s3 + $0x318] sm:$0xff]
  %v1278 = vld [vmem:[%s3 + $0x320] sm:$0xff]
  %v1279 = vld [vmem:[%s3 + $0x328] sm:$0xff]
  %v1280 = vld [vmem:[%s3 + $0x330] sm:$0xff]
  %v1281 = vld [vmem:[%s3 + $0x338] sm:$0xff]
  %v1282 = vld [vmem:[%s3 + $0x340] sm:$0xff]
  %v1283 = vld [vmem:[%s3 + $0x348] sm:$0xff]
  %v1284 = vld [vmem:[%s3 + $0x350] sm:$0xff]
  %v1285 = vld [vmem:[%s3 + $0x358] sm:$0xff]
  %v1286 = vld [vmem:[%s3 + $0x360] sm:$0xff]
  %v1287 = vld [vmem:[%s3 + $0x368] sm:$0xff]
  %v1288 = vld [vmem:[%s3 + $0x370] sm:$0xff]
  %v1289 = vld [vmem:[%s3 + $0x378] sm:$0xff]
  %v1290 = vld [vmem:[%s3 + $0x380] sm:$0xff]
  %v1291 = vld [vmem:[%s3 + $0x388] sm:$0xff]
  %v1292 = vld [vmem:[%s3 + $0x390] sm:$0xff]
  %v1293 = vld [vmem:[%s3 + $0x398] sm:$0xff]
  %v1294 = vld [vmem:[%s3 + $0x3a0] sm:$0xff]
  %v1295 = vld [vmem:[%s3 + $0x3a8] sm:$0xff]
  %v1296 = vld [vmem:[%s3 + $0x3b0] sm:$0xff]
  %v1297 = vld [vmem:[%s3 + $0x3b8] sm:$0xff]
  %v1298 = vld [vmem:[%s3 + $0x3c0] sm:$0xff]
  %v1299 = vld [vmem:[%s3 + $0x3c8] sm:$0xff]
  %v1300 = vld [vmem:[%s3 + $0x3d0] sm:$0xff]
  %v1301 = vld [vmem:[%s3 + $0x3d8] sm:$0xff]
  %v1302 = vld [vmem:[%s3 + $0x3e0] sm:$0xff]
  %v1303 = vld [vmem:[%s3 + $0x3e8] sm:$0xff]
  %v1304 = vld [vmem:[%s3 + $0x3f0] sm:$0xff]
  %v1305 = vld [vmem:[%s3 + $0x3f8] sm:$0xff]
  %v1306 = vld [vmem:[%s4] sm:$0x3]
  %v1308 = vlaneseq
  %v1309 = vshrl.u32 %v1308, 7
  %v1310 = vsub.s32 0, %v1309
  %v1311 = vrot.slane %v1306, %v1310
  %v1312 = vlaneseq
  %v1313 = vshrl.u32 %v1312, 7
  %v1314 = vsub.s32 1, %v1313
  %v1315 = vrot.slane %v1306, %v1314
  %1318 = vmatprep.subr.mxu0 %v1209
  %1319 = vmatpush1.msra.mxu0 %v1208
  %1320 = vmatprep.subr.mxu0 %v1207
  %1321 = vmatpush1.msra.mxu0 %v1206
  %1322 = vmatprep.subr.mxu0 %v1205
  %1323 = vmatpush1.msra.mxu0 %v1204
  %1324 = vmatprep.subr.mxu0 %v1203
  %1325 = vmatpush1.msra.mxu0 %v1202
  %1326 = vmatprep.subr.mxu0 %v1201
  %1327 = vmatpush1.msra.mxu0 %v1200
  %1328 = vmatprep.subr.mxu0 %v1199
  %1329 = vmatpush1.msra.mxu0 %v1198
  %1330 = vmatprep.subr.mxu0 %v1197
  %1331 = vmatpush1.msra.mxu0 %v1196
  %1332 = vmatprep.subr.mxu0 %v1195
  %1333 = vmatpush1.msra.mxu0 %v1194
  %1334 = vmatprep.subr.mxu0 %v1193
  %1335 = vmatpush1.msra.mxu0 %v1192
  %1336 = vmatprep.subr.mxu0 %v1191
  %1337 = vmatpush1.msra.mxu0 %v1190
  %1338 = vmatprep.subr.mxu0 %v1189
  %1339 = vmatpush1.msra.mxu0 %v1188
  %1340 = vmatprep.subr.mxu0 %v1187
  %1341 = vmatpush1.msra.mxu0 %v1186
  %1342 = vmatprep.subr.mxu0 %v1185
  %1343 = vmatpush1.msra.mxu0 %v1184
  %1344 = vmatprep.subr.mxu0 %v1183
  %1345 = vmatpush1.msra.mxu0 %v1182
  %1346 = vmatprep.subr.mxu0 %v1181
  %1347 = vmatpush1.msra.mxu0 %v1180
  %1348 = vmatprep.subr.mxu0 %v1179
  %1349 = vmatpush1.msra.mxu0 %v1178
  %1350 = vmatprep.subr.mxu0 %v1241
  %1351 = vmatpush2.msra.mxu0 %v1240
  %1352 = vmatprep.subr.mxu0 %v1239
  %1353 = vmatpush2.msra.mxu0 %v1238
  %1354 = vmatprep.subr.mxu0 %v1237
  %1355 = vmatpush2.msra.mxu0 %v1236
  %1356 = vmatprep.subr.mxu0 %v1235
  %1357 = vmatpush2.msra.mxu0 %v1234
  %1358 = vmatprep.subr.mxu0 %v1233
  %1359 = vmatpush2.msra.mxu0 %v1232
  %1360 = vmatprep.subr.mxu0 %v1231
  %1361 = vmatpush2.msra.mxu0 %v1230
  %1362 = vmatprep.subr.mxu0 %v1229
  %1363 = vmatpush2.msra.mxu0 %v1228
  %1364 = vmatprep.subr.mxu0 %v1227
  %1365 = vmatpush2.msra.mxu0 %v1226
  %1366 = vmatprep.subr.mxu0 %v1225
  %1367 = vmatpush2.msra.mxu0 %v1224
  %1368 = vmatprep.subr.mxu0 %v1223
  %1369 = vmatpush2.msra.mxu0 %v1222
  %1370 = vmatprep.subr.mxu0 %v1221
  %1371 = vmatpush2.msra.mxu0 %v1220
  %1372 = vmatprep.subr.mxu0 %v1219
  %1373 = vmatpush2.msra.mxu0 %v1218
  %1374 = vmatprep.subr.mxu0 %v1217
  %1375 = vmatpush2.msra.mxu0 %v1216
  %1376 = vmatprep.subr.mxu0 %v1215
  %1377 = vmatpush2.msra.mxu0 %v1214
  %1378 = vmatprep.subr.mxu0 %v1213
  %1379 = vmatpush2.msra.mxu0 %v1212
  %1380 = vmatprep.subr.mxu0 %v1211
  %1381 = vmatpush2.msra.mxu0 %v1210
  %1382 = vmatprep.mubr.f32.mxu0 %v1175
  %1383 = vmatmul.mubr.f32.gmra.mxu0 %v1174
  %v1384 = vpop.f32.mrf.mxu0
  %v1385 = vadd.f32 %v1311, %v1384
  %v1386 = vpop.f32.mrf.mxu0
  %v1387 = vadd.f32 %v1315, %v1386
  %1388 = vdwg.mxu0
  %1389 = vmatprep.subr.mxu0 %v1273
  %1390 = vmatpush1.msra.mxu0 %v1272
  %1391 = vmatprep.subr.mxu0 %v1271
  %1392 = vmatpush1.msra.mxu0 %v1270
  %1393 = vmatprep.subr.mxu0 %v1269
  %1394 = vmatpush1.msra.mxu0 %v1268
  %1395 = vmatprep.subr.mxu0 %v1267
  %1396 = vmatpush1.msra.mxu0 %v1266
  %1397 = vmatprep.subr.mxu0 %v1265
  %1398 = vmatpush1.msra.mxu0 %v1264
  %1399 = vmatprep.subr.mxu0 %v1263
  %1400 = vmatpush1.msra.mxu0 %v1262
  %1401 = vmatprep.subr.mxu0 %v1261
  %1402 = vmatpush1.msra.mxu0 %v1260
  %1403 = vmatprep.subr.mxu0 %v1259
  %1404 = vmatpush1.msra.mxu0 %v1258
  %1405 = vmatprep.subr.mxu0 %v1257
  %1406 = vmatpush1.msra.mxu0 %v1256
  %1407 = vmatprep.subr.mxu0 %v1255
  %1408 = vmatpush1.msra.mxu0 %v1254
  %1409 = vmatprep.subr.mxu0 %v1253
  %1410 = vmatpush1.msra.mxu0 %v1252
  %1411 = vmatprep.subr.mxu0 %v1251
  %1412 = vmatpush1.msra.mxu0 %v1250
  %1413 = vmatprep.subr.mxu0 %v1249
  %1414 = vmatpush1.msra.mxu0 %v1248
  %1415 = vmatprep.subr.mxu0 %v1247
  %1416 = vmatpush1.msra.mxu0 %v1246
  %1417 = vmatprep.subr.mxu0 %v1245
  %1418 = vmatpush1.msra.mxu0 %v1244
  %1419 = vmatprep.subr.mxu0 %v1243
  %1420 = vmatpush1.msra.mxu0 %v1242
  %1421 = vmatprep.subr.mxu0 %v1305
  %1422 = vmatpush2.msra.mxu0 %v1304
  %1423 = vmatprep.subr.mxu0 %v1303
  %1424 = vmatpush2.msra.mxu0 %v1302
  %1425 = vmatprep.subr.mxu0 %v1301
  %1426 = vmatpush2.msra.mxu0 %v1300
  %1427 = vmatprep.subr.mxu0 %v1299
  %1428 = vmatpush2.msra.mxu0 %v1298
  %1429 = vmatprep.subr.mxu0 %v1297
  %1430 = vmatpush2.msra.mxu0 %v1296
  %1431 = vmatprep.subr.mxu0 %v1295
  %1432 = vmatpush2.msra.mxu0 %v1294
  %1433 = vmatprep.subr.mxu0 %v1293
  %1434 = vmatpush2.msra.mxu0 %v1292
  %1435 = vmatprep.subr.mxu0 %v1291
  %1436 = vmatpush2.msra.mxu0 %v1290
  %1437 = vmatprep.subr.mxu0 %v1289
  %1438 = vmatpush2.msra.mxu0 %v1288
  %1439 = vmatprep.subr.mxu0 %v1287
  %1440 = vmatpush2.msra.mxu0 %v1286
  %1441 = vmatprep.subr.mxu0 %v1285
  %1442 = vmatpush2.msra.mxu0 %v1284
  %1443 = vmatprep.subr.mxu0 %v1283
  %1444 = vmatpush2.msra.mxu0 %v1282
  %1445 = vmatprep.subr.mxu0 %v1281
  %1446 = vmatpush2.msra.mxu0 %v1280
  %1447 = vmatprep.subr.mxu0 %v1279
  %1448 = vmatpush2.msra.mxu0 %v1278
  %1449 = vmatprep.subr.mxu0 %v1277
  %1450 = vmatpush2.msra.mxu0 %v1276
  %1451 = vmatprep.subr.mxu0 %v1275
  %1452 = vmatpush2.msra.mxu0 %v1274
  %1453 = vmatprep.mubr.f32.mxu0 %v1177
  %1454 = vmatmul.mubr.f32.gmra.mxu0 %v1176
  %v1455 = vpop.f32.mrf.mxu0
  %v1456 = vadd.f32 %v1385, %v1455
  %v1457 = vpop.f32.mrf.mxu0
  %v1458 = vadd.f32 %v1387, %v1457
  %1459 = vdwg.mxu0
  %v1460 = vmax.f32 %v1456, 0.0
  %v1461 = vmax.f32 %v1458, 0.0
  %v1462 = vld [vmem:[%s5] sm:$0xff]
  %v1463 = vld [vmem:[%s5 + $0x8] sm:$0xff]
  %v1464 = vld [vmem:[%s5 + $0x10] sm:$0xff]
  %v1465 = vld [vmem:[%s5 + $0x18] sm:$0xff]
  %v1466 = vld [vmem:[%s5 + $0x20] sm:$0xff]
  %v1467 = vld [vmem:[%s5 + $0x28] sm:$0xff]
  %v1468 = vld [vmem:[%s5 + $0x30] sm:$0xff]
  %v1469 = vld [vmem:[%s5 + $0x38] sm:$0xff]
  %v1470 = vld [vmem:[%s5 + $0x40] sm:$0xff]
  %v1471 = vld [vmem:[%s5 + $0x48] sm:$0xff]
  %v1472 = vld [vmem:[%s5 + $0x50] sm:$0xff]
  %v1473 = vld [vmem:[%s5 + $0x58] sm:$0xff]
  %v1474 = vld [vmem:[%s5 + $0x60] sm:$0xff]
  %v1475 = vld [vmem:[%s5 + $0x68] sm:$0xff]
  %v1476 = vld [vmem:[%s5 + $0x70] sm:$0xff]
  %v1477 = vld [vmem:[%s5 + $0x78] sm:$0xff]
  %v1478 = vld [vmem:[%s5 + $0x80] sm:$0xff]
  %v1479 = vld [vmem:[%s5 + $0x88] sm:$0xff]
  %v1480 = vld [vmem:[%s5 + $0x90] sm:$0xff]
  %v1481 = vld [vmem:[%s5 + $0x98] sm:$0xff]
  %v1482 = vld [vmem:[%s5 + $0xa0] sm:$0xff]
  %v1483 = vld [vmem:[%s5 + $0xa8] sm:$0xff]
  %v1484 = vld [vmem:[%s5 + $0xb0] sm:$0xff]
  %v1485 = vld [vmem:[%s5 + $0xb8] sm:$0xff]
  %v1486 = vld [vmem:[%s5 + $0xc0] sm:$0xff]
  %v1487 = vld [vmem:[%s5 + $0xc8] sm:$0xff]
  %v1488 = vld [vmem:[%s5 + $0xd0] sm:$0xff]
  %v1489 = vld [vmem:[%s5 + $0xd8] sm:$0xff]
  %v1490 = vld [vmem:[%s5 + $0xe0] sm:$0xff]
  %v1491 = vld [vmem:[%s5 + $0xe8] sm:$0xff]
  %v1492 = vld [vmem:[%s5 + $0xf0] sm:$0xff]
  %v1493 = vld [vmem:[%s5 + $0xf8] sm:$0xff]
  %v1494 = vld [vmem:[%s6] sm:$0x1]
  %v1496 = vlaneseq
  %v1497 = vshrl.u32 %v1496, 7
  %v1498 = vsub.s32 0, %v1497
  %v1499 = vrot.slane %v1494, %v1498
  %1501 = vmatprep.subr.mxu0 0.0
  %1502 = vmatpush1.msra.mxu0 %v1477
  %1503 = vmatprep.subr.mxu0 0.0
  %1504 = vmatpush1.msra.mxu0 %v1476
  %1505 = vmatprep.subr.mxu0 0.0
  %1506 = vmatpush1.msra.mxu0 %v1475
  %1507 = vmatprep.subr.mxu0 0.0
  %1508 = vmatpush1.msra.mxu0 %v1474
  %1509 = vmatprep.subr.mxu0 0.0
  %1510 = vmatpush1.msra.mxu0 %v1473
  %1511 = vmatprep.subr.mxu0 0.0
  %1512 = vmatpush1.msra.mxu0 %v1472
  %1513 = vmatprep.subr.mxu0 0.0
  %1514 = vmatpush1.msra.mxu0 %v1471
  %1515 = vmatprep.subr.mxu0 0.0
  %1516 = vmatpush1.msra.mxu0 %v1470
  %1517 = vmatprep.subr.mxu0 0.0
  %1518 = vmatpush1.msra.mxu0 %v1469
  %1519 = vmatprep.subr.mxu0 0.0
  %1520 = vmatpush1.msra.mxu0 %v1468
  %1521 = vmatprep.subr.mxu0 0.0
  %1522 = vmatpush1.msra.mxu0 %v1467
  %1523 = vmatprep.subr.mxu0 0.0
  %1524 = vmatpush1.msra.mxu0 %v1466
  %1525 = vmatprep.subr.mxu0 0.0
  %1526 = vmatpush1.msra.mxu0 %v1465
  %1527 = vmatprep.subr.mxu0 0.0
  %1528 = vmatpush1.msra.mxu0 %v1464
  %1529 = vmatprep.subr.mxu0 0.0
  %1530 = vmatpush1.msra.mxu0 %v1463
  %1531 = vmatprep.subr.mxu0 0.0
  %1532 = vmatpush1.msra.mxu0 %v1462
  %1533 = vmatprep.subr.mxu0 0.0
  %1534 = vmatpush2.msra.mxu0 %v1493
  %1535 = vmatprep.subr.mxu0 0.0
  %1536 = vmatpush2.msra.mxu0 %v1492
  %1537 = vmatprep.subr.mxu0 0.0
  %1538 = vmatpush2.msra.mxu0 %v1491
  %1539 = vmatprep.subr.mxu0 0.0
  %1540 = vmatpush2.msra.mxu0 %v1490
  %1541 = vmatprep.subr.mxu0 0.0
  %1542 = vmatpush2.msra.mxu0 %v1489
  %1543 = vmatprep.subr.mxu0 0.0
  %1544 = vmatpush2.msra.mxu0 %v1488
  %1545 = vmatprep.subr.mxu0 0.0
  %1546 = vmatpush2.msra.mxu0 %v1487
  %1547 = vmatprep.subr.mxu0 0.0
  %1548 = vmatpush2.msra.mxu0 %v1486
  %1549 = vmatprep.subr.mxu0 0.0
  %1550 = vmatpush2.msra.mxu0 %v1485
  %1551 = vmatprep.subr.mxu0 0.0
  %1552 = vmatpush2.msra.mxu0 %v1484
  %1553 = vmatprep.subr.mxu0 0.0
  %1554 = vmatpush2.msra.mxu0 %v1483
  %1555 = vmatprep.subr.mxu0 0.0
  %1556 = vmatpush2.msra.mxu0 %v1482
  %1557 = vmatprep.subr.mxu0 0.0
  %1558 = vmatpush2.msra.mxu0 %v1481
  %1559 = vmatprep.subr.mxu0 0.0
  %1560 = vmatpush2.msra.mxu0 %v1480
  %1561 = vmatprep.subr.mxu0 0.0
  %1562 = vmatpush2.msra.mxu0 %v1479
  %1563 = vmatprep.subr.mxu0 0.0
  %1564 = vmatpush2.msra.mxu0 %v1478
  %1565 = vmatprep.mubr.f32.mxu0 %v1461
  %1566 = vmatmul.mubr.f32.gmra.mxu0 %v1460
  %v1567 = vpop.f32.mrf.mxu0
  %v1568 = vadd.f32 %v1499, %v1567
  %v1569 = vpop.f32.mrf.mxu0
  %1570 = vdwg.mxu0
  %vm1571 = vcmask 66560
  %1572 = vst.msk [vmem:[%s7] sm:$0x3] %vm1571, %v1568
  // Predicated region
  $region30: #{pointnet_cls_forward.5} parent=0 // pred_check
    _
  $region31: #{pointnet_cls_forward.5} parent=0 // pred_check_branch
    %1574 = sbr.rel (0) target = $region33
  $region32: #{pointnet_cls_forward.5} parent=0 // pred_region
    _
  $region33: #{pointnet_cls_forward.5} parent=0 // pred_fallthru
    _
  // Predicated region
  $region34: #{pointnet_cls_forward.5} parent=0 // pred_check
    _
  $region35: #{pointnet_cls_forward.5} parent=0 // pred_check_branch
    %1576 = sbr.rel (0) target = $region37
  $region36: #{pointnet_cls_forward.5} parent=0 // pred_region
    _
  $region37: #{pointnet_cls_forward.5} parent=0 // pred_fallthru
    _

// kernel: pointnet_cls_forward.6
$region0: #{pointnet_cls_forward.6}
  #allocation0 [shape = 'u32[]', space=smem, size = 0x4, offset = 0x4, fixed_abs, tag = 'smem constant byte address 0x4 - core index']
  #allocation1 [shape = 'u32[144,128]{1,0:T(1,128)}', space=vmem, size = 0x12000, scoped, tag = 'internal scratch']
  %s0 = inlined_call_operand.vmem [shape: f32[2,256,3], index: 0, kind: input, shape index: {}]
  %s1 = inlined_call_operand.vmem [shape: f32[2,3,64], index: 1, kind: input, shape index: {}]
  %s2 = inlined_call_operand.vmem [shape: f32[1,64], index: 2, kind: input, shape index: {}]
  %s3 = inlined_call_operand.vmem [shape: f32[64,128], index: 3, kind: input, shape index: {}]
  %s4 = inlined_call_operand.vmem [shape: f32[1,128], index: 4, kind: input, shape index: {}]
  %s5 = inlined_call_operand.vmem [shape: f32[128,1024], index: 5, kind: input, shape index: {}]
  %s6 = inlined_call_operand.vmem [shape: f32[1,1024], index: 6, kind: input, shape index: {}]
  %s7 = inlined_call_operand.vmem [shape: f32[2,1,1024], index: 7, kind: output, shape index: {}]
  %s8 = sld [smem:[#allocation0]]
  $region69: #{pointnet_cls_forward.6} parent=0
    _
  %s10 = ssub.s32 1, %s8
  %s11 = scalar_select 0, %s10, %s8
  loop: start=0, step=1, limit=4
  $region2: #{pointnet_cls_forward.6} parent=0 // loop_pre_header
    _
  $region3: #{pointnet_cls_forward.6} parent=0 // loop_header
    %s13 = sphi 0, %s17
    %p14 = scmp.ge.s32.totalorder %s13, 4
    %s20 = sphi 0, %s32
    %s21 = sphi 0, %s28
    %s22 = sphi 0, %s20
    %s23 = sphi 0, %s21
    %s24 = sphi 0, %s22
    %s25 = sphi 0, %s23
    %s37 = sphi 0, %s39
    %s40 = sphi 0, %s37
    %s41 = sphi 0, %s40
    %s57 = sphi 0, %s41
    %s63 = sphi 0, %s65
    %s66 = sphi 0, %s63
    %s67 = sphi 0, %s66
    %s83 = sphi 0, %s67
    %s87 = sphi 0, %s87
    %s89 = sphi 0, %s87
    %s90 = sphi 0, %s89
    %s104 = sphi 0, %s90
    %s108 = sphi 0, %s108
    %s110 = sphi 0, %s108
    %s111 = sphi 0, %s110
    %s125 = sphi 0, %s111
    %s129 = sphi 0, %s129
    %s131 = sphi 0, %s129
    %s132 = sphi 0, %s131
    %s146 = sphi 0, %s132
    %s150 = sphi 0, %s150
    %s152 = sphi 0, %s150
    %s153 = sphi 0, %s152
    %s167 = sphi 0, %s153
    %s171 = sphi 0, %s171
    %s173 = sphi 0, %s171
    %s174 = sphi 0, %s173
    %s188 = sphi 0, %s174
    %s194 = sphi 0, %s196
    %s197 = sphi 0, %s194
    %s198 = sphi 0, %s197
    %s214 = sphi 0, %s198
  $region4: #{pointnet_cls_forward.6} parent=0 // loop_header_branch
    %16 = sbr.rel (%p14) target = $region8
  $region5: #{pointnet_cls_forward.6} parent=0 // loop_body
    %s18 = ssub.s32 %s13, 1
    %s19 = ssub.s32 %s13, 2
    %s26 = sadd.s32 1, %s21
    %p27 = scmp.ge.s32.totalorder %s26, 1
    %s28 = scalar_select %p27, 0, %s26
    %s29 = sadd.s32 1, %s20
    %s30 = scalar_select %p27, %s29, %s20
    %p31 = scmp.ge.s32.totalorder %s30, 2
    %s32 = scalar_select %p31, 0, %s30
    %s33 = ssub.s32 %s20, %s32
    %s34 = ssub.s32 %s21, %s28
    %s35 = sor.u32 %s33, %s34
    %p36 = scmp.eq.s32.totalorder %s35, 0
    %s38 = sadd.s32 %s37, 1
    %s39 = scalar_select %p36, %s37, %s38
    %p42 = pneg %p36
    %p43 = scmp.eq.s32.totalorder %s13, 1
    %p44 = por %p42, %p43
    %p45 = scmp.ne.s32.totalorder %s37, %s40
    %p46 = scmp.eq.s32.totalorder %s13, 0
    %p47 = por %p45, %p46
    %p48 = scmp.ne.s32.totalorder %s37, %s40
    %p49 = scmp.eq.s32.totalorder %s18, 1
    %p50 = por %p48, %p49
    %p51 = scmp.ne.s32.totalorder %s40, %s41
    %p52 = scmp.eq.s32.totalorder %s18, 0
    %p53 = por %p51, %p52
    %p54 = scmp.ne.s32.totalorder %s40, %s41
    %p55 = scmp.eq.s32.totalorder %s19, 1
    %p56 = por %p54, %p55
    %p58 = scmp.ne.s32.totalorder %s41, %s57
    %p59 = scmp.eq.s32.totalorder %s19, 0
    %p60 = por %p58, %p59
    %s61 = ssub.s32 %s20, %s32
    %p62 = scmp.eq.s32.totalorder %s61, 0
    %s64 = sadd.s32 %s63, 1
    %s65 = scalar_select %p62, %s63, %s64
    %p68 = pneg %p62
    %p69 = scmp.eq.s32.totalorder %s13, 1
    %p70 = por %p68, %p69
    %p71 = scmp.ne.s32.totalorder %s63, %s66
    %p72 = scmp.eq.s32.totalorder %s13, 0
    %p73 = por %p71, %p72
    %p74 = scmp.ne.s32.totalorder %s63, %s66
    %p75 = scmp.eq.s32.totalorder %s18, 1
    %p76 = por %p74, %p75
    %p77 = scmp.ne.s32.totalorder %s66, %s67
    %p78 = scmp.eq.s32.totalorder %s18, 0
    %p79 = por %p77, %p78
    %p80 = scmp.ne.s32.totalorder %s66, %s67
    %p81 = scmp.eq.s32.totalorder %s19, 1
    %p82 = por %p80, %p81
    %p84 = scmp.ne.s32.totalorder %s67, %s83
    %p85 = scmp.eq.s32.totalorder %s19, 0
    %p86 = por %p84, %p85
    %s88 = sadd.s32 %s87, 1
    %p91 = scmp.eq.s32.totalorder %s13, 1
    %p92 = scmp.ne.s32.totalorder %s87, %s89
    %p93 = scmp.eq.s32.totalorder %s13, 0
    %p94 = por %p92, %p93
    %p95 = scmp.ne.s32.totalorder %s87, %s89
    %p96 = scmp.eq.s32.totalorder %s18, 1
    %p97 = por %p95, %p96
    %p98 = scmp.ne.s32.totalorder %s89, %s90
    %p99 = scmp.eq.s32.totalorder %s18, 0
    %p100 = por %p98, %p99
    %p101 = scmp.ne.s32.totalorder %s89, %s90
    %p102 = scmp.eq.s32.totalorder %s19, 1
    %p103 = por %p101, %p102
    %p105 = scmp.ne.s32.totalorder %s90, %s104
    %p106 = scmp.eq.s32.totalorder %s19, 0
    %p107 = por %p105, %p106
    %s109 = sadd.s32 %s108, 1
    %p112 = scmp.eq.s32.totalorder %s13, 1
    %p113 = scmp.ne.s32.totalorder %s108, %s110
    %p114 = scmp.eq.s32.totalorder %s13, 0
    %p115 = por %p113, %p114
    %p116 = scmp.ne.s32.totalorder %s108, %s110
    %p117 = scmp.eq.s32.totalorder %s18, 1
    %p118 = por %p116, %p117
    %p119 = scmp.ne.s32.totalorder %s110, %s111
    %p120 = scmp.eq.s32.totalorder %s18, 0
    %p121 = por %p119, %p120
    %p122 = scmp.ne.s32.totalorder %s110, %s111
    %p123 = scmp.eq.s32.totalorder %s19, 1
    %p124 = por %p122, %p123
    %p126 = scmp.ne.s32.totalorder %s111, %s125
    %p127 = scmp.eq.s32.totalorder %s19, 0
    %p128 = por %p126, %p127
    %s130 = sadd.s32 %s129, 1
    %p133 = scmp.eq.s32.totalorder %s13, 1
    %p134 = scmp.ne.s32.totalorder %s129, %s131
    %p135 = scmp.eq.s32.totalorder %s13, 0
    %p136 = por %p134, %p135
    %p137 = scmp.ne.s32.totalorder %s129, %s131
    %p138 = scmp.eq.s32.totalorder %s18, 1
    %p139 = por %p137, %p138
    %p140 = scmp.ne.s32.totalorder %s131, %s132
    %p141 = scmp.eq.s32.totalorder %s18, 0
    %p142 = por %p140, %p141
    %p143 = scmp.ne.s32.totalorder %s131, %s132
    %p144 = scmp.eq.s32.totalorder %s19, 1
    %p145 = por %p143, %p144
    %p147 = scmp.ne.s32.totalorder %s132, %s146
    %p148 = scmp.eq.s32.totalorder %s19, 0
    %p149 = por %p147, %p148
    %s151 = sadd.s32 %s150, 1
    %p154 = scmp.eq.s32.totalorder %s13, 1
    %p155 = scmp.ne.s32.totalorder %s150, %s152
    %p156 = scmp.eq.s32.totalorder %s13, 0
    %p157 = por %p155, %p156
    %p158 = scmp.ne.s32.totalorder %s150, %s152
    %p159 = scmp.eq.s32.totalorder %s18, 1
    %p160 = por %p158, %p159
    %p161 = scmp.ne.s32.totalorder %s152, %s153
    %p162 = scmp.eq.s32.totalorder %s18, 0
    %p163 = por %p161, %p162
    %p164 = scmp.ne.s32.totalorder %s152, %s153
    %p165 = scmp.eq.s32.totalorder %s19, 1
    %p166 = por %p164, %p165
    %p168 = scmp.ne.s32.totalorder %s153, %s167
    %p169 = scmp.eq.s32.totalorder %s19, 0
    %p170 = por %p168, %p169
    %s172 = sadd.s32 %s171, 1
    %p175 = scmp.eq.s32.totalorder %s13, 1
    %p176 = scmp.ne.s32.totalorder %s171, %s173
    %p177 = scmp.eq.s32.totalorder %s13, 0
    %p178 = por %p176, %p177
    %p179 = scmp.ne.s32.totalorder %s171, %s173
    %p180 = scmp.eq.s32.totalorder %s18, 1
    %p181 = por %p179, %p180
    %p182 = scmp.ne.s32.totalorder %s173, %s174
    %p183 = scmp.eq.s32.totalorder %s18, 0
    %p184 = por %p182, %p183
    %p185 = scmp.ne.s32.totalorder %s173, %s174
    %p186 = scmp.eq.s32.totalorder %s19, 1
    %p187 = por %p185, %p186
    %p189 = scmp.ne.s32.totalorder %s174, %s188
    %p190 = scmp.eq.s32.totalorder %s19, 0
    %p191 = por %p189, %p190
    %s192 = ssub.s32 %s20, %s32
    %p193 = scmp.eq.s32.totalorder %s192, 0
    %s195 = sadd.s32 %s194, 1
    %s196 = scalar_select %p193, %s194, %s195
    %p199 = pneg %p193
    %p200 = scmp.eq.s32.totalorder %s13, 1
    %p201 = por %p199, %p200
    %p202 = scmp.ne.s32.totalorder %s194, %s197
    %p203 = scmp.eq.s32.totalorder %s13, 0
    %p204 = por %p202, %p203
    %p205 = scmp.ne.s32.totalorder %s194, %s197
    %p206 = scmp.eq.s32.totalorder %s18, 1
    %p207 = por %p205, %p206
    %p208 = scmp.ne.s32.totalorder %s197, %s198
    %p209 = scmp.eq.s32.totalorder %s18, 0
    %p210 = por %p208, %p209
    %p211 = scmp.ne.s32.totalorder %s197, %s198
    %p212 = scmp.eq.s32.totalorder %s19, 1
    %p213 = por %p211, %p212
    %p215 = scmp.ne.s32.totalorder %s198, %s214
    %p216 = scmp.eq.s32.totalorder %s19, 0
    %p217 = por %p215, %p216
    %p218 = scmp.le.s32.totalorder 1, %s13
    %p219 = scmp.lt.s32.totalorder %s13, 3
    %p220 = pnand %p218, %p219
    %p221 = pneg %p220
    // Predicated region
    $region9: #{pointnet_cls_forward.6} parent=5 // pred_check
      _
    $region10: #{pointnet_cls_forward.6} parent=5 // pred_check_branch
      %223 = sbr.rel (%p220) target = $region12
    $region11: #{pointnet_cls_forward.6} parent=5 // pred_region
      %s224 = ssub.s32 %s13, 1
      // Predicated region
      $region13: #{pointnet_cls_forward.6} parent=11 // pred_check
        %p225 = pneg %p100
      $region14: #{pointnet_cls_forward.6} parent=11 // pred_check_branch
        %227 = sbr.rel (%p225) target = $region16
      $region15: #{pointnet_cls_forward.6} parent=11 // pred_region
        _
      $region16: #{pointnet_cls_forward.6} parent=11 // pred_fallthru
        _
      // Predicated region
      $region17: #{pointnet_cls_forward.6} parent=11 // pred_check
        %p228 = pneg %p121
      $region18: #{pointnet_cls_forward.6} parent=11 // pred_check_branch
        %230 = sbr.rel (%p228) target = $region20
      $region19: #{pointnet_cls_forward.6} parent=11 // pred_region
        _
      $region20: #{pointnet_cls_forward.6} parent=11 // pred_fallthru
        _
      // Predicated region
      $region21: #{pointnet_cls_forward.6} parent=11 // pred_check
        %p231 = pneg %p142
      $region22: #{pointnet_cls_forward.6} parent=11 // pred_check_branch
        %233 = sbr.rel (%p231) target = $region24
      $region23: #{pointnet_cls_forward.6} parent=11 // pred_region
        _
      $region24: #{pointnet_cls_forward.6} parent=11 // pred_fallthru
        _
      // Predicated region
      $region25: #{pointnet_cls_forward.6} parent=11 // pred_check
        %p234 = pneg %p163
      $region26: #{pointnet_cls_forward.6} parent=11 // pred_check_branch
        %236 = sbr.rel (%p234) target = $region28
      $region27: #{pointnet_cls_forward.6} parent=11 // pred_region
        _
      $region28: #{pointnet_cls_forward.6} parent=11 // pred_fallthru
        _
      // Predicated region
      $region29: #{pointnet_cls_forward.6} parent=11 // pred_check
        %p237 = pneg %p184
      $region30: #{pointnet_cls_forward.6} parent=11 // pred_check_branch
        %239 = sbr.rel (%p237) target = $region32
      $region31: #{pointnet_cls_forward.6} parent=11 // pred_region
        _
      $region32: #{pointnet_cls_forward.6} parent=11 // pred_fallthru
        _
    $region12: #{pointnet_cls_forward.6} parent=5 // pred_fallthru
      _
    %p240 = scmp.lt.s32.totalorder %s13, 2
    // Predicated region
    $region33: #{pointnet_cls_forward.6} parent=5 // pred_check
      %p241 = pneg %p240
    $region34: #{pointnet_cls_forward.6} parent=5 // pred_check_branch
      %243 = sbr.rel (%p241) target = $region36
    $region35: #{pointnet_cls_forward.6} parent=5 // pred_region
      // Predicated region
      $region37: #{pointnet_cls_forward.6} parent=35 // pred_check
        %p244 = pneg %p47
      $region38: #{pointnet_cls_forward.6} parent=35 // pred_check_branch
        %246 = sbr.rel (%p244) target = $region40
      $region39: #{pointnet_cls_forward.6} parent=35 // pred_region
        %s247 = smul.u32 32, %s21
        %p248 = scmp.lt.s32.totalorder %s20, 1
        %s249 = scalar_select %p248, %s20, 1
        %p250 = scmp.lt.s32.totalorder %s247, 31
        %s251 = scalar_select %p250, %s247, 31
        %s252 = smul.addr %s249, 32
        %s253 = sadd.s32 %s251, %s252
        %s254 = smul.addr %s253, 8
        %s255 = scalar_lea.vmem %s0, %s254
        %s256 = smul.u32 32, %s21
      $region40: #{pointnet_cls_forward.6} parent=35 // pred_fallthru
        _
      // Predicated region
      $region41: #{pointnet_cls_forward.6} parent=35 // pred_check
        %p257 = pneg %p73
      $region42: #{pointnet_cls_forward.6} parent=35 // pred_check_branch
        %259 = sbr.rel (%p257) target = $region44
      $region43: #{pointnet_cls_forward.6} parent=35 // pred_region
        %p260 = scmp.lt.s32.totalorder %s20, 1
        %s261 = scalar_select %p260, %s20, 1
        %s262 = smul.addr %s261, 4
        %s263 = scalar_lea.vmem %s1, %s262
      $region44: #{pointnet_cls_forward.6} parent=35 // pred_fallthru
        _
    $region36: #{pointnet_cls_forward.6} parent=5 // pred_fallthru
      _
    %p264 = scmp.le.s32.totalorder 1, %s13
    %p265 = scmp.lt.s32.totalorder %s13, 3
    %p266 = pnand %p264, %p265
    %p267 = pneg %p266
    // Predicated region
    $region45: #{pointnet_cls_forward.6} parent=5 // pred_check
      _
    $region46: #{pointnet_cls_forward.6} parent=5 // pred_check_branch
      %269 = sbr.rel (%p266) target = $region48
    $region47: #{pointnet_cls_forward.6} parent=5 // pred_region
      %s270 = ssub.s32 %s13, 1
      %s271 = smul.u32 32, %s23
      %p272 = scmp.lt.s32.totalorder %s22, 1
      %s273 = scalar_select %p272, %s22, 1
      %p274 = scmp.lt.s32.totalorder %s271, 31
      %s275 = scalar_select %p274, %s271, 31
      %s276 = smul.addr %s273, 32
      %s277 = sadd.s32 %s275, %s276
      %s278 = smul.addr %s277, 8
      %s279 = scalar_lea.vmem %s0, %s278
      %p280 = pneg %p53
      %p281 = pneg %p50
      %p282 = scmp.lt.s32.totalorder %s22, 1
      %s283 = scalar_select %p282, %s22, 1
      %s284 = smul.addr %s283, 4
      %s285 = scalar_lea.vmem %s1, %s284
      %p286 = pneg %p79
      %p287 = pneg %p76
      %p288 = pneg %p100
      %p289 = pneg %p97
      %p290 = pneg %p121
      %p291 = pneg %p118
      %p292 = pneg %p142
      %p293 = pneg %p139
      %p294 = pneg %p163
      %p295 = pneg %p160
      %p296 = pneg %p184
      %p297 = pneg %p181
      %p298 = pneg %p210
      %p299 = pneg %p207
      %p300 = scmp.lt.s32.totalorder %s22, 1
      %s301 = scalar_select %p300, %s22, 1
      %s302 = smul.addr %s301, 8
      %s303 = scalar_lea.vmem %s7, %s302
      %s304 = smul.u32 32, %s23
      %p305 = scmp.lt.s32.totalorder %s22, 1
      %s306 = scalar_select %p305, %s22, 1
      %p307 = scmp.lt.s32.totalorder %s304, 31
      %s308 = scalar_select %p307, %s304, 31
      %s309 = smul.addr %s306, 32
      %s310 = sadd.s32 %s308, %s309
      %s311 = smul.addr %s310, 8
      %s312 = scalar_lea.vmem %s0, %s311
      %s313 = smul.u32 32, %s23
      %p314 = scmp.lt.s32.totalorder %s22, 1
      %s315 = scalar_select %p314, %s22, 1
      %s316 = smul.addr %s315, 4
      %s317 = scalar_lea.vmem %s1, %s316
      %p318 = scmp.lt.s32.totalorder %s22, 1
      %s319 = scalar_select %p318, %s22, 1
      %s320 = smul.addr %s319, 8
      %s321 = scalar_lea.vmem %s7, %s320
      %v322 = vld [vmem:[%s312] sm:$0xff]
      %v323 = vld [vmem:[%s312 + $0x8] sm:$0xff]
      %v324 = vld [vmem:[%s312 + $0x10] sm:$0xff]
      %v325 = vld [vmem:[%s312 + $0x18] sm:$0xff]
      %v326 = vld [vmem:[%s312 + $0x20] sm:$0xff]
      %v327 = vld [vmem:[%s312 + $0x28] sm:$0xff]
      %v328 = vld [vmem:[%s312 + $0x30] sm:$0xff]
      %v329 = vld [vmem:[%s312 + $0x38] sm:$0xff]
      %v330 = vld [vmem:[%s312 + $0x40] sm:$0xff]
      %v331 = vld [vmem:[%s312 + $0x48] sm:$0xff]
      %v332 = vld [vmem:[%s312 + $0x50] sm:$0xff]
      %v333 = vld [vmem:[%s312 + $0x58] sm:$0xff]
      %v334 = vld [vmem:[%s312 + $0x60] sm:$0xff]
      %v335 = vld [vmem:[%s312 + $0x68] sm:$0xff]
      %v336 = vld [vmem:[%s312 + $0x70] sm:$0xff]
      %v337 = vld [vmem:[%s312 + $0x78] sm:$0xff]
      %v338 = vld [vmem:[%s312 + $0x80] sm:$0xff]
      %v339 = vld [vmem:[%s312 + $0x88] sm:$0xff]
      %v340 = vld [vmem:[%s312 + $0x90] sm:$0xff]
      %v341 = vld [vmem:[%s312 + $0x98] sm:$0xff]
      %v342 = vld [vmem:[%s312 + $0xa0] sm:$0xff]
      %v343 = vld [vmem:[%s312 + $0xa8] sm:$0xff]
      %v344 = vld [vmem:[%s312 + $0xb0] sm:$0xff]
      %v345 = vld [vmem:[%s312 + $0xb8] sm:$0xff]
      %v346 = vld [vmem:[%s312 + $0xc0] sm:$0xff]
      %v347 = vld [vmem:[%s312 + $0xc8] sm:$0xff]
      %v348 = vld [vmem:[%s312 + $0xd0] sm:$0xff]
      %v349 = vld [vmem:[%s312 + $0xd8] sm:$0xff]
      %v350 = vld [vmem:[%s312 + $0xe0] sm:$0xff]
      %v351 = vld [vmem:[%s312 + $0xe8] sm:$0xff]
      %v352 = vld [vmem:[%s312 + $0xf0] sm:$0xff]
      %v353 = vld [vmem:[%s312 + $0xf8] sm:$0xff]
      %v354 = vld [vmem:[%s317] sm:$0x7]
      %v355 = vld [vmem:[%s2] sm:$0x1]
      %v357 = vlaneseq
      %v358 = vshrl.u32 %v357, 7
      %v359 = vsub.s32 0, %v358
      %v360 = vrot.slane %v355, %v359
      %vm362 = vcmask 23552
      %v364 = vsel %vm362, %v322, 0
      %v367 = vsel %vm362, %v323, 0
      %v370 = vsel %vm362, %v324, 0
      %v373 = vsel %vm362, %v325, 0
      %v376 = vsel %vm362, %v326, 0
      %v379 = vsel %vm362, %v327, 0
      %v382 = vsel %vm362, %v328, 0
      %v385 = vsel %vm362, %v329, 0
      %v388 = vsel %vm362, %v330, 0
      %v391 = vsel %vm362, %v331, 0
      %v394 = vsel %vm362, %v332, 0
      %v397 = vsel %vm362, %v333, 0
      %v400 = vsel %vm362, %v334, 0
      %v403 = vsel %vm362, %v335, 0
      %v406 = vsel %vm362, %v336, 0
      %v409 = vsel %vm362, %v337, 0
      %v412 = vsel %vm362, %v338, 0
      %v415 = vsel %vm362, %v339, 0
      %v418 = vsel %vm362, %v340, 0
      %v421 = vsel %vm362, %v341, 0
      %v424 = vsel %vm362, %v342, 0
      %v427 = vsel %vm362, %v343, 0
      %v430 = vsel %vm362, %v344, 0
      %v433 = vsel %vm362, %v345, 0
      %v436 = vsel %vm362, %v346, 0
      %v439 = vsel %vm362, %v347, 0
      %v442 = vsel %vm362, %v348, 0
      %v445 = vsel %vm362, %v349, 0
      %v448 = vsel %vm362, %v350, 0
      %v451 = vsel %vm362, %v351, 0
      %v454 = vsel %vm362, %v352, 0
      %v457 = vsel %vm362, %v353, 0
      %vm459 = vcmask 1042432
      %v461 = vsel %vm459, %v354, 0
      %463 = vmatprep.subr.mxu0 0.0
      %464 = vmatpush1.msra.mxu0 0.0
      %465 = vmatprep.subr.mxu0 0.0
      %466 = vmatpush1.msra.mxu0 0.0
      %467 = vmatprep.subr.mxu0 0.0
      %468 = vmatpush1.msra.mxu0 0.0
      %469 = vmatprep.subr.mxu0 0.0
      %470 = vmatpush1.msra.mxu0 0.0
      %471 = vmatprep.subr.mxu0 0.0
      %472 = vmatpush1.msra.mxu0 0.0
      %473 = vmatprep.subr.mxu0 0.0
      %474 = vmatpush1.msra.mxu0 0.0
      %475 = vmatprep.subr.mxu0 0.0
      %476 = vmatpush1.msra.mxu0 0.0
      %477 = vmatprep.subr.mxu0 0.0
      %478 = vmatpush1.msra.mxu0 0.0
      %479 = vmatprep.subr.mxu0 0.0
      %480 = vmatpush1.msra.mxu0 0.0
      %481 = vmatprep.subr.mxu0 0.0
      %482 = vmatpush1.msra.mxu0 0.0
      %483 = vmatprep.subr.mxu0 0.0
      %484 = vmatpush1.msra.mxu0 0.0
      %485 = vmatprep.subr.mxu0 0.0
      %486 = vmatpush1.msra.mxu0 0.0
      %487 = vmatprep.subr.mxu0 0.0
      %488 = vmatpush1.msra.mxu0 0.0
      %489 = vmatprep.subr.mxu0 0.0
      %490 = vmatpush1.msra.mxu0 0.0
      %491 = vmatprep.subr.mxu0 0.0
      %492 = vmatpush1.msra.mxu0 0.0
      %493 = vmatprep.subr.mxu0 0.0
      %494 = vmatpush1.msra.mxu0 %v461
      %495 = vmatprep.subr.mxu0 0.0
      %496 = vmatpush2.msra.mxu0 0.0
      %497 = vmatprep.subr.mxu0 0.0
      %498 = vmatpush2.msra.mxu0 0.0
      %499 = vmatprep.subr.mxu0 0.0
      %500 = vmatpush2.msra.mxu0 0.0
      %501 = vmatprep.subr.mxu0 0.0
      %502 = vmatpush2.msra.mxu0 0.0
      %503 = vmatprep.subr.mxu0 0.0
      %504 = vmatpush2.msra.mxu0 0.0
      %505 = vmatprep.subr.mxu0 0.0
      %506 = vmatpush2.msra.mxu0 0.0
      %507 = vmatprep.subr.mxu0 0.0
      %508 = vmatpush2.msra.mxu0 0.0
      %509 = vmatprep.subr.mxu0 0.0
      %510 = vmatpush2.msra.mxu0 0.0
      %511 = vmatprep.subr.mxu0 0.0
      %512 = vmatpush2.msra.mxu0 0.0
      %513 = vmatprep.subr.mxu0 0.0
      %514 = vmatpush2.msra.mxu0 0.0
      %515 = vmatprep.subr.mxu0 0.0
      %516 = vmatpush2.msra.mxu0 0.0
      %517 = vmatprep.subr.mxu0 0.0
      %518 = vmatpush2.msra.mxu0 0.0
      %519 = vmatprep.subr.mxu0 0.0
      %520 = vmatpush2.msra.mxu0 0.0
      %521 = vmatprep.subr.mxu0 0.0
      %522 = vmatpush2.msra.mxu0 0.0
      %523 = vmatprep.subr.mxu0 0.0
      %524 = vmatpush2.msra.mxu0 0.0
      %525 = vmatprep.subr.mxu0 0.0
      %526 = vmatpush2.msra.mxu0 0.0
      %527 = vmatprep.mubr.f32.mxu0 0.0
      %528 = vmatmul.mubr.f32.gmra.mxu0 %v364
      %v529 = vpop.f32.mrf.mxu0
      %v530 = vadd.f32 %v360, %v529
      %v531 = vpop.f32.mrf.mxu0
      %532 = vmatprep.mubr.f32.mxu0 0.0
      %533 = vmatmul.mubr.f32.gmra.mxu0 %v367
      %v534 = vpop.f32.mrf.mxu0
      %v535 = vadd.f32 %v360, %v534
      %v536 = vpop.f32.mrf.mxu0
      %537 = vmatprep.mubr.f32.mxu0 0.0
      %538 = vmatmul.mubr.f32.gmra.mxu0 %v370
      %v539 = vpop.f32.mrf.mxu0
      %v540 = vadd.f32 %v360, %v539
      %v541 = vpop.f32.mrf.mxu0
      %542 = vmatprep.mubr.f32.mxu0 0.0
      %543 = vmatmul.mubr.f32.gmra.mxu0 %v373
      %v544 = vpop.f32.mrf.mxu0
      %v545 = vadd.f32 %v360, %v544
      %v546 = vpop.f32.mrf.mxu0
      %547 = vmatprep.mubr.f32.mxu0 0.0
      %548 = vmatmul.mubr.f32.gmra.mxu0 %v376
      %v549 = vpop.f32.mrf.mxu0
      %v550 = vadd.f32 %v360, %v549
      %v551 = vpop.f32.mrf.mxu0
      %552 = vmatprep.mubr.f32.mxu0 0.0
      %553 = vmatmul.mubr.f32.gmra.mxu0 %v379
      %v554 = vpop.f32.mrf.mxu0
      %v555 = vadd.f32 %v360, %v554
      %v556 = vpop.f32.mrf.mxu0
      %557 = vmatprep.mubr.f32.mxu0 0.0
      %558 = vmatmul.mubr.f32.gmra.mxu0 %v382
      %v559 = vpop.f32.mrf.mxu0
      %v560 = vadd.f32 %v360, %v559
      %v561 = vpop.f32.mrf.mxu0
      %562 = vmatprep.mubr.f32.mxu0 0.0
      %563 = vmatmul.mubr.f32.gmra.mxu0 %v385
      %v564 = vpop.f32.mrf.mxu0
      %v565 = vadd.f32 %v360, %v564
      %v566 = vpop.f32.mrf.mxu0
      %567 = vmatprep.mubr.f32.mxu0 0.0
      %568 = vmatmul.mubr.f32.gmra.mxu0 %v388
      %v569 = vpop.f32.mrf.mxu0
      %v570 = vadd.f32 %v360, %v569
      %v571 = vpop.f32.mrf.mxu0
      %572 = vmatprep.mubr.f32.mxu0 0.0
      %573 = vmatmul.mubr.f32.gmra.mxu0 %v391
      %v574 = vpop.f32.mrf.mxu0
      %v575 = vadd.f32 %v360, %v574
      %v576 = vpop.f32.mrf.mxu0
      %577 = vmatprep.mubr.f32.mxu0 0.0
      %578 = vmatmul.mubr.f32.gmra.mxu0 %v394
      %v579 = vpop.f32.mrf.mxu0
      %v580 = vadd.f32 %v360, %v579
      %v581 = vpop.f32.mrf.mxu0
      %582 = vmatprep.mubr.f32.mxu0 0.0
      %583 = vmatmul.mubr.f32.gmra.mxu0 %v397
      %v584 = vpop.f32.mrf.mxu0
      %v585 = vadd.f32 %v360, %v584
      %v586 = vpop.f32.mrf.mxu0
      %587 = vmatprep.mubr.f32.mxu0 0.0
      %588 = vmatmul.mubr.f32.gmra.mxu0 %v400
      %v589 = vpop.f32.mrf.mxu0
      %v590 = vadd.f32 %v360, %v589
      %v591 = vpop.f32.mrf.mxu0
      %592 = vmatprep.mubr.f32.mxu0 0.0
      %593 = vmatmul.mubr.f32.gmra.mxu0 %v403
      %v594 = vpop.f32.mrf.mxu0
      %v595 = vadd.f32 %v360, %v594
      %v596 = vpop.f32.mrf.mxu0
      %597 = vmatprep.mubr.f32.mxu0 0.0
      %598 = vmatmul.mubr.f32.gmra.mxu0 %v406
      %v599 = vpop.f32.mrf.mxu0
      %v600 = vadd.f32 %v360, %v599
      %v601 = vpop.f32.mrf.mxu0
      %602 = vmatprep.mubr.f32.mxu0 0.0
      %603 = vmatmul.mubr.f32.gmra.mxu0 %v409
      %v604 = vpop.f32.mrf.mxu0
      %v605 = vadd.f32 %v360, %v604
      %v606 = vpop.f32.mrf.mxu0
      %607 = vmatprep.mubr.f32.mxu0 0.0
      %608 = vmatmul.mubr.f32.gmra.mxu0 %v412
      %v609 = vpop.f32.mrf.mxu0
      %v610 = vadd.f32 %v360, %v609
      %v611 = vpop.f32.mrf.mxu0
      %612 = vmatprep.mubr.f32.mxu0 0.0
      %613 = vmatmul.mubr.f32.gmra.mxu0 %v415
      %v614 = vpop.f32.mrf.mxu0
      %v615 = vadd.f32 %v360, %v614
      %v616 = vpop.f32.mrf.mxu0
      %617 = vmatprep.mubr.f32.mxu0 0.0
      %618 = vmatmul.mubr.f32.gmra.mxu0 %v418
      %v619 = vpop.f32.mrf.mxu0
      %v620 = vadd.f32 %v360, %v619
      %v621 = vpop.f32.mrf.mxu0
      %622 = vmatprep.mubr.f32.mxu0 0.0
      %623 = vmatmul.mubr.f32.gmra.mxu0 %v421
      %v624 = vpop.f32.mrf.mxu0
      %v625 = vadd.f32 %v360, %v624
      %v626 = vpop.f32.mrf.mxu0
      %627 = vmatprep.mubr.f32.mxu0 0.0
      %628 = vmatmul.mubr.f32.gmra.mxu0 %v424
      %v629 = vpop.f32.mrf.mxu0
      %v630 = vadd.f32 %v360, %v629
      %v631 = vpop.f32.mrf.mxu0
      %632 = vmatprep.mubr.f32.mxu0 0.0
      %633 = vmatmul.mubr.f32.gmra.mxu0 %v427
      %v634 = vpop.f32.mrf.mxu0
      %v635 = vadd.f32 %v360, %v634
      %v636 = vpop.f32.mrf.mxu0
      %637 = vmatprep.mubr.f32.mxu0 0.0
      %638 = vmatmul.mubr.f32.gmra.mxu0 %v430
      %v639 = vpop.f32.mrf.mxu0
      %v640 = vadd.f32 %v360, %v639
      %v641 = vpop.f32.mrf.mxu0
      %642 = vmatprep.mubr.f32.mxu0 0.0
      %643 = vmatmul.mubr.f32.gmra.mxu0 %v433
      %v644 = vpop.f32.mrf.mxu0
      %v645 = vadd.f32 %v360, %v644
      %v646 = vpop.f32.mrf.mxu0
      %647 = vmatprep.mubr.f32.mxu0 0.0
      %648 = vmatmul.mubr.f32.gmra.mxu0 %v436
      %v649 = vpop.f32.mrf.mxu0
      %v650 = vadd.f32 %v360, %v649
      %v651 = vpop.f32.mrf.mxu0
      %652 = vmatprep.mubr.f32.mxu0 0.0
      %653 = vmatmul.mubr.f32.gmra.mxu0 %v439
      %v654 = vpop.f32.mrf.mxu0
      %v655 = vadd.f32 %v360, %v654
      %v656 = vpop.f32.mrf.mxu0
      %657 = vmatprep.mubr.f32.mxu0 0.0
      %658 = vmatmul.mubr.f32.gmra.mxu0 %v442
      %v659 = vpop.f32.mrf.mxu0
      %v660 = vadd.f32 %v360, %v659
      %v661 = vpop.f32.mrf.mxu0
      %662 = vmatprep.mubr.f32.mxu0 0.0
      %663 = vmatmul.mubr.f32.gmra.mxu0 %v445
      %v664 = vpop.f32.mrf.mxu0
      %v665 = vadd.f32 %v360, %v664
      %v666 = vpop.f32.mrf.mxu0
      %667 = vmatprep.mubr.f32.mxu0 0.0
      %668 = vmatmul.mubr.f32.gmra.mxu0 %v448
      %v669 = vpop.f32.mrf.mxu0
      %v670 = vadd.f32 %v360, %v669
      %v671 = vpop.f32.mrf.mxu0
      %672 = vmatprep.mubr.f32.mxu0 0.0
      %673 = vmatmul.mubr.f32.gmra.mxu0 %v451
      %v674 = vpop.f32.mrf.mxu0
      %v675 = vadd.f32 %v360, %v674
      %v676 = vpop.f32.mrf.mxu0
      %677 = vmatprep.mubr.f32.mxu0 0.0
      %678 = vmatmul.mubr.f32.gmra.mxu0 %v454
      %v679 = vpop.f32.mrf.mxu0
      %v680 = vadd.f32 %v360, %v679
      %v681 = vpop.f32.mrf.mxu0
      %682 = vmatprep.mubr.f32.mxu0 0.0
      %683 = vmatmul.mubr.f32.gmra.mxu0 %v457
      %v684 = vpop.f32.mrf.mxu0
      %v685 = vadd.f32 %v360, %v684
      %v686 = vpop.f32.mrf.mxu0
      %687 = vdwg.mxu0
      %v688 = vmax.f32 %v530, 0.0
      %v689 = vmax.f32 %v535, 0.0
      %v690 = vmax.f32 %v540, 0.0
      %v691 = vmax.f32 %v545, 0.0
      %v692 = vmax.f32 %v550, 0.0
      %v693 = vmax.f32 %v555, 0.0
      %v694 = vmax.f32 %v560, 0.0
      %v695 = vmax.f32 %v565, 0.0
      %v696 = vmax.f32 %v570, 0.0
      %v697 = vmax.f32 %v575, 0.0
      %v698 = vmax.f32 %v580, 0.0
      %v699 = vmax.f32 %v585, 0.0
      %v700 = vmax.f32 %v590, 0.0
      %v701 = vmax.f32 %v595, 0.0
      %v702 = vmax.f32 %v600, 0.0
      %v703 = vmax.f32 %v605, 0.0
      %v704 = vmax.f32 %v610, 0.0
      %v705 = vmax.f32 %v615, 0.0
      %v706 = vmax.f32 %v620, 0.0
      %v707 = vmax.f32 %v625, 0.0
      %v708 = vmax.f32 %v630, 0.0
      %v709 = vmax.f32 %v635, 0.0
      %v710 = vmax.f32 %v640, 0.0
      %v711 = vmax.f32 %v645, 0.0
      %v712 = vmax.f32 %v650, 0.0
      %v713 = vmax.f32 %v655, 0.0
      %v714 = vmax.f32 %v660, 0.0
      %v715 = vmax.f32 %v665, 0.0
      %v716 = vmax.f32 %v670, 0.0
      %v717 = vmax.f32 %v675, 0.0
      %v718 = vmax.f32 %v680, 0.0
      %v719 = vmax.f32 %v685, 0.0
      %v720 = vld [vmem:[%s3] sm:$0xff]
      %v721 = vld [vmem:[%s3 + $0x8] sm:$0xff]
      %v722 = vld [vmem:[%s3 + $0x10] sm:$0xff]
      %v723 = vld [vmem:[%s3 + $0x18] sm:$0xff]
      %v724 = vld [vmem:[%s3 + $0x20] sm:$0xff]
      %v725 = vld [vmem:[%s3 + $0x28] sm:$0xff]
      %v726 = vld [vmem:[%s3 + $0x30] sm:$0xff]
      %v727 = vld [vmem:[%s3 + $0x38] sm:$0xff]
      %v728 = vld [vmem:[%s4] sm:$0x1]
      %v730 = vlaneseq
      %v731 = vshrl.u32 %v730, 7
      %v732 = vsub.s32 0, %v731
      %v733 = vrot.slane %v728, %v732
      %vm735 = vcmask 523264
      %v737 = vsel %vm735, %v688, 0
      %v740 = vsel %vm735, %v689, 0
      %v743 = vsel %vm735, %v690, 0
      %v746 = vsel %vm735, %v691, 0
      %v749 = vsel %vm735, %v692, 0
      %v752 = vsel %vm735, %v693, 0
      %v755 = vsel %vm735, %v694, 0
      %v758 = vsel %vm735, %v695, 0
      %v761 = vsel %vm735, %v696, 0
      %v764 = vsel %vm735, %v697, 0
      %v767 = vsel %vm735, %v698, 0
      %v770 = vsel %vm735, %v699, 0
      %v773 = vsel %vm735, %v700, 0
      %v776 = vsel %vm735, %v701, 0
      %v779 = vsel %vm735, %v702, 0
      %v782 = vsel %vm735, %v703, 0
      %v785 = vsel %vm735, %v704, 0
      %v788 = vsel %vm735, %v705, 0
      %v791 = vsel %vm735, %v706, 0
      %v794 = vsel %vm735, %v707, 0
      %v797 = vsel %vm735, %v708, 0
      %v800 = vsel %vm735, %v709, 0
      %v803 = vsel %vm735, %v710, 0
      %v806 = vsel %vm735, %v711, 0
      %v809 = vsel %vm735, %v712, 0
      %v812 = vsel %vm735, %v713, 0
      %v815 = vsel %vm735, %v714, 0
      %v818 = vsel %vm735, %v715, 0
      %v821 = vsel %vm735, %v716, 0
      %v824 = vsel %vm735, %v717, 0
      %v827 = vsel %vm735, %v718, 0
      %v830 = vsel %vm735, %v719, 0
      %832 = vmatprep.subr.mxu0 0.0
      %833 = vmatpush1.msra.mxu0 0.0
      %834 = vmatprep.subr.mxu0 0.0
      %835 = vmatpush1.msra.mxu0 0.0
      %836 = vmatprep.subr.mxu0 0.0
      %837 = vmatpush1.msra.mxu0 0.0
      %838 = vmatprep.subr.mxu0 0.0
      %839 = vmatpush1.msra.mxu0 0.0
      %840 = vmatprep.subr.mxu0 0.0
      %841 = vmatpush1.msra.mxu0 0.0
      %842 = vmatprep.subr.mxu0 0.0
      %843 = vmatpush1.msra.mxu0 0.0
      %844 = vmatprep.subr.mxu0 0.0
      %845 = vmatpush1.msra.mxu0 0.0
      %846 = vmatprep.subr.mxu0 0.0
      %847 = vmatpush1.msra.mxu0 0.0
      %848 = vmatprep.subr.mxu0 0.0
      %849 = vmatpush1.msra.mxu0 %v727
      %850 = vmatprep.subr.mxu0 0.0
      %851 = vmatpush1.msra.mxu0 %v726
      %852 = vmatprep.subr.mxu0 0.0
      %853 = vmatpush1.msra.mxu0 %v725
      %854 = vmatprep.subr.mxu0 0.0
      %855 = vmatpush1.msra.mxu0 %v724
      %856 = vmatprep.subr.mxu0 0.0
      %857 = vmatpush1.msra.mxu0 %v723
      %858 = vmatprep.subr.mxu0 0.0
      %859 = vmatpush1.msra.mxu0 %v722
      %860 = vmatprep.subr.mxu0 0.0
      %861 = vmatpush1.msra.mxu0 %v721
      %862 = vmatprep.subr.mxu0 0.0
      %863 = vmatpush1.msra.mxu0 %v720
      %864 = vmatprep.subr.mxu0 0.0
      %865 = vmatpush2.msra.mxu0 0.0
      %866 = vmatprep.subr.mxu0 0.0
      %867 = vmatpush2.msra.mxu0 0.0
      %868 = vmatprep.subr.mxu0 0.0
      %869 = vmatpush2.msra.mxu0 0.0
      %870 = vmatprep.subr.mxu0 0.0
      %871 = vmatpush2.msra.mxu0 0.0
      %872 = vmatprep.subr.mxu0 0.0
      %873 = vmatpush2.msra.mxu0 0.0
      %874 = vmatprep.subr.mxu0 0.0
      %875 = vmatpush2.msra.mxu0 0.0
      %876 = vmatprep.subr.mxu0 0.0
      %877 = vmatpush2.msra.mxu0 0.0
      %878 = vmatprep.subr.mxu0 0.0
      %879 = vmatpush2.msra.mxu0 0.0
      %880 = vmatprep.subr.mxu0 0.0
      %881 = vmatpush2.msra.mxu0 0.0
      %882 = vmatprep.subr.mxu0 0.0
      %883 = vmatpush2.msra.mxu0 0.0
      %884 = vmatprep.subr.mxu0 0.0
      %885 = vmatpush2.msra.mxu0 0.0
      %886 = vmatprep.subr.mxu0 0.0
      %887 = vmatpush2.msra.mxu0 0.0
      %888 = vmatprep.subr.mxu0 0.0
      %889 = vmatpush2.msra.mxu0 0.0
      %890 = vmatprep.subr.mxu0 0.0
      %891 = vmatpush2.msra.mxu0 0.0
      %892 = vmatprep.subr.mxu0 0.0
      %893 = vmatpush2.msra.mxu0 0.0
      %894 = vmatprep.subr.mxu0 0.0
      %895 = vmatpush2.msra.mxu0 0.0
      %896 = vmatprep.mubr.f32.mxu0 0.0
      %897 = vmatmul.mubr.f32.gmra.mxu0 %v737
      %v898 = vpop.f32.mrf.mxu0
      %v899 = vadd.f32 %v733, %v898
      %v900 = vpop.f32.mrf.mxu0
      %901 = vmatprep.mubr.f32.mxu0 0.0
      %902 = vmatmul.mubr.f32.gmra.mxu0 %v740
      %v903 = vpop.f32.mrf.mxu0
      %v904 = vadd.f32 %v733, %v903
      %v905 = vpop.f32.mrf.mxu0
      %906 = vmatprep.mubr.f32.mxu0 0.0
      %907 = vmatmul.mubr.f32.gmra.mxu0 %v743
      %v908 = vpop.f32.mrf.mxu0
      %v909 = vadd.f32 %v733, %v908
      %v910 = vpop.f32.mrf.mxu0
      %911 = vmatprep.mubr.f32.mxu0 0.0
      %912 = vmatmul.mubr.f32.gmra.mxu0 %v746
      %v913 = vpop.f32.mrf.mxu0
      %v914 = vadd.f32 %v733, %v913
      %v915 = vpop.f32.mrf.mxu0
      %916 = vmatprep.mubr.f32.mxu0 0.0
      %917 = vmatmul.mubr.f32.gmra.mxu0 %v749
      %v918 = vpop.f32.mrf.mxu0
      %v919 = vadd.f32 %v733, %v918
      %v920 = vpop.f32.mrf.mxu0
      %921 = vmatprep.mubr.f32.mxu0 0.0
      %922 = vmatmul.mubr.f32.gmra.mxu0 %v752
      %v923 = vpop.f32.mrf.mxu0
      %v924 = vadd.f32 %v733, %v923
      %v925 = vpop.f32.mrf.mxu0
      %926 = vmatprep.mubr.f32.mxu0 0.0
      %927 = vmatmul.mubr.f32.gmra.mxu0 %v755
      %v928 = vpop.f32.mrf.mxu0
      %v929 = vadd.f32 %v733, %v928
      %v930 = vpop.f32.mrf.mxu0
      %931 = vmatprep.mubr.f32.mxu0 0.0
      %932 = vmatmul.mubr.f32.gmra.mxu0 %v758
      %v933 = vpop.f32.mrf.mxu0
      %v934 = vadd.f32 %v733, %v933
      %v935 = vpop.f32.mrf.mxu0
      %936 = vmatprep.mubr.f32.mxu0 0.0
      %937 = vmatmul.mubr.f32.gmra.mxu0 %v761
      %v938 = vpop.f32.mrf.mxu0
      %v939 = vadd.f32 %v733, %v938
      %v940 = vpop.f32.mrf.mxu0
      %941 = vmatprep.mubr.f32.mxu0 0.0
      %942 = vmatmul.mubr.f32.gmra.mxu0 %v764
      %v943 = vpop.f32.mrf.mxu0
      %v944 = vadd.f32 %v733, %v943
      %v945 = vpop.f32.mrf.mxu0
      %946 = vmatprep.mubr.f32.mxu0 0.0
      %947 = vmatmul.mubr.f32.gmra.mxu0 %v767
      %v948 = vpop.f32.mrf.mxu0
      %v949 = vadd.f32 %v733, %v948
      %v950 = vpop.f32.mrf.mxu0
      %951 = vmatprep.mubr.f32.mxu0 0.0
      %952 = vmatmul.mubr.f32.gmra.mxu0 %v770
      %v953 = vpop.f32.mrf.mxu0
      %v954 = vadd.f32 %v733, %v953
      %v955 = vpop.f32.mrf.mxu0
      %956 = vmatprep.mubr.f32.mxu0 0.0
      %957 = vmatmul.mubr.f32.gmra.mxu0 %v773
      %v958 = vpop.f32.mrf.mxu0
      %v959 = vadd.f32 %v733, %v958
      %v960 = vpop.f32.mrf.mxu0
      %961 = vmatprep.mubr.f32.mxu0 0.0
      %962 = vmatmul.mubr.f32.gmra.mxu0 %v776
      %v963 = vpop.f32.mrf.mxu0
      %v964 = vadd.f32 %v733, %v963
      %v965 = vpop.f32.mrf.mxu0
      %966 = vmatprep.mubr.f32.mxu0 0.0
      %967 = vmatmul.mubr.f32.gmra.mxu0 %v779
      %v968 = vpop.f32.mrf.mxu0
      %v969 = vadd.f32 %v733, %v968
      %v970 = vpop.f32.mrf.mxu0
      %971 = vmatprep.mubr.f32.mxu0 0.0
      %972 = vmatmul.mubr.f32.gmra.mxu0 %v782
      %v973 = vpop.f32.mrf.mxu0
      %v974 = vadd.f32 %v733, %v973
      %v975 = vpop.f32.mrf.mxu0
      %976 = vmatprep.mubr.f32.mxu0 0.0
      %977 = vmatmul.mubr.f32.gmra.mxu0 %v785
      %v978 = vpop.f32.mrf.mxu0
      %v979 = vadd.f32 %v733, %v978
      %v980 = vpop.f32.mrf.mxu0
      %981 = vmatprep.mubr.f32.mxu0 0.0
      %982 = vmatmul.mubr.f32.gmra.mxu0 %v788
      %v983 = vpop.f32.mrf.mxu0
      %v984 = vadd.f32 %v733, %v983
      %v985 = vpop.f32.mrf.mxu0
      %986 = vmatprep.mubr.f32.mxu0 0.0
      %987 = vmatmul.mubr.f32.gmra.mxu0 %v791
      %v988 = vpop.f32.mrf.mxu0
      %v989 = vadd.f32 %v733, %v988
      %v990 = vpop.f32.mrf.mxu0
      %991 = vmatprep.mubr.f32.mxu0 0.0
      %992 = vmatmul.mubr.f32.gmra.mxu0 %v794
      %v993 = vpop.f32.mrf.mxu0
      %v994 = vadd.f32 %v733, %v993
      %v995 = vpop.f32.mrf.mxu0
      %996 = vmatprep.mubr.f32.mxu0 0.0
      %997 = vmatmul.mubr.f32.gmra.mxu0 %v797
      %v998 = vpop.f32.mrf.mxu0
      %v999 = vadd.f32 %v733, %v998
      %v1000 = vpop.f32.mrf.mxu0
      %1001 = vmatprep.mubr.f32.mxu0 0.0
      %1002 = vmatmul.mubr.f32.gmra.mxu0 %v800
      %v1003 = vpop.f32.mrf.mxu0
      %v1004 = vadd.f32 %v733, %v1003
      %v1005 = vpop.f32.mrf.mxu0
      %1006 = vmatprep.mubr.f32.mxu0 0.0
      %1007 = vmatmul.mubr.f32.gmra.mxu0 %v803
      %v1008 = vpop.f32.mrf.mxu0
      %v1009 = vadd.f32 %v733, %v1008
      %v1010 = vpop.f32.mrf.mxu0
      %1011 = vmatprep.mubr.f32.mxu0 0.0
      %1012 = vmatmul.mubr.f32.gmra.mxu0 %v806
      %v1013 = vpop.f32.mrf.mxu0
      %v1014 = vadd.f32 %v733, %v1013
      %v1015 = vpop.f32.mrf.mxu0
      %1016 = vmatprep.mubr.f32.mxu0 0.0
      %1017 = vmatmul.mubr.f32.gmra.mxu0 %v809
      %v1018 = vpop.f32.mrf.mxu0
      %v1019 = vadd.f32 %v733, %v1018
      %v1020 = vpop.f32.mrf.mxu0
      %1021 = vmatprep.mubr.f32.mxu0 0.0
      %1022 = vmatmul.mubr.f32.gmra.mxu0 %v812
      %v1023 = vpop.f32.mrf.mxu0
      %v1024 = vadd.f32 %v733, %v1023
      %v1025 = vpop.f32.mrf.mxu0
      %1026 = vmatprep.mubr.f32.mxu0 0.0
      %1027 = vmatmul.mubr.f32.gmra.mxu0 %v815
      %v1028 = vpop.f32.mrf.mxu0
      %v1029 = vadd.f32 %v733, %v1028
      %v1030 = vpop.f32.mrf.mxu0
      %1031 = vmatprep.mubr.f32.mxu0 0.0
      %1032 = vmatmul.mubr.f32.gmra.mxu0 %v818
      %v1033 = vpop.f32.mrf.mxu0
      %v1034 = vadd.f32 %v733, %v1033
      %v1035 = vpop.f32.mrf.mxu0
      %1036 = vmatprep.mubr.f32.mxu0 0.0
      %1037 = vmatmul.mubr.f32.gmra.mxu0 %v821
      %v1038 = vpop.f32.mrf.mxu0
      %v1039 = vadd.f32 %v733, %v1038
      %v1040 = vpop.f32.mrf.mxu0
      %1041 = vmatprep.mubr.f32.mxu0 0.0
      %1042 = vmatmul.mubr.f32.gmra.mxu0 %v824
      %v1043 = vpop.f32.mrf.mxu0
      %v1044 = vadd.f32 %v733, %v1043
      %v1045 = vpop.f32.mrf.mxu0
      %1046 = vmatprep.mubr.f32.mxu0 0.0
      %1047 = vmatmul.mubr.f32.gmra.mxu0 %v827
      %v1048 = vpop.f32.mrf.mxu0
      %v1049 = vadd.f32 %v733, %v1048
      %v1050 = vpop.f32.mrf.mxu0
      %1051 = vmatprep.mubr.f32.mxu0 0.0
      %1052 = vmatmul.mubr.f32.gmra.mxu0 %v830
      %v1053 = vpop.f32.mrf.mxu0
      %v1054 = vadd.f32 %v733, %v1053
      %v1055 = vpop.f32.mrf.mxu0
      %1056 = vdwg.mxu0
      %v1057 = vmax.f32 %v899, 0.0
      %v1058 = vmax.f32 %v904, 0.0
      %v1059 = vmax.f32 %v909, 0.0
      %v1060 = vmax.f32 %v914, 0.0
      %v1061 = vmax.f32 %v919, 0.0
      %v1062 = vmax.f32 %v924, 0.0
      %v1063 = vmax.f32 %v929, 0.0
      %v1064 = vmax.f32 %v934, 0.0
      %v1065 = vmax.f32 %v939, 0.0
      %v1066 = vmax.f32 %v944, 0.0
      %v1067 = vmax.f32 %v949, 0.0
      %v1068 = vmax.f32 %v954, 0.0
      %v1069 = vmax.f32 %v959, 0.0
      %v1070 = vmax.f32 %v964, 0.0
      %v1071 = vmax.f32 %v969, 0.0
      %v1072 = vmax.f32 %v974, 0.0
      %v1073 = vmax.f32 %v979, 0.0
      %v1074 = vmax.f32 %v984, 0.0
      %v1075 = vmax.f32 %v989, 0.0
      %v1076 = vmax.f32 %v994, 0.0
      %v1077 = vmax.f32 %v999, 0.0
      %v1078 = vmax.f32 %v1004, 0.0
      %v1079 = vmax.f32 %v1009, 0.0
      %v1080 = vmax.f32 %v1014, 0.0
      %v1081 = vmax.f32 %v1019, 0.0
      %v1082 = vmax.f32 %v1024, 0.0
      %v1083 = vmax.f32 %v1029, 0.0
      %v1084 = vmax.f32 %v1034, 0.0
      %v1085 = vmax.f32 %v1039, 0.0
      %v1086 = vmax.f32 %v1044, 0.0
      %v1087 = vmax.f32 %v1049, 0.0
      %v1088 = vmax.f32 %v1054, 0.0
      %v1089 = vld [vmem:[%s5] sm:$0xff]
      %v1090 = vld [vmem:[%s5 + $0x8] sm:$0xff]
      %v1091 = vld [vmem:[%s5 + $0x10] sm:$0xff]
      %v1092 = vld [vmem:[%s5 + $0x18] sm:$0xff]
      %v1093 = vld [vmem:[%s5 + $0x20] sm:$0xff]
      %v1094 = vld [vmem:[%s5 + $0x28] sm:$0xff]
      %v1095 = vld [vmem:[%s5 + $0x30] sm:$0xff]
      %v1096 = vld [vmem:[%s5 + $0x38] sm:$0xff]
      %v1097 = vld [vmem:[%s5 + $0x40] sm:$0xff]
      %v1098 = vld [vmem:[%s5 + $0x48] sm:$0xff]
      %v1099 = vld [vmem:[%s5 + $0x50] sm:$0xff]
      %v1100 = vld [vmem:[%s5 + $0x58] sm:$0xff]
      %v1101 = vld [vmem:[%s5 + $0x60] sm:$0xff]
      %v1102 = vld [vmem:[%s5 + $0x68] sm:$0xff]
      %v1103 = vld [vmem:[%s5 + $0x70] sm:$0xff]
      %v1104 = vld [vmem:[%s5 + $0x78] sm:$0xff]
      %v1105 = vld [vmem:[%s5 + $0x80] sm:$0xff]
      %v1106 = vld [vmem:[%s5 + $0x88] sm:$0xff]
      %v1107 = vld [vmem:[%s5 + $0x90] sm:$0xff]
      %v1108 = vld [vmem:[%s5 + $0x98] sm:$0xff]
      %v1109 = vld [vmem:[%s5 + $0xa0] sm:$0xff]
      %v1110 = vld [vmem:[%s5 + $0xa8] sm:$0xff]
      %v1111 = vld [vmem:[%s5 + $0xb0] sm:$0xff]
      %v1112 = vld [vmem:[%s5 + $0xb8] sm:$0xff]
      %v1113 = vld [vmem:[%s5 + $0xc0] sm:$0xff]
      %v1114 = vld [vmem:[%s5 + $0xc8] sm:$0xff]
      %v1115 = vld [vmem:[%s5 + $0xd0] sm:$0xff]
      %v1116 = vld [vmem:[%s5 + $0xd8] sm:$0xff]
      %v1117 = vld [vmem:[%s5 + $0xe0] sm:$0xff]
      %v1118 = vld [vmem:[%s5 + $0xe8] sm:$0xff]
      %v1119 = vld [vmem:[%s5 + $0xf0] sm:$0xff]
      %v1120 = vld [vmem:[%s5 + $0xf8] sm:$0xff]
      %v1121 = vld [vmem:[%s5 + $0x100] sm:$0xff]
      %v1122 = vld [vmem:[%s5 + $0x108] sm:$0xff]
      %v1123 = vld [vmem:[%s5 + $0x110] sm:$0xff]
      %v1124 = vld [vmem:[%s5 + $0x118] sm:$0xff]
      %v1125 = vld [vmem:[%s5 + $0x120] sm:$0xff]
      %v1126 = vld [vmem:[%s5 + $0x128] sm:$0xff]
      %v1127 = vld [vmem:[%s5 + $0x130] sm:$0xff]
      %v1128 = vld [vmem:[%s5 + $0x138] sm:$0xff]
      %v1129 = vld [vmem:[%s5 + $0x140] sm:$0xff]
      %v1130 = vld [vmem:[%s5 + $0x148] sm:$0xff]
      %v1131 = vld [vmem:[%s5 + $0x150] sm:$0xff]
      %v1132 = vld [vmem:[%s5 + $0x158] sm:$0xff]
      %v1133 = vld [vmem:[%s5 + $0x160] sm:$0xff]
      %v1134 = vld [vmem:[%s5 + $0x168] sm:$0xff]
      %v1135 = vld [vmem:[%s5 + $0x170] sm:$0xff]
      %v1136 = vld [vmem:[%s5 + $0x178] sm:$0xff]
      %v1137 = vld [vmem:[%s5 + $0x180] sm:$0xff]
      %v1138 = vld [vmem:[%s5 + $0x188] sm:$0xff]
      %v1139 = vld [vmem:[%s5 + $0x190] sm:$0xff]
      %v1140 = vld [vmem:[%s5 + $0x198] sm:$0xff]
      %v1141 = vld [vmem:[%s5 + $0x1a0] sm:$0xff]
      %v1142 = vld [vmem:[%s5 + $0x1a8] sm:$0xff]
      %v1143 = vld [vmem:[%s5 + $0x1b0] sm:$0xff]
      %v1144 = vld [vmem:[%s5 + $0x1b8] sm:$0xff]
      %v1145 = vld [vmem:[%s5 + $0x1c0] sm:$0xff]
      %v1146 = vld [vmem:[%s5 + $0x1c8] sm:$0xff]
      %v1147 = vld [vmem:[%s5 + $0x1d0] sm:$0xff]
      %v1148 = vld [vmem:[%s5 + $0x1d8] sm:$0xff]
      %v1149 = vld [vmem:[%s5 + $0x1e0] sm:$0xff]
      %v1150 = vld [vmem:[%s5 + $0x1e8] sm:$0xff]
      %v1151 = vld [vmem:[%s5 + $0x1f0] sm:$0xff]
      %v1152 = vld [vmem:[%s5 + $0x1f8] sm:$0xff]
      %v1153 = vld [vmem:[%s5 + $0x200] sm:$0xff]
      %v1154 = vld [vmem:[%s5 + $0x208] sm:$0xff]
      %v1155 = vld [vmem:[%s5 + $0x210] sm:$0xff]
      %v1156 = vld [vmem:[%s5 + $0x218] sm:$0xff]
      %v1157 = vld [vmem:[%s5 + $0x220] sm:$0xff]
      %v1158 = vld [vmem:[%s5 + $0x228] sm:$0xff]
      %v1159 = vld [vmem:[%s5 + $0x230] sm:$0xff]
      %v1160 = vld [vmem:[%s5 + $0x238] sm:$0xff]
      %v1161 = vld [vmem:[%s5 + $0x240] sm:$0xff]
      %v1162 = vld [vmem:[%s5 + $0x248] sm:$0xff]
      %v1163 = vld [vmem:[%s5 + $0x250] sm:$0xff]
      %v1164 = vld [vmem:[%s5 + $0x258] sm:$0xff]
      %v1165 = vld [vmem:[%s5 + $0x260] sm:$0xff]
      %v1166 = vld [vmem:[%s5 + $0x268] sm:$0xff]
      %v1167 = vld [vmem:[%s5 + $0x270] sm:$0xff]
      %v1168 = vld [vmem:[%s5 + $0x278] sm:$0xff]
      %v1169 = vld [vmem:[%s5 + $0x280] sm:$0xff]
      %v1170 = vld [vmem:[%s5 + $0x288] sm:$0xff]
      %v1171 = vld [vmem:[%s5 + $0x290] sm:$0xff]
      %v1172 = vld [vmem:[%s5 + $0x298] sm:$0xff]
      %v1173 = vld [vmem:[%s5 + $0x2a0] sm:$0xff]
      %v1174 = vld [vmem:[%s5 + $0x2a8] sm:$0xff]
      %v1175 = vld [vmem:[%s5 + $0x2b0] sm:$0xff]
      %v1176 = vld [vmem:[%s5 + $0x2b8] sm:$0xff]
      %v1177 = vld [vmem:[%s5 + $0x2c0] sm:$0xff]
      %v1178 = vld [vmem:[%s5 + $0x2c8] sm:$0xff]
      %v1179 = vld [vmem:[%s5 + $0x2d0] sm:$0xff]
      %v1180 = vld [vmem:[%s5 + $0x2d8] sm:$0xff]
      %v1181 = vld [vmem:[%s5 + $0x2e0] sm:$0xff]
      %v1182 = vld [vmem:[%s5 + $0x2e8] sm:$0xff]
      %v1183 = vld [vmem:[%s5 + $0x2f0] sm:$0xff]
      %v1184 = vld [vmem:[%s5 + $0x2f8] sm:$0xff]
      %v1185 = vld [vmem:[%s5 + $0x300] sm:$0xff]
      %v1186 = vld [vmem:[%s5 + $0x308] sm:$0xff]
      %v1187 = vld [vmem:[%s5 + $0x310] sm:$0xff]
      %v1188 = vld [vmem:[%s5 + $0x318] sm:$0xff]
      %v1189 = vld [vmem:[%s5 + $0x320] sm:$0xff]
      %v1190 = vld [vmem:[%s5 + $0x328] sm:$0xff]
      %v1191 = vld [vmem:[%s5 + $0x330] sm:$0xff]
      %v1192 = vld [vmem:[%s5 + $0x338] sm:$0xff]
      %v1193 = vld [vmem:[%s5 + $0x340] sm:$0xff]
      %v1194 = vld [vmem:[%s5 + $0x348] sm:$0xff]
      %v1195 = vld [vmem:[%s5 + $0x350] sm:$0xff]
      %v1196 = vld [vmem:[%s5 + $0x358] sm:$0xff]
      %v1197 = vld [vmem:[%s5 + $0x360] sm:$0xff]
      %v1198 = vld [vmem:[%s5 + $0x368] sm:$0xff]
      %v1199 = vld [vmem:[%s5 + $0x370] sm:$0xff]
      %v1200 = vld [vmem:[%s5 + $0x378] sm:$0xff]
      %v1201 = vld [vmem:[%s5 + $0x380] sm:$0xff]
      %v1202 = vld [vmem:[%s5 + $0x388] sm:$0xff]
      %v1203 = vld [vmem:[%s5 + $0x390] sm:$0xff]
      %v1204 = vld [vmem:[%s5 + $0x398] sm:$0xff]
      %v1205 = vld [vmem:[%s5 + $0x3a0] sm:$0xff]
      %v1206 = vld [vmem:[%s5 + $0x3a8] sm:$0xff]
      %v1207 = vld [vmem:[%s5 + $0x3b0] sm:$0xff]
      %v1208 = vld [vmem:[%s5 + $0x3b8] sm:$0xff]
      %v1209 = vld [vmem:[%s5 + $0x3c0] sm:$0xff]
      %v1210 = vld [vmem:[%s5 + $0x3c8] sm:$0xff]
      %v1211 = vld [vmem:[%s5 + $0x3d0] sm:$0xff]
      %v1212 = vld [vmem:[%s5 + $0x3d8] sm:$0xff]
      %v1213 = vld [vmem:[%s5 + $0x3e0] sm:$0xff]
      %v1214 = vld [vmem:[%s5 + $0x3e8] sm:$0xff]
      %v1215 = vld [vmem:[%s5 + $0x3f0] sm:$0xff]
      %v1216 = vld [vmem:[%s5 + $0x3f8] sm:$0xff]
      %v1217 = vld [vmem:[%s6] sm:$0xff]
      %v1219 = vlaneseq
      %v1220 = vshrl.u32 %v1219, 7
      %v1221 = vsub.s32 0, %v1220
      %v1222 = vrot.slane %v1217, %v1221
      %v1223 = vlaneseq
      %v1224 = vshrl.u32 %v1223, 7
      %v1225 = vsub.s32 1, %v1224
      %v1226 = vrot.slane %v1217, %v1225
      %v1227 = vlaneseq
      %v1228 = vshrl.u32 %v1227, 7
      %v1229 = vsub.s32 2, %v1228
      %v1230 = vrot.slane %v1217, %v1229
      %v1231 = vlaneseq
      %v1232 = vshrl.u32 %v1231, 7
      %v1233 = vsub.s32 3, %v1232
      %v1234 = vrot.slane %v1217, %v1233
      %v1235 = vlaneseq
      %v1236 = vshrl.u32 %v1235, 7
      %v1237 = vsub.s32 4, %v1236
      %v1238 = vrot.slane %v1217, %v1237
      %v1239 = vlaneseq
      %v1240 = vshrl.u32 %v1239, 7
      %v1241 = vsub.s32 5, %v1240
      %v1242 = vrot.slane %v1217, %v1241
      %v1243 = vlaneseq
      %v1244 = vshrl.u32 %v1243, 7
      %v1245 = vsub.s32 6, %v1244
      %v1246 = vrot.slane %v1217, %v1245
      %v1247 = vlaneseq
      %v1248 = vshrl.u32 %v1247, 7
      %v1249 = vsub.s32 7, %v1248
      %v1250 = vrot.slane %v1217, %v1249
      %1259 = vmatprep.subr.mxu0 %v1210
      %1260 = vmatpush1.msra.mxu0 %v1209
      %1261 = vmatprep.subr.mxu0 %v1202
      %1262 = vmatpush1.msra.mxu0 %v1201
      %1263 = vmatprep.subr.mxu0 %v1194
      %1264 = vmatpush1.msra.mxu0 %v1193
      %1265 = vmatprep.subr.mxu0 %v1186
      %1266 = vmatpush1.msra.mxu0 %v1185
      %1267 = vmatprep.subr.mxu0 %v1178
      %1268 = vmatpush1.msra.mxu0 %v1177
      %1269 = vmatprep.subr.mxu0 %v1170
      %1270 = vmatpush1.msra.mxu0 %v1169
      %1271 = vmatprep.subr.mxu0 %v1162
      %1272 = vmatpush1.msra.mxu0 %v1161
      %1273 = vmatprep.subr.mxu0 %v1154
      %1274 = vmatpush1.msra.mxu0 %v1153
      %1275 = vmatprep.subr.mxu0 %v1146
      %1276 = vmatpush1.msra.mxu0 %v1145
      %1277 = vmatprep.subr.mxu0 %v1138
      %1278 = vmatpush1.msra.mxu0 %v1137
      %1279 = vmatprep.subr.mxu0 %v1130
      %1280 = vmatpush1.msra.mxu0 %v1129
      %1281 = vmatprep.subr.mxu0 %v1122
      %1282 = vmatpush1.msra.mxu0 %v1121
      %1283 = vmatprep.subr.mxu0 %v1114
      %1284 = vmatpush1.msra.mxu0 %v1113
      %1285 = vmatprep.subr.mxu0 %v1106
      %1286 = vmatpush1.msra.mxu0 %v1105
      %1287 = vmatprep.subr.mxu0 %v1098
      %1288 = vmatpush1.msra.mxu0 %v1097
      %1289 = vmatprep.subr.mxu0 %v1090
      %1290 = vmatpush1.msra.mxu0 %v1089
      %1291 = vmatprep.subr.mxu0 0.0
      %1292 = vmatpush2.msra.mxu0 0.0
      %1293 = vmatprep.subr.mxu0 0.0
      %1294 = vmatpush2.msra.mxu0 0.0
      %1295 = vmatprep.subr.mxu0 0.0
      %1296 = vmatpush2.msra.mxu0 0.0
      %1297 = vmatprep.subr.mxu0 0.0
      %1298 = vmatpush2.msra.mxu0 0.0
      %1299 = vmatprep.subr.mxu0 0.0
      %1300 = vmatpush2.msra.mxu0 0.0
      %1301 = vmatprep.subr.mxu0 0.0
      %1302 = vmatpush2.msra.mxu0 0.0
      %1303 = vmatprep.subr.mxu0 0.0
      %1304 = vmatpush2.msra.mxu0 0.0
      %1305 = vmatprep.subr.mxu0 0.0
      %1306 = vmatpush2.msra.mxu0 0.0
      %1307 = vmatprep.subr.mxu0 0.0
      %1308 = vmatpush2.msra.mxu0 0.0
      %1309 = vmatprep.subr.mxu0 0.0
      %1310 = vmatpush2.msra.mxu0 0.0
      %1311 = vmatprep.subr.mxu0 0.0
      %1312 = vmatpush2.msra.mxu0 0.0
      %1313 = vmatprep.subr.mxu0 0.0
      %1314 = vmatpush2.msra.mxu0 0.0
      %1315 = vmatprep.subr.mxu0 0.0
      %1316 = vmatpush2.msra.mxu0 0.0
      %1317 = vmatprep.subr.mxu0 0.0
      %1318 = vmatpush2.msra.mxu0 0.0
      %1319 = vmatprep.subr.mxu0 0.0
      %1320 = vmatpush2.msra.mxu0 0.0
      %1321 = vmatprep.subr.mxu0 0.0
      %1322 = vmatpush2.msra.mxu0 0.0
      %1323 = vmatprep.mubr.f32.mxu0 0.0
      %1324 = vmatmul.mubr.f32.gmra.mxu0 %v1057
      %v1325 = vpop.f32.mrf.mxu0
      %v1326 = vadd.f32 %v1222, %v1325
      %v1327 = vpop.f32.mrf.mxu0
      %v1328 = vadd.f32 %v1226, %v1327
      %1329 = vmatprep.mubr.f32.mxu0 0.0
      %1330 = vmatmul.mubr.f32.gmra.mxu0 %v1058
      %v1331 = vpop.f32.mrf.mxu0
      %v1332 = vadd.f32 %v1222, %v1331
      %v1333 = vpop.f32.mrf.mxu0
      %v1334 = vadd.f32 %v1226, %v1333
      %1335 = vmatprep.mubr.f32.mxu0 0.0
      %1336 = vmatmul.mubr.f32.gmra.mxu0 %v1059
      %v1337 = vpop.f32.mrf.mxu0
      %v1338 = vadd.f32 %v1222, %v1337
      %v1339 = vpop.f32.mrf.mxu0
      %v1340 = vadd.f32 %v1226, %v1339
      %1341 = vmatprep.mubr.f32.mxu0 0.0
      %1342 = vmatmul.mubr.f32.gmra.mxu0 %v1060
      %v1343 = vpop.f32.mrf.mxu0
      %v1344 = vadd.f32 %v1222, %v1343
      %v1345 = vpop.f32.mrf.mxu0
      %v1346 = vadd.f32 %v1226, %v1345
      %1347 = vmatprep.mubr.f32.mxu0 0.0
      %1348 = vmatmul.mubr.f32.gmra.mxu0 %v1061
      %v1349 = vpop.f32.mrf.mxu0
      %v1350 = vadd.f32 %v1222, %v1349
      %v1351 = vpop.f32.mrf.mxu0
      %v1352 = vadd.f32 %v1226, %v1351
      %1353 = vmatprep.mubr.f32.mxu0 0.0
      %1354 = vmatmul.mubr.f32.gmra.mxu0 %v1062
      %v1355 = vpop.f32.mrf.mxu0
      %v1356 = vadd.f32 %v1222, %v1355
      %v1357 = vpop.f32.mrf.mxu0
      %v1358 = vadd.f32 %v1226, %v1357
      %1359 = vmatprep.mubr.f32.mxu0 0.0
      %1360 = vmatmul.mubr.f32.gmra.mxu0 %v1063
      %v1361 = vpop.f32.mrf.mxu0
      %v1362 = vadd.f32 %v1222, %v1361
      %v1363 = vpop.f32.mrf.mxu0
      %v1364 = vadd.f32 %v1226, %v1363
      %1365 = vmatprep.mubr.f32.mxu0 0.0
      %1366 = vmatmul.mubr.f32.gmra.mxu0 %v1064
      %v1367 = vpop.f32.mrf.mxu0
      %v1368 = vadd.f32 %v1222, %v1367
      %v1369 = vpop.f32.mrf.mxu0
      %v1370 = vadd.f32 %v1226, %v1369
      %1371 = vmatprep.mubr.f32.mxu0 0.0
      %1372 = vmatmul.mubr.f32.gmra.mxu0 %v1065
      %v1373 = vpop.f32.mrf.mxu0
      %v1374 = vadd.f32 %v1222, %v1373
      %v1375 = vpop.f32.mrf.mxu0
      %v1376 = vadd.f32 %v1226, %v1375
      %1377 = vmatprep.mubr.f32.mxu0 0.0
      %1378 = vmatmul.mubr.f32.gmra.mxu0 %v1066
      %v1379 = vpop.f32.mrf.mxu0
      %v1380 = vadd.f32 %v1222, %v1379
      %v1381 = vpop.f32.mrf.mxu0
      %v1382 = vadd.f32 %v1226, %v1381
      %1383 = vmatprep.mubr.f32.mxu0 0.0
      %1384 = vmatmul.mubr.f32.gmra.mxu0 %v1067
      %v1385 = vpop.f32.mrf.mxu0
      %v1386 = vadd.f32 %v1222, %v1385
      %v1387 = vpop.f32.mrf.mxu0
      %v1388 = vadd.f32 %v1226, %v1387
      %1389 = vmatprep.mubr.f32.mxu0 0.0
      %1390 = vmatmul.mubr.f32.gmra.mxu0 %v1068
      %v1391 = vpop.f32.mrf.mxu0
      %v1392 = vadd.f32 %v1222, %v1391
      %v1393 = vpop.f32.mrf.mxu0
      %v1394 = vadd.f32 %v1226, %v1393
      %1395 = vmatprep.mubr.f32.mxu0 0.0
      %1396 = vmatmul.mubr.f32.gmra.mxu0 %v1069
      %v1397 = vpop.f32.mrf.mxu0
      %v1398 = vadd.f32 %v1222, %v1397
      %v1399 = vpop.f32.mrf.mxu0
      %v1400 = vadd.f32 %v1226, %v1399
      %1401 = vmatprep.mubr.f32.mxu0 0.0
      %1402 = vmatmul.mubr.f32.gmra.mxu0 %v1070
      %v1403 = vpop.f32.mrf.mxu0
      %v1404 = vadd.f32 %v1222, %v1403
      %v1405 = vpop.f32.mrf.mxu0
      %v1406 = vadd.f32 %v1226, %v1405
      %1407 = vmatprep.mubr.f32.mxu0 0.0
      %1408 = vmatmul.mubr.f32.gmra.mxu0 %v1071
      %v1409 = vpop.f32.mrf.mxu0
      %v1410 = vadd.f32 %v1222, %v1409
      %v1411 = vpop.f32.mrf.mxu0
      %v1412 = vadd.f32 %v1226, %v1411
      %1413 = vmatprep.mubr.f32.mxu0 0.0
      %1414 = vmatmul.mubr.f32.gmra.mxu0 %v1072
      %v1415 = vpop.f32.mrf.mxu0
      %v1416 = vadd.f32 %v1222, %v1415
      %v1417 = vpop.f32.mrf.mxu0
      %v1418 = vadd.f32 %v1226, %v1417
      %1419 = vmatprep.mubr.f32.mxu0 0.0
      %1420 = vmatmul.mubr.f32.gmra.mxu0 %v1073
      %v1421 = vpop.f32.mrf.mxu0
      %v1422 = vadd.f32 %v1222, %v1421
      %v1423 = vpop.f32.mrf.mxu0
      %v1424 = vadd.f32 %v1226, %v1423
      %1425 = vmatprep.mubr.f32.mxu0 0.0
      %1426 = vmatmul.mubr.f32.gmra.mxu0 %v1074
      %v1427 = vpop.f32.mrf.mxu0
      %v1428 = vadd.f32 %v1222, %v1427
      %v1429 = vpop.f32.mrf.mxu0
      %v1430 = vadd.f32 %v1226, %v1429
      %1431 = vmatprep.mubr.f32.mxu0 0.0
      %1432 = vmatmul.mubr.f32.gmra.mxu0 %v1075
      %v1433 = vpop.f32.mrf.mxu0
      %v1434 = vadd.f32 %v1222, %v1433
      %v1435 = vpop.f32.mrf.mxu0
      %v1436 = vadd.f32 %v1226, %v1435
      %1437 = vmatprep.mubr.f32.mxu0 0.0
      %1438 = vmatmul.mubr.f32.gmra.mxu0 %v1076
      %v1439 = vpop.f32.mrf.mxu0
      %v1440 = vadd.f32 %v1222, %v1439
      %v1441 = vpop.f32.mrf.mxu0
      %v1442 = vadd.f32 %v1226, %v1441
      %1443 = vmatprep.mubr.f32.mxu0 0.0
      %1444 = vmatmul.mubr.f32.gmra.mxu0 %v1077
      %v1445 = vpop.f32.mrf.mxu0
      %v1446 = vadd.f32 %v1222, %v1445
      %v1447 = vpop.f32.mrf.mxu0
      %v1448 = vadd.f32 %v1226, %v1447
      %1449 = vmatprep.mubr.f32.mxu0 0.0
      %1450 = vmatmul.mubr.f32.gmra.mxu0 %v1078
      %v1451 = vpop.f32.mrf.mxu0
      %v1452 = vadd.f32 %v1222, %v1451
      %v1453 = vpop.f32.mrf.mxu0
      %v1454 = vadd.f32 %v1226, %v1453
      %1455 = vmatprep.mubr.f32.mxu0 0.0
      %1456 = vmatmul.mubr.f32.gmra.mxu0 %v1079
      %v1457 = vpop.f32.mrf.mxu0
      %v1458 = vadd.f32 %v1222, %v1457
      %v1459 = vpop.f32.mrf.mxu0
      %v1460 = vadd.f32 %v1226, %v1459
      %1461 = vmatprep.mubr.f32.mxu0 0.0
      %1462 = vmatmul.mubr.f32.gmra.mxu0 %v1080
      %v1463 = vpop.f32.mrf.mxu0
      %v1464 = vadd.f32 %v1222, %v1463
      %v1465 = vpop.f32.mrf.mxu0
      %v1466 = vadd.f32 %v1226, %v1465
      %1467 = vmatprep.mubr.f32.mxu0 0.0
      %1468 = vmatmul.mubr.f32.gmra.mxu0 %v1081
      %v1469 = vpop.f32.mrf.mxu0
      %v1470 = vadd.f32 %v1222, %v1469
      %v1471 = vpop.f32.mrf.mxu0
      %v1472 = vadd.f32 %v1226, %v1471
      %1473 = vmatprep.mubr.f32.mxu0 0.0
      %1474 = vmatmul.mubr.f32.gmra.mxu0 %v1082
      %v1475 = vpop.f32.mrf.mxu0
      %v1476 = vadd.f32 %v1222, %v1475
      %v1477 = vpop.f32.mrf.mxu0
      %v1478 = vadd.f32 %v1226, %v1477
      %1479 = vmatprep.mubr.f32.mxu0 0.0
      %1480 = vmatmul.mubr.f32.gmra.mxu0 %v1083
      %v1481 = vpop.f32.mrf.mxu0
      %v1482 = vadd.f32 %v1222, %v1481
      %v1483 = vpop.f32.mrf.mxu0
      %v1484 = vadd.f32 %v1226, %v1483
      %1485 = vmatprep.mubr.f32.mxu0 0.0
      %1486 = vmatmul.mubr.f32.gmra.mxu0 %v1084
      %v1487 = vpop.f32.mrf.mxu0
      %v1488 = vadd.f32 %v1222, %v1487
      %v1489 = vpop.f32.mrf.mxu0
      %v1490 = vadd.f32 %v1226, %v1489
      %1491 = vmatprep.mubr.f32.mxu0 0.0
      %1492 = vmatmul.mubr.f32.gmra.mxu0 %v1085
      %v1493 = vpop.f32.mrf.mxu0
      %v1494 = vadd.f32 %v1222, %v1493
      %v1495 = vpop.f32.mrf.mxu0
      %v1496 = vadd.f32 %v1226, %v1495
      %1497 = vmatprep.mubr.f32.mxu0 0.0
      %1498 = vmatmul.mubr.f32.gmra.mxu0 %v1086
      %v1499 = vpop.f32.mrf.mxu0
      %v1500 = vadd.f32 %v1222, %v1499
      %v1501 = vpop.f32.mrf.mxu0
      %v1502 = vadd.f32 %v1226, %v1501
      %1503 = vmatprep.mubr.f32.mxu0 0.0
      %1504 = vmatmul.mubr.f32.gmra.mxu0 %v1087
      %v1505 = vpop.f32.mrf.mxu0
      %v1506 = vadd.f32 %v1222, %v1505
      %v1507 = vpop.f32.mrf.mxu0
      %v1508 = vadd.f32 %v1226, %v1507
      %1509 = vmatprep.mubr.f32.mxu0 0.0
      %1510 = vmatmul.mubr.f32.gmra.mxu0 %v1088
      %v1511 = vpop.f32.mrf.mxu0
      %v1512 = vadd.f32 %v1222, %v1511
      %v1513 = vpop.f32.mrf.mxu0
      %v1514 = vadd.f32 %v1226, %v1513
      %1515 = vdwg.mxu0
      %1516 = vmatprep.subr.mxu0 %v1212
      %1517 = vmatpush1.msra.mxu0 %v1211
      %1518 = vmatprep.subr.mxu0 %v1204
      %1519 = vmatpush1.msra.mxu0 %v1203
      %1520 = vmatprep.subr.mxu0 %v1196
      %1521 = vmatpush1.msra.mxu0 %v1195
      %1522 = vmatprep.subr.mxu0 %v1188
      %1523 = vmatpush1.msra.mxu0 %v1187
      %1524 = vmatprep.subr.mxu0 %v1180
      %1525 = vmatpush1.msra.mxu0 %v1179
      %1526 = vmatprep.subr.mxu0 %v1172
      %1527 = vmatpush1.msra.mxu0 %v1171
      %1528 = vmatprep.subr.mxu0 %v1164
      %1529 = vmatpush1.msra.mxu0 %v1163
      %1530 = vmatprep.subr.mxu0 %v1156
      %1531 = vmatpush1.msra.mxu0 %v1155
      %1532 = vmatprep.subr.mxu0 %v1148
      %1533 = vmatpush1.msra.mxu0 %v1147
      %1534 = vmatprep.subr.mxu0 %v1140
      %1535 = vmatpush1.msra.mxu0 %v1139
      %1536 = vmatprep.subr.mxu0 %v1132
      %1537 = vmatpush1.msra.mxu0 %v1131
      %1538 = vmatprep.subr.mxu0 %v1124
      %1539 = vmatpush1.msra.mxu0 %v1123
      %1540 = vmatprep.subr.mxu0 %v1116
      %1541 = vmatpush1.msra.mxu0 %v1115
      %1542 = vmatprep.subr.mxu0 %v1108
      %1543 = vmatpush1.msra.mxu0 %v1107
      %1544 = vmatprep.subr.mxu0 %v1100
      %1545 = vmatpush1.msra.mxu0 %v1099
      %1546 = vmatprep.subr.mxu0 %v1092
      %1547 = vmatpush1.msra.mxu0 %v1091
      %1548 = vmatprep.subr.mxu0 0.0
      %1549 = vmatpush2.msra.mxu0 0.0
      %1550 = vmatprep.subr.mxu0 0.0
      %1551 = vmatpush2.msra.mxu0 0.0
      %1552 = vmatprep.subr.mxu0 0.0
      %1553 = vmatpush2.msra.mxu0 0.0
      %1554 = vmatprep.subr.mxu0 0.0
      %1555 = vmatpush2.msra.mxu0 0.0
      %1556 = vmatprep.subr.mxu0 0.0
      %1557 = vmatpush2.msra.mxu0 0.0
      %1558 = vmatprep.subr.mxu0 0.0
      %1559 = vmatpush2.msra.mxu0 0.0
      %1560 = vmatprep.subr.mxu0 0.0
      %1561 = vmatpush2.msra.mxu0 0.0
      %1562 = vmatprep.subr.mxu0 0.0
      %1563 = vmatpush2.msra.mxu0 0.0
      %1564 = vmatprep.subr.mxu0 0.0
      %1565 = vmatpush2.msra.mxu0 0.0
      %1566 = vmatprep.subr.mxu0 0.0
      %1567 = vmatpush2.msra.mxu0 0.0
      %1568 = vmatprep.subr.mxu0 0.0
      %1569 = vmatpush2.msra.mxu0 0.0
      %1570 = vmatprep.subr.mxu0 0.0
      %1571 = vmatpush2.msra.mxu0 0.0
      %1572 = vmatprep.subr.mxu0 0.0
      %1573 = vmatpush2.msra.mxu0 0.0
      %1574 = vmatprep.subr.mxu0 0.0
      %1575 = vmatpush2.msra.mxu0 0.0
      %1576 = vmatprep.subr.mxu0 0.0
      %1577 = vmatpush2.msra.mxu0 0.0
      %1578 = vmatprep.subr.mxu0 0.0
      %1579 = vmatpush2.msra.mxu0 0.0
      %1580 = vmatprep.mubr.f32.mxu0 0.0
      %1581 = vmatmul.mubr.f32.gmra.mxu0 %v1057
      %v1582 = vpop.f32.mrf.mxu0
      %v1583 = vadd.f32 %v1230, %v1582
      %v1584 = vpop.f32.mrf.mxu0
      %v1585 = vadd.f32 %v1234, %v1584
      %1586 = vmatprep.mubr.f32.mxu0 0.0
      %1587 = vmatmul.mubr.f32.gmra.mxu0 %v1058
      %v1588 = vpop.f32.mrf.mxu0
      %v1589 = vadd.f32 %v1230, %v1588
      %v1590 = vpop.f32.mrf.mxu0
      %v1591 = vadd.f32 %v1234, %v1590
      %1592 = vmatprep.mubr.f32.mxu0 0.0
      %1593 = vmatmul.mubr.f32.gmra.mxu0 %v1059
      %v1594 = vpop.f32.mrf.mxu0
      %v1595 = vadd.f32 %v1230, %v1594
      %v1596 = vpop.f32.mrf.mxu0
      %v1597 = vadd.f32 %v1234, %v1596
      %1598 = vmatprep.mubr.f32.mxu0 0.0
      %1599 = vmatmul.mubr.f32.gmra.mxu0 %v1060
      %v1600 = vpop.f32.mrf.mxu0
      %v1601 = vadd.f32 %v1230, %v1600
      %v1602 = vpop.f32.mrf.mxu0
      %v1603 = vadd.f32 %v1234, %v1602
      %1604 = vmatprep.mubr.f32.mxu0 0.0
      %1605 = vmatmul.mubr.f32.gmra.mxu0 %v1061
      %v1606 = vpop.f32.mrf.mxu0
      %v1607 = vadd.f32 %v1230, %v1606
      %v1608 = vpop.f32.mrf.mxu0
      %v1609 = vadd.f32 %v1234, %v1608
      %1610 = vmatprep.mubr.f32.mxu0 0.0
      %1611 = vmatmul.mubr.f32.gmra.mxu0 %v1062
      %v1612 = vpop.f32.mrf.mxu0
      %v1613 = vadd.f32 %v1230, %v1612
      %v1614 = vpop.f32.mrf.mxu0
      %v1615 = vadd.f32 %v1234, %v1614
      %1616 = vmatprep.mubr.f32.mxu0 0.0
      %1617 = vmatmul.mubr.f32.gmra.mxu0 %v1063
      %v1618 = vpop.f32.mrf.mxu0
      %v1619 = vadd.f32 %v1230, %v1618
      %v1620 = vpop.f32.mrf.mxu0
      %v1621 = vadd.f32 %v1234, %v1620
      %1622 = vmatprep.mubr.f32.mxu0 0.0
      %1623 = vmatmul.mubr.f32.gmra.mxu0 %v1064
      %v1624 = vpop.f32.mrf.mxu0
      %v1625 = vadd.f32 %v1230, %v1624
      %v1626 = vpop.f32.mrf.mxu0
      %v1627 = vadd.f32 %v1234, %v1626
      %1628 = vmatprep.mubr.f32.mxu0 0.0
      %1629 = vmatmul.mubr.f32.gmra.mxu0 %v1065
      %v1630 = vpop.f32.mrf.mxu0
      %v1631 = vadd.f32 %v1230, %v1630
      %v1632 = vpop.f32.mrf.mxu0
      %v1633 = vadd.f32 %v1234, %v1632
      %1634 = vmatprep.mubr.f32.mxu0 0.0
      %1635 = vmatmul.mubr.f32.gmra.mxu0 %v1066
      %v1636 = vpop.f32.mrf.mxu0
      %v1637 = vadd.f32 %v1230, %v1636
      %v1638 = vpop.f32.mrf.mxu0
      %v1639 = vadd.f32 %v1234, %v1638
      %1640 = vmatprep.mubr.f32.mxu0 0.0
      %1641 = vmatmul.mubr.f32.gmra.mxu0 %v1067
      %v1642 = vpop.f32.mrf.mxu0
      %v1643 = vadd.f32 %v1230, %v1642
      %v1644 = vpop.f32.mrf.mxu0
      %v1645 = vadd.f32 %v1234, %v1644
      %1646 = vmatprep.mubr.f32.mxu0 0.0
      %1647 = vmatmul.mubr.f32.gmra.mxu0 %v1068
      %v1648 = vpop.f32.mrf.mxu0
      %v1649 = vadd.f32 %v1230, %v1648
      %v1650 = vpop.f32.mrf.mxu0
      %v1651 = vadd.f32 %v1234, %v1650
      %1652 = vmatprep.mubr.f32.mxu0 0.0
      %1653 = vmatmul.mubr.f32.gmra.mxu0 %v1069
      %v1654 = vpop.f32.mrf.mxu0
      %v1655 = vadd.f32 %v1230, %v1654
      %v1656 = vpop.f32.mrf.mxu0
      %v1657 = vadd.f32 %v1234, %v1656
      %1658 = vmatprep.mubr.f32.mxu0 0.0
      %1659 = vmatmul.mubr.f32.gmra.mxu0 %v1070
      %v1660 = vpop.f32.mrf.mxu0
      %v1661 = vadd.f32 %v1230, %v1660
      %v1662 = vpop.f32.mrf.mxu0
      %v1663 = vadd.f32 %v1234, %v1662
      %1664 = vmatprep.mubr.f32.mxu0 0.0
      %1665 = vmatmul.mubr.f32.gmra.mxu0 %v1071
      %v1666 = vpop.f32.mrf.mxu0
      %v1667 = vadd.f32 %v1230, %v1666
      %v1668 = vpop.f32.mrf.mxu0
      %v1669 = vadd.f32 %v1234, %v1668
      %1670 = vmatprep.mubr.f32.mxu0 0.0
      %1671 = vmatmul.mubr.f32.gmra.mxu0 %v1072
      %v1672 = vpop.f32.mrf.mxu0
      %v1673 = vadd.f32 %v1230, %v1672
      %v1674 = vpop.f32.mrf.mxu0
      %v1675 = vadd.f32 %v1234, %v1674
      %1676 = vmatprep.mubr.f32.mxu0 0.0
      %1677 = vmatmul.mubr.f32.gmra.mxu0 %v1073
      %v1678 = vpop.f32.mrf.mxu0
      %v1679 = vadd.f32 %v1230, %v1678
      %v1680 = vpop.f32.mrf.mxu0
      %v1681 = vadd.f32 %v1234, %v1680
      %1682 = vmatprep.mubr.f32.mxu0 0.0
      %1683 = vmatmul.mubr.f32.gmra.mxu0 %v1074
      %v1684 = vpop.f32.mrf.mxu0
      %v1685 = vadd.f32 %v1230, %v1684
      %v1686 = vpop.f32.mrf.mxu0
      %v1687 = vadd.f32 %v1234, %v1686
      %1688 = vmatprep.mubr.f32.mxu0 0.0
      %1689 = vmatmul.mubr.f32.gmra.mxu0 %v1075
      %v1690 = vpop.f32.mrf.mxu0
      %v1691 = vadd.f32 %v1230, %v1690
      %v1692 = vpop.f32.mrf.mxu0
      %v1693 = vadd.f32 %v1234, %v1692
      %1694 = vmatprep.mubr.f32.mxu0 0.0
      %1695 = vmatmul.mubr.f32.gmra.mxu0 %v1076
      %v1696 = vpop.f32.mrf.mxu0
      %v1697 = vadd.f32 %v1230, %v1696
      %v1698 = vpop.f32.mrf.mxu0
      %v1699 = vadd.f32 %v1234, %v1698
      %1700 = vmatprep.mubr.f32.mxu0 0.0
      %1701 = vmatmul.mubr.f32.gmra.mxu0 %v1077
      %v1702 = vpop.f32.mrf.mxu0
      %v1703 = vadd.f32 %v1230, %v1702
      %v1704 = vpop.f32.mrf.mxu0
      %v1705 = vadd.f32 %v1234, %v1704
      %1706 = vmatprep.mubr.f32.mxu0 0.0
      %1707 = vmatmul.mubr.f32.gmra.mxu0 %v1078
      %v1708 = vpop.f32.mrf.mxu0
      %v1709 = vadd.f32 %v1230, %v1708
      %v1710 = vpop.f32.mrf.mxu0
      %v1711 = vadd.f32 %v1234, %v1710
      %1712 = vmatprep.mubr.f32.mxu0 0.0
      %1713 = vmatmul.mubr.f32.gmra.mxu0 %v1079
      %v1714 = vpop.f32.mrf.mxu0
      %v1715 = vadd.f32 %v1230, %v1714
      %v1716 = vpop.f32.mrf.mxu0
      %v1717 = vadd.f32 %v1234, %v1716
      %1718 = vmatprep.mubr.f32.mxu0 0.0
      %1719 = vmatmul.mubr.f32.gmra.mxu0 %v1080
      %v1720 = vpop.f32.mrf.mxu0
      %v1721 = vadd.f32 %v1230, %v1720
      %v1722 = vpop.f32.mrf.mxu0
      %v1723 = vadd.f32 %v1234, %v1722
      %1724 = vmatprep.mubr.f32.mxu0 0.0
      %1725 = vmatmul.mubr.f32.gmra.mxu0 %v1081
      %v1726 = vpop.f32.mrf.mxu0
      %v1727 = vadd.f32 %v1230, %v1726
      %v1728 = vpop.f32.mrf.mxu0
      %v1729 = vadd.f32 %v1234, %v1728
      %1730 = vmatprep.mubr.f32.mxu0 0.0
      %1731 = vmatmul.mubr.f32.gmra.mxu0 %v1082
      %v1732 = vpop.f32.mrf.mxu0
      %v1733 = vadd.f32 %v1230, %v1732
      %v1734 = vpop.f32.mrf.mxu0
      %v1735 = vadd.f32 %v1234, %v1734
      %1736 = vmatprep.mubr.f32.mxu0 0.0
      %1737 = vmatmul.mubr.f32.gmra.mxu0 %v1083
      %v1738 = vpop.f32.mrf.mxu0
      %v1739 = vadd.f32 %v1230, %v1738
      %v1740 = vpop.f32.mrf.mxu0
      %v1741 = vadd.f32 %v1234, %v1740
      %1742 = vmatprep.mubr.f32.mxu0 0.0
      %1743 = vmatmul.mubr.f32.gmra.mxu0 %v1084
      %v1744 = vpop.f32.mrf.mxu0
      %v1745 = vadd.f32 %v1230, %v1744
      %v1746 = vpop.f32.mrf.mxu0
      %v1747 = vadd.f32 %v1234, %v1746
      %1748 = vmatprep.mubr.f32.mxu0 0.0
      %1749 = vmatmul.mubr.f32.gmra.mxu0 %v1085
      %v1750 = vpop.f32.mrf.mxu0
      %v1751 = vadd.f32 %v1230, %v1750
      %v1752 = vpop.f32.mrf.mxu0
      %v1753 = vadd.f32 %v1234, %v1752
      %1754 = vmatprep.mubr.f32.mxu0 0.0
      %1755 = vmatmul.mubr.f32.gmra.mxu0 %v1086
      %v1756 = vpop.f32.mrf.mxu0
      %v1757 = vadd.f32 %v1230, %v1756
      %v1758 = vpop.f32.mrf.mxu0
      %v1759 = vadd.f32 %v1234, %v1758
      %1760 = vmatprep.mubr.f32.mxu0 0.0
      %1761 = vmatmul.mubr.f32.gmra.mxu0 %v1087
      %v1762 = vpop.f32.mrf.mxu0
      %v1763 = vadd.f32 %v1230, %v1762
      %v1764 = vpop.f32.mrf.mxu0
      %v1765 = vadd.f32 %v1234, %v1764
      %1766 = vmatprep.mubr.f32.mxu0 0.0
      %1767 = vmatmul.mubr.f32.gmra.mxu0 %v1088
      %v1768 = vpop.f32.mrf.mxu0
      %v1769 = vadd.f32 %v1230, %v1768
      %v1770 = vpop.f32.mrf.mxu0
      %v1771 = vadd.f32 %v1234, %v1770
      %1772 = vdwg.mxu0
      %1773 = vmatprep.subr.mxu0 %v1214
      %1774 = vmatpush1.msra.mxu0 %v1213
      %1775 = vmatprep.subr.mxu0 %v1206
      %1776 = vmatpush1.msra.mxu0 %v1205
      %1777 = vmatprep.subr.mxu0 %v1198
      %1778 = vmatpush1.msra.mxu0 %v1197
      %1779 = vmatprep.subr.mxu0 %v1190
      %1780 = vmatpush1.msra.mxu0 %v1189
      %1781 = vmatprep.subr.mxu0 %v1182
      %1782 = vmatpush1.msra.mxu0 %v1181
      %1783 = vmatprep.subr.mxu0 %v1174
      %1784 = vmatpush1.msra.mxu0 %v1173
      %1785 = vmatprep.subr.mxu0 %v1166
      %1786 = vmatpush1.msra.mxu0 %v1165
      %1787 = vmatprep.subr.mxu0 %v1158
      %1788 = vmatpush1.msra.mxu0 %v1157
      %1789 = vmatprep.subr.mxu0 %v1150
      %1790 = vmatpush1.msra.mxu0 %v1149
      %1791 = vmatprep.subr.mxu0 %v1142
      %1792 = vmatpush1.msra.mxu0 %v1141
      %1793 = vmatprep.subr.mxu0 %v1134
      %1794 = vmatpush1.msra.mxu0 %v1133
      %1795 = vmatprep.subr.mxu0 %v1126
      %1796 = vmatpush1.msra.mxu0 %v1125
      %1797 = vmatprep.subr.mxu0 %v1118
      %1798 = vmatpush1.msra.mxu0 %v1117
      %1799 = vmatprep.subr.mxu0 %v1110
      %1800 = vmatpush1.msra.mxu0 %v1109
      %1801 = vmatprep.subr.mxu0 %v1102
      %1802 = vmatpush1.msra.mxu0 %v1101
      %1803 = vmatprep.subr.mxu0 %v1094
      %1804 = vmatpush1.msra.mxu0 %v1093
      %1805 = vmatprep.subr.mxu0 0.0
      %1806 = vmatpush2.msra.mxu0 0.0
      %1807 = vmatprep.subr.mxu0 0.0
      %1808 = vmatpush2.msra.mxu0 0.0
      %1809 = vmatprep.subr.mxu0 0.0
      %1810 = vmatpush2.msra.mxu0 0.0
      %1811 = vmatprep.subr.mxu0 0.0
      %1812 = vmatpush2.msra.mxu0 0.0
      %1813 = vmatprep.subr.mxu0 0.0
      %1814 = vmatpush2.msra.mxu0 0.0
      %1815 = vmatprep.subr.mxu0 0.0
      %1816 = vmatpush2.msra.mxu0 0.0
      %1817 = vmatprep.subr.mxu0 0.0
      %1818 = vmatpush2.msra.mxu0 0.0
      %1819 = vmatprep.subr.mxu0 0.0
      %1820 = vmatpush2.msra.mxu0 0.0
      %1821 = vmatprep.subr.mxu0 0.0
      %1822 = vmatpush2.msra.mxu0 0.0
      %1823 = vmatprep.subr.mxu0 0.0
      %1824 = vmatpush2.msra.mxu0 0.0
      %1825 = vmatprep.subr.mxu0 0.0
      %1826 = vmatpush2.msra.mxu0 0.0
      %1827 = vmatprep.subr.mxu0 0.0
      %1828 = vmatpush2.msra.mxu0 0.0
      %1829 = vmatprep.subr.mxu0 0.0
      %1830 = vmatpush2.msra.mxu0 0.0
      %1831 = vmatprep.subr.mxu0 0.0
      %1832 = vmatpush2.msra.mxu0 0.0
      %1833 = vmatprep.subr.mxu0 0.0
      %1834 = vmatpush2.msra.mxu0 0.0
      %1835 = vmatprep.subr.mxu0 0.0
      %1836 = vmatpush2.msra.mxu0 0.0
      %1837 = vmatprep.mubr.f32.mxu0 0.0
      %1838 = vmatmul.mubr.f32.gmra.mxu0 %v1057
      %v1839 = vpop.f32.mrf.mxu0
      %v1840 = vadd.f32 %v1238, %v1839
      %v1841 = vpop.f32.mrf.mxu0
      %v1842 = vadd.f32 %v1242, %v1841
      %1843 = vmatprep.mubr.f32.mxu0 0.0
      %1844 = vmatmul.mubr.f32.gmra.mxu0 %v1058
      %v1845 = vpop.f32.mrf.mxu0
      %v1846 = vadd.f32 %v1238, %v1845
      %v1847 = vpop.f32.mrf.mxu0
      %v1848 = vadd.f32 %v1242, %v1847
      %1849 = vmatprep.mubr.f32.mxu0 0.0
      %1850 = vmatmul.mubr.f32.gmra.mxu0 %v1059
      %v1851 = vpop.f32.mrf.mxu0
      %v1852 = vadd.f32 %v1238, %v1851
      %v1853 = vpop.f32.mrf.mxu0
      %v1854 = vadd.f32 %v1242, %v1853
      %1855 = vmatprep.mubr.f32.mxu0 0.0
      %1856 = vmatmul.mubr.f32.gmra.mxu0 %v1060
      %v1857 = vpop.f32.mrf.mxu0
      %v1858 = vadd.f32 %v1238, %v1857
      %v1859 = vpop.f32.mrf.mxu0
      %v1860 = vadd.f32 %v1242, %v1859
      %1861 = vmatprep.mubr.f32.mxu0 0.0
      %1862 = vmatmul.mubr.f32.gmra.mxu0 %v1061
      %v1863 = vpop.f32.mrf.mxu0
      %v1864 = vadd.f32 %v1238, %v1863
      %v1865 = vpop.f32.mrf.mxu0
      %v1866 = vadd.f32 %v1242, %v1865
      %1867 = vmatprep.mubr.f32.mxu0 0.0
      %1868 = vmatmul.mubr.f32.gmra.mxu0 %v1062
      %v1869 = vpop.f32.mrf.mxu0
      %v1870 = vadd.f32 %v1238, %v1869
      %v1871 = vpop.f32.mrf.mxu0
      %v1872 = vadd.f32 %v1242, %v1871
      %1873 = vmatprep.mubr.f32.mxu0 0.0
      %1874 = vmatmul.mubr.f32.gmra.mxu0 %v1063
      %v1875 = vpop.f32.mrf.mxu0
      %v1876 = vadd.f32 %v1238, %v1875
      %v1877 = vpop.f32.mrf.mxu0
      %v1878 = vadd.f32 %v1242, %v1877
      %1879 = vmatprep.mubr.f32.mxu0 0.0
      %1880 = vmatmul.mubr.f32.gmra.mxu0 %v1064
      %v1881 = vpop.f32.mrf.mxu0
      %v1882 = vadd.f32 %v1238, %v1881
      %v1883 = vpop.f32.mrf.mxu0
      %v1884 = vadd.f32 %v1242, %v1883
      %1885 = vmatprep.mubr.f32.mxu0 0.0
      %1886 = vmatmul.mubr.f32.gmra.mxu0 %v1065
      %v1887 = vpop.f32.mrf.mxu0
      %v1888 = vadd.f32 %v1238, %v1887
      %v1889 = vpop.f32.mrf.mxu0
      %v1890 = vadd.f32 %v1242, %v1889
      %1891 = vmatprep.mubr.f32.mxu0 0.0
      %1892 = vmatmul.mubr.f32.gmra.mxu0 %v1066
      %v1893 = vpop.f32.mrf.mxu0
      %v1894 = vadd.f32 %v1238, %v1893
      %v1895 = vpop.f32.mrf.mxu0
      %v1896 = vadd.f32 %v1242, %v1895
      %1897 = vmatprep.mubr.f32.mxu0 0.0
      %1898 = vmatmul.mubr.f32.gmra.mxu0 %v1067
      %v1899 = vpop.f32.mrf.mxu0
      %v1900 = vadd.f32 %v1238, %v1899
      %v1901 = vpop.f32.mrf.mxu0
      %v1902 = vadd.f32 %v1242, %v1901
      %1903 = vmatprep.mubr.f32.mxu0 0.0
      %1904 = vmatmul.mubr.f32.gmra.mxu0 %v1068
      %v1905 = vpop.f32.mrf.mxu0
      %v1906 = vadd.f32 %v1238, %v1905
      %v1907 = vpop.f32.mrf.mxu0
      %v1908 = vadd.f32 %v1242, %v1907
      %1909 = vmatprep.mubr.f32.mxu0 0.0
      %1910 = vmatmul.mubr.f32.gmra.mxu0 %v1069
      %v1911 = vpop.f32.mrf.mxu0
      %v1912 = vadd.f32 %v1238, %v1911
      %v1913 = vpop.f32.mrf.mxu0
      %v1914 = vadd.f32 %v1242, %v1913
      %1915 = vmatprep.mubr.f32.mxu0 0.0
      %1916 = vmatmul.mubr.f32.gmra.mxu0 %v1070
      %v1917 = vpop.f32.mrf.mxu0
      %v1918 = vadd.f32 %v1238, %v1917
      %v1919 = vpop.f32.mrf.mxu0
      %v1920 = vadd.f32 %v1242, %v1919
      %1921 = vmatprep.mubr.f32.mxu0 0.0
      %1922 = vmatmul.mubr.f32.gmra.mxu0 %v1071
      %v1923 = vpop.f32.mrf.mxu0
      %v1924 = vadd.f32 %v1238, %v1923
      %v1925 = vpop.f32.mrf.mxu0
      %v1926 = vadd.f32 %v1242, %v1925
      %1927 = vmatprep.mubr.f32.mxu0 0.0
      %1928 = vmatmul.mubr.f32.gmra.mxu0 %v1072
      %v1929 = vpop.f32.mrf.mxu0
      %v1930 = vadd.f32 %v1238, %v1929
      %v1931 = vpop.f32.mrf.mxu0
      %v1932 = vadd.f32 %v1242, %v1931
      %1933 = vmatprep.mubr.f32.mxu0 0.0
      %1934 = vmatmul.mubr.f32.gmra.mxu0 %v1073
      %v1935 = vpop.f32.mrf.mxu0
      %v1936 = vadd.f32 %v1238, %v1935
      %v1937 = vpop.f32.mrf.mxu0
      %v1938 = vadd.f32 %v1242, %v1937
      %1939 = vmatprep.mubr.f32.mxu0 0.0
      %1940 = vmatmul.mubr.f32.gmra.mxu0 %v1074
      %v1941 = vpop.f32.mrf.mxu0
      %v1942 = vadd.f32 %v1238, %v1941
      %v1943 = vpop.f32.mrf.mxu0
      %v1944 = vadd.f32 %v1242, %v1943
      %1945 = vmatprep.mubr.f32.mxu0 0.0
      %1946 = vmatmul.mubr.f32.gmra.mxu0 %v1075
      %v1947 = vpop.f32.mrf.mxu0
      %v1948 = vadd.f32 %v1238, %v1947
      %v1949 = vpop.f32.mrf.mxu0
      %v1950 = vadd.f32 %v1242, %v1949
      %1951 = vmatprep.mubr.f32.mxu0 0.0
      %1952 = vmatmul.mubr.f32.gmra.mxu0 %v1076
      %v1953 = vpop.f32.mrf.mxu0
      %v1954 = vadd.f32 %v1238, %v1953
      %v1955 = vpop.f32.mrf.mxu0
      %v1956 = vadd.f32 %v1242, %v1955
      %1957 = vmatprep.mubr.f32.mxu0 0.0
      %1958 = vmatmul.mubr.f32.gmra.mxu0 %v1077
      %v1959 = vpop.f32.mrf.mxu0
      %v1960 = vadd.f32 %v1238, %v1959
      %v1961 = vpop.f32.mrf.mxu0
      %v1962 = vadd.f32 %v1242, %v1961
      %1963 = vmatprep.mubr.f32.mxu0 0.0
      %1964 = vmatmul.mubr.f32.gmra.mxu0 %v1078
      %v1965 = vpop.f32.mrf.mxu0
      %v1966 = vadd.f32 %v1238, %v1965
      %v1967 = vpop.f32.mrf.mxu0
      %v1968 = vadd.f32 %v1242, %v1967
      %1969 = vmatprep.mubr.f32.mxu0 0.0
      %1970 = vmatmul.mubr.f32.gmra.mxu0 %v1079
      %v1971 = vpop.f32.mrf.mxu0
      %v1972 = vadd.f32 %v1238, %v1971
      %v1973 = vpop.f32.mrf.mxu0
      %v1974 = vadd.f32 %v1242, %v1973
      %1975 = vmatprep.mubr.f32.mxu0 0.0
      %1976 = vmatmul.mubr.f32.gmra.mxu0 %v1080
      %v1977 = vpop.f32.mrf.mxu0
      %v1978 = vadd.f32 %v1238, %v1977
      %v1979 = vpop.f32.mrf.mxu0
      %v1980 = vadd.f32 %v1242, %v1979
      %1981 = vmatprep.mubr.f32.mxu0 0.0
      %1982 = vmatmul.mubr.f32.gmra.mxu0 %v1081
      %v1983 = vpop.f32.mrf.mxu0
      %v1984 = vadd.f32 %v1238, %v1983
      %v1985 = vpop.f32.mrf.mxu0
      %v1986 = vadd.f32 %v1242, %v1985
      %1987 = vmatprep.mubr.f32.mxu0 0.0
      %1988 = vmatmul.mubr.f32.gmra.mxu0 %v1082
      %v1989 = vpop.f32.mrf.mxu0
      %v1990 = vadd.f32 %v1238, %v1989
      %v1991 = vpop.f32.mrf.mxu0
      %v1992 = vadd.f32 %v1242, %v1991
      %1993 = vmatprep.mubr.f32.mxu0 0.0
      %1994 = vmatmul.mubr.f32.gmra.mxu0 %v1083
      %v1995 = vpop.f32.mrf.mxu0
      %v1996 = vadd.f32 %v1238, %v1995
      %v1997 = vpop.f32.mrf.mxu0
      %v1998 = vadd.f32 %v1242, %v1997
      %1999 = vmatprep.mubr.f32.mxu0 0.0
      %2000 = vmatmul.mubr.f32.gmra.mxu0 %v1084
      %v2001 = vpop.f32.mrf.mxu0
      %v2002 = vadd.f32 %v1238, %v2001
      %v2003 = vpop.f32.mrf.mxu0
      %v2004 = vadd.f32 %v1242, %v2003
      %2005 = vmatprep.mubr.f32.mxu0 0.0
      %2006 = vmatmul.mubr.f32.gmra.mxu0 %v1085
      %v2007 = vpop.f32.mrf.mxu0
      %v2008 = vadd.f32 %v1238, %v2007
      %v2009 = vpop.f32.mrf.mxu0
      %v2010 = vadd.f32 %v1242, %v2009
      %2011 = vmatprep.mubr.f32.mxu0 0.0
      %2012 = vmatmul.mubr.f32.gmra.mxu0 %v1086
      %v2013 = vpop.f32.mrf.mxu0
      %v2014 = vadd.f32 %v1238, %v2013
      %v2015 = vpop.f32.mrf.mxu0
      %v2016 = vadd.f32 %v1242, %v2015
      %2017 = vmatprep.mubr.f32.mxu0 0.0
      %2018 = vmatmul.mubr.f32.gmra.mxu0 %v1087
      %v2019 = vpop.f32.mrf.mxu0
      %v2020 = vadd.f32 %v1238, %v2019
      %v2021 = vpop.f32.mrf.mxu0
      %v2022 = vadd.f32 %v1242, %v2021
      %2023 = vmatprep.mubr.f32.mxu0 0.0
      %2024 = vmatmul.mubr.f32.gmra.mxu0 %v1088
      %v2025 = vpop.f32.mrf.mxu0
      %v2026 = vadd.f32 %v1238, %v2025
      %v2027 = vpop.f32.mrf.mxu0
      %v2028 = vadd.f32 %v1242, %v2027
      %2029 = vdwg.mxu0
      %2030 = vmatprep.subr.mxu0 %v1216
      %2031 = vmatpush1.msra.mxu0 %v1215
      %2032 = vmatprep.subr.mxu0 %v1208
      %2033 = vmatpush1.msra.mxu0 %v1207
      %2034 = vmatprep.subr.mxu0 %v1200
      %2035 = vmatpush1.msra.mxu0 %v1199
      %2036 = vmatprep.subr.mxu0 %v1192
      %2037 = vmatpush1.msra.mxu0 %v1191
      %2038 = vmatprep.subr.mxu0 %v1184
      %2039 = vmatpush1.msra.mxu0 %v1183
      %2040 = vmatprep.subr.mxu0 %v1176
      %2041 = vmatpush1.msra.mxu0 %v1175
      %2042 = vmatprep.subr.mxu0 %v1168
      %2043 = vmatpush1.msra.mxu0 %v1167
      %2044 = vmatprep.subr.mxu0 %v1160
      %2045 = vmatpush1.msra.mxu0 %v1159
      %2046 = vmatprep.subr.mxu0 %v1152
      %2047 = vmatpush1.msra.mxu0 %v1151
      %2048 = vmatprep.subr.mxu0 %v1144
      %2049 = vmatpush1.msra.mxu0 %v1143
      %2050 = vmatprep.subr.mxu0 %v1136
      %2051 = vmatpush1.msra.mxu0 %v1135
      %2052 = vmatprep.subr.mxu0 %v1128
      %2053 = vmatpush1.msra.mxu0 %v1127
      %2054 = vmatprep.subr.mxu0 %v1120
      %2055 = vmatpush1.msra.mxu0 %v1119
      %2056 = vmatprep.subr.mxu0 %v1112
      %2057 = vmatpush1.msra.mxu0 %v1111
      %2058 = vmatprep.subr.mxu0 %v1104
      %2059 = vmatpush1.msra.mxu0 %v1103
      %2060 = vmatprep.subr.mxu0 %v1096
      %2061 = vmatpush1.msra.mxu0 %v1095
      %2062 = vmatprep.subr.mxu0 0.0
      %2063 = vmatpush2.msra.mxu0 0.0
      %2064 = vmatprep.subr.mxu0 0.0
      %2065 = vmatpush2.msra.mxu0 0.0
      %2066 = vmatprep.subr.mxu0 0.0
      %2067 = vmatpush2.msra.mxu0 0.0
      %2068 = vmatprep.subr.mxu0 0.0
      %2069 = vmatpush2.msra.mxu0 0.0
      %2070 = vmatprep.subr.mxu0 0.0
      %2071 = vmatpush2.msra.mxu0 0.0
      %2072 = vmatprep.subr.mxu0 0.0
      %2073 = vmatpush2.msra.mxu0 0.0
      %2074 = vmatprep.subr.mxu0 0.0
      %2075 = vmatpush2.msra.mxu0 0.0
      %2076 = vmatprep.subr.mxu0 0.0
      %2077 = vmatpush2.msra.mxu0 0.0
      %2078 = vmatprep.subr.mxu0 0.0
      %2079 = vmatpush2.msra.mxu0 0.0
      %2080 = vmatprep.subr.mxu0 0.0
      %2081 = vmatpush2.msra.mxu0 0.0
      %2082 = vmatprep.subr.mxu0 0.0
      %2083 = vmatpush2.msra.mxu0 0.0
      %2084 = vmatprep.subr.mxu0 0.0
      %2085 = vmatpush2.msra.mxu0 0.0
      %2086 = vmatprep.subr.mxu0 0.0
      %2087 = vmatpush2.msra.mxu0 0.0
      %2088 = vmatprep.subr.mxu0 0.0
      %2089 = vmatpush2.msra.mxu0 0.0
      %2090 = vmatprep.subr.mxu0 0.0
      %2091 = vmatpush2.msra.mxu0 0.0
      %2092 = vmatprep.subr.mxu0 0.0
      %2093 = vmatpush2.msra.mxu0 0.0
      %2094 = vmatprep.mubr.f32.mxu0 0.0
      %2095 = vmatmul.mubr.f32.gmra.mxu0 %v1057
      %v2096 = vpop.f32.mrf.mxu0
      %v2097 = vadd.f32 %v1246, %v2096
      %v2098 = vpop.f32.mrf.mxu0
      %v2099 = vadd.f32 %v1250, %v2098
      %2100 = vmatprep.mubr.f32.mxu0 0.0
      %2101 = vmatmul.mubr.f32.gmra.mxu0 %v1058
      %v2102 = vpop.f32.mrf.mxu0
      %v2103 = vadd.f32 %v1246, %v2102
      %v2104 = vpop.f32.mrf.mxu0
      %v2105 = vadd.f32 %v1250, %v2104
      %2106 = vmatprep.mubr.f32.mxu0 0.0
      %2107 = vmatmul.mubr.f32.gmra.mxu0 %v1059
      %v2108 = vpop.f32.mrf.mxu0
      %v2109 = vadd.f32 %v1246, %v2108
      %v2110 = vpop.f32.mrf.mxu0
      %v2111 = vadd.f32 %v1250, %v2110
      %2112 = vmatprep.mubr.f32.mxu0 0.0
      %2113 = vmatmul.mubr.f32.gmra.mxu0 %v1060
      %v2114 = vpop.f32.mrf.mxu0
      %v2115 = vadd.f32 %v1246, %v2114
      %v2116 = vpop.f32.mrf.mxu0
      %v2117 = vadd.f32 %v1250, %v2116
      %2118 = vmatprep.mubr.f32.mxu0 0.0
      %2119 = vmatmul.mubr.f32.gmra.mxu0 %v1061
      %v2120 = vpop.f32.mrf.mxu0
      %v2121 = vadd.f32 %v1246, %v2120
      %v2122 = vpop.f32.mrf.mxu0
      %v2123 = vadd.f32 %v1250, %v2122
      %2124 = vmatprep.mubr.f32.mxu0 0.0
      %2125 = vmatmul.mubr.f32.gmra.mxu0 %v1062
      %v2126 = vpop.f32.mrf.mxu0
      %v2127 = vadd.f32 %v1246, %v2126
      %v2128 = vpop.f32.mrf.mxu0
      %v2129 = vadd.f32 %v1250, %v2128
      %2130 = vmatprep.mubr.f32.mxu0 0.0
      %2131 = vmatmul.mubr.f32.gmra.mxu0 %v1063
      %v2132 = vpop.f32.mrf.mxu0
      %v2133 = vadd.f32 %v1246, %v2132
      %v2134 = vpop.f32.mrf.mxu0
      %v2135 = vadd.f32 %v1250, %v2134
      %2136 = vmatprep.mubr.f32.mxu0 0.0
      %2137 = vmatmul.mubr.f32.gmra.mxu0 %v1064
      %v2138 = vpop.f32.mrf.mxu0
      %v2139 = vadd.f32 %v1246, %v2138
      %v2140 = vpop.f32.mrf.mxu0
      %v2141 = vadd.f32 %v1250, %v2140
      %2142 = vmatprep.mubr.f32.mxu0 0.0
      %2143 = vmatmul.mubr.f32.gmra.mxu0 %v1065
      %v2144 = vpop.f32.mrf.mxu0
      %v2145 = vadd.f32 %v1246, %v2144
      %v2146 = vpop.f32.mrf.mxu0
      %v2147 = vadd.f32 %v1250, %v2146
      %2148 = vmatprep.mubr.f32.mxu0 0.0
      %2149 = vmatmul.mubr.f32.gmra.mxu0 %v1066
      %v2150 = vpop.f32.mrf.mxu0
      %v2151 = vadd.f32 %v1246, %v2150
      %v2152 = vpop.f32.mrf.mxu0
      %v2153 = vadd.f32 %v1250, %v2152
      %2154 = vmatprep.mubr.f32.mxu0 0.0
      %2155 = vmatmul.mubr.f32.gmra.mxu0 %v1067
      %v2156 = vpop.f32.mrf.mxu0
      %v2157 = vadd.f32 %v1246, %v2156
      %v2158 = vpop.f32.mrf.mxu0
      %v2159 = vadd.f32 %v1250, %v2158
      %2160 = vmatprep.mubr.f32.mxu0 0.0
      %2161 = vmatmul.mubr.f32.gmra.mxu0 %v1068
      %v2162 = vpop.f32.mrf.mxu0
      %v2163 = vadd.f32 %v1246, %v2162
      %v2164 = vpop.f32.mrf.mxu0
      %v2165 = vadd.f32 %v1250, %v2164
      %2166 = vmatprep.mubr.f32.mxu0 0.0
      %2167 = vmatmul.mubr.f32.gmra.mxu0 %v1069
      %v2168 = vpop.f32.mrf.mxu0
      %v2169 = vadd.f32 %v1246, %v2168
      %v2170 = vpop.f32.mrf.mxu0
      %v2171 = vadd.f32 %v1250, %v2170
      %2172 = vmatprep.mubr.f32.mxu0 0.0
      %2173 = vmatmul.mubr.f32.gmra.mxu0 %v1070
      %v2174 = vpop.f32.mrf.mxu0
      %v2175 = vadd.f32 %v1246, %v2174
      %v2176 = vpop.f32.mrf.mxu0
      %v2177 = vadd.f32 %v1250, %v2176
      %2178 = vmatprep.mubr.f32.mxu0 0.0
      %2179 = vmatmul.mubr.f32.gmra.mxu0 %v1071
      %v2180 = vpop.f32.mrf.mxu0
      %v2181 = vadd.f32 %v1246, %v2180
      %v2182 = vpop.f32.mrf.mxu0
      %v2183 = vadd.f32 %v1250, %v2182
      %2184 = vmatprep.mubr.f32.mxu0 0.0
      %2185 = vmatmul.mubr.f32.gmra.mxu0 %v1072
      %v2186 = vpop.f32.mrf.mxu0
      %v2187 = vadd.f32 %v1246, %v2186
      %v2188 = vpop.f32.mrf.mxu0
      %v2189 = vadd.f32 %v1250, %v2188
      %2190 = vmatprep.mubr.f32.mxu0 0.0
      %2191 = vmatmul.mubr.f32.gmra.mxu0 %v1073
      %v2192 = vpop.f32.mrf.mxu0
      %v2193 = vadd.f32 %v1246, %v2192
      %v2194 = vpop.f32.mrf.mxu0
      %v2195 = vadd.f32 %v1250, %v2194
      %2196 = vmatprep.mubr.f32.mxu0 0.0
      %2197 = vmatmul.mubr.f32.gmra.mxu0 %v1074
      %v2198 = vpop.f32.mrf.mxu0
      %v2199 = vadd.f32 %v1246, %v2198
      %v2200 = vpop.f32.mrf.mxu0
      %v2201 = vadd.f32 %v1250, %v2200
      %2202 = vmatprep.mubr.f32.mxu0 0.0
      %2203 = vmatmul.mubr.f32.gmra.mxu0 %v1075
      %v2204 = vpop.f32.mrf.mxu0
      %v2205 = vadd.f32 %v1246, %v2204
      %v2206 = vpop.f32.mrf.mxu0
      %v2207 = vadd.f32 %v1250, %v2206
      %2208 = vmatprep.mubr.f32.mxu0 0.0
      %2209 = vmatmul.mubr.f32.gmra.mxu0 %v1076
      %v2210 = vpop.f32.mrf.mxu0
      %v2211 = vadd.f32 %v1246, %v2210
      %v2212 = vpop.f32.mrf.mxu0
      %v2213 = vadd.f32 %v1250, %v2212
      %2214 = vmatprep.mubr.f32.mxu0 0.0
      %2215 = vmatmul.mubr.f32.gmra.mxu0 %v1077
      %v2216 = vpop.f32.mrf.mxu0
      %v2217 = vadd.f32 %v1246, %v2216
      %v2218 = vpop.f32.mrf.mxu0
      %v2219 = vadd.f32 %v1250, %v2218
      %2220 = vmatprep.mubr.f32.mxu0 0.0
      %2221 = vmatmul.mubr.f32.gmra.mxu0 %v1078
      %v2222 = vpop.f32.mrf.mxu0
      %v2223 = vadd.f32 %v1246, %v2222
      %v2224 = vpop.f32.mrf.mxu0
      %v2225 = vadd.f32 %v1250, %v2224
      %2226 = vmatprep.mubr.f32.mxu0 0.0
      %2227 = vmatmul.mubr.f32.gmra.mxu0 %v1079
      %v2228 = vpop.f32.mrf.mxu0
      %v2229 = vadd.f32 %v1246, %v2228
      %v2230 = vpop.f32.mrf.mxu0
      %v2231 = vadd.f32 %v1250, %v2230
      %2232 = vmatprep.mubr.f32.mxu0 0.0
      %2233 = vmatmul.mubr.f32.gmra.mxu0 %v1080
      %v2234 = vpop.f32.mrf.mxu0
      %v2235 = vadd.f32 %v1246, %v2234
      %v2236 = vpop.f32.mrf.mxu0
      %v2237 = vadd.f32 %v1250, %v2236
      %2238 = vmatprep.mubr.f32.mxu0 0.0
      %2239 = vmatmul.mubr.f32.gmra.mxu0 %v1081
      %v2240 = vpop.f32.mrf.mxu0
      %v2241 = vadd.f32 %v1246, %v2240
      %v2242 = vpop.f32.mrf.mxu0
      %v2243 = vadd.f32 %v1250, %v2242
      %2244 = vmatprep.mubr.f32.mxu0 0.0
      %2245 = vmatmul.mubr.f32.gmra.mxu0 %v1082
      %v2246 = vpop.f32.mrf.mxu0
      %v2247 = vadd.f32 %v1246, %v2246
      %v2248 = vpop.f32.mrf.mxu0
      %v2249 = vadd.f32 %v1250, %v2248
      %2250 = vmatprep.mubr.f32.mxu0 0.0
      %2251 = vmatmul.mubr.f32.gmra.mxu0 %v1083
      %v2252 = vpop.f32.mrf.mxu0
      %v2253 = vadd.f32 %v1246, %v2252
      %v2254 = vpop.f32.mrf.mxu0
      %v2255 = vadd.f32 %v1250, %v2254
      %2256 = vmatprep.mubr.f32.mxu0 0.0
      %2257 = vmatmul.mubr.f32.gmra.mxu0 %v1084
      %v2258 = vpop.f32.mrf.mxu0
      %v2259 = vadd.f32 %v1246, %v2258
      %v2260 = vpop.f32.mrf.mxu0
      %v2261 = vadd.f32 %v1250, %v2260
      %2262 = vmatprep.mubr.f32.mxu0 0.0
      %2263 = vmatmul.mubr.f32.gmra.mxu0 %v1085
      %v2264 = vpop.f32.mrf.mxu0
      %v2265 = vadd.f32 %v1246, %v2264
      %v2266 = vpop.f32.mrf.mxu0
      %v2267 = vadd.f32 %v1250, %v2266
      %2268 = vmatprep.mubr.f32.mxu0 0.0
      %2269 = vmatmul.mubr.f32.gmra.mxu0 %v1086
      %v2270 = vpop.f32.mrf.mxu0
      %v2271 = vadd.f32 %v1246, %v2270
      %v2272 = vpop.f32.mrf.mxu0
      %v2273 = vadd.f32 %v1250, %v2272
      %2274 = vmatprep.mubr.f32.mxu0 0.0
      %2275 = vmatmul.mubr.f32.gmra.mxu0 %v1087
      %v2276 = vpop.f32.mrf.mxu0
      %v2277 = vadd.f32 %v1246, %v2276
      %v2278 = vpop.f32.mrf.mxu0
      %v2279 = vadd.f32 %v1250, %v2278
      %2280 = vmatprep.mubr.f32.mxu0 0.0
      %2281 = vmatmul.mubr.f32.gmra.mxu0 %v1088
      %v2282 = vpop.f32.mrf.mxu0
      %v2283 = vadd.f32 %v1246, %v2282
      %v2284 = vpop.f32.mrf.mxu0
      %v2285 = vadd.f32 %v1250, %v2284
      %2286 = vdwg.mxu0
      %v2287 = vmax.f32 %v1326, %v1332
      %v2288 = vmax.f32 %v2287, %v1338
      %v2289 = vmax.f32 %v2288, %v1344
      %v2290 = vmax.f32 %v2289, %v1350
      %v2291 = vmax.f32 %v2290, %v1356
      %v2292 = vmax.f32 %v2291, %v1362
      %v2293 = vmax.f32 %v2292, %v1368
      %v2294 = vmax.f32 %v2293, %v1374
      %v2295 = vmax.f32 %v2294, %v1380
      %v2296 = vmax.f32 %v2295, %v1386
      %v2297 = vmax.f32 %v2296, %v1392
      %v2298 = vmax.f32 %v2297, %v1398
      %v2299 = vmax.f32 %v2298, %v1404
      %v2300 = vmax.f32 %v2299, %v1410
      %v2301 = vmax.f32 %v2300, %v1416
      %v2302 = vmax.f32 %v2301, %v1422
      %v2303 = vmax.f32 %v2302, %v1428
      %v2304 = vmax.f32 %v2303, %v1434
      %v2305 = vmax.f32 %v2304, %v1440
      %v2306 = vmax.f32 %v2305, %v1446
      %v2307 = vmax.f32 %v2306, %v1452
      %v2308 = vmax.f32 %v2307, %v1458
      %v2309 = vmax.f32 %v2308, %v1464
      %v2310 = vmax.f32 %v2309, %v1470
      %v2311 = vmax.f32 %v2310, %v1476
      %v2312 = vmax.f32 %v2311, %v1482
      %v2313 = vmax.f32 %v2312, %v1488
      %v2314 = vmax.f32 %v2313, %v1494
      %v2315 = vmax.f32 %v2314, %v1500
      %v2316 = vmax.f32 %v2315, %v1506
      %v2317 = vmax.f32 %v2316, %v1512
      %v2318 = vrot.slane %v2317, 4
      %v2319 = vmax.f32 %v2317, %v2318
      %v2320 = vrot.slane %v2319, 2
      %v2321 = vmax.f32 %v2319, %v2320
      %v2322 = vrot.slane %v2321, 1
      %v2323 = vmax.f32 %v2321, %v2322
      %v2324 = vmax.f32 %v1328, %v1334
      %v2325 = vmax.f32 %v2324, %v1340
      %v2326 = vmax.f32 %v2325, %v1346
      %v2327 = vmax.f32 %v2326, %v1352
      %v2328 = vmax.f32 %v2327, %v1358
      %v2329 = vmax.f32 %v2328, %v1364
      %v2330 = vmax.f32 %v2329, %v1370
      %v2331 = vmax.f32 %v2330, %v1376
      %v2332 = vmax.f32 %v2331, %v1382
      %v2333 = vmax.f32 %v2332, %v1388
      %v2334 = vmax.f32 %v2333, %v1394
      %v2335 = vmax.f32 %v2334, %v1400
      %v2336 = vmax.f32 %v2335, %v1406
      %v2337 = vmax.f32 %v2336, %v1412
      %v2338 = vmax.f32 %v2337, %v1418
      %v2339 = vmax.f32 %v2338, %v1424
      %v2340 = vmax.f32 %v2339, %v1430
      %v2341 = vmax.f32 %v2340, %v1436
      %v2342 = vmax.f32 %v2341, %v1442
      %v2343 = vmax.f32 %v2342, %v1448
      %v2344 = vmax.f32 %v2343, %v1454
      %v2345 = vmax.f32 %v2344, %v1460
      %v2346 = vmax.f32 %v2345, %v1466
      %v2347 = vmax.f32 %v2346, %v1472
      %v2348 = vmax.f32 %v2347, %v1478
      %v2349 = vmax.f32 %v2348, %v1484
      %v2350 = vmax.f32 %v2349, %v1490
      %v2351 = vmax.f32 %v2350, %v1496
      %v2352 = vmax.f32 %v2351, %v1502
      %v2353 = vmax.f32 %v2352, %v1508
      %v2354 = vmax.f32 %v2353, %v1514
      %v2355 = vrot.slane %v2354, 4
      %v2356 = vmax.f32 %v2354, %v2355
      %v2357 = vrot.slane %v2356, 2
      %v2358 = vmax.f32 %v2356, %v2357
      %v2359 = vrot.slane %v2358, 1
      %v2360 = vmax.f32 %v2358, %v2359
      %v2361 = vmax.f32 %v1583, %v1589
      %v2362 = vmax.f32 %v2361, %v1595
      %v2363 = vmax.f32 %v2362, %v1601
      %v2364 = vmax.f32 %v2363, %v1607
      %v2365 = vmax.f32 %v2364, %v1613
      %v2366 = vmax.f32 %v2365, %v1619
      %v2367 = vmax.f32 %v2366, %v1625
      %v2368 = vmax.f32 %v2367, %v1631
      %v2369 = vmax.f32 %v2368, %v1637
      %v2370 = vmax.f32 %v2369, %v1643
      %v2371 = vmax.f32 %v2370, %v1649
      %v2372 = vmax.f32 %v2371, %v1655
      %v2373 = vmax.f32 %v2372, %v1661
      %v2374 = vmax.f32 %v2373, %v1667
      %v2375 = vmax.f32 %v2374, %v1673
      %v2376 = vmax.f32 %v2375, %v1679
      %v2377 = vmax.f32 %v2376, %v1685
      %v2378 = vmax.f32 %v2377, %v1691
      %v2379 = vmax.f32 %v2378, %v1697
      %v2380 = vmax.f32 %v2379, %v1703
      %v2381 = vmax.f32 %v2380, %v1709
      %v2382 = vmax.f32 %v2381, %v1715
      %v2383 = vmax.f32 %v2382, %v1721
      %v2384 = vmax.f32 %v2383, %v1727
      %v2385 = vmax.f32 %v2384, %v1733
      %v2386 = vmax.f32 %v2385, %v1739
      %v2387 = vmax.f32 %v2386, %v1745
      %v2388 = vmax.f32 %v2387, %v1751
      %v2389 = vmax.f32 %v2388, %v1757
      %v2390 = vmax.f32 %v2389, %v1763
      %v2391 = vmax.f32 %v2390, %v1769
      %v2392 = vrot.slane %v2391, 4
      %v2393 = vmax.f32 %v2391, %v2392
      %v2394 = vrot.slane %v2393, 2
      %v2395 = vmax.f32 %v2393, %v2394
      %v2396 = vrot.slane %v2395, 1
      %v2397 = vmax.f32 %v2395, %v2396
      %v2398 = vmax.f32 %v1585, %v1591
      %v2399 = vmax.f32 %v2398, %v1597
      %v2400 = vmax.f32 %v2399, %v1603
      %v2401 = vmax.f32 %v2400, %v1609
      %v2402 = vmax.f32 %v2401, %v1615
      %v2403 = vmax.f32 %v2402, %v1621
      %v2404 = vmax.f32 %v2403, %v1627
      %v2405 = vmax.f32 %v2404, %v1633
      %v2406 = vmax.f32 %v2405, %v1639
      %v2407 = vmax.f32 %v2406, %v1645
      %v2408 = vmax.f32 %v2407, %v1651
      %v2409 = vmax.f32 %v2408, %v1657
      %v2410 = vmax.f32 %v2409, %v1663
      %v2411 = vmax.f32 %v2410, %v1669
      %v2412 = vmax.f32 %v2411, %v1675
      %v2413 = vmax.f32 %v2412, %v1681
      %v2414 = vmax.f32 %v2413, %v1687
      %v2415 = vmax.f32 %v2414, %v1693
      %v2416 = vmax.f32 %v2415, %v1699
      %v2417 = vmax.f32 %v2416, %v1705
      %v2418 = vmax.f32 %v2417, %v1711
      %v2419 = vmax.f32 %v2418, %v1717
      %v2420 = vmax.f32 %v2419, %v1723
      %v2421 = vmax.f32 %v2420, %v1729
      %v2422 = vmax.f32 %v2421, %v1735
      %v2423 = vmax.f32 %v2422, %v1741
      %v2424 = vmax.f32 %v2423, %v1747
      %v2425 = vmax.f32 %v2424, %v1753
      %v2426 = vmax.f32 %v2425, %v1759
      %v2427 = vmax.f32 %v2426, %v1765
      %v2428 = vmax.f32 %v2427, %v1771
      %v2429 = vrot.slane %v2428, 4
      %v2430 = vmax.f32 %v2428, %v2429
      %v2431 = vrot.slane %v2430, 2
      %v2432 = vmax.f32 %v2430, %v2431
      %v2433 = vrot.slane %v2432, 1
      %v2434 = vmax.f32 %v2432, %v2433
      %v2435 = vmax.f32 %v1840, %v1846
      %v2436 = vmax.f32 %v2435, %v1852
      %v2437 = vmax.f32 %v2436, %v1858
      %v2438 = vmax.f32 %v2437, %v1864
      %v2439 = vmax.f32 %v2438, %v1870
      %v2440 = vmax.f32 %v2439, %v1876
      %v2441 = vmax.f32 %v2440, %v1882
      %v2442 = vmax.f32 %v2441, %v1888
      %v2443 = vmax.f32 %v2442, %v1894
      %v2444 = vmax.f32 %v2443, %v1900
      %v2445 = vmax.f32 %v2444, %v1906
      %v2446 = vmax.f32 %v2445, %v1912
      %v2447 = vmax.f32 %v2446, %v1918
      %v2448 = vmax.f32 %v2447, %v1924
      %v2449 = vmax.f32 %v2448, %v1930
      %v2450 = vmax.f32 %v2449, %v1936
      %v2451 = vmax.f32 %v2450, %v1942
      %v2452 = vmax.f32 %v2451, %v1948
      %v2453 = vmax.f32 %v2452, %v1954
      %v2454 = vmax.f32 %v2453, %v1960
      %v2455 = vmax.f32 %v2454, %v1966
      %v2456 = vmax.f32 %v2455, %v1972
      %v2457 = vmax.f32 %v2456, %v1978
      %v2458 = vmax.f32 %v2457, %v1984
      %v2459 = vmax.f32 %v2458, %v1990
      %v2460 = vmax.f32 %v2459, %v1996
      %v2461 = vmax.f32 %v2460, %v2002
      %v2462 = vmax.f32 %v2461, %v2008
      %v2463 = vmax.f32 %v2462, %v2014
      %v2464 = vmax.f32 %v2463, %v2020
      %v2465 = vmax.f32 %v2464, %v2026
      %v2466 = vrot.slane %v2465, 4
      %v2467 = vmax.f32 %v2465, %v2466
      %v2468 = vrot.slane %v2467, 2
      %v2469 = vmax.f32 %v2467, %v2468
      %v2470 = vrot.slane %v2469, 1
      %v2471 = vmax.f32 %v2469, %v2470
      %v2472 = vmax.f32 %v1842, %v1848
      %v2473 = vmax.f32 %v2472, %v1854
      %v2474 = vmax.f32 %v2473, %v1860
      %v2475 = vmax.f32 %v2474, %v1866
      %v2476 = vmax.f32 %v2475, %v1872
      %v2477 = vmax.f32 %v2476, %v1878
      %v2478 = vmax.f32 %v2477, %v1884
      %v2479 = vmax.f32 %v2478, %v1890
      %v2480 = vmax.f32 %v2479, %v1896
      %v2481 = vmax.f32 %v2480, %v1902
      %v2482 = vmax.f32 %v2481, %v1908
      %v2483 = vmax.f32 %v2482, %v1914
      %v2484 = vmax.f32 %v2483, %v1920
      %v2485 = vmax.f32 %v2484, %v1926
      %v2486 = vmax.f32 %v2485, %v1932
      %v2487 = vmax.f32 %v2486, %v1938
      %v2488 = vmax.f32 %v2487, %v1944
      %v2489 = vmax.f32 %v2488, %v1950
      %v2490 = vmax.f32 %v2489, %v1956
      %v2491 = vmax.f32 %v2490, %v1962
      %v2492 = vmax.f32 %v2491, %v1968
      %v2493 = vmax.f32 %v2492, %v1974
      %v2494 = vmax.f32 %v2493, %v1980
      %v2495 = vmax.f32 %v2494, %v1986
      %v2496 = vmax.f32 %v2495, %v1992
      %v2497 = vmax.f32 %v2496, %v1998
      %v2498 = vmax.f32 %v2497, %v2004
      %v2499 = vmax.f32 %v2498, %v2010
      %v2500 = vmax.f32 %v2499, %v2016
      %v2501 = vmax.f32 %v2500, %v2022
      %v2502 = vmax.f32 %v2501, %v2028
      %v2503 = vrot.slane %v2502, 4
      %v2504 = vmax.f32 %v2502, %v2503
      %v2505 = vrot.slane %v2504, 2
      %v2506 = vmax.f32 %v2504, %v2505
      %v2507 = vrot.slane %v2506, 1
      %v2508 = vmax.f32 %v2506, %v2507
      %v2509 = vmax.f32 %v2097, %v2103
      %v2510 = vmax.f32 %v2509, %v2109
      %v2511 = vmax.f32 %v2510, %v2115
      %v2512 = vmax.f32 %v2511, %v2121
      %v2513 = vmax.f32 %v2512, %v2127
      %v2514 = vmax.f32 %v2513, %v2133
      %v2515 = vmax.f32 %v2514, %v2139
      %v2516 = vmax.f32 %v2515, %v2145
      %v2517 = vmax.f32 %v2516, %v2151
      %v2518 = vmax.f32 %v2517, %v2157
      %v2519 = vmax.f32 %v2518, %v2163
      %v2520 = vmax.f32 %v2519, %v2169
      %v2521 = vmax.f32 %v2520, %v2175
      %v2522 = vmax.f32 %v2521, %v2181
      %v2523 = vmax.f32 %v2522, %v2187
      %v2524 = vmax.f32 %v2523, %v2193
      %v2525 = vmax.f32 %v2524, %v2199
      %v2526 = vmax.f32 %v2525, %v2205
      %v2527 = vmax.f32 %v2526, %v2211
      %v2528 = vmax.f32 %v2527, %v2217
      %v2529 = vmax.f32 %v2528, %v2223
      %v2530 = vmax.f32 %v2529, %v2229
      %v2531 = vmax.f32 %v2530, %v2235
      %v2532 = vmax.f32 %v2531, %v2241
      %v2533 = vmax.f32 %v2532, %v2247
      %v2534 = vmax.f32 %v2533, %v2253
      %v2535 = vmax.f32 %v2534, %v2259
      %v2536 = vmax.f32 %v2535, %v2265
      %v2537 = vmax.f32 %v2536, %v2271
      %v2538 = vmax.f32 %v2537, %v2277
      %v2539 = vmax.f32 %v2538, %v2283
      %v2540 = vrot.slane %v2539, 4
      %v2541 = vmax.f32 %v2539, %v2540
      %v2542 = vrot.slane %v2541, 2
      %v2543 = vmax.f32 %v2541, %v2542
      %v2544 = vrot.slane %v2543, 1
      %v2545 = vmax.f32 %v2543, %v2544
      %v2546 = vmax.f32 %v2099, %v2105
      %v2547 = vmax.f32 %v2546, %v2111
      %v2548 = vmax.f32 %v2547, %v2117
      %v2549 = vmax.f32 %v2548, %v2123
      %v2550 = vmax.f32 %v2549, %v2129
      %v2551 = vmax.f32 %v2550, %v2135
      %v2552 = vmax.f32 %v2551, %v2141
      %v2553 = vmax.f32 %v2552, %v2147
      %v2554 = vmax.f32 %v2553, %v2153
      %v2555 = vmax.f32 %v2554, %v2159
      %v2556 = vmax.f32 %v2555, %v2165
      %v2557 = vmax.f32 %v2556, %v2171
      %v2558 = vmax.f32 %v2557, %v2177
      %v2559 = vmax.f32 %v2558, %v2183
      %v2560 = vmax.f32 %v2559, %v2189
      %v2561 = vmax.f32 %v2560, %v2195
      %v2562 = vmax.f32 %v2561, %v2201
      %v2563 = vmax.f32 %v2562, %v2207
      %v2564 = vmax.f32 %v2563, %v2213
      %v2565 = vmax.f32 %v2564, %v2219
      %v2566 = vmax.f32 %v2565, %v2225
      %v2567 = vmax.f32 %v2566, %v2231
      %v2568 = vmax.f32 %v2567, %v2237
      %v2569 = vmax.f32 %v2568, %v2243
      %v2570 = vmax.f32 %v2569, %v2249
      %v2571 = vmax.f32 %v2570, %v2255
      %v2572 = vmax.f32 %v2571, %v2261
      %v2573 = vmax.f32 %v2572, %v2267
      %v2574 = vmax.f32 %v2573, %v2273
      %v2575 = vmax.f32 %v2574, %v2279
      %v2576 = vmax.f32 %v2575, %v2285
      %v2577 = vrot.slane %v2576, 4
      %v2578 = vmax.f32 %v2576, %v2577
      %v2579 = vrot.slane %v2578, 2
      %v2580 = vmax.f32 %v2578, %v2579
      %v2581 = vrot.slane %v2580, 1
      %v2582 = vmax.f32 %v2580, %v2581
      %p2583 = scmp.eq.s32.totalorder %s23, 0
      // Predicated region
      $region49: #{pointnet_cls_forward.6} parent=47 // pred_check
        %p2584 = pneg %p2583
      $region50: #{pointnet_cls_forward.6} parent=47 // pred_check_branch
        %2586 = sbr.rel (%p2584) target = $region52
      $region51: #{pointnet_cls_forward.6} parent=47 // pred_region
        %v2595 = vcombine.low %v2323, %v2360
        %v2596 = vcombine.low %v2397, %v2434
        %v2597 = vcombine.low %v2471, %v2508
        %v2598 = vcombine.low %v2545, %v2582
        %v2600 = vunpack.c.l.s4 1966171168
        %v2601 = vunpack.c.0.s8 %v2600
        %v2602 = vlaneseq
        %v2603 = vshrl.u32 %v2602, 7
        %v2604 = vsub.s32 %v2601, %v2603
        %v2605 = vrot.slane %v2595, %v2604
        %v2607 = vunpack.c.l.s4 1966171168
        %v2608 = vunpack.c.0.s8 %v2607
        %v2609 = vlaneseq
        %v2610 = vshrl.u32 %v2609, 7
        %v2611 = vsub.s32 %v2608, %v2610
        %v2612 = vrot.slane %v2596, %v2611
        %v2614 = vunpack.c.l.s4 1966171168
        %v2615 = vunpack.c.0.s8 %v2614
        %v2616 = vlaneseq
        %v2617 = vshrl.u32 %v2616, 7
        %v2618 = vsub.s32 %v2615, %v2617
        %v2619 = vrot.slane %v2597, %v2618
        %v2621 = vunpack.c.l.s4 1966171168
        %v2622 = vunpack.c.0.s8 %v2621
        %v2623 = vlaneseq
        %v2624 = vshrl.u32 %v2623, 7
        %v2625 = vsub.s32 %v2622, %v2624
        %v2626 = vrot.slane %v2598, %v2625
        %v2627 = vcombine.low %v2605, %v2612
        %v2628 = vcombine.low %v2619, %v2626
        %v2630 = vunpack.c.l.s4 1966171168
        %v2631 = vunpack.c.0.s8 %v2630
        %v2632 = vlaneseq
        %v2633 = vshrl.u32 %v2632, 7
        %v2634 = vsub.s32 %v2631, %v2633
        %v2635 = vrot.slane %v2627, %v2634
        %v2637 = vunpack.c.l.s4 1966171168
        %v2638 = vunpack.c.0.s8 %v2637
        %v2639 = vlaneseq
        %v2640 = vshrl.u32 %v2639, 7
        %v2641 = vsub.s32 %v2638, %v2640
        %v2642 = vrot.slane %v2628, %v2641
        %v2643 = vcombine.low %v2635, %v2642
        %2645 = vst [vmem:[%s321] sm:$0xff] %v2643
      $region52: #{pointnet_cls_forward.6} parent=47 // pred_fallthru
        _
      %p2646 = scmp.gt.s32.totalorder %s23, 0
      // Predicated region
      $region53: #{pointnet_cls_forward.6} parent=47 // pred_check
        %p2647 = pneg %p2646
      $region54: #{pointnet_cls_forward.6} parent=47 // pred_check_branch
        %2649 = sbr.rel (%p2647) target = $region56
      $region55: #{pointnet_cls_forward.6} parent=47 // pred_region
        %v2650 = vld [vmem:[%s321] sm:$0xff]
        %v2659 = vcombine.low %v2323, %v2360
        %v2660 = vcombine.low %v2397, %v2434
        %v2661 = vcombine.low %v2471, %v2508
        %v2662 = vcombine.low %v2545, %v2582
        %v2664 = vunpack.c.l.s4 1966171168
        %v2665 = vunpack.c.0.s8 %v2664
        %v2666 = vlaneseq
        %v2667 = vshrl.u32 %v2666, 7
        %v2668 = vsub.s32 %v2665, %v2667
        %v2669 = vrot.slane %v2659, %v2668
        %v2671 = vunpack.c.l.s4 1966171168
        %v2672 = vunpack.c.0.s8 %v2671
        %v2673 = vlaneseq
        %v2674 = vshrl.u32 %v2673, 7
        %v2675 = vsub.s32 %v2672, %v2674
        %v2676 = vrot.slane %v2660, %v2675
        %v2678 = vunpack.c.l.s4 1966171168
        %v2679 = vunpack.c.0.s8 %v2678
        %v2680 = vlaneseq
        %v2681 = vshrl.u32 %v2680, 7
        %v2682 = vsub.s32 %v2679, %v2681
        %v2683 = vrot.slane %v2661, %v2682
        %v2685 = vunpack.c.l.s4 1966171168
        %v2686 = vunpack.c.0.s8 %v2685
        %v2687 = vlaneseq
        %v2688 = vshrl.u32 %v2687, 7
        %v2689 = vsub.s32 %v2686, %v2688
        %v2690 = vrot.slane %v2662, %v2689
        %v2691 = vcombine.low %v2669, %v2676
        %v2692 = vcombine.low %v2683, %v2690
        %v2694 = vunpack.c.l.s4 1966171168
        %v2695 = vunpack.c.0.s8 %v2694
        %v2696 = vlaneseq
        %v2697 = vshrl.u32 %v2696, 7
        %v2698 = vsub.s32 %v2695, %v2697
        %v2699 = vrot.slane %v2691, %v2698
        %v2701 = vunpack.c.l.s4 1966171168
        %v2702 = vunpack.c.0.s8 %v2701
        %v2703 = vlaneseq
        %v2704 = vshrl.u32 %v2703, 7
        %v2705 = vsub.s32 %v2702, %v2704
        %v2706 = vrot.slane %v2692, %v2705
        %v2707 = vcombine.low %v2699, %v2706
        %v2709 = vmax.f32 %v2650, %v2707
        %2710 = vst [vmem:[%s321] sm:$0xff] %v2709
      $region56: #{pointnet_cls_forward.6} parent=47 // pred_fallthru
        _
      %p2711 = scmp.lt.s32.totalorder %s22, 1
      %s2712 = scalar_select %p2711, %s22, 1
      %s2713 = smul.addr %s2712, 8
      %s2714 = scalar_lea.vmem %s7, %s2713
      // Predicated region
      $region57: #{pointnet_cls_forward.6} parent=47 // pred_check
        %p2715 = pneg %p207
      $region58: #{pointnet_cls_forward.6} parent=47 // pred_check_branch
        %2717 = sbr.rel (%p2715) target = $region60
      $region59: #{pointnet_cls_forward.6} parent=47 // pred_region
        _
      $region60: #{pointnet_cls_forward.6} parent=47 // pred_fallthru
        _
    $region48: #{pointnet_cls_forward.6} parent=5 // pred_fallthru
      _
    %p2718 = scmp.le.s32.totalorder 2, %s13
    // Predicated region
    $region61: #{pointnet_cls_forward.6} parent=5 // pred_check
      %p2719 = pneg %p2718
    $region62: #{pointnet_cls_forward.6} parent=5 // pred_check_branch
      %2721 = sbr.rel (%p2719) target = $region64
    $region63: #{pointnet_cls_forward.6} parent=5 // pred_region
      %s2722 = ssub.s32 %s13, 2
      // Predicated region
      $region65: #{pointnet_cls_forward.6} parent=63 // pred_check
        %p2723 = pneg %p213
      $region66: #{pointnet_cls_forward.6} parent=63 // pred_check_branch
        %2725 = sbr.rel (%p2723) target = $region68
      $region67: #{pointnet_cls_forward.6} parent=63 // pred_region
        %p2726 = scmp.lt.s32.totalorder %s24, 1
        %s2727 = scalar_select %p2726, %s24, 1
        %s2728 = smul.addr %s2727, 8
        %s2729 = scalar_lea.vmem %s7, %s2728
      $region68: #{pointnet_cls_forward.6} parent=63 // pred_fallthru
        _
    $region64: #{pointnet_cls_forward.6} parent=5 // pred_fallthru
      _
  $region6: #{pointnet_cls_forward.6} parent=0 // loop_footer
    %s17 = sadd.s32 1, %s13
  $region7: #{pointnet_cls_forward.6} parent=0 // loop_footer_branch
    %12 = sbr.rel target = $region3
  $region8: #{pointnet_cls_forward.6} parent=0 // loop_exit
    _

// kernel: pointnet_cls_forward.7
$region0: #{pointnet_cls_forward.7}
  #allocation0 [shape = 'u32[]', space=smem, size = 0x4, offset = 0x4, fixed_abs, tag = 'smem constant byte address 0x4 - core index']
  #allocation1 [shape = 'u32[144,128]{1,0:T(1,128)}', space=vmem, size = 0x12000, scoped, tag = 'internal scratch']
  %s0 = inlined_call_operand.vmem [shape: f32[2,1024], index: 0, kind: input, shape index: {}]
  %s1 = inlined_call_operand.vmem [shape: f32[1024,512], index: 1, kind: input, shape index: {}]
  %s2 = inlined_call_operand.vmem [shape: f32[1,512], index: 2, kind: input, shape index: {}]
  %s3 = inlined_call_operand.vmem [shape: f32[512,256], index: 3, kind: input, shape index: {}]
  %s4 = inlined_call_operand.vmem [shape: f32[1,256], index: 4, kind: input, shape index: {}]
  %s5 = inlined_call_operand.vmem [shape: f32[256,2], index: 5, kind: input, shape index: {}]
  %s6 = inlined_call_operand.vmem [shape: f32[1,2], index: 6, kind: input, shape index: {}]
  %s7 = inlined_call_operand.hbm [shape: f32[2,2], index: 7, kind: output, shape index: {}]
  %s8 = sld [smem:[#allocation0]]
  $region38: #{pointnet_cls_forward.7} parent=0
    _
  %s10 = ssub.s32 1, %s8
  %s11 = scalar_select 0, %s10, %s8
  $region1: #{pointnet_cls_forward.7} parent=0
    #allocation2 [shape = 'u8[1024]{0}', space=vmem, size = 0x400, scoped, tag = 'output window, operand 0, single buffered']
    #allocation3 [shape = 's32[1]{0}', space=sflag, size = 0x4, scoped, tag = 'scoped memory for pointnet_cls_forward.7']
    %12 = vsyncpa [#allocation3], 0
    // Predicated region
    $region2: #{pointnet_cls_forward.7} parent=1 // pred_check
      _
    $region3: #{pointnet_cls_forward.7} parent=1 // pred_check_branch
      %14 = sbr.rel (0) target = $region5
    $region4: #{pointnet_cls_forward.7} parent=1 // pred_region
      _
    $region5: #{pointnet_cls_forward.7} parent=1 // pred_fallthru
      _
    // Predicated region
    $region6: #{pointnet_cls_forward.7} parent=1 // pred_check
      _
    $region7: #{pointnet_cls_forward.7} parent=1 // pred_check_branch
      %16 = sbr.rel (0) target = $region9
    $region8: #{pointnet_cls_forward.7} parent=1 // pred_region
      _
    $region9: #{pointnet_cls_forward.7} parent=1 // pred_fallthru
      _
    // Predicated region
    $region10: #{pointnet_cls_forward.7} parent=1 // pred_check
      _
    $region11: #{pointnet_cls_forward.7} parent=1 // pred_check_branch
      %18 = sbr.rel (0) target = $region13
    $region12: #{pointnet_cls_forward.7} parent=1 // pred_region
      _
    $region13: #{pointnet_cls_forward.7} parent=1 // pred_fallthru
      _
    // Predicated region
    $region14: #{pointnet_cls_forward.7} parent=1 // pred_check
      _
    $region15: #{pointnet_cls_forward.7} parent=1 // pred_check_branch
      %20 = sbr.rel (0) target = $region17
    $region16: #{pointnet_cls_forward.7} parent=1 // pred_region
      _
    $region17: #{pointnet_cls_forward.7} parent=1 // pred_fallthru
      _
    // Predicated region
    $region18: #{pointnet_cls_forward.7} parent=1 // pred_check
      _
    $region19: #{pointnet_cls_forward.7} parent=1 // pred_check_branch
      %22 = sbr.rel (0) target = $region21
    $region20: #{pointnet_cls_forward.7} parent=1 // pred_region
      _
    $region21: #{pointnet_cls_forward.7} parent=1 // pred_fallthru
      _
    // Predicated region
    $region22: #{pointnet_cls_forward.7} parent=1 // pred_check
      _
    $region23: #{pointnet_cls_forward.7} parent=1 // pred_check_branch
      %24 = sbr.rel (0) target = $region25
    $region24: #{pointnet_cls_forward.7} parent=1 // pred_region
      _
    $region25: #{pointnet_cls_forward.7} parent=1 // pred_fallthru
      _
    // Predicated region
    $region26: #{pointnet_cls_forward.7} parent=1 // pred_check
      _
    $region27: #{pointnet_cls_forward.7} parent=1 // pred_check_branch
      %26 = sbr.rel (0) target = $region29
    $region28: #{pointnet_cls_forward.7} parent=1 // pred_region
      _
    $region29: #{pointnet_cls_forward.7} parent=1 // pred_fallthru
      _
    %v27 = vld [vmem:[%s0] sm:$0xff]
    %v28 = vld [vmem:[%s0 + $0x8] sm:$0xff]
    %v29 = vld [vmem:[%s1] sm:$0xff]
    %v30 = vld [vmem:[%s1 + $0x8] sm:$0xff]
    %v31 = vld [vmem:[%s1 + $0x10] sm:$0xff]
    %v32 = vld [vmem:[%s1 + $0x18] sm:$0xff]
    %v33 = vld [vmem:[%s1 + $0x20] sm:$0xff]
    %v34 = vld [vmem:[%s1 + $0x28] sm:$0xff]
    %v35 = vld [vmem:[%s1 + $0x30] sm:$0xff]
    %v36 = vld [vmem:[%s1 + $0x38] sm:$0xff]
    %v37 = vld [vmem:[%s1 + $0x40] sm:$0xff]
    %v38 = vld [vmem:[%s1 + $0x48] sm:$0xff]
    %v39 = vld [vmem:[%s1 + $0x50] sm:$0xff]
    %v40 = vld [vmem:[%s1 + $0x58] sm:$0xff]
    %v41 = vld [vmem:[%s1 + $0x60] sm:$0xff]
    %v42 = vld [vmem:[%s1 + $0x68] sm:$0xff]
    %v43 = vld [vmem:[%s1 + $0x70] sm:$0xff]
    %v44 = vld [vmem:[%s1 + $0x78] sm:$0xff]
    %v45 = vld [vmem:[%s1 + $0x80] sm:$0xff]
    %v46 = vld [vmem:[%s1 + $0x88] sm:$0xff]
    %v47 = vld [vmem:[%s1 + $0x90] sm:$0xff]
    %v48 = vld [vmem:[%s1 + $0x98] sm:$0xff]
    %v49 = vld [vmem:[%s1 + $0xa0] sm:$0xff]
    %v50 = vld [vmem:[%s1 + $0xa8] sm:$0xff]
    %v51 = vld [vmem:[%s1 + $0xb0] sm:$0xff]
    %v52 = vld [vmem:[%s1 + $0xb8] sm:$0xff]
    %v53 = vld [vmem:[%s1 + $0xc0] sm:$0xff]
    %v54 = vld [vmem:[%s1 + $0xc8] sm:$0xff]
    %v55 = vld [vmem:[%s1 + $0xd0] sm:$0xff]
    %v56 = vld [vmem:[%s1 + $0xd8] sm:$0xff]
    %v57 = vld [vmem:[%s1 + $0xe0] sm:$0xff]
    %v58 = vld [vmem:[%s1 + $0xe8] sm:$0xff]
    %v59 = vld [vmem:[%s1 + $0xf0] sm:$0xff]
    %v60 = vld [vmem:[%s1 + $0xf8] sm:$0xff]
    %v61 = vld [vmem:[%s1 + $0x100] sm:$0xff]
    %v62 = vld [vmem:[%s1 + $0x108] sm:$0xff]
    %v63 = vld [vmem:[%s1 + $0x110] sm:$0xff]
    %v64 = vld [vmem:[%s1 + $0x118] sm:$0xff]
    %v65 = vld [vmem:[%s1 + $0x120] sm:$0xff]
    %v66 = vld [vmem:[%s1 + $0x128] sm:$0xff]
    %v67 = vld [vmem:[%s1 + $0x130] sm:$0xff]
    %v68 = vld [vmem:[%s1 + $0x138] sm:$0xff]
    %v69 = vld [vmem:[%s1 + $0x140] sm:$0xff]
    %v70 = vld [vmem:[%s1 + $0x148] sm:$0xff]
    %v71 = vld [vmem:[%s1 + $0x150] sm:$0xff]
    %v72 = vld [vmem:[%s1 + $0x158] sm:$0xff]
    %v73 = vld [vmem:[%s1 + $0x160] sm:$0xff]
    %v74 = vld [vmem:[%s1 + $0x168] sm:$0xff]
    %v75 = vld [vmem:[%s1 + $0x170] sm:$0xff]
    %v76 = vld [vmem:[%s1 + $0x178] sm:$0xff]
    %v77 = vld [vmem:[%s1 + $0x180] sm:$0xff]
    %v78 = vld [vmem:[%s1 + $0x188] sm:$0xff]
    %v79 = vld [vmem:[%s1 + $0x190] sm:$0xff]
    %v80 = vld [vmem:[%s1 + $0x198] sm:$0xff]
    %v81 = vld [vmem:[%s1 + $0x1a0] sm:$0xff]
    %v82 = vld [vmem:[%s1 + $0x1a8] sm:$0xff]
    %v83 = vld [vmem:[%s1 + $0x1b0] sm:$0xff]
    %v84 = vld [vmem:[%s1 + $0x1b8] sm:$0xff]
    %v85 = vld [vmem:[%s1 + $0x1c0] sm:$0xff]
    %v86 = vld [vmem:[%s1 + $0x1c8] sm:$0xff]
    %v87 = vld [vmem:[%s1 + $0x1d0] sm:$0xff]
    %v88 = vld [vmem:[%s1 + $0x1d8] sm:$0xff]
    %v89 = vld [vmem:[%s1 + $0x1e0] sm:$0xff]
    %v90 = vld [vmem:[%s1 + $0x1e8] sm:$0xff]
    %v91 = vld [vmem:[%s1 + $0x1f0] sm:$0xff]
    %v92 = vld [vmem:[%s1 + $0x1f8] sm:$0xff]
    %v93 = vld [vmem:[%s1 + $0x200] sm:$0xff]
    %v94 = vld [vmem:[%s1 + $0x208] sm:$0xff]
    %v95 = vld [vmem:[%s1 + $0x210] sm:$0xff]
    %v96 = vld [vmem:[%s1 + $0x218] sm:$0xff]
    %v97 = vld [vmem:[%s1 + $0x220] sm:$0xff]
    %v98 = vld [vmem:[%s1 + $0x228] sm:$0xff]
    %v99 = vld [vmem:[%s1 + $0x230] sm:$0xff]
    %v100 = vld [vmem:[%s1 + $0x238] sm:$0xff]
    %v101 = vld [vmem:[%s1 + $0x240] sm:$0xff]
    %v102 = vld [vmem:[%s1 + $0x248] sm:$0xff]
    %v103 = vld [vmem:[%s1 + $0x250] sm:$0xff]
    %v104 = vld [vmem:[%s1 + $0x258] sm:$0xff]
    %v105 = vld [vmem:[%s1 + $0x260] sm:$0xff]
    %v106 = vld [vmem:[%s1 + $0x268] sm:$0xff]
    %v107 = vld [vmem:[%s1 + $0x270] sm:$0xff]
    %v108 = vld [vmem:[%s1 + $0x278] sm:$0xff]
    %v109 = vld [vmem:[%s1 + $0x280] sm:$0xff]
    %v110 = vld [vmem:[%s1 + $0x288] sm:$0xff]
    %v111 = vld [vmem:[%s1 + $0x290] sm:$0xff]
    %v112 = vld [vmem:[%s1 + $0x298] sm:$0xff]
    %v113 = vld [vmem:[%s1 + $0x2a0] sm:$0xff]
    %v114 = vld [vmem:[%s1 + $0x2a8] sm:$0xff]
    %v115 = vld [vmem:[%s1 + $0x2b0] sm:$0xff]
    %v116 = vld [vmem:[%s1 + $0x2b8] sm:$0xff]
    %v117 = vld [vmem:[%s1 + $0x2c0] sm:$0xff]
    %v118 = vld [vmem:[%s1 + $0x2c8] sm:$0xff]
    %v119 = vld [vmem:[%s1 + $0x2d0] sm:$0xff]
    %v120 = vld [vmem:[%s1 + $0x2d8] sm:$0xff]
    %v121 = vld [vmem:[%s1 + $0x2e0] sm:$0xff]
    %v122 = vld [vmem:[%s1 + $0x2e8] sm:$0xff]
    %v123 = vld [vmem:[%s1 + $0x2f0] sm:$0xff]
    %v124 = vld [vmem:[%s1 + $0x2f8] sm:$0xff]
    %v125 = vld [vmem:[%s1 + $0x300] sm:$0xff]
    %v126 = vld [vmem:[%s1 + $0x308] sm:$0xff]
    %v127 = vld [vmem:[%s1 + $0x310] sm:$0xff]
    %v128 = vld [vmem:[%s1 + $0x318] sm:$0xff]
    %v129 = vld [vmem:[%s1 + $0x320] sm:$0xff]
    %v130 = vld [vmem:[%s1 + $0x328] sm:$0xff]
    %v131 = vld [vmem:[%s1 + $0x330] sm:$0xff]
    %v132 = vld [vmem:[%s1 + $0x338] sm:$0xff]
    %v133 = vld [vmem:[%s1 + $0x340] sm:$0xff]
    %v134 = vld [vmem:[%s1 + $0x348] sm:$0xff]
    %v135 = vld [vmem:[%s1 + $0x350] sm:$0xff]
    %v136 = vld [vmem:[%s1 + $0x358] sm:$0xff]
    %v137 = vld [vmem:[%s1 + $0x360] sm:$0xff]
    %v138 = vld [vmem:[%s1 + $0x368] sm:$0xff]
    %v139 = vld [vmem:[%s1 + $0x370] sm:$0xff]
    %v140 = vld [vmem:[%s1 + $0x378] sm:$0xff]
    %v141 = vld [vmem:[%s1 + $0x380] sm:$0xff]
    %v142 = vld [vmem:[%s1 + $0x388] sm:$0xff]
    %v143 = vld [vmem:[%s1 + $0x390] sm:$0xff]
    %v144 = vld [vmem:[%s1 + $0x398] sm:$0xff]
    %v145 = vld [vmem:[%s1 + $0x3a0] sm:$0xff]
    %v146 = vld [vmem:[%s1 + $0x3a8] sm:$0xff]
    %v147 = vld [vmem:[%s1 + $0x3b0] sm:$0xff]
    %v148 = vld [vmem:[%s1 + $0x3b8] sm:$0xff]
    %v149 = vld [vmem:[%s1 + $0x3c0] sm:$0xff]
    %v150 = vld [vmem:[%s1 + $0x3c8] sm:$0xff]
    %v151 = vld [vmem:[%s1 + $0x3d0] sm:$0xff]
    %v152 = vld [vmem:[%s1 + $0x3d8] sm:$0xff]
    %v153 = vld [vmem:[%s1 + $0x3e0] sm:$0xff]
    %v154 = vld [vmem:[%s1 + $0x3e8] sm:$0xff]
    %v155 = vld [vmem:[%s1 + $0x3f0] sm:$0xff]
    %v156 = vld [vmem:[%s1 + $0x3f8] sm:$0xff]
    %v157 = vld [vmem:[%s1 + $0x400] sm:$0xff]
    %v158 = vld [vmem:[%s1 + $0x408] sm:$0xff]
    %v159 = vld [vmem:[%s1 + $0x410] sm:$0xff]
    %v160 = vld [vmem:[%s1 + $0x418] sm:$0xff]
    %v161 = vld [vmem:[%s1 + $0x420] sm:$0xff]
    %v162 = vld [vmem:[%s1 + $0x428] sm:$0xff]
    %v163 = vld [vmem:[%s1 + $0x430] sm:$0xff]
    %v164 = vld [vmem:[%s1 + $0x438] sm:$0xff]
    %v165 = vld [vmem:[%s1 + $0x440] sm:$0xff]
    %v166 = vld [vmem:[%s1 + $0x448] sm:$0xff]
    %v167 = vld [vmem:[%s1 + $0x450] sm:$0xff]
    %v168 = vld [vmem:[%s1 + $0x458] sm:$0xff]
    %v169 = vld [vmem:[%s1 + $0x460] sm:$0xff]
    %v170 = vld [vmem:[%s1 + $0x468] sm:$0xff]
    %v171 = vld [vmem:[%s1 + $0x470] sm:$0xff]
    %v172 = vld [vmem:[%s1 + $0x478] sm:$0xff]
    %v173 = vld [vmem:[%s1 + $0x480] sm:$0xff]
    %v174 = vld [vmem:[%s1 + $0x488] sm:$0xff]
    %v175 = vld [vmem:[%s1 + $0x490] sm:$0xff]
    %v176 = vld [vmem:[%s1 + $0x498] sm:$0xff]
    %v177 = vld [vmem:[%s1 + $0x4a0] sm:$0xff]
    %v178 = vld [vmem:[%s1 + $0x4a8] sm:$0xff]
    %v179 = vld [vmem:[%s1 + $0x4b0] sm:$0xff]
    %v180 = vld [vmem:[%s1 + $0x4b8] sm:$0xff]
    %v181 = vld [vmem:[%s1 + $0x4c0] sm:$0xff]
    %v182 = vld [vmem:[%s1 + $0x4c8] sm:$0xff]
    %v183 = vld [vmem:[%s1 + $0x4d0] sm:$0xff]
    %v184 = vld [vmem:[%s1 + $0x4d8] sm:$0xff]
    %v185 = vld [vmem:[%s1 + $0x4e0] sm:$0xff]
    %v186 = vld [vmem:[%s1 + $0x4e8] sm:$0xff]
    %v187 = vld [vmem:[%s1 + $0x4f0] sm:$0xff]
    %v188 = vld [vmem:[%s1 + $0x4f8] sm:$0xff]
    %v189 = vld [vmem:[%s1 + $0x500] sm:$0xff]
    %v190 = vld [vmem:[%s1 + $0x508] sm:$0xff]
    %v191 = vld [vmem:[%s1 + $0x510] sm:$0xff]
    %v192 = vld [vmem:[%s1 + $0x518] sm:$0xff]
    %v193 = vld [vmem:[%s1 + $0x520] sm:$0xff]
    %v194 = vld [vmem:[%s1 + $0x528] sm:$0xff]
    %v195 = vld [vmem:[%s1 + $0x530] sm:$0xff]
    %v196 = vld [vmem:[%s1 + $0x538] sm:$0xff]
    %v197 = vld [vmem:[%s1 + $0x540] sm:$0xff]
    %v198 = vld [vmem:[%s1 + $0x548] sm:$0xff]
    %v199 = vld [vmem:[%s1 + $0x550] sm:$0xff]
    %v200 = vld [vmem:[%s1 + $0x558] sm:$0xff]
    %v201 = vld [vmem:[%s1 + $0x560] sm:$0xff]
    %v202 = vld [vmem:[%s1 + $0x568] sm:$0xff]
    %v203 = vld [vmem:[%s1 + $0x570] sm:$0xff]
    %v204 = vld [vmem:[%s1 + $0x578] sm:$0xff]
    %v205 = vld [vmem:[%s1 + $0x580] sm:$0xff]
    %v206 = vld [vmem:[%s1 + $0x588] sm:$0xff]
    %v207 = vld [vmem:[%s1 + $0x590] sm:$0xff]
    %v208 = vld [vmem:[%s1 + $0x598] sm:$0xff]
    %v209 = vld [vmem:[%s1 + $0x5a0] sm:$0xff]
    %v210 = vld [vmem:[%s1 + $0x5a8] sm:$0xff]
    %v211 = vld [vmem:[%s1 + $0x5b0] sm:$0xff]
    %v212 = vld [vmem:[%s1 + $0x5b8] sm:$0xff]
    %v213 = vld [vmem:[%s1 + $0x5c0] sm:$0xff]
    %v214 = vld [vmem:[%s1 + $0x5c8] sm:$0xff]
    %v215 = vld [vmem:[%s1 + $0x5d0] sm:$0xff]
    %v216 = vld [vmem:[%s1 + $0x5d8] sm:$0xff]
    %v217 = vld [vmem:[%s1 + $0x5e0] sm:$0xff]
    %v218 = vld [vmem:[%s1 + $0x5e8] sm:$0xff]
    %v219 = vld [vmem:[%s1 + $0x5f0] sm:$0xff]
    %v220 = vld [vmem:[%s1 + $0x5f8] sm:$0xff]
    %v221 = vld [vmem:[%s1 + $0x600] sm:$0xff]
    %v222 = vld [vmem:[%s1 + $0x608] sm:$0xff]
    %v223 = vld [vmem:[%s1 + $0x610] sm:$0xff]
    %v224 = vld [vmem:[%s1 + $0x618] sm:$0xff]
    %v225 = vld [vmem:[%s1 + $0x620] sm:$0xff]
    %v226 = vld [vmem:[%s1 + $0x628] sm:$0xff]
    %v227 = vld [vmem:[%s1 + $0x630] sm:$0xff]
    %v228 = vld [vmem:[%s1 + $0x638] sm:$0xff]
    %v229 = vld [vmem:[%s1 + $0x640] sm:$0xff]
    %v230 = vld [vmem:[%s1 + $0x648] sm:$0xff]
    %v231 = vld [vmem:[%s1 + $0x650] sm:$0xff]
    %v232 = vld [vmem:[%s1 + $0x658] sm:$0xff]
    %v233 = vld [vmem:[%s1 + $0x660] sm:$0xff]
    %v234 = vld [vmem:[%s1 + $0x668] sm:$0xff]
    %v235 = vld [vmem:[%s1 + $0x670] sm:$0xff]
    %v236 = vld [vmem:[%s1 + $0x678] sm:$0xff]
    %v237 = vld [vmem:[%s1 + $0x680] sm:$0xff]
    %v238 = vld [vmem:[%s1 + $0x688] sm:$0xff]
    %v239 = vld [vmem:[%s1 + $0x690] sm:$0xff]
    %v240 = vld [vmem:[%s1 + $0x698] sm:$0xff]
    %v241 = vld [vmem:[%s1 + $0x6a0] sm:$0xff]
    %v242 = vld [vmem:[%s1 + $0x6a8] sm:$0xff]
    %v243 = vld [vmem:[%s1 + $0x6b0] sm:$0xff]
    %v244 = vld [vmem:[%s1 + $0x6b8] sm:$0xff]
    %v245 = vld [vmem:[%s1 + $0x6c0] sm:$0xff]
    %v246 = vld [vmem:[%s1 + $0x6c8] sm:$0xff]
    %v247 = vld [vmem:[%s1 + $0x6d0] sm:$0xff]
    %v248 = vld [vmem:[%s1 + $0x6d8] sm:$0xff]
    %v249 = vld [vmem:[%s1 + $0x6e0] sm:$0xff]
    %v250 = vld [vmem:[%s1 + $0x6e8] sm:$0xff]
    %v251 = vld [vmem:[%s1 + $0x6f0] sm:$0xff]
    %v252 = vld [vmem:[%s1 + $0x6f8] sm:$0xff]
    %v253 = vld [vmem:[%s1 + $0x700] sm:$0xff]
    %v254 = vld [vmem:[%s1 + $0x708] sm:$0xff]
    %v255 = vld [vmem:[%s1 + $0x710] sm:$0xff]
    %v256 = vld [vmem:[%s1 + $0x718] sm:$0xff]
    %v257 = vld [vmem:[%s1 + $0x720] sm:$0xff]
    %v258 = vld [vmem:[%s1 + $0x728] sm:$0xff]
    %v259 = vld [vmem:[%s1 + $0x730] sm:$0xff]
    %v260 = vld [vmem:[%s1 + $0x738] sm:$0xff]
    %v261 = vld [vmem:[%s1 + $0x740] sm:$0xff]
    %v262 = vld [vmem:[%s1 + $0x748] sm:$0xff]
    %v263 = vld [vmem:[%s1 + $0x750] sm:$0xff]
    %v264 = vld [vmem:[%s1 + $0x758] sm:$0xff]
    %v265 = vld [vmem:[%s1 + $0x760] sm:$0xff]
    %v266 = vld [vmem:[%s1 + $0x768] sm:$0xff]
    %v267 = vld [vmem:[%s1 + $0x770] sm:$0xff]
    %v268 = vld [vmem:[%s1 + $0x778] sm:$0xff]
    %v269 = vld [vmem:[%s1 + $0x780] sm:$0xff]
    %v270 = vld [vmem:[%s1 + $0x788] sm:$0xff]
    %v271 = vld [vmem:[%s1 + $0x790] sm:$0xff]
    %v272 = vld [vmem:[%s1 + $0x798] sm:$0xff]
    %v273 = vld [vmem:[%s1 + $0x7a0] sm:$0xff]
    %v274 = vld [vmem:[%s1 + $0x7a8] sm:$0xff]
    %v275 = vld [vmem:[%s1 + $0x7b0] sm:$0xff]
    %v276 = vld [vmem:[%s1 + $0x7b8] sm:$0xff]
    %v277 = vld [vmem:[%s1 + $0x7c0] sm:$0xff]
    %v278 = vld [vmem:[%s1 + $0x7c8] sm:$0xff]
    %v279 = vld [vmem:[%s1 + $0x7d0] sm:$0xff]
    %v280 = vld [vmem:[%s1 + $0x7d8] sm:$0xff]
    %v281 = vld [vmem:[%s1 + $0x7e0] sm:$0xff]
    %v282 = vld [vmem:[%s1 + $0x7e8] sm:$0xff]
    %v283 = vld [vmem:[%s1 + $0x7f0] sm:$0xff]
    %v284 = vld [vmem:[%s1 + $0x7f8] sm:$0xff]
    %v285 = vld [vmem:[%s1 + $0x800] sm:$0xff]
    %v286 = vld [vmem:[%s1 + $0x808] sm:$0xff]
    %v287 = vld [vmem:[%s1 + $0x810] sm:$0xff]
    %v288 = vld [vmem:[%s1 + $0x818] sm:$0xff]
    %v289 = vld [vmem:[%s1 + $0x820] sm:$0xff]
    %v290 = vld [vmem:[%s1 + $0x828] sm:$0xff]
    %v291 = vld [vmem:[%s1 + $0x830] sm:$0xff]
    %v292 = vld [vmem:[%s1 + $0x838] sm:$0xff]
    %v293 = vld [vmem:[%s1 + $0x840] sm:$0xff]
    %v294 = vld [vmem:[%s1 + $0x848] sm:$0xff]
    %v295 = vld [vmem:[%s1 + $0x850] sm:$0xff]
    %v296 = vld [vmem:[%s1 + $0x858] sm:$0xff]
    %v297 = vld [vmem:[%s1 + $0x860] sm:$0xff]
    %v298 = vld [vmem:[%s1 + $0x868] sm:$0xff]
    %v299 = vld [vmem:[%s1 + $0x870] sm:$0xff]
    %v300 = vld [vmem:[%s1 + $0x878] sm:$0xff]
    %v301 = vld [vmem:[%s1 + $0x880] sm:$0xff]
    %v302 = vld [vmem:[%s1 + $0x888] sm:$0xff]
    %v303 = vld [vmem:[%s1 + $0x890] sm:$0xff]
    %v304 = vld [vmem:[%s1 + $0x898] sm:$0xff]
    %v305 = vld [vmem:[%s1 + $0x8a0] sm:$0xff]
    %v306 = vld [vmem:[%s1 + $0x8a8] sm:$0xff]
    %v307 = vld [vmem:[%s1 + $0x8b0] sm:$0xff]
    %v308 = vld [vmem:[%s1 + $0x8b8] sm:$0xff]
    %v309 = vld [vmem:[%s1 + $0x8c0] sm:$0xff]
    %v310 = vld [vmem:[%s1 + $0x8c8] sm:$0xff]
    %v311 = vld [vmem:[%s1 + $0x8d0] sm:$0xff]
    %v312 = vld [vmem:[%s1 + $0x8d8] sm:$0xff]
    %v313 = vld [vmem:[%s1 + $0x8e0] sm:$0xff]
    %v314 = vld [vmem:[%s1 + $0x8e8] sm:$0xff]
    %v315 = vld [vmem:[%s1 + $0x8f0] sm:$0xff]
    %v316 = vld [vmem:[%s1 + $0x8f8] sm:$0xff]
    %v317 = vld [vmem:[%s1 + $0x900] sm:$0xff]
    %v318 = vld [vmem:[%s1 + $0x908] sm:$0xff]
    %v319 = vld [vmem:[%s1 + $0x910] sm:$0xff]
    %v320 = vld [vmem:[%s1 + $0x918] sm:$0xff]
    %v321 = vld [vmem:[%s1 + $0x920] sm:$0xff]
    %v322 = vld [vmem:[%s1 + $0x928] sm:$0xff]
    %v323 = vld [vmem:[%s1 + $0x930] sm:$0xff]
    %v324 = vld [vmem:[%s1 + $0x938] sm:$0xff]
    %v325 = vld [vmem:[%s1 + $0x940] sm:$0xff]
    %v326 = vld [vmem:[%s1 + $0x948] sm:$0xff]
    %v327 = vld [vmem:[%s1 + $0x950] sm:$0xff]
    %v328 = vld [vmem:[%s1 + $0x958] sm:$0xff]
    %v329 = vld [vmem:[%s1 + $0x960] sm:$0xff]
    %v330 = vld [vmem:[%s1 + $0x968] sm:$0xff]
    %v331 = vld [vmem:[%s1 + $0x970] sm:$0xff]
    %v332 = vld [vmem:[%s1 + $0x978] sm:$0xff]
    %v333 = vld [vmem:[%s1 + $0x980] sm:$0xff]
    %v334 = vld [vmem:[%s1 + $0x988] sm:$0xff]
    %v335 = vld [vmem:[%s1 + $0x990] sm:$0xff]
    %v336 = vld [vmem:[%s1 + $0x998] sm:$0xff]
    %v337 = vld [vmem:[%s1 + $0x9a0] sm:$0xff]
    %v338 = vld [vmem:[%s1 + $0x9a8] sm:$0xff]
    %v339 = vld [vmem:[%s1 + $0x9b0] sm:$0xff]
    %v340 = vld [vmem:[%s1 + $0x9b8] sm:$0xff]
    %v341 = vld [vmem:[%s1 + $0x9c0] sm:$0xff]
    %v342 = vld [vmem:[%s1 + $0x9c8] sm:$0xff]
    %v343 = vld [vmem:[%s1 + $0x9d0] sm:$0xff]
    %v344 = vld [vmem:[%s1 + $0x9d8] sm:$0xff]
    %v345 = vld [vmem:[%s1 + $0x9e0] sm:$0xff]
    %v346 = vld [vmem:[%s1 + $0x9e8] sm:$0xff]
    %v347 = vld [vmem:[%s1 + $0x9f0] sm:$0xff]
    %v348 = vld [vmem:[%s1 + $0x9f8] sm:$0xff]
    %v349 = vld [vmem:[%s1 + $0xa00] sm:$0xff]
    %v350 = vld [vmem:[%s1 + $0xa08] sm:$0xff]
    %v351 = vld [vmem:[%s1 + $0xa10] sm:$0xff]
    %v352 = vld [vmem:[%s1 + $0xa18] sm:$0xff]
    %v353 = vld [vmem:[%s1 + $0xa20] sm:$0xff]
    %v354 = vld [vmem:[%s1 + $0xa28] sm:$0xff]
    %v355 = vld [vmem:[%s1 + $0xa30] sm:$0xff]
    %v356 = vld [vmem:[%s1 + $0xa38] sm:$0xff]
    %v357 = vld [vmem:[%s1 + $0xa40] sm:$0xff]
    %v358 = vld [vmem:[%s1 + $0xa48] sm:$0xff]
    %v359 = vld [vmem:[%s1 + $0xa50] sm:$0xff]
    %v360 = vld [vmem:[%s1 + $0xa58] sm:$0xff]
    %v361 = vld [vmem:[%s1 + $0xa60] sm:$0xff]
    %v362 = vld [vmem:[%s1 + $0xa68] sm:$0xff]
    %v363 = vld [vmem:[%s1 + $0xa70] sm:$0xff]
    %v364 = vld [vmem:[%s1 + $0xa78] sm:$0xff]
    %v365 = vld [vmem:[%s1 + $0xa80] sm:$0xff]
    %v366 = vld [vmem:[%s1 + $0xa88] sm:$0xff]
    %v367 = vld [vmem:[%s1 + $0xa90] sm:$0xff]
    %v368 = vld [vmem:[%s1 + $0xa98] sm:$0xff]
    %v369 = vld [vmem:[%s1 + $0xaa0] sm:$0xff]
    %v370 = vld [vmem:[%s1 + $0xaa8] sm:$0xff]
    %v371 = vld [vmem:[%s1 + $0xab0] sm:$0xff]
    %v372 = vld [vmem:[%s1 + $0xab8] sm:$0xff]
    %v373 = vld [vmem:[%s1 + $0xac0] sm:$0xff]
    %v374 = vld [vmem:[%s1 + $0xac8] sm:$0xff]
    %v375 = vld [vmem:[%s1 + $0xad0] sm:$0xff]
    %v376 = vld [vmem:[%s1 + $0xad8] sm:$0xff]
    %v377 = vld [vmem:[%s1 + $0xae0] sm:$0xff]
    %v378 = vld [vmem:[%s1 + $0xae8] sm:$0xff]
    %v379 = vld [vmem:[%s1 + $0xaf0] sm:$0xff]
    %v380 = vld [vmem:[%s1 + $0xaf8] sm:$0xff]
    %v381 = vld [vmem:[%s1 + $0xb00] sm:$0xff]
    %v382 = vld [vmem:[%s1 + $0xb08] sm:$0xff]
    %v383 = vld [vmem:[%s1 + $0xb10] sm:$0xff]
    %v384 = vld [vmem:[%s1 + $0xb18] sm:$0xff]
    %v385 = vld [vmem:[%s1 + $0xb20] sm:$0xff]
    %v386 = vld [vmem:[%s1 + $0xb28] sm:$0xff]
    %v387 = vld [vmem:[%s1 + $0xb30] sm:$0xff]
    %v388 = vld [vmem:[%s1 + $0xb38] sm:$0xff]
    %v389 = vld [vmem:[%s1 + $0xb40] sm:$0xff]
    %v390 = vld [vmem:[%s1 + $0xb48] sm:$0xff]
    %v391 = vld [vmem:[%s1 + $0xb50] sm:$0xff]
    %v392 = vld [vmem:[%s1 + $0xb58] sm:$0xff]
    %v393 = vld [vmem:[%s1 + $0xb60] sm:$0xff]
    %v394 = vld [vmem:[%s1 + $0xb68] sm:$0xff]
    %v395 = vld [vmem:[%s1 + $0xb70] sm:$0xff]
    %v396 = vld [vmem:[%s1 + $0xb78] sm:$0xff]
    %v397 = vld [vmem:[%s1 + $0xb80] sm:$0xff]
    %v398 = vld [vmem:[%s1 + $0xb88] sm:$0xff]
    %v399 = vld [vmem:[%s1 + $0xb90] sm:$0xff]
    %v400 = vld [vmem:[%s1 + $0xb98] sm:$0xff]
    %v401 = vld [vmem:[%s1 + $0xba0] sm:$0xff]
    %v402 = vld [vmem:[%s1 + $0xba8] sm:$0xff]
    %v403 = vld [vmem:[%s1 + $0xbb0] sm:$0xff]
    %v404 = vld [vmem:[%s1 + $0xbb8] sm:$0xff]
    %v405 = vld [vmem:[%s1 + $0xbc0] sm:$0xff]
    %v406 = vld [vmem:[%s1 + $0xbc8] sm:$0xff]
    %v407 = vld [vmem:[%s1 + $0xbd0] sm:$0xff]
    %v408 = vld [vmem:[%s1 + $0xbd8] sm:$0xff]
    %v409 = vld [vmem:[%s1 + $0xbe0] sm:$0xff]
    %v410 = vld [vmem:[%s1 + $0xbe8] sm:$0xff]
    %v411 = vld [vmem:[%s1 + $0xbf0] sm:$0xff]
    %v412 = vld [vmem:[%s1 + $0xbf8] sm:$0xff]
    %v413 = vld [vmem:[%s1 + $0xc00] sm:$0xff]
    %v414 = vld [vmem:[%s1 + $0xc08] sm:$0xff]
    %v415 = vld [vmem:[%s1 + $0xc10] sm:$0xff]
    %v416 = vld [vmem:[%s1 + $0xc18] sm:$0xff]
    %v417 = vld [vmem:[%s1 + $0xc20] sm:$0xff]
    %v418 = vld [vmem:[%s1 + $0xc28] sm:$0xff]
    %v419 = vld [vmem:[%s1 + $0xc30] sm:$0xff]
    %v420 = vld [vmem:[%s1 + $0xc38] sm:$0xff]
    %v421 = vld [vmem:[%s1 + $0xc40] sm:$0xff]
    %v422 = vld [vmem:[%s1 + $0xc48] sm:$0xff]
    %v423 = vld [vmem:[%s1 + $0xc50] sm:$0xff]
    %v424 = vld [vmem:[%s1 + $0xc58] sm:$0xff]
    %v425 = vld [vmem:[%s1 + $0xc60] sm:$0xff]
    %v426 = vld [vmem:[%s1 + $0xc68] sm:$0xff]
    %v427 = vld [vmem:[%s1 + $0xc70] sm:$0xff]
    %v428 = vld [vmem:[%s1 + $0xc78] sm:$0xff]
    %v429 = vld [vmem:[%s1 + $0xc80] sm:$0xff]
    %v430 = vld [vmem:[%s1 + $0xc88] sm:$0xff]
    %v431 = vld [vmem:[%s1 + $0xc90] sm:$0xff]
    %v432 = vld [vmem:[%s1 + $0xc98] sm:$0xff]
    %v433 = vld [vmem:[%s1 + $0xca0] sm:$0xff]
    %v434 = vld [vmem:[%s1 + $0xca8] sm:$0xff]
    %v435 = vld [vmem:[%s1 + $0xcb0] sm:$0xff]
    %v436 = vld [vmem:[%s1 + $0xcb8] sm:$0xff]
    %v437 = vld [vmem:[%s1 + $0xcc0] sm:$0xff]
    %v438 = vld [vmem:[%s1 + $0xcc8] sm:$0xff]
    %v439 = vld [vmem:[%s1 + $0xcd0] sm:$0xff]
    %v440 = vld [vmem:[%s1 + $0xcd8] sm:$0xff]
    %v441 = vld [vmem:[%s1 + $0xce0] sm:$0xff]
    %v442 = vld [vmem:[%s1 + $0xce8] sm:$0xff]
    %v443 = vld [vmem:[%s1 + $0xcf0] sm:$0xff]
    %v444 = vld [vmem:[%s1 + $0xcf8] sm:$0xff]
    %v445 = vld [vmem:[%s1 + $0xd00] sm:$0xff]
    %v446 = vld [vmem:[%s1 + $0xd08] sm:$0xff]
    %v447 = vld [vmem:[%s1 + $0xd10] sm:$0xff]
    %v448 = vld [vmem:[%s1 + $0xd18] sm:$0xff]
    %v449 = vld [vmem:[%s1 + $0xd20] sm:$0xff]
    %v450 = vld [vmem:[%s1 + $0xd28] sm:$0xff]
    %v451 = vld [vmem:[%s1 + $0xd30] sm:$0xff]
    %v452 = vld [vmem:[%s1 + $0xd38] sm:$0xff]
    %v453 = vld [vmem:[%s1 + $0xd40] sm:$0xff]
    %v454 = vld [vmem:[%s1 + $0xd48] sm:$0xff]
    %v455 = vld [vmem:[%s1 + $0xd50] sm:$0xff]
    %v456 = vld [vmem:[%s1 + $0xd58] sm:$0xff]
    %v457 = vld [vmem:[%s1 + $0xd60] sm:$0xff]
    %v458 = vld [vmem:[%s1 + $0xd68] sm:$0xff]
    %v459 = vld [vmem:[%s1 + $0xd70] sm:$0xff]
    %v460 = vld [vmem:[%s1 + $0xd78] sm:$0xff]
    %v461 = vld [vmem:[%s1 + $0xd80] sm:$0xff]
    %v462 = vld [vmem:[%s1 + $0xd88] sm:$0xff]
    %v463 = vld [vmem:[%s1 + $0xd90] sm:$0xff]
    %v464 = vld [vmem:[%s1 + $0xd98] sm:$0xff]
    %v465 = vld [vmem:[%s1 + $0xda0] sm:$0xff]
    %v466 = vld [vmem:[%s1 + $0xda8] sm:$0xff]
    %v467 = vld [vmem:[%s1 + $0xdb0] sm:$0xff]
    %v468 = vld [vmem:[%s1 + $0xdb8] sm:$0xff]
    %v469 = vld [vmem:[%s1 + $0xdc0] sm:$0xff]
    %v470 = vld [vmem:[%s1 + $0xdc8] sm:$0xff]
    %v471 = vld [vmem:[%s1 + $0xdd0] sm:$0xff]
    %v472 = vld [vmem:[%s1 + $0xdd8] sm:$0xff]
    %v473 = vld [vmem:[%s1 + $0xde0] sm:$0xff]
    %v474 = vld [vmem:[%s1 + $0xde8] sm:$0xff]
    %v475 = vld [vmem:[%s1 + $0xdf0] sm:$0xff]
    %v476 = vld [vmem:[%s1 + $0xdf8] sm:$0xff]
    %v477 = vld [vmem:[%s1 + $0xe00] sm:$0xff]
    %v478 = vld [vmem:[%s1 + $0xe08] sm:$0xff]
    %v479 = vld [vmem:[%s1 + $0xe10] sm:$0xff]
    %v480 = vld [vmem:[%s1 + $0xe18] sm:$0xff]
    %v481 = vld [vmem:[%s1 + $0xe20] sm:$0xff]
    %v482 = vld [vmem:[%s1 + $0xe28] sm:$0xff]
    %v483 = vld [vmem:[%s1 + $0xe30] sm:$0xff]
    %v484 = vld [vmem:[%s1 + $0xe38] sm:$0xff]
    %v485 = vld [vmem:[%s1 + $0xe40] sm:$0xff]
    %v486 = vld [vmem:[%s1 + $0xe48] sm:$0xff]
    %v487 = vld [vmem:[%s1 + $0xe50] sm:$0xff]
    %v488 = vld [vmem:[%s1 + $0xe58] sm:$0xff]
    %v489 = vld [vmem:[%s1 + $0xe60] sm:$0xff]
    %v490 = vld [vmem:[%s1 + $0xe68] sm:$0xff]
    %v491 = vld [vmem:[%s1 + $0xe70] sm:$0xff]
    %v492 = vld [vmem:[%s1 + $0xe78] sm:$0xff]
    %v493 = vld [vmem:[%s1 + $0xe80] sm:$0xff]
    %v494 = vld [vmem:[%s1 + $0xe88] sm:$0xff]
    %v495 = vld [vmem:[%s1 + $0xe90] sm:$0xff]
    %v496 = vld [vmem:[%s1 + $0xe98] sm:$0xff]
    %v497 = vld [vmem:[%s1 + $0xea0] sm:$0xff]
    %v498 = vld [vmem:[%s1 + $0xea8] sm:$0xff]
    %v499 = vld [vmem:[%s1 + $0xeb0] sm:$0xff]
    %v500 = vld [vmem:[%s1 + $0xeb8] sm:$0xff]
    %v501 = vld [vmem:[%s1 + $0xec0] sm:$0xff]
    %v502 = vld [vmem:[%s1 + $0xec8] sm:$0xff]
    %v503 = vld [vmem:[%s1 + $0xed0] sm:$0xff]
    %v504 = vld [vmem:[%s1 + $0xed8] sm:$0xff]
    %v505 = vld [vmem:[%s1 + $0xee0] sm:$0xff]
    %v506 = vld [vmem:[%s1 + $0xee8] sm:$0xff]
    %v507 = vld [vmem:[%s1 + $0xef0] sm:$0xff]
    %v508 = vld [vmem:[%s1 + $0xef8] sm:$0xff]
    %v509 = vld [vmem:[%s1 + $0xf00] sm:$0xff]
    %v510 = vld [vmem:[%s1 + $0xf08] sm:$0xff]
    %v511 = vld [vmem:[%s1 + $0xf10] sm:$0xff]
    %v512 = vld [vmem:[%s1 + $0xf18] sm:$0xff]
    %v513 = vld [vmem:[%s1 + $0xf20] sm:$0xff]
    %v514 = vld [vmem:[%s1 + $0xf28] sm:$0xff]
    %v515 = vld [vmem:[%s1 + $0xf30] sm:$0xff]
    %v516 = vld [vmem:[%s1 + $0xf38] sm:$0xff]
    %v517 = vld [vmem:[%s1 + $0xf40] sm:$0xff]
    %v518 = vld [vmem:[%s1 + $0xf48] sm:$0xff]
    %v519 = vld [vmem:[%s1 + $0xf50] sm:$0xff]
    %v520 = vld [vmem:[%s1 + $0xf58] sm:$0xff]
    %v521 = vld [vmem:[%s1 + $0xf60] sm:$0xff]
    %v522 = vld [vmem:[%s1 + $0xf68] sm:$0xff]
    %v523 = vld [vmem:[%s1 + $0xf70] sm:$0xff]
    %v524 = vld [vmem:[%s1 + $0xf78] sm:$0xff]
    %v525 = vld [vmem:[%s1 + $0xf80] sm:$0xff]
    %v526 = vld [vmem:[%s1 + $0xf88] sm:$0xff]
    %v527 = vld [vmem:[%s1 + $0xf90] sm:$0xff]
    %v528 = vld [vmem:[%s1 + $0xf98] sm:$0xff]
    %v529 = vld [vmem:[%s1 + $0xfa0] sm:$0xff]
    %v530 = vld [vmem:[%s1 + $0xfa8] sm:$0xff]
    %v531 = vld [vmem:[%s1 + $0xfb0] sm:$0xff]
    %v532 = vld [vmem:[%s1 + $0xfb8] sm:$0xff]
    %v533 = vld [vmem:[%s1 + $0xfc0] sm:$0xff]
    %v534 = vld [vmem:[%s1 + $0xfc8] sm:$0xff]
    %v535 = vld [vmem:[%s1 + $0xfd0] sm:$0xff]
    %v536 = vld [vmem:[%s1 + $0xfd8] sm:$0xff]
    %v537 = vld [vmem:[%s1 + $0xfe0] sm:$0xff]
    %v538 = vld [vmem:[%s1 + $0xfe8] sm:$0xff]
    %v539 = vld [vmem:[%s1 + $0xff0] sm:$0xff]
    %v540 = vld [vmem:[%s1 + $0xff8] sm:$0xff]
    %v541 = vld [vmem:[%s2] sm:$0xf]
    %v543 = vlaneseq
    %v544 = vshrl.u32 %v543, 7
    %v545 = vsub.s32 0, %v544
    %v546 = vrot.slane %v541, %v545
    %v547 = vlaneseq
    %v548 = vshrl.u32 %v547, 7
    %v549 = vsub.s32 1, %v548
    %v550 = vrot.slane %v541, %v549
    %v551 = vlaneseq
    %v552 = vshrl.u32 %v551, 7
    %v553 = vsub.s32 2, %v552
    %v554 = vrot.slane %v541, %v553
    %v555 = vlaneseq
    %v556 = vshrl.u32 %v555, 7
    %v557 = vsub.s32 3, %v556
    %v558 = vrot.slane %v541, %v557
    %v565 = vcombine.high %v27, %v27
    %v567 = vunpack.c.l.s4 1983009808
    %v568 = vunpack.c.0.s8 %v567
    %v569 = vlaneseq
    %v570 = vshrl.u32 %v569, 7
    %v571 = vsub.s32 %v568, %v570
    %v572 = vrot.slane %v27, %v571
    %v574 = vunpack.c.l.s4 1983009808
    %v575 = vunpack.c.0.s8 %v574
    %v576 = vlaneseq
    %v577 = vshrl.u32 %v576, 7
    %v578 = vsub.s32 %v575, %v577
    %v579 = vrot.slane %v565, %v578
    %v580 = vcombine.high %v572, %v572
    %v581 = vcombine.high %v579, %v579
    %v582 = vcombine.high %v28, %v28
    %v584 = vunpack.c.l.s4 1983009808
    %v585 = vunpack.c.0.s8 %v584
    %v586 = vlaneseq
    %v587 = vshrl.u32 %v586, 7
    %v588 = vsub.s32 %v585, %v587
    %v589 = vrot.slane %v28, %v588
    %v591 = vunpack.c.l.s4 1983009808
    %v592 = vunpack.c.0.s8 %v591
    %v593 = vlaneseq
    %v594 = vshrl.u32 %v593, 7
    %v595 = vsub.s32 %v592, %v594
    %v596 = vrot.slane %v582, %v595
    %v597 = vcombine.high %v589, %v589
    %v598 = vcombine.high %v596, %v596
    %607 = vmatprep.subr.mxu0 %v90
    %608 = vmatpush1.msra.mxu0 %v89
    %609 = vmatprep.subr.mxu0 %v86
    %610 = vmatpush1.msra.mxu0 %v85
    %611 = vmatprep.subr.mxu0 %v82
    %612 = vmatpush1.msra.mxu0 %v81
    %613 = vmatprep.subr.mxu0 %v78
    %614 = vmatpush1.msra.mxu0 %v77
    %615 = vmatprep.subr.mxu0 %v74
    %616 = vmatpush1.msra.mxu0 %v73
    %617 = vmatprep.subr.mxu0 %v70
    %618 = vmatpush1.msra.mxu0 %v69
    %619 = vmatprep.subr.mxu0 %v66
    %620 = vmatpush1.msra.mxu0 %v65
    %621 = vmatprep.subr.mxu0 %v62
    %622 = vmatpush1.msra.mxu0 %v61
    %623 = vmatprep.subr.mxu0 %v58
    %624 = vmatpush1.msra.mxu0 %v57
    %625 = vmatprep.subr.mxu0 %v54
    %626 = vmatpush1.msra.mxu0 %v53
    %627 = vmatprep.subr.mxu0 %v50
    %628 = vmatpush1.msra.mxu0 %v49
    %629 = vmatprep.subr.mxu0 %v46
    %630 = vmatpush1.msra.mxu0 %v45
    %631 = vmatprep.subr.mxu0 %v42
    %632 = vmatpush1.msra.mxu0 %v41
    %633 = vmatprep.subr.mxu0 %v38
    %634 = vmatpush1.msra.mxu0 %v37
    %635 = vmatprep.subr.mxu0 %v34
    %636 = vmatpush1.msra.mxu0 %v33
    %637 = vmatprep.subr.mxu0 %v30
    %638 = vmatpush1.msra.mxu0 %v29
    %639 = vmatprep.subr.mxu0 %v154
    %640 = vmatpush2.msra.mxu0 %v153
    %641 = vmatprep.subr.mxu0 %v150
    %642 = vmatpush2.msra.mxu0 %v149
    %643 = vmatprep.subr.mxu0 %v146
    %644 = vmatpush2.msra.mxu0 %v145
    %645 = vmatprep.subr.mxu0 %v142
    %646 = vmatpush2.msra.mxu0 %v141
    %647 = vmatprep.subr.mxu0 %v138
    %648 = vmatpush2.msra.mxu0 %v137
    %649 = vmatprep.subr.mxu0 %v134
    %650 = vmatpush2.msra.mxu0 %v133
    %651 = vmatprep.subr.mxu0 %v130
    %652 = vmatpush2.msra.mxu0 %v129
    %653 = vmatprep.subr.mxu0 %v126
    %654 = vmatpush2.msra.mxu0 %v125
    %655 = vmatprep.subr.mxu0 %v122
    %656 = vmatpush2.msra.mxu0 %v121
    %657 = vmatprep.subr.mxu0 %v118
    %658 = vmatpush2.msra.mxu0 %v117
    %659 = vmatprep.subr.mxu0 %v114
    %660 = vmatpush2.msra.mxu0 %v113
    %661 = vmatprep.subr.mxu0 %v110
    %662 = vmatpush2.msra.mxu0 %v109
    %663 = vmatprep.subr.mxu0 %v106
    %664 = vmatpush2.msra.mxu0 %v105
    %665 = vmatprep.subr.mxu0 %v102
    %666 = vmatpush2.msra.mxu0 %v101
    %667 = vmatprep.subr.mxu0 %v98
    %668 = vmatpush2.msra.mxu0 %v97
    %669 = vmatprep.subr.mxu0 %v94
    %670 = vmatpush2.msra.mxu0 %v93
    %671 = vmatprep.mubr.f32.mxu0 %v580
    %672 = vmatmul.mubr.f32.gmra.mxu0 %v572
    %v673 = vpop.f32.mrf.mxu0
    %v674 = vadd.f32 %v546, %v673
    %v675 = vpop.f32.mrf.mxu0
    %v676 = vadd.f32 %v550, %v675
    %677 = vdwg.mxu0
    %678 = vmatprep.subr.mxu0 %v218
    %679 = vmatpush1.msra.mxu0 %v217
    %680 = vmatprep.subr.mxu0 %v214
    %681 = vmatpush1.msra.mxu0 %v213
    %682 = vmatprep.subr.mxu0 %v210
    %683 = vmatpush1.msra.mxu0 %v209
    %684 = vmatprep.subr.mxu0 %v206
    %685 = vmatpush1.msra.mxu0 %v205
    %686 = vmatprep.subr.mxu0 %v202
    %687 = vmatpush1.msra.mxu0 %v201
    %688 = vmatprep.subr.mxu0 %v198
    %689 = vmatpush1.msra.mxu0 %v197
    %690 = vmatprep.subr.mxu0 %v194
    %691 = vmatpush1.msra.mxu0 %v193
    %692 = vmatprep.subr.mxu0 %v190
    %693 = vmatpush1.msra.mxu0 %v189
    %694 = vmatprep.subr.mxu0 %v186
    %695 = vmatpush1.msra.mxu0 %v185
    %696 = vmatprep.subr.mxu0 %v182
    %697 = vmatpush1.msra.mxu0 %v181
    %698 = vmatprep.subr.mxu0 %v178
    %699 = vmatpush1.msra.mxu0 %v177
    %700 = vmatprep.subr.mxu0 %v174
    %701 = vmatpush1.msra.mxu0 %v173
    %702 = vmatprep.subr.mxu0 %v170
    %703 = vmatpush1.msra.mxu0 %v169
    %704 = vmatprep.subr.mxu0 %v166
    %705 = vmatpush1.msra.mxu0 %v165
    %706 = vmatprep.subr.mxu0 %v162
    %707 = vmatpush1.msra.mxu0 %v161
    %708 = vmatprep.subr.mxu0 %v158
    %709 = vmatpush1.msra.mxu0 %v157
    %710 = vmatprep.subr.mxu0 %v282
    %711 = vmatpush2.msra.mxu0 %v281
    %712 = vmatprep.subr.mxu0 %v278
    %713 = vmatpush2.msra.mxu0 %v277
    %714 = vmatprep.subr.mxu0 %v274
    %715 = vmatpush2.msra.mxu0 %v273
    %716 = vmatprep.subr.mxu0 %v270
    %717 = vmatpush2.msra.mxu0 %v269
    %718 = vmatprep.subr.mxu0 %v266
    %719 = vmatpush2.msra.mxu0 %v265
    %720 = vmatprep.subr.mxu0 %v262
    %721 = vmatpush2.msra.mxu0 %v261
    %722 = vmatprep.subr.mxu0 %v258
    %723 = vmatpush2.msra.mxu0 %v257
    %724 = vmatprep.subr.mxu0 %v254
    %725 = vmatpush2.msra.mxu0 %v253
    %726 = vmatprep.subr.mxu0 %v250
    %727 = vmatpush2.msra.mxu0 %v249
    %728 = vmatprep.subr.mxu0 %v246
    %729 = vmatpush2.msra.mxu0 %v245
    %730 = vmatprep.subr.mxu0 %v242
    %731 = vmatpush2.msra.mxu0 %v241
    %732 = vmatprep.subr.mxu0 %v238
    %733 = vmatpush2.msra.mxu0 %v237
    %734 = vmatprep.subr.mxu0 %v234
    %735 = vmatpush2.msra.mxu0 %v233
    %736 = vmatprep.subr.mxu0 %v230
    %737 = vmatpush2.msra.mxu0 %v229
    %738 = vmatprep.subr.mxu0 %v226
    %739 = vmatpush2.msra.mxu0 %v225
    %740 = vmatprep.subr.mxu0 %v222
    %741 = vmatpush2.msra.mxu0 %v221
    %742 = vmatprep.mubr.f32.mxu0 %v581
    %743 = vmatmul.mubr.f32.gmra.mxu0 %v579
    %v744 = vpop.f32.mrf.mxu0
    %v745 = vadd.f32 %v674, %v744
    %v746 = vpop.f32.mrf.mxu0
    %v747 = vadd.f32 %v676, %v746
    %748 = vdwg.mxu0
    %749 = vmatprep.subr.mxu0 %v346
    %750 = vmatpush1.msra.mxu0 %v345
    %751 = vmatprep.subr.mxu0 %v342
    %752 = vmatpush1.msra.mxu0 %v341
    %753 = vmatprep.subr.mxu0 %v338
    %754 = vmatpush1.msra.mxu0 %v337
    %755 = vmatprep.subr.mxu0 %v334
    %756 = vmatpush1.msra.mxu0 %v333
    %757 = vmatprep.subr.mxu0 %v330
    %758 = vmatpush1.msra.mxu0 %v329
    %759 = vmatprep.subr.mxu0 %v326
    %760 = vmatpush1.msra.mxu0 %v325
    %761 = vmatprep.subr.mxu0 %v322
    %762 = vmatpush1.msra.mxu0 %v321
    %763 = vmatprep.subr.mxu0 %v318
    %764 = vmatpush1.msra.mxu0 %v317
    %765 = vmatprep.subr.mxu0 %v314
    %766 = vmatpush1.msra.mxu0 %v313
    %767 = vmatprep.subr.mxu0 %v310
    %768 = vmatpush1.msra.mxu0 %v309
    %769 = vmatprep.subr.mxu0 %v306
    %770 = vmatpush1.msra.mxu0 %v305
    %771 = vmatprep.subr.mxu0 %v302
    %772 = vmatpush1.msra.mxu0 %v301
    %773 = vmatprep.subr.mxu0 %v298
    %774 = vmatpush1.msra.mxu0 %v297
    %775 = vmatprep.subr.mxu0 %v294
    %776 = vmatpush1.msra.mxu0 %v293
    %777 = vmatprep.subr.mxu0 %v290
    %778 = vmatpush1.msra.mxu0 %v289
    %779 = vmatprep.subr.mxu0 %v286
    %780 = vmatpush1.msra.mxu0 %v285
    %781 = vmatprep.subr.mxu0 %v410
    %782 = vmatpush2.msra.mxu0 %v409
    %783 = vmatprep.subr.mxu0 %v406
    %784 = vmatpush2.msra.mxu0 %v405
    %785 = vmatprep.subr.mxu0 %v402
    %786 = vmatpush2.msra.mxu0 %v401
    %787 = vmatprep.subr.mxu0 %v398
    %788 = vmatpush2.msra.mxu0 %v397
    %789 = vmatprep.subr.mxu0 %v394
    %790 = vmatpush2.msra.mxu0 %v393
    %791 = vmatprep.subr.mxu0 %v390
    %792 = vmatpush2.msra.mxu0 %v389
    %793 = vmatprep.subr.mxu0 %v386
    %794 = vmatpush2.msra.mxu0 %v385
    %795 = vmatprep.subr.mxu0 %v382
    %796 = vmatpush2.msra.mxu0 %v381
    %797 = vmatprep.subr.mxu0 %v378
    %798 = vmatpush2.msra.mxu0 %v377
    %799 = vmatprep.subr.mxu0 %v374
    %800 = vmatpush2.msra.mxu0 %v373
    %801 = vmatprep.subr.mxu0 %v370
    %802 = vmatpush2.msra.mxu0 %v369
    %803 = vmatprep.subr.mxu0 %v366
    %804 = vmatpush2.msra.mxu0 %v365
    %805 = vmatprep.subr.mxu0 %v362
    %806 = vmatpush2.msra.mxu0 %v361
    %807 = vmatprep.subr.mxu0 %v358
    %808 = vmatpush2.msra.mxu0 %v357
    %809 = vmatprep.subr.mxu0 %v354
    %810 = vmatpush2.msra.mxu0 %v353
    %811 = vmatprep.subr.mxu0 %v350
    %812 = vmatpush2.msra.mxu0 %v349
    %813 = vmatprep.mubr.f32.mxu0 %v597
    %814 = vmatmul.mubr.f32.gmra.mxu0 %v589
    %v815 = vpop.f32.mrf.mxu0
    %v816 = vadd.f32 %v745, %v815
    %v817 = vpop.f32.mrf.mxu0
    %v818 = vadd.f32 %v747, %v817
    %819 = vdwg.mxu0
    %820 = vmatprep.subr.mxu0 %v474
    %821 = vmatpush1.msra.mxu0 %v473
    %822 = vmatprep.subr.mxu0 %v470
    %823 = vmatpush1.msra.mxu0 %v469
    %824 = vmatprep.subr.mxu0 %v466
    %825 = vmatpush1.msra.mxu0 %v465
    %826 = vmatprep.subr.mxu0 %v462
    %827 = vmatpush1.msra.mxu0 %v461
    %828 = vmatprep.subr.mxu0 %v458
    %829 = vmatpush1.msra.mxu0 %v457
    %830 = vmatprep.subr.mxu0 %v454
    %831 = vmatpush1.msra.mxu0 %v453
    %832 = vmatprep.subr.mxu0 %v450
    %833 = vmatpush1.msra.mxu0 %v449
    %834 = vmatprep.subr.mxu0 %v446
    %835 = vmatpush1.msra.mxu0 %v445
    %836 = vmatprep.subr.mxu0 %v442
    %837 = vmatpush1.msra.mxu0 %v441
    %838 = vmatprep.subr.mxu0 %v438
    %839 = vmatpush1.msra.mxu0 %v437
    %840 = vmatprep.subr.mxu0 %v434
    %841 = vmatpush1.msra.mxu0 %v433
    %842 = vmatprep.subr.mxu0 %v430
    %843 = vmatpush1.msra.mxu0 %v429
    %844 = vmatprep.subr.mxu0 %v426
    %845 = vmatpush1.msra.mxu0 %v425
    %846 = vmatprep.subr.mxu0 %v422
    %847 = vmatpush1.msra.mxu0 %v421
    %848 = vmatprep.subr.mxu0 %v418
    %849 = vmatpush1.msra.mxu0 %v417
    %850 = vmatprep.subr.mxu0 %v414
    %851 = vmatpush1.msra.mxu0 %v413
    %852 = vmatprep.subr.mxu0 %v538
    %853 = vmatpush2.msra.mxu0 %v537
    %854 = vmatprep.subr.mxu0 %v534
    %855 = vmatpush2.msra.mxu0 %v533
    %856 = vmatprep.subr.mxu0 %v530
    %857 = vmatpush2.msra.mxu0 %v529
    %858 = vmatprep.subr.mxu0 %v526
    %859 = vmatpush2.msra.mxu0 %v525
    %860 = vmatprep.subr.mxu0 %v522
    %861 = vmatpush2.msra.mxu0 %v521
    %862 = vmatprep.subr.mxu0 %v518
    %863 = vmatpush2.msra.mxu0 %v517
    %864 = vmatprep.subr.mxu0 %v514
    %865 = vmatpush2.msra.mxu0 %v513
    %866 = vmatprep.subr.mxu0 %v510
    %867 = vmatpush2.msra.mxu0 %v509
    %868 = vmatprep.subr.mxu0 %v506
    %869 = vmatpush2.msra.mxu0 %v505
    %870 = vmatprep.subr.mxu0 %v502
    %871 = vmatpush2.msra.mxu0 %v501
    %872 = vmatprep.subr.mxu0 %v498
    %873 = vmatpush2.msra.mxu0 %v497
    %874 = vmatprep.subr.mxu0 %v494
    %875 = vmatpush2.msra.mxu0 %v493
    %876 = vmatprep.subr.mxu0 %v490
    %877 = vmatpush2.msra.mxu0 %v489
    %878 = vmatprep.subr.mxu0 %v486
    %879 = vmatpush2.msra.mxu0 %v485
    %880 = vmatprep.subr.mxu0 %v482
    %881 = vmatpush2.msra.mxu0 %v481
    %882 = vmatprep.subr.mxu0 %v478
    %883 = vmatpush2.msra.mxu0 %v477
    %884 = vmatprep.mubr.f32.mxu0 %v598
    %885 = vmatmul.mubr.f32.gmra.mxu0 %v596
    %v886 = vpop.f32.mrf.mxu0
    %v887 = vadd.f32 %v816, %v886
    %v888 = vpop.f32.mrf.mxu0
    %v889 = vadd.f32 %v818, %v888
    %890 = vdwg.mxu0
    %891 = vmatprep.subr.mxu0 %v92
    %892 = vmatpush1.msra.mxu0 %v91
    %893 = vmatprep.subr.mxu0 %v88
    %894 = vmatpush1.msra.mxu0 %v87
    %895 = vmatprep.subr.mxu0 %v84
    %896 = vmatpush1.msra.mxu0 %v83
    %897 = vmatprep.subr.mxu0 %v80
    %898 = vmatpush1.msra.mxu0 %v79
    %899 = vmatprep.subr.mxu0 %v76
    %900 = vmatpush1.msra.mxu0 %v75
    %901 = vmatprep.subr.mxu0 %v72
    %902 = vmatpush1.msra.mxu0 %v71
    %903 = vmatprep.subr.mxu0 %v68
    %904 = vmatpush1.msra.mxu0 %v67
    %905 = vmatprep.subr.mxu0 %v64
    %906 = vmatpush1.msra.mxu0 %v63
    %907 = vmatprep.subr.mxu0 %v60
    %908 = vmatpush1.msra.mxu0 %v59
    %909 = vmatprep.subr.mxu0 %v56
    %910 = vmatpush1.msra.mxu0 %v55
    %911 = vmatprep.subr.mxu0 %v52
    %912 = vmatpush1.msra.mxu0 %v51
    %913 = vmatprep.subr.mxu0 %v48
    %914 = vmatpush1.msra.mxu0 %v47
    %915 = vmatprep.subr.mxu0 %v44
    %916 = vmatpush1.msra.mxu0 %v43
    %917 = vmatprep.subr.mxu0 %v40
    %918 = vmatpush1.msra.mxu0 %v39
    %919 = vmatprep.subr.mxu0 %v36
    %920 = vmatpush1.msra.mxu0 %v35
    %921 = vmatprep.subr.mxu0 %v32
    %922 = vmatpush1.msra.mxu0 %v31
    %923 = vmatprep.subr.mxu0 %v156
    %924 = vmatpush2.msra.mxu0 %v155
    %925 = vmatprep.subr.mxu0 %v152
    %926 = vmatpush2.msra.mxu0 %v151
    %927 = vmatprep.subr.mxu0 %v148
    %928 = vmatpush2.msra.mxu0 %v147
    %929 = vmatprep.subr.mxu0 %v144
    %930 = vmatpush2.msra.mxu0 %v143
    %931 = vmatprep.subr.mxu0 %v140
    %932 = vmatpush2.msra.mxu0 %v139
    %933 = vmatprep.subr.mxu0 %v136
    %934 = vmatpush2.msra.mxu0 %v135
    %935 = vmatprep.subr.mxu0 %v132
    %936 = vmatpush2.msra.mxu0 %v131
    %937 = vmatprep.subr.mxu0 %v128
    %938 = vmatpush2.msra.mxu0 %v127
    %939 = vmatprep.subr.mxu0 %v124
    %940 = vmatpush2.msra.mxu0 %v123
    %941 = vmatprep.subr.mxu0 %v120
    %942 = vmatpush2.msra.mxu0 %v119
    %943 = vmatprep.subr.mxu0 %v116
    %944 = vmatpush2.msra.mxu0 %v115
    %945 = vmatprep.subr.mxu0 %v112
    %946 = vmatpush2.msra.mxu0 %v111
    %947 = vmatprep.subr.mxu0 %v108
    %948 = vmatpush2.msra.mxu0 %v107
    %949 = vmatprep.subr.mxu0 %v104
    %950 = vmatpush2.msra.mxu0 %v103
    %951 = vmatprep.subr.mxu0 %v100
    %952 = vmatpush2.msra.mxu0 %v99
    %953 = vmatprep.subr.mxu0 %v96
    %954 = vmatpush2.msra.mxu0 %v95
    %955 = vmatprep.mubr.f32.mxu0 %v580
    %956 = vmatmul.mubr.f32.gmra.mxu0 %v572
    %v957 = vpop.f32.mrf.mxu0
    %v958 = vadd.f32 %v554, %v957
    %v959 = vpop.f32.mrf.mxu0
    %v960 = vadd.f32 %v558, %v959
    %961 = vdwg.mxu0
    %962 = vmatprep.subr.mxu0 %v220
    %963 = vmatpush1.msra.mxu0 %v219
    %964 = vmatprep.subr.mxu0 %v216
    %965 = vmatpush1.msra.mxu0 %v215
    %966 = vmatprep.subr.mxu0 %v212
    %967 = vmatpush1.msra.mxu0 %v211
    %968 = vmatprep.subr.mxu0 %v208
    %969 = vmatpush1.msra.mxu0 %v207
    %970 = vmatprep.subr.mxu0 %v204
    %971 = vmatpush1.msra.mxu0 %v203
    %972 = vmatprep.subr.mxu0 %v200
    %973 = vmatpush1.msra.mxu0 %v199
    %974 = vmatprep.subr.mxu0 %v196
    %975 = vmatpush1.msra.mxu0 %v195
    %976 = vmatprep.subr.mxu0 %v192
    %977 = vmatpush1.msra.mxu0 %v191
    %978 = vmatprep.subr.mxu0 %v188
    %979 = vmatpush1.msra.mxu0 %v187
    %980 = vmatprep.subr.mxu0 %v184
    %981 = vmatpush1.msra.mxu0 %v183
    %982 = vmatprep.subr.mxu0 %v180
    %983 = vmatpush1.msra.mxu0 %v179
    %984 = vmatprep.subr.mxu0 %v176
    %985 = vmatpush1.msra.mxu0 %v175
    %986 = vmatprep.subr.mxu0 %v172
    %987 = vmatpush1.msra.mxu0 %v171
    %988 = vmatprep.subr.mxu0 %v168
    %989 = vmatpush1.msra.mxu0 %v167
    %990 = vmatprep.subr.mxu0 %v164
    %991 = vmatpush1.msra.mxu0 %v163
    %992 = vmatprep.subr.mxu0 %v160
    %993 = vmatpush1.msra.mxu0 %v159
    %994 = vmatprep.subr.mxu0 %v284
    %995 = vmatpush2.msra.mxu0 %v283
    %996 = vmatprep.subr.mxu0 %v280
    %997 = vmatpush2.msra.mxu0 %v279
    %998 = vmatprep.subr.mxu0 %v276
    %999 = vmatpush2.msra.mxu0 %v275
    %1000 = vmatprep.subr.mxu0 %v272
    %1001 = vmatpush2.msra.mxu0 %v271
    %1002 = vmatprep.subr.mxu0 %v268
    %1003 = vmatpush2.msra.mxu0 %v267
    %1004 = vmatprep.subr.mxu0 %v264
    %1005 = vmatpush2.msra.mxu0 %v263
    %1006 = vmatprep.subr.mxu0 %v260
    %1007 = vmatpush2.msra.mxu0 %v259
    %1008 = vmatprep.subr.mxu0 %v256
    %1009 = vmatpush2.msra.mxu0 %v255
    %1010 = vmatprep.subr.mxu0 %v252
    %1011 = vmatpush2.msra.mxu0 %v251
    %1012 = vmatprep.subr.mxu0 %v248
    %1013 = vmatpush2.msra.mxu0 %v247
    %1014 = vmatprep.subr.mxu0 %v244
    %1015 = vmatpush2.msra.mxu0 %v243
    %1016 = vmatprep.subr.mxu0 %v240
    %1017 = vmatpush2.msra.mxu0 %v239
    %1018 = vmatprep.subr.mxu0 %v236
    %1019 = vmatpush2.msra.mxu0 %v235
    %1020 = vmatprep.subr.mxu0 %v232
    %1021 = vmatpush2.msra.mxu0 %v231
    %1022 = vmatprep.subr.mxu0 %v228
    %1023 = vmatpush2.msra.mxu0 %v227
    %1024 = vmatprep.subr.mxu0 %v224
    %1025 = vmatpush2.msra.mxu0 %v223
    %1026 = vmatprep.mubr.f32.mxu0 %v581
    %1027 = vmatmul.mubr.f32.gmra.mxu0 %v579
    %v1028 = vpop.f32.mrf.mxu0
    %v1029 = vadd.f32 %v958, %v1028
    %v1030 = vpop.f32.mrf.mxu0
    %v1031 = vadd.f32 %v960, %v1030
    %1032 = vdwg.mxu0
    %1033 = vmatprep.subr.mxu0 %v348
    %1034 = vmatpush1.msra.mxu0 %v347
    %1035 = vmatprep.subr.mxu0 %v344
    %1036 = vmatpush1.msra.mxu0 %v343
    %1037 = vmatprep.subr.mxu0 %v340
    %1038 = vmatpush1.msra.mxu0 %v339
    %1039 = vmatprep.subr.mxu0 %v336
    %1040 = vmatpush1.msra.mxu0 %v335
    %1041 = vmatprep.subr.mxu0 %v332
    %1042 = vmatpush1.msra.mxu0 %v331
    %1043 = vmatprep.subr.mxu0 %v328
    %1044 = vmatpush1.msra.mxu0 %v327
    %1045 = vmatprep.subr.mxu0 %v324
    %1046 = vmatpush1.msra.mxu0 %v323
    %1047 = vmatprep.subr.mxu0 %v320
    %1048 = vmatpush1.msra.mxu0 %v319
    %1049 = vmatprep.subr.mxu0 %v316
    %1050 = vmatpush1.msra.mxu0 %v315
    %1051 = vmatprep.subr.mxu0 %v312
    %1052 = vmatpush1.msra.mxu0 %v311
    %1053 = vmatprep.subr.mxu0 %v308
    %1054 = vmatpush1.msra.mxu0 %v307
    %1055 = vmatprep.subr.mxu0 %v304
    %1056 = vmatpush1.msra.mxu0 %v303
    %1057 = vmatprep.subr.mxu0 %v300
    %1058 = vmatpush1.msra.mxu0 %v299
    %1059 = vmatprep.subr.mxu0 %v296
    %1060 = vmatpush1.msra.mxu0 %v295
    %1061 = vmatprep.subr.mxu0 %v292
    %1062 = vmatpush1.msra.mxu0 %v291
    %1063 = vmatprep.subr.mxu0 %v288
    %1064 = vmatpush1.msra.mxu0 %v287
    %1065 = vmatprep.subr.mxu0 %v412
    %1066 = vmatpush2.msra.mxu0 %v411
    %1067 = vmatprep.subr.mxu0 %v408
    %1068 = vmatpush2.msra.mxu0 %v407
    %1069 = vmatprep.subr.mxu0 %v404
    %1070 = vmatpush2.msra.mxu0 %v403
    %1071 = vmatprep.subr.mxu0 %v400
    %1072 = vmatpush2.msra.mxu0 %v399
    %1073 = vmatprep.subr.mxu0 %v396
    %1074 = vmatpush2.msra.mxu0 %v395
    %1075 = vmatprep.subr.mxu0 %v392
    %1076 = vmatpush2.msra.mxu0 %v391
    %1077 = vmatprep.subr.mxu0 %v388
    %1078 = vmatpush2.msra.mxu0 %v387
    %1079 = vmatprep.subr.mxu0 %v384
    %1080 = vmatpush2.msra.mxu0 %v383
    %1081 = vmatprep.subr.mxu0 %v380
    %1082 = vmatpush2.msra.mxu0 %v379
    %1083 = vmatprep.subr.mxu0 %v376
    %1084 = vmatpush2.msra.mxu0 %v375
    %1085 = vmatprep.subr.mxu0 %v372
    %1086 = vmatpush2.msra.mxu0 %v371
    %1087 = vmatprep.subr.mxu0 %v368
    %1088 = vmatpush2.msra.mxu0 %v367
    %1089 = vmatprep.subr.mxu0 %v364
    %1090 = vmatpush2.msra.mxu0 %v363
    %1091 = vmatprep.subr.mxu0 %v360
    %1092 = vmatpush2.msra.mxu0 %v359
    %1093 = vmatprep.subr.mxu0 %v356
    %1094 = vmatpush2.msra.mxu0 %v355
    %1095 = vmatprep.subr.mxu0 %v352
    %1096 = vmatpush2.msra.mxu0 %v351
    %1097 = vmatprep.mubr.f32.mxu0 %v597
    %1098 = vmatmul.mubr.f32.gmra.mxu0 %v589
    %v1099 = vpop.f32.mrf.mxu0
    %v1100 = vadd.f32 %v1029, %v1099
    %v1101 = vpop.f32.mrf.mxu0
    %v1102 = vadd.f32 %v1031, %v1101
    %1103 = vdwg.mxu0
    %1104 = vmatprep.subr.mxu0 %v476
    %1105 = vmatpush1.msra.mxu0 %v475
    %1106 = vmatprep.subr.mxu0 %v472
    %1107 = vmatpush1.msra.mxu0 %v471
    %1108 = vmatprep.subr.mxu0 %v468
    %1109 = vmatpush1.msra.mxu0 %v467
    %1110 = vmatprep.subr.mxu0 %v464
    %1111 = vmatpush1.msra.mxu0 %v463
    %1112 = vmatprep.subr.mxu0 %v460
    %1113 = vmatpush1.msra.mxu0 %v459
    %1114 = vmatprep.subr.mxu0 %v456
    %1115 = vmatpush1.msra.mxu0 %v455
    %1116 = vmatprep.subr.mxu0 %v452
    %1117 = vmatpush1.msra.mxu0 %v451
    %1118 = vmatprep.subr.mxu0 %v448
    %1119 = vmatpush1.msra.mxu0 %v447
    %1120 = vmatprep.subr.mxu0 %v444
    %1121 = vmatpush1.msra.mxu0 %v443
    %1122 = vmatprep.subr.mxu0 %v440
    %1123 = vmatpush1.msra.mxu0 %v439
    %1124 = vmatprep.subr.mxu0 %v436
    %1125 = vmatpush1.msra.mxu0 %v435
    %1126 = vmatprep.subr.mxu0 %v432
    %1127 = vmatpush1.msra.mxu0 %v431
    %1128 = vmatprep.subr.mxu0 %v428
    %1129 = vmatpush1.msra.mxu0 %v427
    %1130 = vmatprep.subr.mxu0 %v424
    %1131 = vmatpush1.msra.mxu0 %v423
    %1132 = vmatprep.subr.mxu0 %v420
    %1133 = vmatpush1.msra.mxu0 %v419
    %1134 = vmatprep.subr.mxu0 %v416
    %1135 = vmatpush1.msra.mxu0 %v415
    %1136 = vmatprep.subr.mxu0 %v540
    %1137 = vmatpush2.msra.mxu0 %v539
    %1138 = vmatprep.subr.mxu0 %v536
    %1139 = vmatpush2.msra.mxu0 %v535
    %1140 = vmatprep.subr.mxu0 %v532
    %1141 = vmatpush2.msra.mxu0 %v531
    %1142 = vmatprep.subr.mxu0 %v528
    %1143 = vmatpush2.msra.mxu0 %v527
    %1144 = vmatprep.subr.mxu0 %v524
    %1145 = vmatpush2.msra.mxu0 %v523
    %1146 = vmatprep.subr.mxu0 %v520
    %1147 = vmatpush2.msra.mxu0 %v519
    %1148 = vmatprep.subr.mxu0 %v516
    %1149 = vmatpush2.msra.mxu0 %v515
    %1150 = vmatprep.subr.mxu0 %v512
    %1151 = vmatpush2.msra.mxu0 %v511
    %1152 = vmatprep.subr.mxu0 %v508
    %1153 = vmatpush2.msra.mxu0 %v507
    %1154 = vmatprep.subr.mxu0 %v504
    %1155 = vmatpush2.msra.mxu0 %v503
    %1156 = vmatprep.subr.mxu0 %v500
    %1157 = vmatpush2.msra.mxu0 %v499
    %1158 = vmatprep.subr.mxu0 %v496
    %1159 = vmatpush2.msra.mxu0 %v495
    %1160 = vmatprep.subr.mxu0 %v492
    %1161 = vmatpush2.msra.mxu0 %v491
    %1162 = vmatprep.subr.mxu0 %v488
    %1163 = vmatpush2.msra.mxu0 %v487
    %1164 = vmatprep.subr.mxu0 %v484
    %1165 = vmatpush2.msra.mxu0 %v483
    %1166 = vmatprep.subr.mxu0 %v480
    %1167 = vmatpush2.msra.mxu0 %v479
    %1168 = vmatprep.mubr.f32.mxu0 %v598
    %1169 = vmatmul.mubr.f32.gmra.mxu0 %v596
    %v1170 = vpop.f32.mrf.mxu0
    %v1171 = vadd.f32 %v1100, %v1170
    %v1172 = vpop.f32.mrf.mxu0
    %v1173 = vadd.f32 %v1102, %v1172
    %1174 = vdwg.mxu0
    %v1175 = vmax.f32 %v887, 0.0
    %v1176 = vmax.f32 %v889, 0.0
    %v1177 = vmax.f32 %v1171, 0.0
    %v1178 = vmax.f32 %v1173, 0.0
    %v1179 = vld [vmem:[%s3] sm:$0xff]
    %v1180 = vld [vmem:[%s3 + $0x8] sm:$0xff]
    %v1181 = vld [vmem:[%s3 + $0x10] sm:$0xff]
    %v1182 = vld [vmem:[%s3 + $0x18] sm:$0xff]
    %v1183 = vld [vmem:[%s3 + $0x20] sm:$0xff]
    %v1184 = vld [vmem:[%s3 + $0x28] sm:$0xff]
    %v1185 = vld [vmem:[%s3 + $0x30] sm:$0xff]
    %v1186 = vld [vmem:[%s3 + $0x38] sm:$0xff]
    %v1187 = vld [vmem:[%s3 + $0x40] sm:$0xff]
    %v1188 = vld [vmem:[%s3 + $0x48] sm:$0xff]
    %v1189 = vld [vmem:[%s3 + $0x50] sm:$0xff]
    %v1190 = vld [vmem:[%s3 + $0x58] sm:$0xff]
    %v1191 = vld [vmem:[%s3 + $0x60] sm:$0xff]
    %v1192 = vld [vmem:[%s3 + $0x68] sm:$0xff]
    %v1193 = vld [vmem:[%s3 + $0x70] sm:$0xff]
    %v1194 = vld [vmem:[%s3 + $0x78] sm:$0xff]
    %v1195 = vld [vmem:[%s3 + $0x80] sm:$0xff]
    %v1196 = vld [vmem:[%s3 + $0x88] sm:$0xff]
    %v1197 = vld [vmem:[%s3 + $0x90] sm:$0xff]
    %v1198 = vld [vmem:[%s3 + $0x98] sm:$0xff]
    %v1199 = vld [vmem:[%s3 + $0xa0] sm:$0xff]
    %v1200 = vld [vmem:[%s3 + $0xa8] sm:$0xff]
    %v1201 = vld [vmem:[%s3 + $0xb0] sm:$0xff]
    %v1202 = vld [vmem:[%s3 + $0xb8] sm:$0xff]
    %v1203 = vld [vmem:[%s3 + $0xc0] sm:$0xff]
    %v1204 = vld [vmem:[%s3 + $0xc8] sm:$0xff]
    %v1205 = vld [vmem:[%s3 + $0xd0] sm:$0xff]
    %v1206 = vld [vmem:[%s3 + $0xd8] sm:$0xff]
    %v1207 = vld [vmem:[%s3 + $0xe0] sm:$0xff]
    %v1208 = vld [vmem:[%s3 + $0xe8] sm:$0xff]
    %v1209 = vld [vmem:[%s3 + $0xf0] sm:$0xff]
    %v1210 = vld [vmem:[%s3 + $0xf8] sm:$0xff]
    %v1211 = vld [vmem:[%s3 + $0x100] sm:$0xff]
    %v1212 = vld [vmem:[%s3 + $0x108] sm:$0xff]
    %v1213 = vld [vmem:[%s3 + $0x110] sm:$0xff]
    %v1214 = vld [vmem:[%s3 + $0x118] sm:$0xff]
    %v1215 = vld [vmem:[%s3 + $0x120] sm:$0xff]
    %v1216 = vld [vmem:[%s3 + $0x128] sm:$0xff]
    %v1217 = vld [vmem:[%s3 + $0x130] sm:$0xff]
    %v1218 = vld [vmem:[%s3 + $0x138] sm:$0xff]
    %v1219 = vld [vmem:[%s3 + $0x140] sm:$0xff]
    %v1220 = vld [vmem:[%s3 + $0x148] sm:$0xff]
    %v1221 = vld [vmem:[%s3 + $0x150] sm:$0xff]
    %v1222 = vld [vmem:[%s3 + $0x158] sm:$0xff]
    %v1223 = vld [vmem:[%s3 + $0x160] sm:$0xff]
    %v1224 = vld [vmem:[%s3 + $0x168] sm:$0xff]
    %v1225 = vld [vmem:[%s3 + $0x170] sm:$0xff]
    %v1226 = vld [vmem:[%s3 + $0x178] sm:$0xff]
    %v1227 = vld [vmem:[%s3 + $0x180] sm:$0xff]
    %v1228 = vld [vmem:[%s3 + $0x188] sm:$0xff]
    %v1229 = vld [vmem:[%s3 + $0x190] sm:$0xff]
    %v1230 = vld [vmem:[%s3 + $0x198] sm:$0xff]
    %v1231 = vld [vmem:[%s3 + $0x1a0] sm:$0xff]
    %v1232 = vld [vmem:[%s3 + $0x1a8] sm:$0xff]
    %v1233 = vld [vmem:[%s3 + $0x1b0] sm:$0xff]
    %v1234 = vld [vmem:[%s3 + $0x1b8] sm:$0xff]
    %v1235 = vld [vmem:[%s3 + $0x1c0] sm:$0xff]
    %v1236 = vld [vmem:[%s3 + $0x1c8] sm:$0xff]
    %v1237 = vld [vmem:[%s3 + $0x1d0] sm:$0xff]
    %v1238 = vld [vmem:[%s3 + $0x1d8] sm:$0xff]
    %v1239 = vld [vmem:[%s3 + $0x1e0] sm:$0xff]
    %v1240 = vld [vmem:[%s3 + $0x1e8] sm:$0xff]
    %v1241 = vld [vmem:[%s3 + $0x1f0] sm:$0xff]
    %v1242 = vld [vmem:[%s3 + $0x1f8] sm:$0xff]
    %v1243 = vld [vmem:[%s3 + $0x200] sm:$0xff]
    %v1244 = vld [vmem:[%s3 + $0x208] sm:$0xff]
    %v1245 = vld [vmem:[%s3 + $0x210] sm:$0xff]
    %v1246 = vld [vmem:[%s3 + $0x218] sm:$0xff]
    %v1247 = vld [vmem:[%s3 + $0x220] sm:$0xff]
    %v1248 = vld [vmem:[%s3 + $0x228] sm:$0xff]
    %v1249 = vld [vmem:[%s3 + $0x230] sm:$0xff]
    %v1250 = vld [vmem:[%s3 + $0x238] sm:$0xff]
    %v1251 = vld [vmem:[%s3 + $0x240] sm:$0xff]
    %v1252 = vld [vmem:[%s3 + $0x248] sm:$0xff]
    %v1253 = vld [vmem:[%s3 + $0x250] sm:$0xff]
    %v1254 = vld [vmem:[%s3 + $0x258] sm:$0xff]
    %v1255 = vld [vmem:[%s3 + $0x260] sm:$0xff]
    %v1256 = vld [vmem:[%s3 + $0x268] sm:$0xff]
    %v1257 = vld [vmem:[%s3 + $0x270] sm:$0xff]
    %v1258 = vld [vmem:[%s3 + $0x278] sm:$0xff]
    %v1259 = vld [vmem:[%s3 + $0x280] sm:$0xff]
    %v1260 = vld [vmem:[%s3 + $0x288] sm:$0xff]
    %v1261 = vld [vmem:[%s3 + $0x290] sm:$0xff]
    %v1262 = vld [vmem:[%s3 + $0x298] sm:$0xff]
    %v1263 = vld [vmem:[%s3 + $0x2a0] sm:$0xff]
    %v1264 = vld [vmem:[%s3 + $0x2a8] sm:$0xff]
    %v1265 = vld [vmem:[%s3 + $0x2b0] sm:$0xff]
    %v1266 = vld [vmem:[%s3 + $0x2b8] sm:$0xff]
    %v1267 = vld [vmem:[%s3 + $0x2c0] sm:$0xff]
    %v1268 = vld [vmem:[%s3 + $0x2c8] sm:$0xff]
    %v1269 = vld [vmem:[%s3 + $0x2d0] sm:$0xff]
    %v1270 = vld [vmem:[%s3 + $0x2d8] sm:$0xff]
    %v1271 = vld [vmem:[%s3 + $0x2e0] sm:$0xff]
    %v1272 = vld [vmem:[%s3 + $0x2e8] sm:$0xff]
    %v1273 = vld [vmem:[%s3 + $0x2f0] sm:$0xff]
    %v1274 = vld [vmem:[%s3 + $0x2f8] sm:$0xff]
    %v1275 = vld [vmem:[%s3 + $0x300] sm:$0xff]
    %v1276 = vld [vmem:[%s3 + $0x308] sm:$0xff]
    %v1277 = vld [vmem:[%s3 + $0x310] sm:$0xff]
    %v1278 = vld [vmem:[%s3 + $0x318] sm:$0xff]
    %v1279 = vld [vmem:[%s3 + $0x320] sm:$0xff]
    %v1280 = vld [vmem:[%s3 + $0x328] sm:$0xff]
    %v1281 = vld [vmem:[%s3 + $0x330] sm:$0xff]
    %v1282 = vld [vmem:[%s3 + $0x338] sm:$0xff]
    %v1283 = vld [vmem:[%s3 + $0x340] sm:$0xff]
    %v1284 = vld [vmem:[%s3 + $0x348] sm:$0xff]
    %v1285 = vld [vmem:[%s3 + $0x350] sm:$0xff]
    %v1286 = vld [vmem:[%s3 + $0x358] sm:$0xff]
    %v1287 = vld [vmem:[%s3 + $0x360] sm:$0xff]
    %v1288 = vld [vmem:[%s3 + $0x368] sm:$0xff]
    %v1289 = vld [vmem:[%s3 + $0x370] sm:$0xff]
    %v1290 = vld [vmem:[%s3 + $0x378] sm:$0xff]
    %v1291 = vld [vmem:[%s3 + $0x380] sm:$0xff]
    %v1292 = vld [vmem:[%s3 + $0x388] sm:$0xff]
    %v1293 = vld [vmem:[%s3 + $0x390] sm:$0xff]
    %v1294 = vld [vmem:[%s3 + $0x398] sm:$0xff]
    %v1295 = vld [vmem:[%s3 + $0x3a0] sm:$0xff]
    %v1296 = vld [vmem:[%s3 + $0x3a8] sm:$0xff]
    %v1297 = vld [vmem:[%s3 + $0x3b0] sm:$0xff]
    %v1298 = vld [vmem:[%s3 + $0x3b8] sm:$0xff]
    %v1299 = vld [vmem:[%s3 + $0x3c0] sm:$0xff]
    %v1300 = vld [vmem:[%s3 + $0x3c8] sm:$0xff]
    %v1301 = vld [vmem:[%s3 + $0x3d0] sm:$0xff]
    %v1302 = vld [vmem:[%s3 + $0x3d8] sm:$0xff]
    %v1303 = vld [vmem:[%s3 + $0x3e0] sm:$0xff]
    %v1304 = vld [vmem:[%s3 + $0x3e8] sm:$0xff]
    %v1305 = vld [vmem:[%s3 + $0x3f0] sm:$0xff]
    %v1306 = vld [vmem:[%s3 + $0x3f8] sm:$0xff]
    %v1307 = vld [vmem:[%s4] sm:$0x3]
    %v1309 = vlaneseq
    %v1310 = vshrl.u32 %v1309, 7
    %v1311 = vsub.s32 0, %v1310
    %v1312 = vrot.slane %v1307, %v1311
    %v1313 = vlaneseq
    %v1314 = vshrl.u32 %v1313, 7
    %v1315 = vsub.s32 1, %v1314
    %v1316 = vrot.slane %v1307, %v1315
    %1319 = vmatprep.subr.mxu0 %v1210
    %1320 = vmatpush1.msra.mxu0 %v1209
    %1321 = vmatprep.subr.mxu0 %v1208
    %1322 = vmatpush1.msra.mxu0 %v1207
    %1323 = vmatprep.subr.mxu0 %v1206
    %1324 = vmatpush1.msra.mxu0 %v1205
    %1325 = vmatprep.subr.mxu0 %v1204
    %1326 = vmatpush1.msra.mxu0 %v1203
    %1327 = vmatprep.subr.mxu0 %v1202
    %1328 = vmatpush1.msra.mxu0 %v1201
    %1329 = vmatprep.subr.mxu0 %v1200
    %1330 = vmatpush1.msra.mxu0 %v1199
    %1331 = vmatprep.subr.mxu0 %v1198
    %1332 = vmatpush1.msra.mxu0 %v1197
    %1333 = vmatprep.subr.mxu0 %v1196
    %1334 = vmatpush1.msra.mxu0 %v1195
    %1335 = vmatprep.subr.mxu0 %v1194
    %1336 = vmatpush1.msra.mxu0 %v1193
    %1337 = vmatprep.subr.mxu0 %v1192
    %1338 = vmatpush1.msra.mxu0 %v1191
    %1339 = vmatprep.subr.mxu0 %v1190
    %1340 = vmatpush1.msra.mxu0 %v1189
    %1341 = vmatprep.subr.mxu0 %v1188
    %1342 = vmatpush1.msra.mxu0 %v1187
    %1343 = vmatprep.subr.mxu0 %v1186
    %1344 = vmatpush1.msra.mxu0 %v1185
    %1345 = vmatprep.subr.mxu0 %v1184
    %1346 = vmatpush1.msra.mxu0 %v1183
    %1347 = vmatprep.subr.mxu0 %v1182
    %1348 = vmatpush1.msra.mxu0 %v1181
    %1349 = vmatprep.subr.mxu0 %v1180
    %1350 = vmatpush1.msra.mxu0 %v1179
    %1351 = vmatprep.subr.mxu0 %v1242
    %1352 = vmatpush2.msra.mxu0 %v1241
    %1353 = vmatprep.subr.mxu0 %v1240
    %1354 = vmatpush2.msra.mxu0 %v1239
    %1355 = vmatprep.subr.mxu0 %v1238
    %1356 = vmatpush2.msra.mxu0 %v1237
    %1357 = vmatprep.subr.mxu0 %v1236
    %1358 = vmatpush2.msra.mxu0 %v1235
    %1359 = vmatprep.subr.mxu0 %v1234
    %1360 = vmatpush2.msra.mxu0 %v1233
    %1361 = vmatprep.subr.mxu0 %v1232
    %1362 = vmatpush2.msra.mxu0 %v1231
    %1363 = vmatprep.subr.mxu0 %v1230
    %1364 = vmatpush2.msra.mxu0 %v1229
    %1365 = vmatprep.subr.mxu0 %v1228
    %1366 = vmatpush2.msra.mxu0 %v1227
    %1367 = vmatprep.subr.mxu0 %v1226
    %1368 = vmatpush2.msra.mxu0 %v1225
    %1369 = vmatprep.subr.mxu0 %v1224
    %1370 = vmatpush2.msra.mxu0 %v1223
    %1371 = vmatprep.subr.mxu0 %v1222
    %1372 = vmatpush2.msra.mxu0 %v1221
    %1373 = vmatprep.subr.mxu0 %v1220
    %1374 = vmatpush2.msra.mxu0 %v1219
    %1375 = vmatprep.subr.mxu0 %v1218
    %1376 = vmatpush2.msra.mxu0 %v1217
    %1377 = vmatprep.subr.mxu0 %v1216
    %1378 = vmatpush2.msra.mxu0 %v1215
    %1379 = vmatprep.subr.mxu0 %v1214
    %1380 = vmatpush2.msra.mxu0 %v1213
    %1381 = vmatprep.subr.mxu0 %v1212
    %1382 = vmatpush2.msra.mxu0 %v1211
    %1383 = vmatprep.mubr.f32.mxu0 %v1176
    %1384 = vmatmul.mubr.f32.gmra.mxu0 %v1175
    %v1385 = vpop.f32.mrf.mxu0
    %v1386 = vadd.f32 %v1312, %v1385
    %v1387 = vpop.f32.mrf.mxu0
    %v1388 = vadd.f32 %v1316, %v1387
    %1389 = vdwg.mxu0
    %1390 = vmatprep.subr.mxu0 %v1274
    %1391 = vmatpush1.msra.mxu0 %v1273
    %1392 = vmatprep.subr.mxu0 %v1272
    %1393 = vmatpush1.msra.mxu0 %v1271
    %1394 = vmatprep.subr.mxu0 %v1270
    %1395 = vmatpush1.msra.mxu0 %v1269
    %1396 = vmatprep.subr.mxu0 %v1268
    %1397 = vmatpush1.msra.mxu0 %v1267
    %1398 = vmatprep.subr.mxu0 %v1266
    %1399 = vmatpush1.msra.mxu0 %v1265
    %1400 = vmatprep.subr.mxu0 %v1264
    %1401 = vmatpush1.msra.mxu0 %v1263
    %1402 = vmatprep.subr.mxu0 %v1262
    %1403 = vmatpush1.msra.mxu0 %v1261
    %1404 = vmatprep.subr.mxu0 %v1260
    %1405 = vmatpush1.msra.mxu0 %v1259
    %1406 = vmatprep.subr.mxu0 %v1258
    %1407 = vmatpush1.msra.mxu0 %v1257
    %1408 = vmatprep.subr.mxu0 %v1256
    %1409 = vmatpush1.msra.mxu0 %v1255
    %1410 = vmatprep.subr.mxu0 %v1254
    %1411 = vmatpush1.msra.mxu0 %v1253
    %1412 = vmatprep.subr.mxu0 %v1252
    %1413 = vmatpush1.msra.mxu0 %v1251
    %1414 = vmatprep.subr.mxu0 %v1250
    %1415 = vmatpush1.msra.mxu0 %v1249
    %1416 = vmatprep.subr.mxu0 %v1248
    %1417 = vmatpush1.msra.mxu0 %v1247
    %1418 = vmatprep.subr.mxu0 %v1246
    %1419 = vmatpush1.msra.mxu0 %v1245
    %1420 = vmatprep.subr.mxu0 %v1244
    %1421 = vmatpush1.msra.mxu0 %v1243
    %1422 = vmatprep.subr.mxu0 %v1306
    %1423 = vmatpush2.msra.mxu0 %v1305
    %1424 = vmatprep.subr.mxu0 %v1304
    %1425 = vmatpush2.msra.mxu0 %v1303
    %1426 = vmatprep.subr.mxu0 %v1302
    %1427 = vmatpush2.msra.mxu0 %v1301
    %1428 = vmatprep.subr.mxu0 %v1300
    %1429 = vmatpush2.msra.mxu0 %v1299
    %1430 = vmatprep.subr.mxu0 %v1298
    %1431 = vmatpush2.msra.mxu0 %v1297
    %1432 = vmatprep.subr.mxu0 %v1296
    %1433 = vmatpush2.msra.mxu0 %v1295
    %1434 = vmatprep.subr.mxu0 %v1294
    %1435 = vmatpush2.msra.mxu0 %v1293
    %1436 = vmatprep.subr.mxu0 %v1292
    %1437 = vmatpush2.msra.mxu0 %v1291
    %1438 = vmatprep.subr.mxu0 %v1290
    %1439 = vmatpush2.msra.mxu0 %v1289
    %1440 = vmatprep.subr.mxu0 %v1288
    %1441 = vmatpush2.msra.mxu0 %v1287
    %1442 = vmatprep.subr.mxu0 %v1286
    %1443 = vmatpush2.msra.mxu0 %v1285
    %1444 = vmatprep.subr.mxu0 %v1284
    %1445 = vmatpush2.msra.mxu0 %v1283
    %1446 = vmatprep.subr.mxu0 %v1282
    %1447 = vmatpush2.msra.mxu0 %v1281
    %1448 = vmatprep.subr.mxu0 %v1280
    %1449 = vmatpush2.msra.mxu0 %v1279
    %1450 = vmatprep.subr.mxu0 %v1278
    %1451 = vmatpush2.msra.mxu0 %v1277
    %1452 = vmatprep.subr.mxu0 %v1276
    %1453 = vmatpush2.msra.mxu0 %v1275
    %1454 = vmatprep.mubr.f32.mxu0 %v1178
    %1455 = vmatmul.mubr.f32.gmra.mxu0 %v1177
    %v1456 = vpop.f32.mrf.mxu0
    %v1457 = vadd.f32 %v1386, %v1456
    %v1458 = vpop.f32.mrf.mxu0
    %v1459 = vadd.f32 %v1388, %v1458
    %1460 = vdwg.mxu0
    %v1461 = vmax.f32 %v1457, 0.0
    %v1462 = vmax.f32 %v1459, 0.0
    %v1463 = vld [vmem:[%s5] sm:$0xff]
    %v1464 = vld [vmem:[%s5 + $0x8] sm:$0xff]
    %v1465 = vld [vmem:[%s5 + $0x10] sm:$0xff]
    %v1466 = vld [vmem:[%s5 + $0x18] sm:$0xff]
    %v1467 = vld [vmem:[%s5 + $0x20] sm:$0xff]
    %v1468 = vld [vmem:[%s5 + $0x28] sm:$0xff]
    %v1469 = vld [vmem:[%s5 + $0x30] sm:$0xff]
    %v1470 = vld [vmem:[%s5 + $0x38] sm:$0xff]
    %v1471 = vld [vmem:[%s5 + $0x40] sm:$0xff]
    %v1472 = vld [vmem:[%s5 + $0x48] sm:$0xff]
    %v1473 = vld [vmem:[%s5 + $0x50] sm:$0xff]
    %v1474 = vld [vmem:[%s5 + $0x58] sm:$0xff]
    %v1475 = vld [vmem:[%s5 + $0x60] sm:$0xff]
    %v1476 = vld [vmem:[%s5 + $0x68] sm:$0xff]
    %v1477 = vld [vmem:[%s5 + $0x70] sm:$0xff]
    %v1478 = vld [vmem:[%s5 + $0x78] sm:$0xff]
    %v1479 = vld [vmem:[%s5 + $0x80] sm:$0xff]
    %v1480 = vld [vmem:[%s5 + $0x88] sm:$0xff]
    %v1481 = vld [vmem:[%s5 + $0x90] sm:$0xff]
    %v1482 = vld [vmem:[%s5 + $0x98] sm:$0xff]
    %v1483 = vld [vmem:[%s5 + $0xa0] sm:$0xff]
    %v1484 = vld [vmem:[%s5 + $0xa8] sm:$0xff]
    %v1485 = vld [vmem:[%s5 + $0xb0] sm:$0xff]
    %v1486 = vld [vmem:[%s5 + $0xb8] sm:$0xff]
    %v1487 = vld [vmem:[%s5 + $0xc0] sm:$0xff]
    %v1488 = vld [vmem:[%s5 + $0xc8] sm:$0xff]
    %v1489 = vld [vmem:[%s5 + $0xd0] sm:$0xff]
    %v1490 = vld [vmem:[%s5 + $0xd8] sm:$0xff]
    %v1491 = vld [vmem:[%s5 + $0xe0] sm:$0xff]
    %v1492 = vld [vmem:[%s5 + $0xe8] sm:$0xff]
    %v1493 = vld [vmem:[%s5 + $0xf0] sm:$0xff]
    %v1494 = vld [vmem:[%s5 + $0xf8] sm:$0xff]
    %v1495 = vld [vmem:[%s6] sm:$0x1]
    %v1497 = vlaneseq
    %v1498 = vshrl.u32 %v1497, 7
    %v1499 = vsub.s32 0, %v1498
    %v1500 = vrot.slane %v1495, %v1499
    %1502 = vmatprep.subr.mxu0 0.0
    %1503 = vmatpush1.msra.mxu0 %v1478
    %1504 = vmatprep.subr.mxu0 0.0
    %1505 = vmatpush1.msra.mxu0 %v1477
    %1506 = vmatprep.subr.mxu0 0.0
    %1507 = vmatpush1.msra.mxu0 %v1476
    %1508 = vmatprep.subr.mxu0 0.0
    %1509 = vmatpush1.msra.mxu0 %v1475
    %1510 = vmatprep.subr.mxu0 0.0
    %1511 = vmatpush1.msra.mxu0 %v1474
    %1512 = vmatprep.subr.mxu0 0.0
    %1513 = vmatpush1.msra.mxu0 %v1473
    %1514 = vmatprep.subr.mxu0 0.0
    %1515 = vmatpush1.msra.mxu0 %v1472
    %1516 = vmatprep.subr.mxu0 0.0
    %1517 = vmatpush1.msra.mxu0 %v1471
    %1518 = vmatprep.subr.mxu0 0.0
    %1519 = vmatpush1.msra.mxu0 %v1470
    %1520 = vmatprep.subr.mxu0 0.0
    %1521 = vmatpush1.msra.mxu0 %v1469
    %1522 = vmatprep.subr.mxu0 0.0
    %1523 = vmatpush1.msra.mxu0 %v1468
    %1524 = vmatprep.subr.mxu0 0.0
    %1525 = vmatpush1.msra.mxu0 %v1467
    %1526 = vmatprep.subr.mxu0 0.0
    %1527 = vmatpush1.msra.mxu0 %v1466
    %1528 = vmatprep.subr.mxu0 0.0
    %1529 = vmatpush1.msra.mxu0 %v1465
    %1530 = vmatprep.subr.mxu0 0.0
    %1531 = vmatpush1.msra.mxu0 %v1464
    %1532 = vmatprep.subr.mxu0 0.0
    %1533 = vmatpush1.msra.mxu0 %v1463
    %1534 = vmatprep.subr.mxu0 0.0
    %1535 = vmatpush2.msra.mxu0 %v1494
    %1536 = vmatprep.subr.mxu0 0.0
    %1537 = vmatpush2.msra.mxu0 %v1493
    %1538 = vmatprep.subr.mxu0 0.0
    %1539 = vmatpush2.msra.mxu0 %v1492
    %1540 = vmatprep.subr.mxu0 0.0
    %1541 = vmatpush2.msra.mxu0 %v1491
    %1542 = vmatprep.subr.mxu0 0.0
    %1543 = vmatpush2.msra.mxu0 %v1490
    %1544 = vmatprep.subr.mxu0 0.0
    %1545 = vmatpush2.msra.mxu0 %v1489
    %1546 = vmatprep.subr.mxu0 0.0
    %1547 = vmatpush2.msra.mxu0 %v1488
    %1548 = vmatprep.subr.mxu0 0.0
    %1549 = vmatpush2.msra.mxu0 %v1487
    %1550 = vmatprep.subr.mxu0 0.0
    %1551 = vmatpush2.msra.mxu0 %v1486
    %1552 = vmatprep.subr.mxu0 0.0
    %1553 = vmatpush2.msra.mxu0 %v1485
    %1554 = vmatprep.subr.mxu0 0.0
    %1555 = vmatpush2.msra.mxu0 %v1484
    %1556 = vmatprep.subr.mxu0 0.0
    %1557 = vmatpush2.msra.mxu0 %v1483
    %1558 = vmatprep.subr.mxu0 0.0
    %1559 = vmatpush2.msra.mxu0 %v1482
    %1560 = vmatprep.subr.mxu0 0.0
    %1561 = vmatpush2.msra.mxu0 %v1481
    %1562 = vmatprep.subr.mxu0 0.0
    %1563 = vmatpush2.msra.mxu0 %v1480
    %1564 = vmatprep.subr.mxu0 0.0
    %1565 = vmatpush2.msra.mxu0 %v1479
    %1566 = vmatprep.mubr.f32.mxu0 %v1462
    %1567 = vmatmul.mubr.f32.gmra.mxu0 %v1461
    %v1568 = vpop.f32.mrf.mxu0
    %v1569 = vadd.f32 %v1500, %v1568
    %v1570 = vpop.f32.mrf.mxu0
    %1571 = vdwg.mxu0
    %vm1572 = vcmask 9216
    %v1573 = vsel %vm1572, %v1569, -inf
    %v1574 = vrot.slane %v1573, 4
    %v1575 = vmax.f32 %v1573, %v1574
    %v1576 = vrot.slane %v1575, 2
    %v1577 = vmax.f32 %v1575, %v1576
    %v1578 = vrot.slane %v1577, 1
    %v1579 = vmax.f32 %v1577, %v1578
    %v1580 = vsub.f32 %v1569, %v1579
    %v1581 = vmul.f32 %v1580, 1.442695
    %v1582 = vpow.pop %v1581
    %v1583 = vsel %vm1572, %v1582, 0.0
    %v1584 = vrot.slane %v1583, 4
    %v1585 = vadd.f32 %v1583, %v1584
    %v1586 = vrot.slane %v1585, 2
    %v1587 = vadd.f32 %v1585, %v1586
    %v1588 = vrot.slane %v1587, 1
    %v1589 = vadd.f32 %v1587, %v1588
    %v1590 = vlog2.pop %v1589
    %v1591 = vmul.f32 %v1590, 0.6931472
    %v1592 = vadd.f32 %v1591, %v1579
    %v1593 = vsub.f32 %v1569, %v1592
    %1594 = vst.msk [vmem:[#allocation2] sm:$0x3] %vm1572, %v1593
    // Predicated region
    $region30: #{pointnet_cls_forward.7} parent=1 // pred_check
      _
    $region31: #{pointnet_cls_forward.7} parent=1 // pred_check_branch
      %1596 = sbr.rel (0) target = $region33
    $region32: #{pointnet_cls_forward.7} parent=1 // pred_region
      %s1598 = ssub.s32 32, 32
      %1599 = vsyncadd [#allocation3], %s1598
      %s1601 = sshll.u32 [#allocation2], 4
      %s1602 = int_to_ptr.vmem [resolvable:$true] %s1601
      %1604 = dma.vmem_to_hbm [thread:$0]  %s1602, 32, %s7, [#allocation3]
    $region33: #{pointnet_cls_forward.7} parent=1 // pred_fallthru
      _
    // Predicated region
    $region34: #{pointnet_cls_forward.7} parent=1 // pred_check
      _
    $region35: #{pointnet_cls_forward.7} parent=1 // pred_check_branch
      %1606 = sbr.rel (0) target = $region37
    $region36: #{pointnet_cls_forward.7} parent=1 // pred_region
      %1607 = dma.done [#allocation3], 32
    $region37: #{pointnet_cls_forward.7} parent=1 // pred_fallthru
      _
    %1608 = vsyncpa [#allocation3], 1

</llo_original>
